<compile_context>
chip_gen: v7x
topology: tpu7x:2x2x1
jax: 0.10.0
libtpu: 0.0.40
codegen_flags: <defaults>
</compile_context>

<pallas_src>
import jax
import jax.numpy as jnp
from jax.experimental import pallas as pl
from jax.experimental.pallas import tpu as pltpu


# Original (in, out) dims of the five nn.Linear layers (transposed vs torch's (out,in)).
DIMS = [(600, 600), (600, 150), (150, 40), (40, 10), (10, 2)]
# Lane-padded dims used inside the kernel (all multiples of 128).
DIMS_PAD = [(640, 640), (640, 256), (256, 128), (128, 128), (128, 128)]
D_IN_PAD = DIMS_PAD[0][0]     # 640
D_OUT_PAD = DIMS_PAD[-1][1]   # 128
BIAS_OFFS = [0, 640, 896, 1024, 1152]
BIAS_TOTAL = 1280
NUM_REAL_OUT = 2

TB = 256                      # batch tile (multiple of 8 sublanes, MXU-friendly)


def mlp_kernel(preluw_ref, x_ref, w1, w2, w3, w4, w5, bias_ref, o_ref):
    a = preluw_ref[0]                       # scalar PReLU slope from SMEM

    def layer(h, w_ref, b_off, width):
        # bf16 x bf16 matmul with f32 accumulation on the MXU.
        y = jnp.dot(h.astype(jnp.bfloat16), w_ref[...],
                    preferred_element_type=jnp.float32)
        y = y + bias_ref[:, b_off:b_off + width]        # (1, width) broadcast, f32
        # PReLU with a single scalar weight (f32 on the VPU).
        return jnp.where(y >= 0, y, a * y)

    h = x_ref[...]                                       # (TB, 640) f32
    h = layer(h, w1, BIAS_OFFS[0], 640)
    h = layer(h, w2, BIAS_OFFS[1], 256)
    # dropout1 (p=0.2): identity at inference
    h = layer(h, w3, BIAS_OFFS[2], 128)
    h = layer(h, w4, BIAS_OFFS[3], 128)
    # dropout2 (p=0.2): identity at inference
    logits = layer(h, w5, BIAS_OFFS[4], 128)             # (TB, 128)

    # Softmax over dim=1, restricted to the 2 real logits (padded lanes masked).
    lane = jax.lax.broadcasted_iota(jnp.int32, logits.shape, 1)
    logits = jnp.where(lane < NUM_REAL_OUT, logits, jnp.float32(-1e30))
    m = jnp.max(logits, axis=1, keepdims=True)
    e = jnp.exp(logits - m)
    o_ref[...] = e / jnp.sum(e, axis=1, keepdims=True)


def init_params(key):
    """Deterministic PyTorch-style nn.Linear init: U(-1/sqrt(in), 1/sqrt(in)).
    Weights stored already transposed to (in, out)."""
    params = []
    for (din, dout) in DIMS:
        key, kw, kb = jax.random.split(key, 3)
        bound = 1.0 / jnp.sqrt(jnp.float32(din))
        w = jax.random.uniform(kw, (din, dout), jnp.float32, -bound, bound)
        b = jax.random.uniform(kb, (dout,), jnp.float32, -bound, bound)
        params.append((w, b))
    return params


def prepare_params(params):
    """Zero-pad to lane multiples, cast weights to bf16, pack biases (f32) into
    one lane-aligned (1, 1280) array."""
    ws, bs = [], []
    for (w, b), (dpi, dpo) in zip(params, DIMS_PAD):
        din, dout = w.shape
        wp = jnp.zeros((dpi, dpo), jnp.float32).at[:din, :dout].set(w)
        ws.append(wp.astype(jnp.bfloat16))
        bs.append(jnp.zeros((dpo,), jnp.float32).at[:dout].set(b.reshape(-1)))
    bias_packed = jnp.concatenate(bs).reshape(1, BIAS_TOTAL)
    return ws, bias_packed


def net_forward(x, params, preluw, *, tb=TB):
    B, d_in = x.shape
    nb = pl.cdiv(B, tb)
    b_pad = nb * tb

    ws, bias_packed = prepare_params(params)
    x_pad = jnp.zeros((b_pad, D_IN_PAD), jnp.float32).at[:B, :d_in].set(x)

    # Weights / biases: constant index_map -> VMEM-resident across grid steps.
    w_specs = [pl.BlockSpec((dpi, dpo), lambda i, *_: (0, 0))
               for (dpi, dpo) in DIMS_PAD]

    flops = 2 * b_pad * sum(dpi * dpo for dpi, dpo in DIMS_PAD)
    bytes_accessed = (sum(dpi * dpo * 2 for dpi, dpo in DIMS_PAD)   # bf16 weights
                      + BIAS_TOTAL * 4
                      + b_pad * D_IN_PAD * 4                        # x tiles
                      + b_pad * D_OUT_PAD * 4)                      # output

    out = pl.pallas_call(
        mlp_kernel,
        out_shape=jax.ShapeDtypeStruct((b_pad, D_OUT_PAD), jnp.float32),
        grid_spec=pltpu.PrefetchScalarGridSpec(
            num_scalar_prefetch=1,               # preluw -> SMEM scalar
            grid=(nb,),
            in_specs=[pl.BlockSpec((tb, D_IN_PAD), lambda i, *_: (i, 0))]
                     + w_specs
                     + [pl.BlockSpec((1, BIAS_TOTAL), lambda i, *_: (0, 0))],
            out_specs=pl.BlockSpec((tb, D_OUT_PAD), lambda i, *_: (i, 0)),
        ),
        compiler_params=pltpu.CompilerParams(
            dimension_semantics=("parallel",),       # 2 TCs on v7x; harmless elsewhere
            vmem_limit_bytes=32 * 1024 * 1024),      # explicit budget (v5e default is 16 MiB)
        cost_estimate=pl.CostEstimate(
            flops=flops,
            transcendentals=b_pad * D_OUT_PAD,
            bytes_accessed=bytes_accessed),
    )(preluw, x_pad, *ws, bias_packed)

    return out[:B, :NUM_REAL_OUT]


def net_forward_ref(x, params, preluw):
    """Pure-JAX reference matching the kernel's numerics (bf16 weights,
    bf16 matmul inputs, f32 accumulation / PReLU / softmax)."""
    a = preluw[0]
    h = x
    for (w, b) in params:
        y = jnp.dot(h.astype(jnp.bfloat16), w.astype(jnp.bfloat16),
                    preferred_element_type=jnp.float32) + b
        h = jnp.where(y >= 0, y, a * y)
    return jax.nn.softmax(h, axis=1)


if __name__ == "__main__":
    key = jax.random.PRNGKey(0)
    key, kx = jax.random.split(key)

    B = 8
    x = jax.random.normal(kx, (B, 600), jnp.float32)
    preluw = jnp.array([0.25], dtype=jnp.float32)
    params = init_params(key)

    out = net_forward(x, params, preluw)
    out = jax.block_until_ready(out)

    ref = net_forward_ref(x, params, preluw)
    assert out.shape == (B, 2)
    assert jnp.allclose(out, ref, atol=1e-4, rtol=1e-4), "mismatch vs JAX reference"
    assert jnp.allclose(jnp.sum(out, axis=1), 1.0, atol=1e-5), "softmax rows must sum to 1"

    print("KERNEL_OK")
</pallas_src>

<mosaic_0001>
module attributes {stable_mosaic.version = 11 : i64} {
  func.func @mlp_kernel(%arg0: i32, %arg1: memref<1xf32, #tpu.memory_space<smem>>, %arg2: memref<256x640xf32, #tpu.memory_space<vmem>>, %arg3: memref<640x640xbf16, #tpu.memory_space<vmem>>, %arg4: memref<640x256xbf16, #tpu.memory_space<vmem>>, %arg5: memref<256x128xbf16, #tpu.memory_space<vmem>>, %arg6: memref<128x128xbf16, #tpu.memory_space<vmem>>, %arg7: memref<128x128xbf16, #tpu.memory_space<vmem>>, %arg8: memref<1x1280xf32, #tpu.memory_space<vmem>>, %arg9: memref<256x128xf32, #tpu.memory_space<vmem>>) attributes {dimension_semantics = [#tpu.dimension_semantics<parallel>], iteration_bounds = array<i64: 1>, scalar_prefetch = 1 : i64, scratch_operands = 0 : i64, tpu.core_type = #tpu.core_type<tc>, window_params = [{transform_indices = @transform_0, window_bounds = array<i64: 256, 640>}, {pipeline_mode = #tpu.pipeline_mode<synchronous>, transform_indices = @transform_1, window_bounds = array<i64: 640, 640>}, {pipeline_mode = #tpu.pipeline_mode<synchronous>, transform_indices = @transform_2, window_bounds = array<i64: 640, 256>}, {pipeline_mode = #tpu.pipeline_mode<synchronous>, transform_indices = @transform_3, window_bounds = array<i64: 256, 128>}, {pipeline_mode = #tpu.pipeline_mode<synchronous>, transform_indices = @transform_4, window_bounds = array<i64: 128, 128>}, {pipeline_mode = #tpu.pipeline_mode<synchronous>, transform_indices = @transform_5, window_bounds = array<i64: 128, 128>}, {pipeline_mode = #tpu.pipeline_mode<synchronous>, transform_indices = @transform_6, window_bounds = array<i64: 1, 1280>}, {transform_indices = @transform_7, window_bounds = array<i64: 256, 128>}]} {
    %c0 = arith.constant 0 : index
    %0 = memref.load %arg1[%c0] : memref<1xf32, #tpu.memory_space<smem>>
    %c0_0 = arith.constant 0 : index
    %c0_1 = arith.constant 0 : index
    %1 = vector.load %arg2[%c0_0, %c0_1] : memref<256x640xf32, #tpu.memory_space<vmem>>, vector<256x640xf32>
    %2 = arith.truncf %1 : vector<256x640xf32> to vector<256x640xbf16>
    %c0_2 = arith.constant 0 : index
    %c0_3 = arith.constant 0 : index
    %3 = vector.load %arg3[%c0_2, %c0_3] : memref<640x640xbf16, #tpu.memory_space<vmem>>, vector<640x640xbf16>
    %cst = arith.constant dense<0.000000e+00> : vector<256x640xf32>
    %4 = tpu.matmul %2, %3, %cst {dimension_numbers = #tpu.dot_dimension_numbers<[1], [0], [0], [1], [0, 0, 1, 1], [], []>} : vector<256x640xbf16>, vector<640x640xbf16>, vector<256x640xf32> -> vector<256x640xf32>
    %c0_4 = arith.constant 0 : index
    %c0_5 = arith.constant 0 : index
    %5 = vector.load %arg8[%c0_4, %c0_5] : memref<1x1280xf32, #tpu.memory_space<vmem>>, vector<1x640xf32>
    %6 = vector.broadcast %5 : vector<1x640xf32> to vector<256x640xf32>
    %7 = arith.addf %4, %6 : vector<256x640xf32>
    %cst_6 = arith.constant 0.000000e+00 : f32
    %8 = vector.broadcast %cst_6 : f32 to vector<256x640xf32>
    %9 = arith.cmpf oge, %7, %8 : vector<256x640xf32>
    %10 = vector.broadcast %0 : f32 to vector<256x640xf32>
    %11 = arith.mulf %10, %7 : vector<256x640xf32>
    %12 = arith.select %9, %7, %11 : vector<256x640xi1>, vector<256x640xf32>
    %13 = arith.truncf %12 : vector<256x640xf32> to vector<256x640xbf16>
    %c0_7 = arith.constant 0 : index
    %c0_8 = arith.constant 0 : index
    %14 = vector.load %arg4[%c0_7, %c0_8] : memref<640x256xbf16, #tpu.memory_space<vmem>>, vector<640x256xbf16>
    %cst_9 = arith.constant dense<0.000000e+00> : vector<256x256xf32>
    %15 = tpu.matmul %13, %14, %cst_9 {dimension_numbers = #tpu.dot_dimension_numbers<[1], [0], [0], [1], [0, 0, 1, 1], [], []>} : vector<256x640xbf16>, vector<640x256xbf16>, vector<256x256xf32> -> vector<256x256xf32>
    %c0_10 = arith.constant 0 : index
    %c640 = arith.constant 640 : index
    %16 = vector.load %arg8[%c0_10, %c640] : memref<1x1280xf32, #tpu.memory_space<vmem>>, vector<1x256xf32>
    %17 = vector.broadcast %16 : vector<1x256xf32> to vector<256x256xf32>
    %18 = arith.addf %15, %17 : vector<256x256xf32>
    %cst_11 = arith.constant 0.000000e+00 : f32
    %19 = vector.broadcast %cst_11 : f32 to vector<256x256xf32>
    %20 = arith.cmpf oge, %18, %19 : vector<256x256xf32>
    %21 = vector.broadcast %0 : f32 to vector<256x256xf32>
    %22 = arith.mulf %21, %18 : vector<256x256xf32>
    %23 = arith.select %20, %18, %22 : vector<256x256xi1>, vector<256x256xf32>
    %24 = arith.truncf %23 : vector<256x256xf32> to vector<256x256xbf16>
    %c0_12 = arith.constant 0 : index
    %c0_13 = arith.constant 0 : index
    %25 = vector.load %arg5[%c0_12, %c0_13] : memref<256x128xbf16, #tpu.memory_space<vmem>>, vector<256x128xbf16>
    %cst_14 = arith.constant dense<0.000000e+00> : vector<256x128xf32>
    %26 = tpu.matmul %24, %25, %cst_14 {dimension_numbers = #tpu.dot_dimension_numbers<[1], [0], [0], [1], [0, 0, 1, 1], [], []>} : vector<256x256xbf16>, vector<256x128xbf16>, vector<256x128xf32> -> vector<256x128xf32>
    %c0_15 = arith.constant 0 : index
    %c896 = arith.constant 896 : index
    %27 = vector.load %arg8[%c0_15, %c896] : memref<1x1280xf32, #tpu.memory_space<vmem>>, vector<1x128xf32>
    %28 = vector.broadcast %27 : vector<1x128xf32> to vector<256x128xf32>
    %29 = arith.addf %26, %28 : vector<256x128xf32>
    %cst_16 = arith.constant 0.000000e+00 : f32
    %30 = vector.broadcast %cst_16 : f32 to vector<256x128xf32>
    %31 = arith.cmpf oge, %29, %30 : vector<256x128xf32>
    %32 = vector.broadcast %0 : f32 to vector<256x128xf32>
    %33 = arith.mulf %32, %29 : vector<256x128xf32>
    %34 = arith.select %31, %29, %33 : vector<256x128xi1>, vector<256x128xf32>
    %35 = arith.truncf %34 : vector<256x128xf32> to vector<256x128xbf16>
    %c0_17 = arith.constant 0 : index
    %c0_18 = arith.constant 0 : index
    %36 = vector.load %arg6[%c0_17, %c0_18] : memref<128x128xbf16, #tpu.memory_space<vmem>>, vector<128x128xbf16>
    %cst_19 = arith.constant dense<0.000000e+00> : vector<256x128xf32>
    %37 = tpu.matmul %35, %36, %cst_19 {dimension_numbers = #tpu.dot_dimension_numbers<[1], [0], [0], [1], [0, 0, 1, 1], [], []>} : vector<256x128xbf16>, vector<128x128xbf16>, vector<256x128xf32> -> vector<256x128xf32>
    %c0_20 = arith.constant 0 : index
    %c1024 = arith.constant 1024 : index
    %38 = vector.load %arg8[%c0_20, %c1024] : memref<1x1280xf32, #tpu.memory_space<vmem>>, vector<1x128xf32>
    %39 = vector.broadcast %38 : vector<1x128xf32> to vector<256x128xf32>
    %40 = arith.addf %37, %39 : vector<256x128xf32>
    %cst_21 = arith.constant 0.000000e+00 : f32
    %41 = vector.broadcast %cst_21 : f32 to vector<256x128xf32>
    %42 = arith.cmpf oge, %40, %41 : vector<256x128xf32>
    %43 = vector.broadcast %0 : f32 to vector<256x128xf32>
    %44 = arith.mulf %43, %40 : vector<256x128xf32>
    %45 = arith.select %42, %40, %44 : vector<256x128xi1>, vector<256x128xf32>
    %46 = arith.truncf %45 : vector<256x128xf32> to vector<256x128xbf16>
    %c0_22 = arith.constant 0 : index
    %c0_23 = arith.constant 0 : index
    %47 = vector.load %arg7[%c0_22, %c0_23] : memref<128x128xbf16, #tpu.memory_space<vmem>>, vector<128x128xbf16>
    %cst_24 = arith.constant dense<0.000000e+00> : vector<256x128xf32>
    %48 = tpu.matmul %46, %47, %cst_24 {dimension_numbers = #tpu.dot_dimension_numbers<[1], [0], [0], [1], [0, 0, 1, 1], [], []>} : vector<256x128xbf16>, vector<128x128xbf16>, vector<256x128xf32> -> vector<256x128xf32>
    %c0_25 = arith.constant 0 : index
    %c1152 = arith.constant 1152 : index
    %49 = vector.load %arg8[%c0_25, %c1152] : memref<1x1280xf32, #tpu.memory_space<vmem>>, vector<1x128xf32>
    %50 = vector.broadcast %49 : vector<1x128xf32> to vector<256x128xf32>
    %51 = arith.addf %48, %50 : vector<256x128xf32>
    %cst_26 = arith.constant 0.000000e+00 : f32
    %52 = vector.broadcast %cst_26 : f32 to vector<256x128xf32>
    %53 = arith.cmpf oge, %51, %52 : vector<256x128xf32>
    %54 = vector.broadcast %0 : f32 to vector<256x128xf32>
    %55 = arith.mulf %54, %51 : vector<256x128xf32>
    %56 = arith.select %53, %51, %55 : vector<256x128xi1>, vector<256x128xf32>
    %57 = tpu.iota {dimensions = array<i32: 1>} : vector<256x128xi32>
    %c2_i32 = arith.constant 2 : i32
    %58 = vector.broadcast %c2_i32 : i32 to vector<256x128xi32>
    %59 = arith.cmpi slt, %57, %58 : vector<256x128xi32>
    %cst_27 = arith.constant -1.000000e+30 : f32
    %60 = vector.broadcast %cst_27 : f32 to vector<256x128xf32>
    %61 = arith.select %59, %56, %60 : vector<256x128xi1>, vector<256x128xf32>
    %cst_28 = arith.constant dense<0xFF800000> : vector<256xf32>
    %62 = vector.multi_reduction <maximumf>, %61, %cst_28 [1] : vector<256x128xf32> to vector<256xf32>
    %63 = vector.shape_cast %62 : vector<256xf32> to vector<256x1xf32>
    %64 = vector.broadcast %63 : vector<256x1xf32> to vector<256x128xf32>
    %65 = arith.subf %61, %64 : vector<256x128xf32>
    %66 = math.exp %65 : vector<256x128xf32>
    %cst_29 = arith.constant dense<0.000000e+00> : vector<256xf32>
    %67 = vector.multi_reduction <add>, %66, %cst_29 [1] : vector<256x128xf32> to vector<256xf32>
    %68 = vector.shape_cast %67 : vector<256xf32> to vector<256x1xf32>
    %69 = vector.broadcast %68 : vector<256x1xf32> to vector<256x128xf32>
    %70 = arith.divf %66, %69 : vector<256x128xf32>
    %c0_30 = arith.constant 0 : index
    %c0_31 = arith.constant 0 : index
    %71 = vector.load %arg9[%c0_30, %c0_31] : memref<256x128xf32, #tpu.memory_space<vmem>>, vector<256x128xf32>
    tpu.vector_store %arg9[%c0_30, %c0_31], %70 {strides = array<i32>} : memref<256x128xf32, #tpu.memory_space<vmem>>, vector<256x128xf32>,
    return
  }
  func.func @transform_0(%arg0: i32, %arg1: memref<1xf32, #tpu.memory_space<smem>>) -> (i32, i32) {
    %c0_i32 = arith.constant 0 : i32
    %c0_i32_0 = arith.constant 0 : i32
    return %arg0, %c0_i32 : i32, i32
  }
  func.func @transform_1(%arg0: i32, %arg1: memref<1xf32, #tpu.memory_space<smem>>) -> (i32, i32) {
    %c0_i32 = arith.constant 0 : i32
    %c0_i32_0 = arith.constant 0 : i32
    %c0_i32_1 = arith.constant 0 : i32
    return %c0_i32, %c0_i32_0 : i32, i32
  }
  func.func @transform_2(%arg0: i32, %arg1: memref<1xf32, #tpu.memory_space<smem>>) -> (i32, i32) {
    %c0_i32 = arith.constant 0 : i32
    %c0_i32_0 = arith.constant 0 : i32
    %c0_i32_1 = arith.constant 0 : i32
    return %c0_i32, %c0_i32_0 : i32, i32
  }
  func.func @transform_3(%arg0: i32, %arg1: memref<1xf32, #tpu.memory_space<smem>>) -> (i32, i32) {
    %c0_i32 = arith.constant 0 : i32
    %c0_i32_0 = arith.constant 0 : i32
    %c0_i32_1 = arith.constant 0 : i32
    return %c0_i32, %c0_i32_0 : i32, i32
  }
  func.func @transform_4(%arg0: i32, %arg1: memref<1xf32, #tpu.memory_space<smem>>) -> (i32, i32) {
    %c0_i32 = arith.constant 0 : i32
    %c0_i32_0 = arith.constant 0 : i32
    %c0_i32_1 = arith.constant 0 : i32
    return %c0_i32, %c0_i32_0 : i32, i32
  }
  func.func @transform_5(%arg0: i32, %arg1: memref<1xf32, #tpu.memory_space<smem>>) -> (i32, i32) {
    %c0_i32 = arith.constant 0 : i32
    %c0_i32_0 = arith.constant 0 : i32
    %c0_i32_1 = arith.constant 0 : i32
    return %c0_i32, %c0_i32_0 : i32, i32
  }
  func.func @transform_6(%arg0: i32, %arg1: memref<1xf32, #tpu.memory_space<smem>>) -> (i32, i32) {
    %c0_i32 = arith.constant 0 : i32
    %c0_i32_0 = arith.constant 0 : i32
    %c0_i32_1 = arith.constant 0 : i32
    return %c0_i32, %c0_i32_0 : i32, i32
  }
  func.func @transform_7(%arg0: i32, %arg1: memref<1xf32, #tpu.memory_space<smem>>) -> (i32, i32) {
    %c0_i32 = arith.constant 0 : i32
    %c0_i32_0 = arith.constant 0 : i32
    return %arg0, %c0_i32 : i32, i32
  }
}

</mosaic_0001>

<llo_original>
// kernel: tpu_custom_call.1
$region0: #{tpu_custom_call.1}
  #allocation0 [shape = 'u32[]', space=smem, size = 0x4, offset = 0x4, fixed_abs, tag = 'smem constant byte address 0x4 - core index']
  #allocation1 [shape = 'u32[144,128]{1,0:T(1,128)}', space=vmem, size = 0x12000, scoped, tag = 'internal scratch']
  #allocation2 [shape = 's32[1]{0}', space=sflag, size = 0x4, scoped, tag = 'scoped memory for tpu_custom_call.1']
  #allocation3 [shape = 'f32[1]{0:T(128)S(6)}', space=smem, size = 0x200, scoped, tag = 'prefetched SMEM operand 0']
  %s0 = inlined_call_operand.<no memory space> [shape: f32[1], index: 0, kind: input, shape index: {}]
  %s1 = inlined_call_operand.hbm [shape: f32[256,640], index: 1, kind: input, shape index: {}]
  %s2 = inlined_call_operand.hbm [shape: bf16[640,640], index: 2, kind: input, shape index: {}]
  %s3 = inlined_call_operand.hbm [shape: bf16[640,256], index: 3, kind: input, shape index: {}]
  %s4 = inlined_call_operand.hbm [shape: bf16[256,128], index: 4, kind: input, shape index: {}]
  %s5 = inlined_call_operand.hbm [shape: bf16[128,128], index: 5, kind: input, shape index: {}]
  %s6 = inlined_call_operand.hbm [shape: bf16[128,128], index: 6, kind: input, shape index: {}]
  %s7 = inlined_call_operand.vmem [shape: f32[1,1280], index: 7, kind: input, shape index: {}]
  %s8 = inlined_call_operand.hbm [shape: f32[256,128], index: 8, kind: output, shape index: {}]
  %s9 = sld [smem:[#allocation0]]
  $region62: #{tpu_custom_call.1} parent=0
    _
  %s11 = ssub.s32 1, %s9
  %s12 = scalar_select 0, %s11, %s9
  %13 = sst [smem:[#allocation3]] %s0
  $region1: #{tpu_custom_call.1} parent=0
    #allocation4 [shape = 'u8[655360]{0}', space=vmem, size = 0xa0000, scoped, tag = 'input window, operand 1, single buffered']
    #allocation5 [shape = 's32[1]{0}', space=sflag, size = 0x4, scoped, tag = 'scoped memory for tpu_custom_call.1']
    #allocation6 [shape = 's32[1]{0}', space=sflag, size = 0x4, scoped, tag = 'scoped memory for tpu_custom_call.1']
    #allocation7 [shape = 'u8[819200]{0}', space=vmem, size = 0xc8000, scoped, tag = 'input window, operand 2, single buffered']
    #allocation8 [shape = 's32[1]{0}', space=sflag, size = 0x4, scoped, tag = 'scoped memory for tpu_custom_call.1']
    #allocation9 [shape = 'u8[327680]{0}', space=vmem, size = 0x50000, scoped, tag = 'input window, operand 3, single buffered']
    #allocation10 [shape = 'u8[65536]{0}', space=vmem, size = 0x10000, scoped, tag = 'input window, operand 4, single buffered']
    #allocation11 [shape = 's32[1]{0}', space=sflag, size = 0x4, scoped, tag = 'scoped memory for tpu_custom_call.1']
    #allocation12 [shape = 'u8[32768]{0}', space=vmem, size = 0x8000, scoped, tag = 'input window, operand 5, single buffered']
    #allocation13 [shape = 'u8[32768]{0}', space=vmem, size = 0x8000, scoped, tag = 'input window, operand 6, single buffered']
    #allocation14 [shape = 's32[1]{0}', space=sflag, size = 0x4, scoped, tag = 'scoped memory for tpu_custom_call.1']
    #allocation15 [shape = 'u8[131072]{0}', space=vmem, size = 0x20000, scoped, tag = 'output window, operand 0, single buffered']
    %14 = vsyncpa [#allocation5], 0
    %15 = vsyncpa [#allocation8], 0
    %16 = vsyncpa [#allocation11], 0
    %17 = vsyncpa [#allocation14], 0
    %18 = vsyncpa [#allocation6], 0
    // Predicated region
    $region2: #{tpu_custom_call.1} parent=1 // pred_check
      _
    $region3: #{tpu_custom_call.1} parent=1 // pred_check_branch
      %20 = sbr.rel (0) target = $region5
    $region4: #{tpu_custom_call.1} parent=1 // pred_region
      %s22 = ssub.s32 20480, 20480
      %23 = vsyncadd [#allocation5], %s22
      %s24 = sshll.u32 [#allocation4], 4
      %s25 = int_to_ptr.vmem [resolvable:$true] %s24
      %30 = dma.hbm_to_vmem [thread:$0]  %s1, 20480, %s25, [#allocation5], 640, 640, 40
    $region5: #{tpu_custom_call.1} parent=1 // pred_fallthru
      _
    // Predicated region
    $region6: #{tpu_custom_call.1} parent=1 // pred_check
      _
    $region7: #{tpu_custom_call.1} parent=1 // pred_check_branch
      %32 = sbr.rel (0) target = $region9
    $region8: #{tpu_custom_call.1} parent=1 // pred_region
      %s34 = ssub.s32 25600, 25600
      %35 = vsyncadd [#allocation8], %s34
      %s36 = sshll.u32 [#allocation7], 4
      %s37 = int_to_ptr.vmem [resolvable:$true] %s36
      %42 = dma.hbm_to_vmem [thread:$0]  %s2, 25600, %s37, [#allocation8], 320, 320, 20
    $region9: #{tpu_custom_call.1} parent=1 // pred_fallthru
      _
    // Predicated region
    $region10: #{tpu_custom_call.1} parent=1 // pred_check
      _
    $region11: #{tpu_custom_call.1} parent=1 // pred_check_branch
      %44 = sbr.rel (0) target = $region13
    $region12: #{tpu_custom_call.1} parent=1 // pred_region
      %s46 = ssub.s32 10240, 10240
      %47 = vsyncadd [#allocation8], %s46
      %s48 = sshll.u32 [#allocation9], 4
      %s49 = int_to_ptr.vmem [resolvable:$true] %s48
      %54 = dma.hbm_to_vmem [thread:$0]  %s3, 10240, %s49, [#allocation8], 128, 128, 8
    $region13: #{tpu_custom_call.1} parent=1 // pred_fallthru
      _
    // Predicated region
    $region14: #{tpu_custom_call.1} parent=1 // pred_check
      _
    $region15: #{tpu_custom_call.1} parent=1 // pred_check_branch
      %56 = sbr.rel (0) target = $region17
    $region16: #{tpu_custom_call.1} parent=1 // pred_region
      %s58 = ssub.s32 2048, 2048
      %59 = vsyncadd [#allocation11], %s58
      %s60 = sshll.u32 [#allocation10], 4
      %s61 = int_to_ptr.vmem [resolvable:$true] %s60
      %66 = dma.hbm_to_vmem [thread:$0]  %s4, 2048, %s61, [#allocation11], 64, 64, 4
    $region17: #{tpu_custom_call.1} parent=1 // pred_fallthru
      _
    // Predicated region
    $region18: #{tpu_custom_call.1} parent=1 // pred_check
      _
    $region19: #{tpu_custom_call.1} parent=1 // pred_check_branch
      %68 = sbr.rel (0) target = $region21
    $region20: #{tpu_custom_call.1} parent=1 // pred_region
      %s70 = ssub.s32 1024, 1024
      %71 = vsyncadd [#allocation11], %s70
      %s72 = sshll.u32 [#allocation12], 4
      %s73 = int_to_ptr.vmem [resolvable:$true] %s72
      %78 = dma.hbm_to_vmem [thread:$0]  %s5, 1024, %s73, [#allocation11], 64, 64, 4
    $region21: #{tpu_custom_call.1} parent=1 // pred_fallthru
      _
    // Predicated region
    $region22: #{tpu_custom_call.1} parent=1 // pred_check
      _
    $region23: #{tpu_custom_call.1} parent=1 // pred_check_branch
      %80 = sbr.rel (0) target = $region25
    $region24: #{tpu_custom_call.1} parent=1 // pred_region
      %s82 = ssub.s32 1024, 1024
      %83 = vsyncadd [#allocation14], %s82
      %s84 = sshll.u32 [#allocation13], 4
      %s85 = int_to_ptr.vmem [resolvable:$true] %s84
      %90 = dma.hbm_to_vmem [thread:$0]  %s6, 1024, %s85, [#allocation14], 64, 64, 4
    $region25: #{tpu_custom_call.1} parent=1 // pred_fallthru
      _
    // Predicated region
    $region26: #{tpu_custom_call.1} parent=1 // pred_check
      _
    $region27: #{tpu_custom_call.1} parent=1 // pred_check_branch
      %92 = sbr.rel (0) target = $region29
    $region28: #{tpu_custom_call.1} parent=1 // pred_region
      _
    $region29: #{tpu_custom_call.1} parent=1 // pred_fallthru
      _
    // Predicated region
    $region30: #{tpu_custom_call.1} parent=1 // pred_check
      _
    $region31: #{tpu_custom_call.1} parent=1 // pred_check_branch
      %94 = sbr.rel (0) target = $region33
    $region32: #{tpu_custom_call.1} parent=1 // pred_region
      %95 = dma.done [#allocation5], 20480
    $region33: #{tpu_custom_call.1} parent=1 // pred_fallthru
      _
    // Predicated region
    $region34: #{tpu_custom_call.1} parent=1 // pred_check
      _
    $region35: #{tpu_custom_call.1} parent=1 // pred_check_branch
      %97 = sbr.rel (0) target = $region37
    $region36: #{tpu_custom_call.1} parent=1 // pred_region
      %98 = dma.done [#allocation8], 25600
    $region37: #{tpu_custom_call.1} parent=1 // pred_fallthru
      _
    // Predicated region
    $region38: #{tpu_custom_call.1} parent=1 // pred_check
      _
    $region39: #{tpu_custom_call.1} parent=1 // pred_check_branch
      %100 = sbr.rel (0) target = $region41
    $region40: #{tpu_custom_call.1} parent=1 // pred_region
      %101 = dma.done [#allocation8], 10240
    $region41: #{tpu_custom_call.1} parent=1 // pred_fallthru
      _
    // Predicated region
    $region42: #{tpu_custom_call.1} parent=1 // pred_check
      _
    $region43: #{tpu_custom_call.1} parent=1 // pred_check_branch
      %103 = sbr.rel (0) target = $region45
    $region44: #{tpu_custom_call.1} parent=1 // pred_region
      %104 = dma.done [#allocation11], 2048
    $region45: #{tpu_custom_call.1} parent=1 // pred_fallthru
      _
    // Predicated region
    $region46: #{tpu_custom_call.1} parent=1 // pred_check
      _
    $region47: #{tpu_custom_call.1} parent=1 // pred_check_branch
      %106 = sbr.rel (0) target = $region49
    $region48: #{tpu_custom_call.1} parent=1 // pred_region
      %107 = dma.done [#allocation11], 1024
    $region49: #{tpu_custom_call.1} parent=1 // pred_fallthru
      _
    // Predicated region
    $region50: #{tpu_custom_call.1} parent=1 // pred_check
      _
    $region51: #{tpu_custom_call.1} parent=1 // pred_check_branch
      %109 = sbr.rel (0) target = $region53
    $region52: #{tpu_custom_call.1} parent=1 // pred_region
      %110 = dma.done [#allocation14], 1024
    $region53: #{tpu_custom_call.1} parent=1 // pred_fallthru
      _
    %s112 = sld [smem:[#allocation3]]
    %v113 = vld [vmem:[#allocation4] sm:$0xff]
    %v114 = vld [vmem:[#allocation4 + $0x8] sm:$0xff]
    %v115 = vld [vmem:[#allocation4 + $0x10] sm:$0xff]
    %v116 = vld [vmem:[#allocation4 + $0x18] sm:$0xff]
    %v117 = vld [vmem:[#allocation4 + $0x20] sm:$0xff]
    %v118 = vld [vmem:[#allocation4 + $0x28] sm:$0xff]
    %v119 = vld [vmem:[#allocation4 + $0x30] sm:$0xff]
    %v120 = vld [vmem:[#allocation4 + $0x38] sm:$0xff]
    %v121 = vld [vmem:[#allocation4 + $0x40] sm:$0xff]
    %v122 = vld [vmem:[#allocation4 + $0x48] sm:$0xff]
    %v123 = vld [vmem:[#allocation4 + $0x50] sm:$0xff]
    %v124 = vld [vmem:[#allocation4 + $0x58] sm:$0xff]
    %v125 = vld [vmem:[#allocation4 + $0x60] sm:$0xff]
    %v126 = vld [vmem:[#allocation4 + $0x68] sm:$0xff]
    %v127 = vld [vmem:[#allocation4 + $0x70] sm:$0xff]
    %v128 = vld [vmem:[#allocation4 + $0x78] sm:$0xff]
    %v129 = vld [vmem:[#allocation4 + $0x80] sm:$0xff]
    %v130 = vld [vmem:[#allocation4 + $0x88] sm:$0xff]
    %v131 = vld [vmem:[#allocation4 + $0x90] sm:$0xff]
    %v132 = vld [vmem:[#allocation4 + $0x98] sm:$0xff]
    %v133 = vld [vmem:[#allocation4 + $0xa0] sm:$0xff]
    %v134 = vld [vmem:[#allocation4 + $0xa8] sm:$0xff]
    %v135 = vld [vmem:[#allocation4 + $0xb0] sm:$0xff]
    %v136 = vld [vmem:[#allocation4 + $0xb8] sm:$0xff]
    %v137 = vld [vmem:[#allocation4 + $0xc0] sm:$0xff]
    %v138 = vld [vmem:[#allocation4 + $0xc8] sm:$0xff]
    %v139 = vld [vmem:[#allocation4 + $0xd0] sm:$0xff]
    %v140 = vld [vmem:[#allocation4 + $0xd8] sm:$0xff]
    %v141 = vld [vmem:[#allocation4 + $0xe0] sm:$0xff]
    %v142 = vld [vmem:[#allocation4 + $0xe8] sm:$0xff]
    %v143 = vld [vmem:[#allocation4 + $0xf0] sm:$0xff]
    %v144 = vld [vmem:[#allocation4 + $0xf8] sm:$0xff]
    %v145 = vld [vmem:[#allocation4 + $0x100] sm:$0xff]
    %v146 = vld [vmem:[#allocation4 + $0x108] sm:$0xff]
    %v147 = vld [vmem:[#allocation4 + $0x110] sm:$0xff]
    %v148 = vld [vmem:[#allocation4 + $0x118] sm:$0xff]
    %v149 = vld [vmem:[#allocation4 + $0x120] sm:$0xff]
    %v150 = vld [vmem:[#allocation4 + $0x128] sm:$0xff]
    %v151 = vld [vmem:[#allocation4 + $0x130] sm:$0xff]
    %v152 = vld [vmem:[#allocation4 + $0x138] sm:$0xff]
    %v153 = vld [vmem:[#allocation4 + $0x140] sm:$0xff]
    %v154 = vld [vmem:[#allocation4 + $0x148] sm:$0xff]
    %v155 = vld [vmem:[#allocation4 + $0x150] sm:$0xff]
    %v156 = vld [vmem:[#allocation4 + $0x158] sm:$0xff]
    %v157 = vld [vmem:[#allocation4 + $0x160] sm:$0xff]
    %v158 = vld [vmem:[#allocation4 + $0x168] sm:$0xff]
    %v159 = vld [vmem:[#allocation4 + $0x170] sm:$0xff]
    %v160 = vld [vmem:[#allocation4 + $0x178] sm:$0xff]
    %v161 = vld [vmem:[#allocation4 + $0x180] sm:$0xff]
    %v162 = vld [vmem:[#allocation4 + $0x188] sm:$0xff]
    %v163 = vld [vmem:[#allocation4 + $0x190] sm:$0xff]
    %v164 = vld [vmem:[#allocation4 + $0x198] sm:$0xff]
    %v165 = vld [vmem:[#allocation4 + $0x1a0] sm:$0xff]
    %v166 = vld [vmem:[#allocation4 + $0x1a8] sm:$0xff]
    %v167 = vld [vmem:[#allocation4 + $0x1b0] sm:$0xff]
    %v168 = vld [vmem:[#allocation4 + $0x1b8] sm:$0xff]
    %v169 = vld [vmem:[#allocation4 + $0x1c0] sm:$0xff]
    %v170 = vld [vmem:[#allocation4 + $0x1c8] sm:$0xff]
    %v171 = vld [vmem:[#allocation4 + $0x1d0] sm:$0xff]
    %v172 = vld [vmem:[#allocation4 + $0x1d8] sm:$0xff]
    %v173 = vld [vmem:[#allocation4 + $0x1e0] sm:$0xff]
    %v174 = vld [vmem:[#allocation4 + $0x1e8] sm:$0xff]
    %v175 = vld [vmem:[#allocation4 + $0x1f0] sm:$0xff]
    %v176 = vld [vmem:[#allocation4 + $0x1f8] sm:$0xff]
    %v177 = vld [vmem:[#allocation4 + $0x200] sm:$0xff]
    %v178 = vld [vmem:[#allocation4 + $0x208] sm:$0xff]
    %v179 = vld [vmem:[#allocation4 + $0x210] sm:$0xff]
    %v180 = vld [vmem:[#allocation4 + $0x218] sm:$0xff]
    %v181 = vld [vmem:[#allocation4 + $0x220] sm:$0xff]
    %v182 = vld [vmem:[#allocation4 + $0x228] sm:$0xff]
    %v183 = vld [vmem:[#allocation4 + $0x230] sm:$0xff]
    %v184 = vld [vmem:[#allocation4 + $0x238] sm:$0xff]
    %v185 = vld [vmem:[#allocation4 + $0x240] sm:$0xff]
    %v186 = vld [vmem:[#allocation4 + $0x248] sm:$0xff]
    %v187 = vld [vmem:[#allocation4 + $0x250] sm:$0xff]
    %v188 = vld [vmem:[#allocation4 + $0x258] sm:$0xff]
    %v189 = vld [vmem:[#allocation4 + $0x260] sm:$0xff]
    %v190 = vld [vmem:[#allocation4 + $0x268] sm:$0xff]
    %v191 = vld [vmem:[#allocation4 + $0x270] sm:$0xff]
    %v192 = vld [vmem:[#allocation4 + $0x278] sm:$0xff]
    %v193 = vld [vmem:[#allocation4 + $0x280] sm:$0xff]
    %v194 = vld [vmem:[#allocation4 + $0x288] sm:$0xff]
    %v195 = vld [vmem:[#allocation4 + $0x290] sm:$0xff]
    %v196 = vld [vmem:[#allocation4 + $0x298] sm:$0xff]
    %v197 = vld [vmem:[#allocation4 + $0x2a0] sm:$0xff]
    %v198 = vld [vmem:[#allocation4 + $0x2a8] sm:$0xff]
    %v199 = vld [vmem:[#allocation4 + $0x2b0] sm:$0xff]
    %v200 = vld [vmem:[#allocation4 + $0x2b8] sm:$0xff]
    %v201 = vld [vmem:[#allocation4 + $0x2c0] sm:$0xff]
    %v202 = vld [vmem:[#allocation4 + $0x2c8] sm:$0xff]
    %v203 = vld [vmem:[#allocation4 + $0x2d0] sm:$0xff]
    %v204 = vld [vmem:[#allocation4 + $0x2d8] sm:$0xff]
    %v205 = vld [vmem:[#allocation4 + $0x2e0] sm:$0xff]
    %v206 = vld [vmem:[#allocation4 + $0x2e8] sm:$0xff]
    %v207 = vld [vmem:[#allocation4 + $0x2f0] sm:$0xff]
    %v208 = vld [vmem:[#allocation4 + $0x2f8] sm:$0xff]
    %v209 = vld [vmem:[#allocation4 + $0x300] sm:$0xff]
    %v210 = vld [vmem:[#allocation4 + $0x308] sm:$0xff]
    %v211 = vld [vmem:[#allocation4 + $0x310] sm:$0xff]
    %v212 = vld [vmem:[#allocation4 + $0x318] sm:$0xff]
    %v213 = vld [vmem:[#allocation4 + $0x320] sm:$0xff]
    %v214 = vld [vmem:[#allocation4 + $0x328] sm:$0xff]
    %v215 = vld [vmem:[#allocation4 + $0x330] sm:$0xff]
    %v216 = vld [vmem:[#allocation4 + $0x338] sm:$0xff]
    %v217 = vld [vmem:[#allocation4 + $0x340] sm:$0xff]
    %v218 = vld [vmem:[#allocation4 + $0x348] sm:$0xff]
    %v219 = vld [vmem:[#allocation4 + $0x350] sm:$0xff]
    %v220 = vld [vmem:[#allocation4 + $0x358] sm:$0xff]
    %v221 = vld [vmem:[#allocation4 + $0x360] sm:$0xff]
    %v222 = vld [vmem:[#allocation4 + $0x368] sm:$0xff]
    %v223 = vld [vmem:[#allocation4 + $0x370] sm:$0xff]
    %v224 = vld [vmem:[#allocation4 + $0x378] sm:$0xff]
    %v225 = vld [vmem:[#allocation4 + $0x380] sm:$0xff]
    %v226 = vld [vmem:[#allocation4 + $0x388] sm:$0xff]
    %v227 = vld [vmem:[#allocation4 + $0x390] sm:$0xff]
    %v228 = vld [vmem:[#allocation4 + $0x398] sm:$0xff]
    %v229 = vld [vmem:[#allocation4 + $0x3a0] sm:$0xff]
    %v230 = vld [vmem:[#allocation4 + $0x3a8] sm:$0xff]
    %v231 = vld [vmem:[#allocation4 + $0x3b0] sm:$0xff]
    %v232 = vld [vmem:[#allocation4 + $0x3b8] sm:$0xff]
    %v233 = vld [vmem:[#allocation4 + $0x3c0] sm:$0xff]
    %v234 = vld [vmem:[#allocation4 + $0x3c8] sm:$0xff]
    %v235 = vld [vmem:[#allocation4 + $0x3d0] sm:$0xff]
    %v236 = vld [vmem:[#allocation4 + $0x3d8] sm:$0xff]
    %v237 = vld [vmem:[#allocation4 + $0x3e0] sm:$0xff]
    %v238 = vld [vmem:[#allocation4 + $0x3e8] sm:$0xff]
    %v239 = vld [vmem:[#allocation4 + $0x3f0] sm:$0xff]
    %v240 = vld [vmem:[#allocation4 + $0x3f8] sm:$0xff]
    %v241 = vld [vmem:[#allocation4 + $0x400] sm:$0xff]
    %v242 = vld [vmem:[#allocation4 + $0x408] sm:$0xff]
    %v243 = vld [vmem:[#allocation4 + $0x410] sm:$0xff]
    %v244 = vld [vmem:[#allocation4 + $0x418] sm:$0xff]
    %v245 = vld [vmem:[#allocation4 + $0x420] sm:$0xff]
    %v246 = vld [vmem:[#allocation4 + $0x428] sm:$0xff]
    %v247 = vld [vmem:[#allocation4 + $0x430] sm:$0xff]
    %v248 = vld [vmem:[#allocation4 + $0x438] sm:$0xff]
    %v249 = vld [vmem:[#allocation4 + $0x440] sm:$0xff]
    %v250 = vld [vmem:[#allocation4 + $0x448] sm:$0xff]
    %v251 = vld [vmem:[#allocation4 + $0x450] sm:$0xff]
    %v252 = vld [vmem:[#allocation4 + $0x458] sm:$0xff]
    %v253 = vld [vmem:[#allocation4 + $0x460] sm:$0xff]
    %v254 = vld [vmem:[#allocation4 + $0x468] sm:$0xff]
    %v255 = vld [vmem:[#allocation4 + $0x470] sm:$0xff]
    %v256 = vld [vmem:[#allocation4 + $0x478] sm:$0xff]
    %v257 = vld [vmem:[#allocation4 + $0x480] sm:$0xff]
    %v258 = vld [vmem:[#allocation4 + $0x488] sm:$0xff]
    %v259 = vld [vmem:[#allocation4 + $0x490] sm:$0xff]
    %v260 = vld [vmem:[#allocation4 + $0x498] sm:$0xff]
    %v261 = vld [vmem:[#allocation4 + $0x4a0] sm:$0xff]
    %v262 = vld [vmem:[#allocation4 + $0x4a8] sm:$0xff]
    %v263 = vld [vmem:[#allocation4 + $0x4b0] sm:$0xff]
    %v264 = vld [vmem:[#allocation4 + $0x4b8] sm:$0xff]
    %v265 = vld [vmem:[#allocation4 + $0x4c0] sm:$0xff]
    %v266 = vld [vmem:[#allocation4 + $0x4c8] sm:$0xff]
    %v267 = vld [vmem:[#allocation4 + $0x4d0] sm:$0xff]
    %v268 = vld [vmem:[#allocation4 + $0x4d8] sm:$0xff]
    %v269 = vld [vmem:[#allocation4 + $0x4e0] sm:$0xff]
    %v270 = vld [vmem:[#allocation4 + $0x4e8] sm:$0xff]
    %v271 = vld [vmem:[#allocation4 + $0x4f0] sm:$0xff]
    %v272 = vld [vmem:[#allocation4 + $0x4f8] sm:$0xff]
    %v273 = vpack.c.bf16 %v118, %v113
    %v274 = vpack.c.bf16 %v119, %v114
    %v275 = vpack.c.bf16 %v120, %v115
    %v276 = vpack.c.bf16 %v121, %v116
    %v277 = vpack.c.bf16 %v122, %v117
    %v278 = vpack.c.bf16 %v128, %v123
    %v279 = vpack.c.bf16 %v129, %v124
    %v280 = vpack.c.bf16 %v130, %v125
    %v281 = vpack.c.bf16 %v131, %v126
    %v282 = vpack.c.bf16 %v132, %v127
    %v283 = vpack.c.bf16 %v138, %v133
    %v284 = vpack.c.bf16 %v139, %v134
    %v285 = vpack.c.bf16 %v140, %v135
    %v286 = vpack.c.bf16 %v141, %v136
    %v287 = vpack.c.bf16 %v142, %v137
    %v288 = vpack.c.bf16 %v148, %v143
    %v289 = vpack.c.bf16 %v149, %v144
    %v290 = vpack.c.bf16 %v150, %v145
    %v291 = vpack.c.bf16 %v151, %v146
    %v292 = vpack.c.bf16 %v152, %v147
    %v293 = vpack.c.bf16 %v158, %v153
    %v294 = vpack.c.bf16 %v159, %v154
    %v295 = vpack.c.bf16 %v160, %v155
    %v296 = vpack.c.bf16 %v161, %v156
    %v297 = vpack.c.bf16 %v162, %v157
    %v298 = vpack.c.bf16 %v168, %v163
    %v299 = vpack.c.bf16 %v169, %v164
    %v300 = vpack.c.bf16 %v170, %v165
    %v301 = vpack.c.bf16 %v171, %v166
    %v302 = vpack.c.bf16 %v172, %v167
    %v303 = vpack.c.bf16 %v178, %v173
    %v304 = vpack.c.bf16 %v179, %v174
    %v305 = vpack.c.bf16 %v180, %v175
    %v306 = vpack.c.bf16 %v181, %v176
    %v307 = vpack.c.bf16 %v182, %v177
    %v308 = vpack.c.bf16 %v188, %v183
    %v309 = vpack.c.bf16 %v189, %v184
    %v310 = vpack.c.bf16 %v190, %v185
    %v311 = vpack.c.bf16 %v191, %v186
    %v312 = vpack.c.bf16 %v192, %v187
    %v313 = vpack.c.bf16 %v198, %v193
    %v314 = vpack.c.bf16 %v199, %v194
    %v315 = vpack.c.bf16 %v200, %v195
    %v316 = vpack.c.bf16 %v201, %v196
    %v317 = vpack.c.bf16 %v202, %v197
    %v318 = vpack.c.bf16 %v208, %v203
    %v319 = vpack.c.bf16 %v209, %v204
    %v320 = vpack.c.bf16 %v210, %v205
    %v321 = vpack.c.bf16 %v211, %v206
    %v322 = vpack.c.bf16 %v212, %v207
    %v323 = vpack.c.bf16 %v218, %v213
    %v324 = vpack.c.bf16 %v219, %v214
    %v325 = vpack.c.bf16 %v220, %v215
    %v326 = vpack.c.bf16 %v221, %v216
    %v327 = vpack.c.bf16 %v222, %v217
    %v328 = vpack.c.bf16 %v228, %v223
    %v329 = vpack.c.bf16 %v229, %v224
    %v330 = vpack.c.bf16 %v230, %v225
    %v331 = vpack.c.bf16 %v231, %v226
    %v332 = vpack.c.bf16 %v232, %v227
    %v333 = vpack.c.bf16 %v238, %v233
    %v334 = vpack.c.bf16 %v239, %v234
    %v335 = vpack.c.bf16 %v240, %v235
    %v336 = vpack.c.bf16 %v241, %v236
    %v337 = vpack.c.bf16 %v242, %v237
    %v338 = vpack.c.bf16 %v248, %v243
    %v339 = vpack.c.bf16 %v249, %v244
    %v340 = vpack.c.bf16 %v250, %v245
    %v341 = vpack.c.bf16 %v251, %v246
    %v342 = vpack.c.bf16 %v252, %v247
    %v343 = vpack.c.bf16 %v258, %v253
    %v344 = vpack.c.bf16 %v259, %v254
    %v345 = vpack.c.bf16 %v260, %v255
    %v346 = vpack.c.bf16 %v261, %v256
    %v347 = vpack.c.bf16 %v262, %v257
    %v348 = vpack.c.bf16 %v268, %v263
    %v349 = vpack.c.bf16 %v269, %v264
    %v350 = vpack.c.bf16 %v270, %v265
    %v351 = vpack.c.bf16 %v271, %v266
    %v352 = vpack.c.bf16 %v272, %v267
    %v353 = vld [vmem:[#allocation7] sm:$0xff]
    %v354 = vld [vmem:[#allocation7 + $0x8] sm:$0xff]
    %v355 = vld [vmem:[#allocation7 + $0x10] sm:$0xf]
    %v356 = vld [vmem:[#allocation7 + $0x14] sm:$0xff]
    %v357 = vld [vmem:[#allocation7 + $0x1c] sm:$0xff]
    %v358 = vld [vmem:[#allocation7 + $0x24] sm:$0xf]
    %v359 = vld [vmem:[#allocation7 + $0x28] sm:$0xff]
    %v360 = vld [vmem:[#allocation7 + $0x30] sm:$0xff]
    %v361 = vld [vmem:[#allocation7 + $0x38] sm:$0xf]
    %v362 = vld [vmem:[#allocation7 + $0x3c] sm:$0xff]
    %v363 = vld [vmem:[#allocation7 + $0x44] sm:$0xff]
    %v364 = vld [vmem:[#allocation7 + $0x4c] sm:$0xf]
    %v365 = vld [vmem:[#allocation7 + $0x50] sm:$0xff]
    %v366 = vld [vmem:[#allocation7 + $0x58] sm:$0xff]
    %v367 = vld [vmem:[#allocation7 + $0x60] sm:$0xf]
    %v368 = vld [vmem:[#allocation7 + $0x64] sm:$0xff]
    %v369 = vld [vmem:[#allocation7 + $0x6c] sm:$0xff]
    %v370 = vld [vmem:[#allocation7 + $0x74] sm:$0xf]
    %v371 = vld [vmem:[#allocation7 + $0x78] sm:$0xff]
    %v372 = vld [vmem:[#allocation7 + $0x80] sm:$0xff]
    %v373 = vld [vmem:[#allocation7 + $0x88] sm:$0xf]
    %v374 = vld [vmem:[#allocation7 + $0x8c] sm:$0xff]
    %v375 = vld [vmem:[#allocation7 + $0x94] sm:$0xff]
    %v376 = vld [vmem:[#allocation7 + $0x9c] sm:$0xf]
    %v377 = vld [vmem:[#allocation7 + $0xa0] sm:$0xff]
    %v378 = vld [vmem:[#allocation7 + $0xa8] sm:$0xff]
    %v379 = vld [vmem:[#allocation7 + $0xb0] sm:$0xf]
    %v380 = vld [vmem:[#allocation7 + $0xb4] sm:$0xff]
    %v381 = vld [vmem:[#allocation7 + $0xbc] sm:$0xff]
    %v382 = vld [vmem:[#allocation7 + $0xc4] sm:$0xf]
    %v383 = vld [vmem:[#allocation7 + $0xc8] sm:$0xff]
    %v384 = vld [vmem:[#allocation7 + $0xd0] sm:$0xff]
    %v385 = vld [vmem:[#allocation7 + $0xd8] sm:$0xf]
    %v386 = vld [vmem:[#allocation7 + $0xdc] sm:$0xff]
    %v387 = vld [vmem:[#allocation7 + $0xe4] sm:$0xff]
    %v388 = vld [vmem:[#allocation7 + $0xec] sm:$0xf]
    %v389 = vld [vmem:[#allocation7 + $0xf0] sm:$0xff]
    %v390 = vld [vmem:[#allocation7 + $0xf8] sm:$0xff]
    %v391 = vld [vmem:[#allocation7 + $0x100] sm:$0xf]
    %v392 = vld [vmem:[#allocation7 + $0x104] sm:$0xff]
    %v393 = vld [vmem:[#allocation7 + $0x10c] sm:$0xff]
    %v394 = vld [vmem:[#allocation7 + $0x114] sm:$0xf]
    %v395 = vld [vmem:[#allocation7 + $0x118] sm:$0xff]
    %v396 = vld [vmem:[#allocation7 + $0x120] sm:$0xff]
    %v397 = vld [vmem:[#allocation7 + $0x128] sm:$0xf]
    %v398 = vld [vmem:[#allocation7 + $0x12c] sm:$0xff]
    %v399 = vld [vmem:[#allocation7 + $0x134] sm:$0xff]
    %v400 = vld [vmem:[#allocation7 + $0x13c] sm:$0xf]
    %v401 = vld [vmem:[#allocation7 + $0x140] sm:$0xff]
    %v402 = vld [vmem:[#allocation7 + $0x148] sm:$0xff]
    %v403 = vld [vmem:[#allocation7 + $0x150] sm:$0xf]
    %v404 = vld [vmem:[#allocation7 + $0x154] sm:$0xff]
    %v405 = vld [vmem:[#allocation7 + $0x15c] sm:$0xff]
    %v406 = vld [vmem:[#allocation7 + $0x164] sm:$0xf]
    %v407 = vld [vmem:[#allocation7 + $0x168] sm:$0xff]
    %v408 = vld [vmem:[#allocation7 + $0x170] sm:$0xff]
    %v409 = vld [vmem:[#allocation7 + $0x178] sm:$0xf]
    %v410 = vld [vmem:[#allocation7 + $0x17c] sm:$0xff]
    %v411 = vld [vmem:[#allocation7 + $0x184] sm:$0xff]
    %v412 = vld [vmem:[#allocation7 + $0x18c] sm:$0xf]
    %v413 = vld [vmem:[#allocation7 + $0x190] sm:$0xff]
    %v414 = vld [vmem:[#allocation7 + $0x198] sm:$0xff]
    %v415 = vld [vmem:[#allocation7 + $0x1a0] sm:$0xf]
    %v416 = vld [vmem:[#allocation7 + $0x1a4] sm:$0xff]
    %v417 = vld [vmem:[#allocation7 + $0x1ac] sm:$0xff]
    %v418 = vld [vmem:[#allocation7 + $0x1b4] sm:$0xf]
    %v419 = vld [vmem:[#allocation7 + $0x1b8] sm:$0xff]
    %v420 = vld [vmem:[#allocation7 + $0x1c0] sm:$0xff]
    %v421 = vld [vmem:[#allocation7 + $0x1c8] sm:$0xf]
    %v422 = vld [vmem:[#allocation7 + $0x1cc] sm:$0xff]
    %v423 = vld [vmem:[#allocation7 + $0x1d4] sm:$0xff]
    %v424 = vld [vmem:[#allocation7 + $0x1dc] sm:$0xf]
    %v425 = vld [vmem:[#allocation7 + $0x1e0] sm:$0xff]
    %v426 = vld [vmem:[#allocation7 + $0x1e8] sm:$0xff]
    %v427 = vld [vmem:[#allocation7 + $0x1f0] sm:$0xf]
    %v428 = vld [vmem:[#allocation7 + $0x1f4] sm:$0xff]
    %v429 = vld [vmem:[#allocation7 + $0x1fc] sm:$0xff]
    %v430 = vld [vmem:[#allocation7 + $0x204] sm:$0xf]
    %v431 = vld [vmem:[#allocation7 + $0x208] sm:$0xff]
    %v432 = vld [vmem:[#allocation7 + $0x210] sm:$0xff]
    %v433 = vld [vmem:[#allocation7 + $0x218] sm:$0xf]
    %v434 = vld [vmem:[#allocation7 + $0x21c] sm:$0xff]
    %v435 = vld [vmem:[#allocation7 + $0x224] sm:$0xff]
    %v436 = vld [vmem:[#allocation7 + $0x22c] sm:$0xf]
    %v437 = vld [vmem:[#allocation7 + $0x230] sm:$0xff]
    %v438 = vld [vmem:[#allocation7 + $0x238] sm:$0xff]
    %v439 = vld [vmem:[#allocation7 + $0x240] sm:$0xf]
    %v440 = vld [vmem:[#allocation7 + $0x244] sm:$0xff]
    %v441 = vld [vmem:[#allocation7 + $0x24c] sm:$0xff]
    %v442 = vld [vmem:[#allocation7 + $0x254] sm:$0xf]
    %v443 = vld [vmem:[#allocation7 + $0x258] sm:$0xff]
    %v444 = vld [vmem:[#allocation7 + $0x260] sm:$0xff]
    %v445 = vld [vmem:[#allocation7 + $0x268] sm:$0xf]
    %v446 = vld [vmem:[#allocation7 + $0x26c] sm:$0xff]
    %v447 = vld [vmem:[#allocation7 + $0x274] sm:$0xff]
    %v448 = vld [vmem:[#allocation7 + $0x27c] sm:$0xf]
    %v449 = vld [vmem:[#allocation7 + $0x280] sm:$0xff]
    %v450 = vld [vmem:[#allocation7 + $0x288] sm:$0xff]
    %v451 = vld [vmem:[#allocation7 + $0x290] sm:$0xf]
    %v452 = vld [vmem:[#allocation7 + $0x294] sm:$0xff]
    %v453 = vld [vmem:[#allocation7 + $0x29c] sm:$0xff]
    %v454 = vld [vmem:[#allocation7 + $0x2a4] sm:$0xf]
    %v455 = vld [vmem:[#allocation7 + $0x2a8] sm:$0xff]
    %v456 = vld [vmem:[#allocation7 + $0x2b0] sm:$0xff]
    %v457 = vld [vmem:[#allocation7 + $0x2b8] sm:$0xf]
    %v458 = vld [vmem:[#allocation7 + $0x2bc] sm:$0xff]
    %v459 = vld [vmem:[#allocation7 + $0x2c4] sm:$0xff]
    %v460 = vld [vmem:[#allocation7 + $0x2cc] sm:$0xf]
    %v461 = vld [vmem:[#allocation7 + $0x2d0] sm:$0xff]
    %v462 = vld [vmem:[#allocation7 + $0x2d8] sm:$0xff]
    %v463 = vld [vmem:[#allocation7 + $0x2e0] sm:$0xf]
    %v464 = vld [vmem:[#allocation7 + $0x2e4] sm:$0xff]
    %v465 = vld [vmem:[#allocation7 + $0x2ec] sm:$0xff]
    %v466 = vld [vmem:[#allocation7 + $0x2f4] sm:$0xf]
    %v467 = vld [vmem:[#allocation7 + $0x2f8] sm:$0xff]
    %v468 = vld [vmem:[#allocation7 + $0x300] sm:$0xff]
    %v469 = vld [vmem:[#allocation7 + $0x308] sm:$0xf]
    %v470 = vld [vmem:[#allocation7 + $0x30c] sm:$0xff]
    %v471 = vld [vmem:[#allocation7 + $0x314] sm:$0xff]
    %v472 = vld [vmem:[#allocation7 + $0x31c] sm:$0xf]
    %v473 = vld [vmem:[#allocation7 + $0x320] sm:$0xff]
    %v474 = vld [vmem:[#allocation7 + $0x328] sm:$0xff]
    %v475 = vld [vmem:[#allocation7 + $0x330] sm:$0xf]
    %v476 = vld [vmem:[#allocation7 + $0x334] sm:$0xff]
    %v477 = vld [vmem:[#allocation7 + $0x33c] sm:$0xff]
    %v478 = vld [vmem:[#allocation7 + $0x344] sm:$0xf]
    %v479 = vld [vmem:[#allocation7 + $0x348] sm:$0xff]
    %v480 = vld [vmem:[#allocation7 + $0x350] sm:$0xff]
    %v481 = vld [vmem:[#allocation7 + $0x358] sm:$0xf]
    %v482 = vld [vmem:[#allocation7 + $0x35c] sm:$0xff]
    %v483 = vld [vmem:[#allocation7 + $0x364] sm:$0xff]
    %v484 = vld [vmem:[#allocation7 + $0x36c] sm:$0xf]
    %v485 = vld [vmem:[#allocation7 + $0x370] sm:$0xff]
    %v486 = vld [vmem:[#allocation7 + $0x378] sm:$0xff]
    %v487 = vld [vmem:[#allocation7 + $0x380] sm:$0xf]
    %v488 = vld [vmem:[#allocation7 + $0x384] sm:$0xff]
    %v489 = vld [vmem:[#allocation7 + $0x38c] sm:$0xff]
    %v490 = vld [vmem:[#allocation7 + $0x394] sm:$0xf]
    %v491 = vld [vmem:[#allocation7 + $0x398] sm:$0xff]
    %v492 = vld [vmem:[#allocation7 + $0x3a0] sm:$0xff]
    %v493 = vld [vmem:[#allocation7 + $0x3a8] sm:$0xf]
    %v494 = vld [vmem:[#allocation7 + $0x3ac] sm:$0xff]
    %v495 = vld [vmem:[#allocation7 + $0x3b4] sm:$0xff]
    %v496 = vld [vmem:[#allocation7 + $0x3bc] sm:$0xf]
    %v497 = vld [vmem:[#allocation7 + $0x3c0] sm:$0xff]
    %v498 = vld [vmem:[#allocation7 + $0x3c8] sm:$0xff]
    %v499 = vld [vmem:[#allocation7 + $0x3d0] sm:$0xf]
    %v500 = vld [vmem:[#allocation7 + $0x3d4] sm:$0xff]
    %v501 = vld [vmem:[#allocation7 + $0x3dc] sm:$0xff]
    %v502 = vld [vmem:[#allocation7 + $0x3e4] sm:$0xf]
    %v503 = vld [vmem:[#allocation7 + $0x3e8] sm:$0xff]
    %v504 = vld [vmem:[#allocation7 + $0x3f0] sm:$0xff]
    %v505 = vld [vmem:[#allocation7 + $0x3f8] sm:$0xf]
    %v506 = vld [vmem:[#allocation7 + $0x3fc] sm:$0xff]
    %v507 = vld [vmem:[#allocation7 + $0x404] sm:$0xff]
    %v508 = vld [vmem:[#allocation7 + $0x40c] sm:$0xf]
    %v509 = vld [vmem:[#allocation7 + $0x410] sm:$0xff]
    %v510 = vld [vmem:[#allocation7 + $0x418] sm:$0xff]
    %v511 = vld [vmem:[#allocation7 + $0x420] sm:$0xf]
    %v512 = vld [vmem:[#allocation7 + $0x424] sm:$0xff]
    %v513 = vld [vmem:[#allocation7 + $0x42c] sm:$0xff]
    %v514 = vld [vmem:[#allocation7 + $0x434] sm:$0xf]
    %v515 = vld [vmem:[#allocation7 + $0x438] sm:$0xff]
    %v516 = vld [vmem:[#allocation7 + $0x440] sm:$0xff]
    %v517 = vld [vmem:[#allocation7 + $0x448] sm:$0xf]
    %v518 = vld [vmem:[#allocation7 + $0x44c] sm:$0xff]
    %v519 = vld [vmem:[#allocation7 + $0x454] sm:$0xff]
    %v520 = vld [vmem:[#allocation7 + $0x45c] sm:$0xf]
    %v521 = vld [vmem:[#allocation7 + $0x460] sm:$0xff]
    %v522 = vld [vmem:[#allocation7 + $0x468] sm:$0xff]
    %v523 = vld [vmem:[#allocation7 + $0x470] sm:$0xf]
    %v524 = vld [vmem:[#allocation7 + $0x474] sm:$0xff]
    %v525 = vld [vmem:[#allocation7 + $0x47c] sm:$0xff]
    %v526 = vld [vmem:[#allocation7 + $0x484] sm:$0xf]
    %v527 = vld [vmem:[#allocation7 + $0x488] sm:$0xff]
    %v528 = vld [vmem:[#allocation7 + $0x490] sm:$0xff]
    %v529 = vld [vmem:[#allocation7 + $0x498] sm:$0xf]
    %v530 = vld [vmem:[#allocation7 + $0x49c] sm:$0xff]
    %v531 = vld [vmem:[#allocation7 + $0x4a4] sm:$0xff]
    %v532 = vld [vmem:[#allocation7 + $0x4ac] sm:$0xf]
    %v533 = vld [vmem:[#allocation7 + $0x4b0] sm:$0xff]
    %v534 = vld [vmem:[#allocation7 + $0x4b8] sm:$0xff]
    %v535 = vld [vmem:[#allocation7 + $0x4c0] sm:$0xf]
    %v536 = vld [vmem:[#allocation7 + $0x4c4] sm:$0xff]
    %v537 = vld [vmem:[#allocation7 + $0x4cc] sm:$0xff]
    %v538 = vld [vmem:[#allocation7 + $0x4d4] sm:$0xf]
    %v539 = vld [vmem:[#allocation7 + $0x4d8] sm:$0xff]
    %v540 = vld [vmem:[#allocation7 + $0x4e0] sm:$0xff]
    %v541 = vld [vmem:[#allocation7 + $0x4e8] sm:$0xf]
    %v542 = vld [vmem:[#allocation7 + $0x4ec] sm:$0xff]
    %v543 = vld [vmem:[#allocation7 + $0x4f4] sm:$0xff]
    %v544 = vld [vmem:[#allocation7 + $0x4fc] sm:$0xf]
    %v545 = vld [vmem:[#allocation7 + $0x500] sm:$0xff]
    %v546 = vld [vmem:[#allocation7 + $0x508] sm:$0xff]
    %v547 = vld [vmem:[#allocation7 + $0x510] sm:$0xf]
    %v548 = vld [vmem:[#allocation7 + $0x514] sm:$0xff]
    %v549 = vld [vmem:[#allocation7 + $0x51c] sm:$0xff]
    %v550 = vld [vmem:[#allocation7 + $0x524] sm:$0xf]
    %v551 = vld [vmem:[#allocation7 + $0x528] sm:$0xff]
    %v552 = vld [vmem:[#allocation7 + $0x530] sm:$0xff]
    %v553 = vld [vmem:[#allocation7 + $0x538] sm:$0xf]
    %v554 = vld [vmem:[#allocation7 + $0x53c] sm:$0xff]
    %v555 = vld [vmem:[#allocation7 + $0x544] sm:$0xff]
    %v556 = vld [vmem:[#allocation7 + $0x54c] sm:$0xf]
    %v557 = vld [vmem:[#allocation7 + $0x550] sm:$0xff]
    %v558 = vld [vmem:[#allocation7 + $0x558] sm:$0xff]
    %v559 = vld [vmem:[#allocation7 + $0x560] sm:$0xf]
    %v560 = vld [vmem:[#allocation7 + $0x564] sm:$0xff]
    %v561 = vld [vmem:[#allocation7 + $0x56c] sm:$0xff]
    %v562 = vld [vmem:[#allocation7 + $0x574] sm:$0xf]
    %v563 = vld [vmem:[#allocation7 + $0x578] sm:$0xff]
    %v564 = vld [vmem:[#allocation7 + $0x580] sm:$0xff]
    %v565 = vld [vmem:[#allocation7 + $0x588] sm:$0xf]
    %v566 = vld [vmem:[#allocation7 + $0x58c] sm:$0xff]
    %v567 = vld [vmem:[#allocation7 + $0x594] sm:$0xff]
    %v568 = vld [vmem:[#allocation7 + $0x59c] sm:$0xf]
    %v569 = vld [vmem:[#allocation7 + $0x5a0] sm:$0xff]
    %v570 = vld [vmem:[#allocation7 + $0x5a8] sm:$0xff]
    %v571 = vld [vmem:[#allocation7 + $0x5b0] sm:$0xf]
    %v572 = vld [vmem:[#allocation7 + $0x5b4] sm:$0xff]
    %v573 = vld [vmem:[#allocation7 + $0x5bc] sm:$0xff]
    %v574 = vld [vmem:[#allocation7 + $0x5c4] sm:$0xf]
    %v575 = vld [vmem:[#allocation7 + $0x5c8] sm:$0xff]
    %v576 = vld [vmem:[#allocation7 + $0x5d0] sm:$0xff]
    %v577 = vld [vmem:[#allocation7 + $0x5d8] sm:$0xf]
    %v578 = vld [vmem:[#allocation7 + $0x5dc] sm:$0xff]
    %v579 = vld [vmem:[#allocation7 + $0x5e4] sm:$0xff]
    %v580 = vld [vmem:[#allocation7 + $0x5ec] sm:$0xf]
    %v581 = vld [vmem:[#allocation7 + $0x5f0] sm:$0xff]
    %v582 = vld [vmem:[#allocation7 + $0x5f8] sm:$0xff]
    %v583 = vld [vmem:[#allocation7 + $0x600] sm:$0xf]
    %v584 = vld [vmem:[#allocation7 + $0x604] sm:$0xff]
    %v585 = vld [vmem:[#allocation7 + $0x60c] sm:$0xff]
    %v586 = vld [vmem:[#allocation7 + $0x614] sm:$0xf]
    %v587 = vld [vmem:[#allocation7 + $0x618] sm:$0xff]
    %v588 = vld [vmem:[#allocation7 + $0x620] sm:$0xff]
    %v589 = vld [vmem:[#allocation7 + $0x628] sm:$0xf]
    %v590 = vld [vmem:[#allocation7 + $0x62c] sm:$0xff]
    %v591 = vld [vmem:[#allocation7 + $0x634] sm:$0xff]
    %v592 = vld [vmem:[#allocation7 + $0x63c] sm:$0xf]
    %v593 = vld [vmem:[%s7] sm:$0x1f]
    %v595 = vlaneseq
    %v596 = vshrl.u32 %v595, 7
    %v597 = vsub.s32 0, %v596
    %v598 = vrot.slane %v593, %v597
    %v599 = vlaneseq
    %v600 = vshrl.u32 %v599, 7
    %v601 = vsub.s32 1, %v600
    %v602 = vrot.slane %v593, %v601
    %v603 = vlaneseq
    %v604 = vshrl.u32 %v603, 7
    %v605 = vsub.s32 2, %v604
    %v606 = vrot.slane %v593, %v605
    %v607 = vlaneseq
    %v608 = vshrl.u32 %v607, 7
    %v609 = vsub.s32 3, %v608
    %v610 = vrot.slane %v593, %v609
    %v611 = vlaneseq
    %v612 = vshrl.u32 %v611, 7
    %v613 = vsub.s32 4, %v612
    %v614 = vrot.slane %v593, %v613
    %v860 = vunpack.c.l.b16 %v353
    %v861 = vunpack.c.h.b16 %v353
    %v862 = vunpack.c.l.b16 %v354
    %v863 = vunpack.c.h.b16 %v354
    %v864 = vunpack.c.l.b16 %v355
    %v865 = vunpack.c.l.b16 %v356
    %v866 = vunpack.c.h.b16 %v356
    %v867 = vunpack.c.l.b16 %v357
    %v868 = vunpack.c.h.b16 %v357
    %v869 = vunpack.c.l.b16 %v358
    %v870 = vunpack.c.l.b16 %v359
    %v871 = vunpack.c.h.b16 %v359
    %v872 = vunpack.c.l.b16 %v360
    %v873 = vunpack.c.h.b16 %v360
    %v874 = vunpack.c.l.b16 %v361
    %v875 = vunpack.c.l.b16 %v362
    %v876 = vunpack.c.h.b16 %v362
    %v877 = vunpack.c.l.b16 %v363
    %v878 = vunpack.c.h.b16 %v363
    %v879 = vunpack.c.l.b16 %v364
    %v880 = vunpack.c.l.b16 %v365
    %v881 = vunpack.c.h.b16 %v365
    %v882 = vunpack.c.l.b16 %v366
    %v883 = vunpack.c.h.b16 %v366
    %v884 = vunpack.c.l.b16 %v367
    %v885 = vunpack.c.l.b16 %v368
    %v886 = vunpack.c.h.b16 %v368
    %v887 = vunpack.c.l.b16 %v369
    %v888 = vunpack.c.h.b16 %v369
    %v889 = vunpack.c.l.b16 %v370
    %v890 = vunpack.c.l.b16 %v371
    %v891 = vunpack.c.h.b16 %v371
    %v892 = vunpack.c.l.b16 %v372
    %v893 = vunpack.c.h.b16 %v372
    %v894 = vunpack.c.l.b16 %v373
    %v895 = vunpack.c.l.b16 %v374
    %v896 = vunpack.c.h.b16 %v374
    %v897 = vunpack.c.l.b16 %v375
    %v898 = vunpack.c.h.b16 %v375
    %v899 = vunpack.c.l.b16 %v376
    %v900 = vunpack.c.l.b16 %v377
    %v901 = vunpack.c.h.b16 %v377
    %v902 = vunpack.c.l.b16 %v378
    %v903 = vunpack.c.h.b16 %v378
    %v904 = vunpack.c.l.b16 %v379
    %v905 = vunpack.c.l.b16 %v380
    %v906 = vunpack.c.h.b16 %v380
    %v907 = vunpack.c.l.b16 %v381
    %v908 = vunpack.c.h.b16 %v381
    %v909 = vunpack.c.l.b16 %v382
    %v910 = vunpack.c.l.b16 %v383
    %v911 = vunpack.c.h.b16 %v383
    %v912 = vunpack.c.l.b16 %v384
    %v913 = vunpack.c.h.b16 %v384
    %v914 = vunpack.c.l.b16 %v385
    %v915 = vunpack.c.l.b16 %v386
    %v916 = vunpack.c.h.b16 %v386
    %v917 = vunpack.c.l.b16 %v387
    %v918 = vunpack.c.h.b16 %v387
    %v919 = vunpack.c.l.b16 %v388
    %v920 = vunpack.c.l.b16 %v389
    %v921 = vunpack.c.h.b16 %v389
    %v922 = vunpack.c.l.b16 %v390
    %v923 = vunpack.c.h.b16 %v390
    %v924 = vunpack.c.l.b16 %v391
    %v925 = vunpack.c.l.b16 %v392
    %v926 = vunpack.c.h.b16 %v392
    %v927 = vunpack.c.l.b16 %v393
    %v928 = vunpack.c.h.b16 %v393
    %v929 = vunpack.c.l.b16 %v394
    %v930 = vunpack.c.l.b16 %v395
    %v931 = vunpack.c.h.b16 %v395
    %v932 = vunpack.c.l.b16 %v396
    %v933 = vunpack.c.h.b16 %v396
    %v934 = vunpack.c.l.b16 %v397
    %v935 = vunpack.c.l.b16 %v398
    %v936 = vunpack.c.h.b16 %v398
    %v937 = vunpack.c.l.b16 %v399
    %v938 = vunpack.c.h.b16 %v399
    %v939 = vunpack.c.l.b16 %v400
    %v940 = vunpack.c.l.b16 %v401
    %v941 = vunpack.c.h.b16 %v401
    %v942 = vunpack.c.l.b16 %v402
    %v943 = vunpack.c.h.b16 %v402
    %v944 = vunpack.c.l.b16 %v403
    %v945 = vunpack.c.l.b16 %v404
    %v946 = vunpack.c.h.b16 %v404
    %v947 = vunpack.c.l.b16 %v405
    %v948 = vunpack.c.h.b16 %v405
    %v949 = vunpack.c.l.b16 %v406
    %v950 = vunpack.c.l.b16 %v407
    %v951 = vunpack.c.h.b16 %v407
    %v952 = vunpack.c.l.b16 %v408
    %v953 = vunpack.c.h.b16 %v408
    %v954 = vunpack.c.l.b16 %v409
    %v955 = vunpack.c.l.b16 %v410
    %v956 = vunpack.c.h.b16 %v410
    %v957 = vunpack.c.l.b16 %v411
    %v958 = vunpack.c.h.b16 %v411
    %v959 = vunpack.c.l.b16 %v412
    %v960 = vunpack.c.l.b16 %v413
    %v961 = vunpack.c.h.b16 %v413
    %v962 = vunpack.c.l.b16 %v414
    %v963 = vunpack.c.h.b16 %v414
    %v964 = vunpack.c.l.b16 %v415
    %v965 = vunpack.c.l.b16 %v416
    %v966 = vunpack.c.h.b16 %v416
    %v967 = vunpack.c.l.b16 %v417
    %v968 = vunpack.c.h.b16 %v417
    %v969 = vunpack.c.l.b16 %v418
    %v970 = vunpack.c.l.b16 %v419
    %v971 = vunpack.c.h.b16 %v419
    %v972 = vunpack.c.l.b16 %v420
    %v973 = vunpack.c.h.b16 %v420
    %v974 = vunpack.c.l.b16 %v421
    %v975 = vunpack.c.l.b16 %v422
    %v976 = vunpack.c.h.b16 %v422
    %v977 = vunpack.c.l.b16 %v423
    %v978 = vunpack.c.h.b16 %v423
    %v979 = vunpack.c.l.b16 %v424
    %v980 = vunpack.c.l.b16 %v425
    %v981 = vunpack.c.h.b16 %v425
    %v982 = vunpack.c.l.b16 %v426
    %v983 = vunpack.c.h.b16 %v426
    %v984 = vunpack.c.l.b16 %v427
    %v985 = vunpack.c.l.b16 %v428
    %v986 = vunpack.c.h.b16 %v428
    %v987 = vunpack.c.l.b16 %v429
    %v988 = vunpack.c.h.b16 %v429
    %v989 = vunpack.c.l.b16 %v430
    %v990 = vunpack.c.l.b16 %v431
    %v991 = vunpack.c.h.b16 %v431
    %v992 = vunpack.c.l.b16 %v432
    %v993 = vunpack.c.h.b16 %v432
    %v994 = vunpack.c.l.b16 %v433
    %v995 = vunpack.c.l.b16 %v434
    %v996 = vunpack.c.h.b16 %v434
    %v997 = vunpack.c.l.b16 %v435
    %v998 = vunpack.c.h.b16 %v435
    %v999 = vunpack.c.l.b16 %v436
    %v1000 = vunpack.c.l.b16 %v437
    %v1001 = vunpack.c.h.b16 %v437
    %v1002 = vunpack.c.l.b16 %v438
    %v1003 = vunpack.c.h.b16 %v438
    %v1004 = vunpack.c.l.b16 %v439
    %v1005 = vunpack.c.l.b16 %v440
    %v1006 = vunpack.c.h.b16 %v440
    %v1007 = vunpack.c.l.b16 %v441
    %v1008 = vunpack.c.h.b16 %v441
    %v1009 = vunpack.c.l.b16 %v442
    %v1010 = vunpack.c.l.b16 %v443
    %v1011 = vunpack.c.h.b16 %v443
    %v1012 = vunpack.c.l.b16 %v444
    %v1013 = vunpack.c.h.b16 %v444
    %v1014 = vunpack.c.l.b16 %v445
    %v1015 = vunpack.c.l.b16 %v446
    %v1016 = vunpack.c.h.b16 %v446
    %v1017 = vunpack.c.l.b16 %v447
    %v1018 = vunpack.c.h.b16 %v447
    %v1019 = vunpack.c.l.b16 %v448
    %v1020 = vunpack.c.l.b16 %v449
    %v1021 = vunpack.c.h.b16 %v449
    %v1022 = vunpack.c.l.b16 %v450
    %v1023 = vunpack.c.h.b16 %v450
    %v1024 = vunpack.c.l.b16 %v451
    %v1025 = vunpack.c.l.b16 %v452
    %v1026 = vunpack.c.h.b16 %v452
    %v1027 = vunpack.c.l.b16 %v453
    %v1028 = vunpack.c.h.b16 %v453
    %v1029 = vunpack.c.l.b16 %v454
    %v1030 = vunpack.c.l.b16 %v455
    %v1031 = vunpack.c.h.b16 %v455
    %v1032 = vunpack.c.l.b16 %v456
    %v1033 = vunpack.c.h.b16 %v456
    %v1034 = vunpack.c.l.b16 %v457
    %v1035 = vunpack.c.l.b16 %v458
    %v1036 = vunpack.c.h.b16 %v458
    %v1037 = vunpack.c.l.b16 %v459
    %v1038 = vunpack.c.h.b16 %v459
    %v1039 = vunpack.c.l.b16 %v460
    %v1040 = vunpack.c.l.b16 %v461
    %v1041 = vunpack.c.h.b16 %v461
    %v1042 = vunpack.c.l.b16 %v462
    %v1043 = vunpack.c.h.b16 %v462
    %v1044 = vunpack.c.l.b16 %v463
    %v1045 = vunpack.c.l.b16 %v464
    %v1046 = vunpack.c.h.b16 %v464
    %v1047 = vunpack.c.l.b16 %v465
    %v1048 = vunpack.c.h.b16 %v465
    %v1049 = vunpack.c.l.b16 %v466
    %v1050 = vunpack.c.l.b16 %v467
    %v1051 = vunpack.c.h.b16 %v467
    %v1052 = vunpack.c.l.b16 %v468
    %v1053 = vunpack.c.h.b16 %v468
    %v1054 = vunpack.c.l.b16 %v469
    %v1055 = vunpack.c.l.b16 %v470
    %v1056 = vunpack.c.h.b16 %v470
    %v1057 = vunpack.c.l.b16 %v471
    %v1058 = vunpack.c.h.b16 %v471
    %v1059 = vunpack.c.l.b16 %v472
    %v1060 = vunpack.c.l.b16 %v473
    %v1061 = vunpack.c.h.b16 %v473
    %v1062 = vunpack.c.l.b16 %v474
    %v1063 = vunpack.c.h.b16 %v474
    %v1064 = vunpack.c.l.b16 %v475
    %v1065 = vunpack.c.l.b16 %v476
    %v1066 = vunpack.c.h.b16 %v476
    %v1067 = vunpack.c.l.b16 %v477
    %v1068 = vunpack.c.h.b16 %v477
    %v1069 = vunpack.c.l.b16 %v478
    %v1070 = vunpack.c.l.b16 %v479
    %v1071 = vunpack.c.h.b16 %v479
    %v1072 = vunpack.c.l.b16 %v480
    %v1073 = vunpack.c.h.b16 %v480
    %v1074 = vunpack.c.l.b16 %v481
    %v1075 = vunpack.c.l.b16 %v482
    %v1076 = vunpack.c.h.b16 %v482
    %v1077 = vunpack.c.l.b16 %v483
    %v1078 = vunpack.c.h.b16 %v483
    %v1079 = vunpack.c.l.b16 %v484
    %v1080 = vunpack.c.l.b16 %v485
    %v1081 = vunpack.c.h.b16 %v485
    %v1082 = vunpack.c.l.b16 %v486
    %v1083 = vunpack.c.h.b16 %v486
    %v1084 = vunpack.c.l.b16 %v487
    %v1085 = vunpack.c.l.b16 %v488
    %v1086 = vunpack.c.h.b16 %v488
    %v1087 = vunpack.c.l.b16 %v489
    %v1088 = vunpack.c.h.b16 %v489
    %v1089 = vunpack.c.l.b16 %v490
    %v1090 = vunpack.c.l.b16 %v491
    %v1091 = vunpack.c.h.b16 %v491
    %v1092 = vunpack.c.l.b16 %v492
    %v1093 = vunpack.c.h.b16 %v492
    %v1094 = vunpack.c.l.b16 %v493
    %v1095 = vunpack.c.l.b16 %v494
    %v1096 = vunpack.c.h.b16 %v494
    %v1097 = vunpack.c.l.b16 %v495
    %v1098 = vunpack.c.h.b16 %v495
    %v1099 = vunpack.c.l.b16 %v496
    %v1100 = vunpack.c.l.b16 %v497
    %v1101 = vunpack.c.h.b16 %v497
    %v1102 = vunpack.c.l.b16 %v498
    %v1103 = vunpack.c.h.b16 %v498
    %v1104 = vunpack.c.l.b16 %v499
    %v1105 = vunpack.c.l.b16 %v500
    %v1106 = vunpack.c.h.b16 %v500
    %v1107 = vunpack.c.l.b16 %v501
    %v1108 = vunpack.c.h.b16 %v501
    %v1109 = vunpack.c.l.b16 %v502
    %v1110 = vunpack.c.l.b16 %v503
    %v1111 = vunpack.c.h.b16 %v503
    %v1112 = vunpack.c.l.b16 %v504
    %v1113 = vunpack.c.h.b16 %v504
    %v1114 = vunpack.c.l.b16 %v505
    %v1115 = vunpack.c.l.b16 %v506
    %v1116 = vunpack.c.h.b16 %v506
    %v1117 = vunpack.c.l.b16 %v507
    %v1118 = vunpack.c.h.b16 %v507
    %v1119 = vunpack.c.l.b16 %v508
    %v1120 = vunpack.c.l.b16 %v509
    %v1121 = vunpack.c.h.b16 %v509
    %v1122 = vunpack.c.l.b16 %v510
    %v1123 = vunpack.c.h.b16 %v510
    %v1124 = vunpack.c.l.b16 %v511
    %v1125 = vunpack.c.l.b16 %v512
    %v1126 = vunpack.c.h.b16 %v512
    %v1127 = vunpack.c.l.b16 %v513
    %v1128 = vunpack.c.h.b16 %v513
    %v1129 = vunpack.c.l.b16 %v514
    %v1130 = vunpack.c.l.b16 %v515
    %v1131 = vunpack.c.h.b16 %v515
    %v1132 = vunpack.c.l.b16 %v516
    %v1133 = vunpack.c.h.b16 %v516
    %v1134 = vunpack.c.l.b16 %v517
    %v1135 = vunpack.c.l.b16 %v518
    %v1136 = vunpack.c.h.b16 %v518
    %v1137 = vunpack.c.l.b16 %v519
    %v1138 = vunpack.c.h.b16 %v519
    %v1139 = vunpack.c.l.b16 %v520
    %v1140 = vunpack.c.l.b16 %v521
    %v1141 = vunpack.c.h.b16 %v521
    %v1142 = vunpack.c.l.b16 %v522
    %v1143 = vunpack.c.h.b16 %v522
    %v1144 = vunpack.c.l.b16 %v523
    %v1145 = vunpack.c.l.b16 %v524
    %v1146 = vunpack.c.h.b16 %v524
    %v1147 = vunpack.c.l.b16 %v525
    %v1148 = vunpack.c.h.b16 %v525
    %v1149 = vunpack.c.l.b16 %v526
    %v1150 = vunpack.c.l.b16 %v527
    %v1151 = vunpack.c.h.b16 %v527
    %v1152 = vunpack.c.l.b16 %v528
    %v1153 = vunpack.c.h.b16 %v528
    %v1154 = vunpack.c.l.b16 %v529
    %v1155 = vunpack.c.l.b16 %v530
    %v1156 = vunpack.c.h.b16 %v530
    %v1157 = vunpack.c.l.b16 %v531
    %v1158 = vunpack.c.h.b16 %v531
    %v1159 = vunpack.c.l.b16 %v532
    %v1160 = vunpack.c.l.b16 %v533
    %v1161 = vunpack.c.h.b16 %v533
    %v1162 = vunpack.c.l.b16 %v534
    %v1163 = vunpack.c.h.b16 %v534
    %v1164 = vunpack.c.l.b16 %v535
    %v1165 = vunpack.c.l.b16 %v536
    %v1166 = vunpack.c.h.b16 %v536
    %v1167 = vunpack.c.l.b16 %v537
    %v1168 = vunpack.c.h.b16 %v537
    %v1169 = vunpack.c.l.b16 %v538
    %v1170 = vunpack.c.l.b16 %v539
    %v1171 = vunpack.c.h.b16 %v539
    %v1172 = vunpack.c.l.b16 %v540
    %v1173 = vunpack.c.h.b16 %v540
    %v1174 = vunpack.c.l.b16 %v541
    %v1175 = vunpack.c.l.b16 %v542
    %v1176 = vunpack.c.h.b16 %v542
    %v1177 = vunpack.c.l.b16 %v543
    %v1178 = vunpack.c.h.b16 %v543
    %v1179 = vunpack.c.l.b16 %v544
    %v1180 = vunpack.c.l.b16 %v545
    %v1181 = vunpack.c.h.b16 %v545
    %v1182 = vunpack.c.l.b16 %v546
    %v1183 = vunpack.c.h.b16 %v546
    %v1184 = vunpack.c.l.b16 %v547
    %v1185 = vunpack.c.l.b16 %v548
    %v1186 = vunpack.c.h.b16 %v548
    %v1187 = vunpack.c.l.b16 %v549
    %v1188 = vunpack.c.h.b16 %v549
    %v1189 = vunpack.c.l.b16 %v550
    %v1190 = vunpack.c.l.b16 %v551
    %v1191 = vunpack.c.h.b16 %v551
    %v1192 = vunpack.c.l.b16 %v552
    %v1193 = vunpack.c.h.b16 %v552
    %v1194 = vunpack.c.l.b16 %v553
    %v1195 = vunpack.c.l.b16 %v554
    %v1196 = vunpack.c.h.b16 %v554
    %v1197 = vunpack.c.l.b16 %v555
    %v1198 = vunpack.c.h.b16 %v555
    %v1199 = vunpack.c.l.b16 %v556
    %v1200 = vunpack.c.l.b16 %v557
    %v1201 = vunpack.c.h.b16 %v557
    %v1202 = vunpack.c.l.b16 %v558
    %v1203 = vunpack.c.h.b16 %v558
    %v1204 = vunpack.c.l.b16 %v559
    %v1205 = vunpack.c.l.b16 %v560
    %v1206 = vunpack.c.h.b16 %v560
    %v1207 = vunpack.c.l.b16 %v561
    %v1208 = vunpack.c.h.b16 %v561
    %v1209 = vunpack.c.l.b16 %v562
    %v1210 = vunpack.c.l.b16 %v563
    %v1211 = vunpack.c.h.b16 %v563
    %v1212 = vunpack.c.l.b16 %v564
    %v1213 = vunpack.c.h.b16 %v564
    %v1214 = vunpack.c.l.b16 %v565
    %v1215 = vunpack.c.l.b16 %v566
    %v1216 = vunpack.c.h.b16 %v566
    %v1217 = vunpack.c.l.b16 %v567
    %v1218 = vunpack.c.h.b16 %v567
    %v1219 = vunpack.c.l.b16 %v568
    %v1220 = vunpack.c.l.b16 %v569
    %v1221 = vunpack.c.h.b16 %v569
    %v1222 = vunpack.c.l.b16 %v570
    %v1223 = vunpack.c.h.b16 %v570
    %v1224 = vunpack.c.l.b16 %v571
    %v1225 = vunpack.c.l.b16 %v572
    %v1226 = vunpack.c.h.b16 %v572
    %v1227 = vunpack.c.l.b16 %v573
    %v1228 = vunpack.c.h.b16 %v573
    %v1229 = vunpack.c.l.b16 %v574
    %v1230 = vunpack.c.l.b16 %v575
    %v1231 = vunpack.c.h.b16 %v575
    %v1232 = vunpack.c.l.b16 %v576
    %v1233 = vunpack.c.h.b16 %v576
    %v1234 = vunpack.c.l.b16 %v577
    %v1235 = vunpack.c.l.b16 %v578
    %v1236 = vunpack.c.h.b16 %v578
    %v1237 = vunpack.c.l.b16 %v579
    %v1238 = vunpack.c.h.b16 %v579
    %v1239 = vunpack.c.l.b16 %v580
    %v1240 = vunpack.c.l.b16 %v581
    %v1241 = vunpack.c.h.b16 %v581
    %v1242 = vunpack.c.l.b16 %v582
    %v1243 = vunpack.c.h.b16 %v582
    %v1244 = vunpack.c.l.b16 %v583
    %v1245 = vunpack.c.l.b16 %v584
    %v1246 = vunpack.c.h.b16 %v584
    %v1247 = vunpack.c.l.b16 %v585
    %v1248 = vunpack.c.h.b16 %v585
    %v1249 = vunpack.c.l.b16 %v586
    %v1250 = vunpack.c.l.b16 %v587
    %v1251 = vunpack.c.h.b16 %v587
    %v1252 = vunpack.c.l.b16 %v588
    %v1253 = vunpack.c.h.b16 %v588
    %v1254 = vunpack.c.l.b16 %v589
    %v1255 = vunpack.c.l.b16 %v590
    %v1256 = vunpack.c.h.b16 %v590
    %v1257 = vunpack.c.l.b16 %v591
    %v1258 = vunpack.c.h.b16 %v591
    %v1259 = vunpack.c.l.b16 %v592
    %v1260 = vpack.c.b16 %v865, %v860
    %v1261 = vpack.c.b16 %v866, %v861
    %v1262 = vpack.c.b16 %v867, %v862
    %v1263 = vpack.c.b16 %v868, %v863
    %v1264 = vpack.c.b16 %v869, %v864
    %v1265 = vpack.c.b16 %v875, %v870
    %v1266 = vpack.c.b16 %v876, %v871
    %v1267 = vpack.c.b16 %v877, %v872
    %v1268 = vpack.c.b16 %v878, %v873
    %v1269 = vpack.c.b16 %v879, %v874
    %v1270 = vpack.c.b16 %v885, %v880
    %v1271 = vpack.c.b16 %v886, %v881
    %v1272 = vpack.c.b16 %v887, %v882
    %v1273 = vpack.c.b16 %v888, %v883
    %v1274 = vpack.c.b16 %v889, %v884
    %v1275 = vpack.c.b16 %v895, %v890
    %v1276 = vpack.c.b16 %v896, %v891
    %v1277 = vpack.c.b16 %v897, %v892
    %v1278 = vpack.c.b16 %v898, %v893
    %v1279 = vpack.c.b16 %v899, %v894
    %v1280 = vpack.c.b16 %v905, %v900
    %v1281 = vpack.c.b16 %v906, %v901
    %v1282 = vpack.c.b16 %v907, %v902
    %v1283 = vpack.c.b16 %v908, %v903
    %v1284 = vpack.c.b16 %v909, %v904
    %v1285 = vpack.c.b16 %v915, %v910
    %v1286 = vpack.c.b16 %v916, %v911
    %v1287 = vpack.c.b16 %v917, %v912
    %v1288 = vpack.c.b16 %v918, %v913
    %v1289 = vpack.c.b16 %v919, %v914
    %v1290 = vpack.c.b16 %v925, %v920
    %v1291 = vpack.c.b16 %v926, %v921
    %v1292 = vpack.c.b16 %v927, %v922
    %v1293 = vpack.c.b16 %v928, %v923
    %v1294 = vpack.c.b16 %v929, %v924
    %v1295 = vpack.c.b16 %v935, %v930
    %v1296 = vpack.c.b16 %v936, %v931
    %v1297 = vpack.c.b16 %v937, %v932
    %v1298 = vpack.c.b16 %v938, %v933
    %v1299 = vpack.c.b16 %v939, %v934
    %v1300 = vpack.c.b16 %v945, %v940
    %v1301 = vpack.c.b16 %v946, %v941
    %v1302 = vpack.c.b16 %v947, %v942
    %v1303 = vpack.c.b16 %v948, %v943
    %v1304 = vpack.c.b16 %v949, %v944
    %v1305 = vpack.c.b16 %v955, %v950
    %v1306 = vpack.c.b16 %v956, %v951
    %v1307 = vpack.c.b16 %v957, %v952
    %v1308 = vpack.c.b16 %v958, %v953
    %v1309 = vpack.c.b16 %v959, %v954
    %v1310 = vpack.c.b16 %v965, %v960
    %v1311 = vpack.c.b16 %v966, %v961
    %v1312 = vpack.c.b16 %v967, %v962
    %v1313 = vpack.c.b16 %v968, %v963
    %v1314 = vpack.c.b16 %v969, %v964
    %v1315 = vpack.c.b16 %v975, %v970
    %v1316 = vpack.c.b16 %v976, %v971
    %v1317 = vpack.c.b16 %v977, %v972
    %v1318 = vpack.c.b16 %v978, %v973
    %v1319 = vpack.c.b16 %v979, %v974
    %v1320 = vpack.c.b16 %v985, %v980
    %v1321 = vpack.c.b16 %v986, %v981
    %v1322 = vpack.c.b16 %v987, %v982
    %v1323 = vpack.c.b16 %v988, %v983
    %v1324 = vpack.c.b16 %v989, %v984
    %v1325 = vpack.c.b16 %v995, %v990
    %v1326 = vpack.c.b16 %v996, %v991
    %v1327 = vpack.c.b16 %v997, %v992
    %v1328 = vpack.c.b16 %v998, %v993
    %v1329 = vpack.c.b16 %v999, %v994
    %v1330 = vpack.c.b16 %v1005, %v1000
    %v1331 = vpack.c.b16 %v1006, %v1001
    %v1332 = vpack.c.b16 %v1007, %v1002
    %v1333 = vpack.c.b16 %v1008, %v1003
    %v1334 = vpack.c.b16 %v1009, %v1004
    %v1335 = vpack.c.b16 %v1015, %v1010
    %v1336 = vpack.c.b16 %v1016, %v1011
    %v1337 = vpack.c.b16 %v1017, %v1012
    %v1338 = vpack.c.b16 %v1018, %v1013
    %v1339 = vpack.c.b16 %v1019, %v1014
    %v1340 = vpack.c.b16 %v1025, %v1020
    %v1341 = vpack.c.b16 %v1026, %v1021
    %v1342 = vpack.c.b16 %v1027, %v1022
    %v1343 = vpack.c.b16 %v1028, %v1023
    %v1344 = vpack.c.b16 %v1029, %v1024
    %v1345 = vpack.c.b16 %v1035, %v1030
    %v1346 = vpack.c.b16 %v1036, %v1031
    %v1347 = vpack.c.b16 %v1037, %v1032
    %v1348 = vpack.c.b16 %v1038, %v1033
    %v1349 = vpack.c.b16 %v1039, %v1034
    %v1350 = vpack.c.b16 %v1045, %v1040
    %v1351 = vpack.c.b16 %v1046, %v1041
    %v1352 = vpack.c.b16 %v1047, %v1042
    %v1353 = vpack.c.b16 %v1048, %v1043
    %v1354 = vpack.c.b16 %v1049, %v1044
    %v1355 = vpack.c.b16 %v1055, %v1050
    %v1356 = vpack.c.b16 %v1056, %v1051
    %v1357 = vpack.c.b16 %v1057, %v1052
    %v1358 = vpack.c.b16 %v1058, %v1053
    %v1359 = vpack.c.b16 %v1059, %v1054
    %v1360 = vpack.c.b16 %v1065, %v1060
    %v1361 = vpack.c.b16 %v1066, %v1061
    %v1362 = vpack.c.b16 %v1067, %v1062
    %v1363 = vpack.c.b16 %v1068, %v1063
    %v1364 = vpack.c.b16 %v1069, %v1064
    %v1365 = vpack.c.b16 %v1075, %v1070
    %v1366 = vpack.c.b16 %v1076, %v1071
    %v1367 = vpack.c.b16 %v1077, %v1072
    %v1368 = vpack.c.b16 %v1078, %v1073
    %v1369 = vpack.c.b16 %v1079, %v1074
    %v1370 = vpack.c.b16 %v1085, %v1080
    %v1371 = vpack.c.b16 %v1086, %v1081
    %v1372 = vpack.c.b16 %v1087, %v1082
    %v1373 = vpack.c.b16 %v1088, %v1083
    %v1374 = vpack.c.b16 %v1089, %v1084
    %v1375 = vpack.c.b16 %v1095, %v1090
    %v1376 = vpack.c.b16 %v1096, %v1091
    %v1377 = vpack.c.b16 %v1097, %v1092
    %v1378 = vpack.c.b16 %v1098, %v1093
    %v1379 = vpack.c.b16 %v1099, %v1094
    %v1380 = vpack.c.b16 %v1105, %v1100
    %v1381 = vpack.c.b16 %v1106, %v1101
    %v1382 = vpack.c.b16 %v1107, %v1102
    %v1383 = vpack.c.b16 %v1108, %v1103
    %v1384 = vpack.c.b16 %v1109, %v1104
    %v1385 = vpack.c.b16 %v1115, %v1110
    %v1386 = vpack.c.b16 %v1116, %v1111
    %v1387 = vpack.c.b16 %v1117, %v1112
    %v1388 = vpack.c.b16 %v1118, %v1113
    %v1389 = vpack.c.b16 %v1119, %v1114
    %v1390 = vpack.c.b16 %v1125, %v1120
    %v1391 = vpack.c.b16 %v1126, %v1121
    %v1392 = vpack.c.b16 %v1127, %v1122
    %v1393 = vpack.c.b16 %v1128, %v1123
    %v1394 = vpack.c.b16 %v1129, %v1124
    %v1395 = vpack.c.b16 %v1135, %v1130
    %v1396 = vpack.c.b16 %v1136, %v1131
    %v1397 = vpack.c.b16 %v1137, %v1132
    %v1398 = vpack.c.b16 %v1138, %v1133
    %v1399 = vpack.c.b16 %v1139, %v1134
    %v1400 = vpack.c.b16 %v1145, %v1140
    %v1401 = vpack.c.b16 %v1146, %v1141
    %v1402 = vpack.c.b16 %v1147, %v1142
    %v1403 = vpack.c.b16 %v1148, %v1143
    %v1404 = vpack.c.b16 %v1149, %v1144
    %v1405 = vpack.c.b16 %v1155, %v1150
    %v1406 = vpack.c.b16 %v1156, %v1151
    %v1407 = vpack.c.b16 %v1157, %v1152
    %v1408 = vpack.c.b16 %v1158, %v1153
    %v1409 = vpack.c.b16 %v1159, %v1154
    %v1410 = vpack.c.b16 %v1165, %v1160
    %v1411 = vpack.c.b16 %v1166, %v1161
    %v1412 = vpack.c.b16 %v1167, %v1162
    %v1413 = vpack.c.b16 %v1168, %v1163
    %v1414 = vpack.c.b16 %v1169, %v1164
    %v1415 = vpack.c.b16 %v1175, %v1170
    %v1416 = vpack.c.b16 %v1176, %v1171
    %v1417 = vpack.c.b16 %v1177, %v1172
    %v1418 = vpack.c.b16 %v1178, %v1173
    %v1419 = vpack.c.b16 %v1179, %v1174
    %v1420 = vpack.c.b16 %v1185, %v1180
    %v1421 = vpack.c.b16 %v1186, %v1181
    %v1422 = vpack.c.b16 %v1187, %v1182
    %v1423 = vpack.c.b16 %v1188, %v1183
    %v1424 = vpack.c.b16 %v1189, %v1184
    %v1425 = vpack.c.b16 %v1195, %v1190
    %v1426 = vpack.c.b16 %v1196, %v1191
    %v1427 = vpack.c.b16 %v1197, %v1192
    %v1428 = vpack.c.b16 %v1198, %v1193
    %v1429 = vpack.c.b16 %v1199, %v1194
    %v1430 = vpack.c.b16 %v1205, %v1200
    %v1431 = vpack.c.b16 %v1206, %v1201
    %v1432 = vpack.c.b16 %v1207, %v1202
    %v1433 = vpack.c.b16 %v1208, %v1203
    %v1434 = vpack.c.b16 %v1209, %v1204
    %v1435 = vpack.c.b16 %v1215, %v1210
    %v1436 = vpack.c.b16 %v1216, %v1211
    %v1437 = vpack.c.b16 %v1217, %v1212
    %v1438 = vpack.c.b16 %v1218, %v1213
    %v1439 = vpack.c.b16 %v1219, %v1214
    %v1440 = vpack.c.b16 %v1225, %v1220
    %v1441 = vpack.c.b16 %v1226, %v1221
    %v1442 = vpack.c.b16 %v1227, %v1222
    %v1443 = vpack.c.b16 %v1228, %v1223
    %v1444 = vpack.c.b16 %v1229, %v1224
    %v1445 = vpack.c.b16 %v1235, %v1230
    %v1446 = vpack.c.b16 %v1236, %v1231
    %v1447 = vpack.c.b16 %v1237, %v1232
    %v1448 = vpack.c.b16 %v1238, %v1233
    %v1449 = vpack.c.b16 %v1239, %v1234
    %v1450 = vpack.c.b16 %v1245, %v1240
    %v1451 = vpack.c.b16 %v1246, %v1241
    %v1452 = vpack.c.b16 %v1247, %v1242
    %v1453 = vpack.c.b16 %v1248, %v1243
    %v1454 = vpack.c.b16 %v1249, %v1244
    %v1455 = vpack.c.b16 %v1255, %v1250
    %v1456 = vpack.c.b16 %v1256, %v1251
    %v1457 = vpack.c.b16 %v1257, %v1252
    %v1458 = vpack.c.b16 %v1258, %v1253
    %v1459 = vpack.c.b16 %v1259, %v1254
    %1660 = vmatprep.subr.bf16.mxu0 %v1261
    %1661 = vmatpush1.bf16.msra.mxu0 %v1260
    %1662 = vmatprep.subr.bf16.mxu0 %v1266
    %1663 = vmatpush1.bf16.msra.mxu0 %v1265
    %1664 = vmatprep.subr.bf16.mxu0 %v1271
    %1665 = vmatpush1.bf16.msra.mxu0 %v1270
    %1666 = vmatprep.subr.bf16.mxu0 %v1276
    %1667 = vmatpush1.bf16.msra.mxu0 %v1275
    %1668 = vmatprep.subr.bf16.mxu0 %v1281
    %1669 = vmatpush1.bf16.msra.mxu0 %v1280
    %1670 = vmatprep.subr.bf16.mxu0 %v1286
    %1671 = vmatpush1.bf16.msra.mxu0 %v1285
    %1672 = vmatprep.subr.bf16.mxu0 %v1291
    %1673 = vmatpush1.bf16.msra.mxu0 %v1290
    %1674 = vmatprep.subr.bf16.mxu0 %v1296
    %1675 = vmatpush1.bf16.msra.mxu0 %v1295
    %1676 = vmatprep.subr.bf16.mxu0 %v1301
    %1677 = vmatpush1.bf16.msra.mxu0 %v1300
    %1678 = vmatprep.subr.bf16.mxu0 %v1306
    %1679 = vmatpush1.bf16.msra.mxu0 %v1305
    %1680 = vmatprep.subr.bf16.mxu0 %v1311
    %1681 = vmatpush1.bf16.msra.mxu0 %v1310
    %1682 = vmatprep.subr.bf16.mxu0 %v1316
    %1683 = vmatpush1.bf16.msra.mxu0 %v1315
    %1684 = vmatprep.subr.bf16.mxu0 %v1321
    %1685 = vmatpush1.bf16.msra.mxu0 %v1320
    %1686 = vmatprep.subr.bf16.mxu0 %v1326
    %1687 = vmatpush1.bf16.msra.mxu0 %v1325
    %1688 = vmatprep.subr.bf16.mxu0 %v1331
    %1689 = vmatpush1.bf16.msra.mxu0 %v1330
    %1690 = vmatprep.subr.bf16.mxu0 %v1336
    %1691 = vmatpush1.bf16.msra.mxu0 %v1335
    %1692 = vmatprep.mubr.bf16.mxu0 %v274
    %1693 = vmatmul.mubr.bf16.gmra.mrb[0].mxu0 %v273
    %v1694 = vpop.f32.mrb[0].mxu0
    %v1695 = vadd.f32 %v598, %v1694
    %v1696 = vpop.f32.mrb[0].mxu0
    %v1697 = vadd.f32 %v602, %v1696
    %v1698 = vpop.f32.mrb[0].mxu0
    %v1699 = vadd.f32 %v598, %v1698
    %v1700 = vpop.f32.mrb[0].mxu0
    %v1701 = vadd.f32 %v602, %v1700
    %1702 = vmatprep.mubr.bf16.mxu0 %v279
    %1703 = vmatmul.mubr.bf16.gmra.mrb[0].mxu0 %v278
    %v1704 = vpop.f32.mrb[0].mxu0
    %v1705 = vadd.f32 %v598, %v1704
    %v1706 = vpop.f32.mrb[0].mxu0
    %v1707 = vadd.f32 %v602, %v1706
    %v1708 = vpop.f32.mrb[0].mxu0
    %v1709 = vadd.f32 %v598, %v1708
    %v1710 = vpop.f32.mrb[0].mxu0
    %v1711 = vadd.f32 %v602, %v1710
    %1712 = vmatprep.mubr.bf16.mxu0 %v284
    %1713 = vmatmul.mubr.bf16.gmra.mrb[0].mxu0 %v283
    %v1714 = vpop.f32.mrb[0].mxu0
    %v1715 = vadd.f32 %v598, %v1714
    %v1716 = vpop.f32.mrb[0].mxu0
    %v1717 = vadd.f32 %v602, %v1716
    %v1718 = vpop.f32.mrb[0].mxu0
    %v1719 = vadd.f32 %v598, %v1718
    %v1720 = vpop.f32.mrb[0].mxu0
    %v1721 = vadd.f32 %v602, %v1720
    %1722 = vmatprep.mubr.bf16.mxu0 %v289
    %1723 = vmatmul.mubr.bf16.gmra.mrb[0].mxu0 %v288
    %v1724 = vpop.f32.mrb[0].mxu0
    %v1725 = vadd.f32 %v598, %v1724
    %v1726 = vpop.f32.mrb[0].mxu0
    %v1727 = vadd.f32 %v602, %v1726
    %v1728 = vpop.f32.mrb[0].mxu0
    %v1729 = vadd.f32 %v598, %v1728
    %v1730 = vpop.f32.mrb[0].mxu0
    %v1731 = vadd.f32 %v602, %v1730
    %1732 = vmatprep.mubr.bf16.mxu0 %v294
    %1733 = vmatmul.mubr.bf16.gmra.mrb[0].mxu0 %v293
    %v1734 = vpop.f32.mrb[0].mxu0
    %v1735 = vadd.f32 %v598, %v1734
    %v1736 = vpop.f32.mrb[0].mxu0
    %v1737 = vadd.f32 %v602, %v1736
    %v1738 = vpop.f32.mrb[0].mxu0
    %v1739 = vadd.f32 %v598, %v1738
    %v1740 = vpop.f32.mrb[0].mxu0
    %v1741 = vadd.f32 %v602, %v1740
    %1742 = vmatprep.mubr.bf16.mxu0 %v299
    %1743 = vmatmul.mubr.bf16.gmra.mrb[0].mxu0 %v298
    %v1744 = vpop.f32.mrb[0].mxu0
    %v1745 = vadd.f32 %v598, %v1744
    %v1746 = vpop.f32.mrb[0].mxu0
    %v1747 = vadd.f32 %v602, %v1746
    %v1748 = vpop.f32.mrb[0].mxu0
    %v1749 = vadd.f32 %v598, %v1748
    %v1750 = vpop.f32.mrb[0].mxu0
    %v1751 = vadd.f32 %v602, %v1750
    %1752 = vmatprep.mubr.bf16.mxu0 %v304
    %1753 = vmatmul.mubr.bf16.gmra.mrb[0].mxu0 %v303
    %v1754 = vpop.f32.mrb[0].mxu0
    %v1755 = vadd.f32 %v598, %v1754
    %v1756 = vpop.f32.mrb[0].mxu0
    %v1757 = vadd.f32 %v602, %v1756
    %v1758 = vpop.f32.mrb[0].mxu0
    %v1759 = vadd.f32 %v598, %v1758
    %v1760 = vpop.f32.mrb[0].mxu0
    %v1761 = vadd.f32 %v602, %v1760
    %1762 = vmatprep.mubr.bf16.mxu0 %v309
    %1763 = vmatmul.mubr.bf16.gmra.mrb[0].mxu0 %v308
    %v1764 = vpop.f32.mrb[0].mxu0
    %v1765 = vadd.f32 %v598, %v1764
    %v1766 = vpop.f32.mrb[0].mxu0
    %v1767 = vadd.f32 %v602, %v1766
    %v1768 = vpop.f32.mrb[0].mxu0
    %v1769 = vadd.f32 %v598, %v1768
    %v1770 = vpop.f32.mrb[0].mxu0
    %v1771 = vadd.f32 %v602, %v1770
    %1772 = vmatprep.mubr.bf16.mxu0 %v314
    %1773 = vmatmul.mubr.bf16.gmra.mrb[0].mxu0 %v313
    %v1774 = vpop.f32.mrb[0].mxu0
    %v1775 = vadd.f32 %v598, %v1774
    %v1776 = vpop.f32.mrb[0].mxu0
    %v1777 = vadd.f32 %v602, %v1776
    %v1778 = vpop.f32.mrb[0].mxu0
    %v1779 = vadd.f32 %v598, %v1778
    %v1780 = vpop.f32.mrb[0].mxu0
    %v1781 = vadd.f32 %v602, %v1780
    %1782 = vmatprep.mubr.bf16.mxu0 %v319
    %1783 = vmatmul.mubr.bf16.gmra.mrb[0].mxu0 %v318
    %v1784 = vpop.f32.mrb[0].mxu0
    %v1785 = vadd.f32 %v598, %v1784
    %v1786 = vpop.f32.mrb[0].mxu0
    %v1787 = vadd.f32 %v602, %v1786
    %v1788 = vpop.f32.mrb[0].mxu0
    %v1789 = vadd.f32 %v598, %v1788
    %v1790 = vpop.f32.mrb[0].mxu0
    %v1791 = vadd.f32 %v602, %v1790
    %1792 = vmatprep.mubr.bf16.mxu0 %v324
    %1793 = vmatmul.mubr.bf16.gmra.mrb[0].mxu0 %v323
    %v1794 = vpop.f32.mrb[0].mxu0
    %v1795 = vadd.f32 %v598, %v1794
    %v1796 = vpop.f32.mrb[0].mxu0
    %v1797 = vadd.f32 %v602, %v1796
    %v1798 = vpop.f32.mrb[0].mxu0
    %v1799 = vadd.f32 %v598, %v1798
    %v1800 = vpop.f32.mrb[0].mxu0
    %v1801 = vadd.f32 %v602, %v1800
    %1802 = vmatprep.mubr.bf16.mxu0 %v329
    %1803 = vmatmul.mubr.bf16.gmra.mrb[0].mxu0 %v328
    %v1804 = vpop.f32.mrb[0].mxu0
    %v1805 = vadd.f32 %v598, %v1804
    %v1806 = vpop.f32.mrb[0].mxu0
    %v1807 = vadd.f32 %v602, %v1806
    %v1808 = vpop.f32.mrb[0].mxu0
    %v1809 = vadd.f32 %v598, %v1808
    %v1810 = vpop.f32.mrb[0].mxu0
    %v1811 = vadd.f32 %v602, %v1810
    %1812 = vmatprep.mubr.bf16.mxu0 %v334
    %1813 = vmatmul.mubr.bf16.gmra.mrb[0].mxu0 %v333
    %v1814 = vpop.f32.mrb[0].mxu0
    %v1815 = vadd.f32 %v598, %v1814
    %v1816 = vpop.f32.mrb[0].mxu0
    %v1817 = vadd.f32 %v602, %v1816
    %v1818 = vpop.f32.mrb[0].mxu0
    %v1819 = vadd.f32 %v598, %v1818
    %v1820 = vpop.f32.mrb[0].mxu0
    %v1821 = vadd.f32 %v602, %v1820
    %1822 = vmatprep.mubr.bf16.mxu0 %v339
    %1823 = vmatmul.mubr.bf16.gmra.mrb[0].mxu0 %v338
    %v1824 = vpop.f32.mrb[0].mxu0
    %v1825 = vadd.f32 %v598, %v1824
    %v1826 = vpop.f32.mrb[0].mxu0
    %v1827 = vadd.f32 %v602, %v1826
    %v1828 = vpop.f32.mrb[0].mxu0
    %v1829 = vadd.f32 %v598, %v1828
    %v1830 = vpop.f32.mrb[0].mxu0
    %v1831 = vadd.f32 %v602, %v1830
    %1832 = vmatprep.mubr.bf16.mxu0 %v344
    %1833 = vmatmul.mubr.bf16.gmra.mrb[0].mxu0 %v343
    %v1834 = vpop.f32.mrb[0].mxu0
    %v1835 = vadd.f32 %v598, %v1834
    %v1836 = vpop.f32.mrb[0].mxu0
    %v1837 = vadd.f32 %v602, %v1836
    %v1838 = vpop.f32.mrb[0].mxu0
    %v1839 = vadd.f32 %v598, %v1838
    %v1840 = vpop.f32.mrb[0].mxu0
    %v1841 = vadd.f32 %v602, %v1840
    %1842 = vmatprep.mubr.bf16.mxu0 %v349
    %1843 = vmatmul.mubr.bf16.gmra.mrb[0].mxu0 %v348
    %v1844 = vpop.f32.mrb[0].mxu0
    %v1845 = vadd.f32 %v598, %v1844
    %v1846 = vpop.f32.mrb[0].mxu0
    %v1847 = vadd.f32 %v602, %v1846
    %v1848 = vpop.f32.mrb[0].mxu0
    %v1849 = vadd.f32 %v598, %v1848
    %v1850 = vpop.f32.mrb[0].mxu0
    %v1851 = vadd.f32 %v602, %v1850
    %1852 = vdwg.mxu0
    %1853 = vmatprep.subr.bf16.mxu0 %v1341
    %1854 = vmatpush1.bf16.msra.mxu0 %v1340
    %1855 = vmatprep.subr.bf16.mxu0 %v1346
    %1856 = vmatpush1.bf16.msra.mxu0 %v1345
    %1857 = vmatprep.subr.bf16.mxu0 %v1351
    %1858 = vmatpush1.bf16.msra.mxu0 %v1350
    %1859 = vmatprep.subr.bf16.mxu0 %v1356
    %1860 = vmatpush1.bf16.msra.mxu0 %v1355
    %1861 = vmatprep.subr.bf16.mxu0 %v1361
    %1862 = vmatpush1.bf16.msra.mxu0 %v1360
    %1863 = vmatprep.subr.bf16.mxu0 %v1366
    %1864 = vmatpush1.bf16.msra.mxu0 %v1365
    %1865 = vmatprep.subr.bf16.mxu0 %v1371
    %1866 = vmatpush1.bf16.msra.mxu0 %v1370
    %1867 = vmatprep.subr.bf16.mxu0 %v1376
    %1868 = vmatpush1.bf16.msra.mxu0 %v1375
    %1869 = vmatprep.subr.bf16.mxu0 %v1381
    %1870 = vmatpush1.bf16.msra.mxu0 %v1380
    %1871 = vmatprep.subr.bf16.mxu0 %v1386
    %1872 = vmatpush1.bf16.msra.mxu0 %v1385
    %1873 = vmatprep.subr.bf16.mxu0 %v1391
    %1874 = vmatpush1.bf16.msra.mxu0 %v1390
    %1875 = vmatprep.subr.bf16.mxu0 %v1396
    %1876 = vmatpush1.bf16.msra.mxu0 %v1395
    %1877 = vmatprep.subr.bf16.mxu0 %v1401
    %1878 = vmatpush1.bf16.msra.mxu0 %v1400
    %1879 = vmatprep.subr.bf16.mxu0 %v1406
    %1880 = vmatpush1.bf16.msra.mxu0 %v1405
    %1881 = vmatprep.subr.bf16.mxu0 %v1411
    %1882 = vmatpush1.bf16.msra.mxu0 %v1410
    %1883 = vmatprep.subr.bf16.mxu0 %v1416
    %1884 = vmatpush1.bf16.msra.mxu0 %v1415
    %1885 = vmatprep.mubr.bf16.mxu0 %v276
    %1886 = vmatmul.mubr.bf16.gmra.mrb[0].mxu0 %v275
    %v1887 = vpop.f32.mrb[0].mxu0
    %v1888 = vadd.f32 %v1695, %v1887
    %v1889 = vpop.f32.mrb[0].mxu0
    %v1890 = vadd.f32 %v1697, %v1889
    %v1891 = vpop.f32.mrb[0].mxu0
    %v1892 = vadd.f32 %v1699, %v1891
    %v1893 = vpop.f32.mrb[0].mxu0
    %v1894 = vadd.f32 %v1701, %v1893
    %1895 = vmatprep.mubr.bf16.mxu0 %v281
    %1896 = vmatmul.mubr.bf16.gmra.mrb[0].mxu0 %v280
    %v1897 = vpop.f32.mrb[0].mxu0
    %v1898 = vadd.f32 %v1705, %v1897
    %v1899 = vpop.f32.mrb[0].mxu0
    %v1900 = vadd.f32 %v1707, %v1899
    %v1901 = vpop.f32.mrb[0].mxu0
    %v1902 = vadd.f32 %v1709, %v1901
    %v1903 = vpop.f32.mrb[0].mxu0
    %v1904 = vadd.f32 %v1711, %v1903
    %1905 = vmatprep.mubr.bf16.mxu0 %v286
    %1906 = vmatmul.mubr.bf16.gmra.mrb[0].mxu0 %v285
    %v1907 = vpop.f32.mrb[0].mxu0
    %v1908 = vadd.f32 %v1715, %v1907
    %v1909 = vpop.f32.mrb[0].mxu0
    %v1910 = vadd.f32 %v1717, %v1909
    %v1911 = vpop.f32.mrb[0].mxu0
    %v1912 = vadd.f32 %v1719, %v1911
    %v1913 = vpop.f32.mrb[0].mxu0
    %v1914 = vadd.f32 %v1721, %v1913
    %1915 = vmatprep.mubr.bf16.mxu0 %v291
    %1916 = vmatmul.mubr.bf16.gmra.mrb[0].mxu0 %v290
    %v1917 = vpop.f32.mrb[0].mxu0
    %v1918 = vadd.f32 %v1725, %v1917
    %v1919 = vpop.f32.mrb[0].mxu0
    %v1920 = vadd.f32 %v1727, %v1919
    %v1921 = vpop.f32.mrb[0].mxu0
    %v1922 = vadd.f32 %v1729, %v1921
    %v1923 = vpop.f32.mrb[0].mxu0
    %v1924 = vadd.f32 %v1731, %v1923
    %1925 = vmatprep.mubr.bf16.mxu0 %v296
    %1926 = vmatmul.mubr.bf16.gmra.mrb[0].mxu0 %v295
    %v1927 = vpop.f32.mrb[0].mxu0
    %v1928 = vadd.f32 %v1735, %v1927
    %v1929 = vpop.f32.mrb[0].mxu0
    %v1930 = vadd.f32 %v1737, %v1929
    %v1931 = vpop.f32.mrb[0].mxu0
    %v1932 = vadd.f32 %v1739, %v1931
    %v1933 = vpop.f32.mrb[0].mxu0
    %v1934 = vadd.f32 %v1741, %v1933
    %1935 = vmatprep.mubr.bf16.mxu0 %v301
    %1936 = vmatmul.mubr.bf16.gmra.mrb[0].mxu0 %v300
    %v1937 = vpop.f32.mrb[0].mxu0
    %v1938 = vadd.f32 %v1745, %v1937
    %v1939 = vpop.f32.mrb[0].mxu0
    %v1940 = vadd.f32 %v1747, %v1939
    %v1941 = vpop.f32.mrb[0].mxu0
    %v1942 = vadd.f32 %v1749, %v1941
    %v1943 = vpop.f32.mrb[0].mxu0
    %v1944 = vadd.f32 %v1751, %v1943
    %1945 = vmatprep.mubr.bf16.mxu0 %v306
    %1946 = vmatmul.mubr.bf16.gmra.mrb[0].mxu0 %v305
    %v1947 = vpop.f32.mrb[0].mxu0
    %v1948 = vadd.f32 %v1755, %v1947
    %v1949 = vpop.f32.mrb[0].mxu0
    %v1950 = vadd.f32 %v1757, %v1949
    %v1951 = vpop.f32.mrb[0].mxu0
    %v1952 = vadd.f32 %v1759, %v1951
    %v1953 = vpop.f32.mrb[0].mxu0
    %v1954 = vadd.f32 %v1761, %v1953
    %1955 = vmatprep.mubr.bf16.mxu0 %v311
    %1956 = vmatmul.mubr.bf16.gmra.mrb[0].mxu0 %v310
    %v1957 = vpop.f32.mrb[0].mxu0
    %v1958 = vadd.f32 %v1765, %v1957
    %v1959 = vpop.f32.mrb[0].mxu0
    %v1960 = vadd.f32 %v1767, %v1959
    %v1961 = vpop.f32.mrb[0].mxu0
    %v1962 = vadd.f32 %v1769, %v1961
    %v1963 = vpop.f32.mrb[0].mxu0
    %v1964 = vadd.f32 %v1771, %v1963
    %1965 = vmatprep.mubr.bf16.mxu0 %v316
    %1966 = vmatmul.mubr.bf16.gmra.mrb[0].mxu0 %v315
    %v1967 = vpop.f32.mrb[0].mxu0
    %v1968 = vadd.f32 %v1775, %v1967
    %v1969 = vpop.f32.mrb[0].mxu0
    %v1970 = vadd.f32 %v1777, %v1969
    %v1971 = vpop.f32.mrb[0].mxu0
    %v1972 = vadd.f32 %v1779, %v1971
    %v1973 = vpop.f32.mrb[0].mxu0
    %v1974 = vadd.f32 %v1781, %v1973
    %1975 = vmatprep.mubr.bf16.mxu0 %v321
    %1976 = vmatmul.mubr.bf16.gmra.mrb[0].mxu0 %v320
    %v1977 = vpop.f32.mrb[0].mxu0
    %v1978 = vadd.f32 %v1785, %v1977
    %v1979 = vpop.f32.mrb[0].mxu0
    %v1980 = vadd.f32 %v1787, %v1979
    %v1981 = vpop.f32.mrb[0].mxu0
    %v1982 = vadd.f32 %v1789, %v1981
    %v1983 = vpop.f32.mrb[0].mxu0
    %v1984 = vadd.f32 %v1791, %v1983
    %1985 = vmatprep.mubr.bf16.mxu0 %v326
    %1986 = vmatmul.mubr.bf16.gmra.mrb[0].mxu0 %v325
    %v1987 = vpop.f32.mrb[0].mxu0
    %v1988 = vadd.f32 %v1795, %v1987
    %v1989 = vpop.f32.mrb[0].mxu0
    %v1990 = vadd.f32 %v1797, %v1989
    %v1991 = vpop.f32.mrb[0].mxu0
    %v1992 = vadd.f32 %v1799, %v1991
    %v1993 = vpop.f32.mrb[0].mxu0
    %v1994 = vadd.f32 %v1801, %v1993
    %1995 = vmatprep.mubr.bf16.mxu0 %v331
    %1996 = vmatmul.mubr.bf16.gmra.mrb[0].mxu0 %v330
    %v1997 = vpop.f32.mrb[0].mxu0
    %v1998 = vadd.f32 %v1805, %v1997
    %v1999 = vpop.f32.mrb[0].mxu0
    %v2000 = vadd.f32 %v1807, %v1999
    %v2001 = vpop.f32.mrb[0].mxu0
    %v2002 = vadd.f32 %v1809, %v2001
    %v2003 = vpop.f32.mrb[0].mxu0
    %v2004 = vadd.f32 %v1811, %v2003
    %2005 = vmatprep.mubr.bf16.mxu0 %v336
    %2006 = vmatmul.mubr.bf16.gmra.mrb[0].mxu0 %v335
    %v2007 = vpop.f32.mrb[0].mxu0
    %v2008 = vadd.f32 %v1815, %v2007
    %v2009 = vpop.f32.mrb[0].mxu0
    %v2010 = vadd.f32 %v1817, %v2009
    %v2011 = vpop.f32.mrb[0].mxu0
    %v2012 = vadd.f32 %v1819, %v2011
    %v2013 = vpop.f32.mrb[0].mxu0
    %v2014 = vadd.f32 %v1821, %v2013
    %2015 = vmatprep.mubr.bf16.mxu0 %v341
    %2016 = vmatmul.mubr.bf16.gmra.mrb[0].mxu0 %v340
    %v2017 = vpop.f32.mrb[0].mxu0
    %v2018 = vadd.f32 %v1825, %v2017
    %v2019 = vpop.f32.mrb[0].mxu0
    %v2020 = vadd.f32 %v1827, %v2019
    %v2021 = vpop.f32.mrb[0].mxu0
    %v2022 = vadd.f32 %v1829, %v2021
    %v2023 = vpop.f32.mrb[0].mxu0
    %v2024 = vadd.f32 %v1831, %v2023
    %2025 = vmatprep.mubr.bf16.mxu0 %v346
    %2026 = vmatmul.mubr.bf16.gmra.mrb[0].mxu0 %v345
    %v2027 = vpop.f32.mrb[0].mxu0
    %v2028 = vadd.f32 %v1835, %v2027
    %v2029 = vpop.f32.mrb[0].mxu0
    %v2030 = vadd.f32 %v1837, %v2029
    %v2031 = vpop.f32.mrb[0].mxu0
    %v2032 = vadd.f32 %v1839, %v2031
    %v2033 = vpop.f32.mrb[0].mxu0
    %v2034 = vadd.f32 %v1841, %v2033
    %2035 = vmatprep.mubr.bf16.mxu0 %v351
    %2036 = vmatmul.mubr.bf16.gmra.mrb[0].mxu0 %v350
    %v2037 = vpop.f32.mrb[0].mxu0
    %v2038 = vadd.f32 %v1845, %v2037
    %v2039 = vpop.f32.mrb[0].mxu0
    %v2040 = vadd.f32 %v1847, %v2039
    %v2041 = vpop.f32.mrb[0].mxu0
    %v2042 = vadd.f32 %v1849, %v2041
    %v2043 = vpop.f32.mrb[0].mxu0
    %v2044 = vadd.f32 %v1851, %v2043
    %2045 = vdwg.mxu0
    %2046 = vmatprep.subr.bf16.mxu0 %v1421
    %2047 = vmatpush1.bf16.msra.mxu0 %v1420
    %2048 = vmatprep.subr.bf16.mxu0 %v1426
    %2049 = vmatpush1.bf16.msra.mxu0 %v1425
    %2050 = vmatprep.subr.bf16.mxu0 %v1431
    %2051 = vmatpush1.bf16.msra.mxu0 %v1430
    %2052 = vmatprep.subr.bf16.mxu0 %v1436
    %2053 = vmatpush1.bf16.msra.mxu0 %v1435
    %2054 = vmatprep.subr.bf16.mxu0 %v1441
    %2055 = vmatpush1.bf16.msra.mxu0 %v1440
    %2056 = vmatprep.subr.bf16.mxu0 %v1446
    %2057 = vmatpush1.bf16.msra.mxu0 %v1445
    %2058 = vmatprep.subr.bf16.mxu0 %v1451
    %2059 = vmatpush1.bf16.msra.mxu0 %v1450
    %2060 = vmatprep.subr.bf16.mxu0 %v1456
    %2061 = vmatpush1.bf16.msra.mxu0 %v1455
    %2062 = vmatprep.subr.bf16.mxu0 0
    %2063 = vmatpush1.bf16.msra.mxu0 0
    %2064 = vmatprep.subr.bf16.mxu0 0
    %2065 = vmatpush1.bf16.msra.mxu0 0
    %2066 = vmatprep.subr.bf16.mxu0 0
    %2067 = vmatpush1.bf16.msra.mxu0 0
    %2068 = vmatprep.subr.bf16.mxu0 0
    %2069 = vmatpush1.bf16.msra.mxu0 0
    %2070 = vmatprep.subr.bf16.mxu0 0
    %2071 = vmatpush1.bf16.msra.mxu0 0
    %2072 = vmatprep.subr.bf16.mxu0 0
    %2073 = vmatpush1.bf16.msra.mxu0 0
    %2074 = vmatprep.subr.bf16.mxu0 0
    %2075 = vmatpush1.bf16.msra.mxu0 0
    %2076 = vmatprep.subr.bf16.mxu0 0
    %2077 = vmatpush1.bf16.msra.mxu0 0
    %2078 = vmatprep.mubr.bf16.mxu0 0
    %2079 = vmatmul.mubr.bf16.gmra.mrb[0].mxu0 %v277
    %v2080 = vpop.f32.mrb[0].mxu0
    %v2081 = vadd.f32 %v1888, %v2080
    %v2082 = vpop.f32.mrb[0].mxu0
    %v2083 = vadd.f32 %v1890, %v2082
    %v2084 = vpop.f32.mrb[0].mxu0
    %v2085 = vadd.f32 %v1892, %v2084
    %v2086 = vpop.f32.mrb[0].mxu0
    %v2087 = vadd.f32 %v1894, %v2086
    %2088 = vmatprep.mubr.bf16.mxu0 0
    %2089 = vmatmul.mubr.bf16.gmra.mrb[0].mxu0 %v282
    %v2090 = vpop.f32.mrb[0].mxu0
    %v2091 = vadd.f32 %v1898, %v2090
    %v2092 = vpop.f32.mrb[0].mxu0
    %v2093 = vadd.f32 %v1900, %v2092
    %v2094 = vpop.f32.mrb[0].mxu0
    %v2095 = vadd.f32 %v1902, %v2094
    %v2096 = vpop.f32.mrb[0].mxu0
    %v2097 = vadd.f32 %v1904, %v2096
    %2098 = vmatprep.mubr.bf16.mxu0 0
    %2099 = vmatmul.mubr.bf16.gmra.mrb[0].mxu0 %v287
    %v2100 = vpop.f32.mrb[0].mxu0
    %v2101 = vadd.f32 %v1908, %v2100
    %v2102 = vpop.f32.mrb[0].mxu0
    %v2103 = vadd.f32 %v1910, %v2102
    %v2104 = vpop.f32.mrb[0].mxu0
    %v2105 = vadd.f32 %v1912, %v2104
    %v2106 = vpop.f32.mrb[0].mxu0
    %v2107 = vadd.f32 %v1914, %v2106
    %2108 = vmatprep.mubr.bf16.mxu0 0
    %2109 = vmatmul.mubr.bf16.gmra.mrb[0].mxu0 %v292
    %v2110 = vpop.f32.mrb[0].mxu0
    %v2111 = vadd.f32 %v1918, %v2110
    %v2112 = vpop.f32.mrb[0].mxu0
    %v2113 = vadd.f32 %v1920, %v2112
    %v2114 = vpop.f32.mrb[0].mxu0
    %v2115 = vadd.f32 %v1922, %v2114
    %v2116 = vpop.f32.mrb[0].mxu0
    %v2117 = vadd.f32 %v1924, %v2116
    %2118 = vmatprep.mubr.bf16.mxu0 0
    %2119 = vmatmul.mubr.bf16.gmra.mrb[0].mxu0 %v297
    %v2120 = vpop.f32.mrb[0].mxu0
    %v2121 = vadd.f32 %v1928, %v2120
    %v2122 = vpop.f32.mrb[0].mxu0
    %v2123 = vadd.f32 %v1930, %v2122
    %v2124 = vpop.f32.mrb[0].mxu0
    %v2125 = vadd.f32 %v1932, %v2124
    %v2126 = vpop.f32.mrb[0].mxu0
    %v2127 = vadd.f32 %v1934, %v2126
    %2128 = vmatprep.mubr.bf16.mxu0 0
    %2129 = vmatmul.mubr.bf16.gmra.mrb[0].mxu0 %v302
    %v2130 = vpop.f32.mrb[0].mxu0
    %v2131 = vadd.f32 %v1938, %v2130
    %v2132 = vpop.f32.mrb[0].mxu0
    %v2133 = vadd.f32 %v1940, %v2132
    %v2134 = vpop.f32.mrb[0].mxu0
    %v2135 = vadd.f32 %v1942, %v2134
    %v2136 = vpop.f32.mrb[0].mxu0
    %v2137 = vadd.f32 %v1944, %v2136
    %2138 = vmatprep.mubr.bf16.mxu0 0
    %2139 = vmatmul.mubr.bf16.gmra.mrb[0].mxu0 %v307
    %v2140 = vpop.f32.mrb[0].mxu0
    %v2141 = vadd.f32 %v1948, %v2140
    %v2142 = vpop.f32.mrb[0].mxu0
    %v2143 = vadd.f32 %v1950, %v2142
    %v2144 = vpop.f32.mrb[0].mxu0
    %v2145 = vadd.f32 %v1952, %v2144
    %v2146 = vpop.f32.mrb[0].mxu0
    %v2147 = vadd.f32 %v1954, %v2146
    %2148 = vmatprep.mubr.bf16.mxu0 0
    %2149 = vmatmul.mubr.bf16.gmra.mrb[0].mxu0 %v312
    %v2150 = vpop.f32.mrb[0].mxu0
    %v2151 = vadd.f32 %v1958, %v2150
    %v2152 = vpop.f32.mrb[0].mxu0
    %v2153 = vadd.f32 %v1960, %v2152
    %v2154 = vpop.f32.mrb[0].mxu0
    %v2155 = vadd.f32 %v1962, %v2154
    %v2156 = vpop.f32.mrb[0].mxu0
    %v2157 = vadd.f32 %v1964, %v2156
    %2158 = vmatprep.mubr.bf16.mxu0 0
    %2159 = vmatmul.mubr.bf16.gmra.mrb[0].mxu0 %v317
    %v2160 = vpop.f32.mrb[0].mxu0
    %v2161 = vadd.f32 %v1968, %v2160
    %v2162 = vpop.f32.mrb[0].mxu0
    %v2163 = vadd.f32 %v1970, %v2162
    %v2164 = vpop.f32.mrb[0].mxu0
    %v2165 = vadd.f32 %v1972, %v2164
    %v2166 = vpop.f32.mrb[0].mxu0
    %v2167 = vadd.f32 %v1974, %v2166
    %2168 = vmatprep.mubr.bf16.mxu0 0
    %2169 = vmatmul.mubr.bf16.gmra.mrb[0].mxu0 %v322
    %v2170 = vpop.f32.mrb[0].mxu0
    %v2171 = vadd.f32 %v1978, %v2170
    %v2172 = vpop.f32.mrb[0].mxu0
    %v2173 = vadd.f32 %v1980, %v2172
    %v2174 = vpop.f32.mrb[0].mxu0
    %v2175 = vadd.f32 %v1982, %v2174
    %v2176 = vpop.f32.mrb[0].mxu0
    %v2177 = vadd.f32 %v1984, %v2176
    %2178 = vmatprep.mubr.bf16.mxu0 0
    %2179 = vmatmul.mubr.bf16.gmra.mrb[0].mxu0 %v327
    %v2180 = vpop.f32.mrb[0].mxu0
    %v2181 = vadd.f32 %v1988, %v2180
    %v2182 = vpop.f32.mrb[0].mxu0
    %v2183 = vadd.f32 %v1990, %v2182
    %v2184 = vpop.f32.mrb[0].mxu0
    %v2185 = vadd.f32 %v1992, %v2184
    %v2186 = vpop.f32.mrb[0].mxu0
    %v2187 = vadd.f32 %v1994, %v2186
    %2188 = vmatprep.mubr.bf16.mxu0 0
    %2189 = vmatmul.mubr.bf16.gmra.mrb[0].mxu0 %v332
    %v2190 = vpop.f32.mrb[0].mxu0
    %v2191 = vadd.f32 %v1998, %v2190
    %v2192 = vpop.f32.mrb[0].mxu0
    %v2193 = vadd.f32 %v2000, %v2192
    %v2194 = vpop.f32.mrb[0].mxu0
    %v2195 = vadd.f32 %v2002, %v2194
    %v2196 = vpop.f32.mrb[0].mxu0
    %v2197 = vadd.f32 %v2004, %v2196
    %2198 = vmatprep.mubr.bf16.mxu0 0
    %2199 = vmatmul.mubr.bf16.gmra.mrb[0].mxu0 %v337
    %v2200 = vpop.f32.mrb[0].mxu0
    %v2201 = vadd.f32 %v2008, %v2200
    %v2202 = vpop.f32.mrb[0].mxu0
    %v2203 = vadd.f32 %v2010, %v2202
    %v2204 = vpop.f32.mrb[0].mxu0
    %v2205 = vadd.f32 %v2012, %v2204
    %v2206 = vpop.f32.mrb[0].mxu0
    %v2207 = vadd.f32 %v2014, %v2206
    %2208 = vmatprep.mubr.bf16.mxu0 0
    %2209 = vmatmul.mubr.bf16.gmra.mrb[0].mxu0 %v342
    %v2210 = vpop.f32.mrb[0].mxu0
    %v2211 = vadd.f32 %v2018, %v2210
    %v2212 = vpop.f32.mrb[0].mxu0
    %v2213 = vadd.f32 %v2020, %v2212
    %v2214 = vpop.f32.mrb[0].mxu0
    %v2215 = vadd.f32 %v2022, %v2214
    %v2216 = vpop.f32.mrb[0].mxu0
    %v2217 = vadd.f32 %v2024, %v2216
    %2218 = vmatprep.mubr.bf16.mxu0 0
    %2219 = vmatmul.mubr.bf16.gmra.mrb[0].mxu0 %v347
    %v2220 = vpop.f32.mrb[0].mxu0
    %v2221 = vadd.f32 %v2028, %v2220
    %v2222 = vpop.f32.mrb[0].mxu0
    %v2223 = vadd.f32 %v2030, %v2222
    %v2224 = vpop.f32.mrb[0].mxu0
    %v2225 = vadd.f32 %v2032, %v2224
    %v2226 = vpop.f32.mrb[0].mxu0
    %v2227 = vadd.f32 %v2034, %v2226
    %2228 = vmatprep.mubr.bf16.mxu0 0
    %2229 = vmatmul.mubr.bf16.gmra.mrb[0].mxu0 %v352
    %v2230 = vpop.f32.mrb[0].mxu0
    %v2231 = vadd.f32 %v2038, %v2230
    %v2232 = vpop.f32.mrb[0].mxu0
    %v2233 = vadd.f32 %v2040, %v2232
    %v2234 = vpop.f32.mrb[0].mxu0
    %v2235 = vadd.f32 %v2042, %v2234
    %v2236 = vpop.f32.mrb[0].mxu0
    %v2237 = vadd.f32 %v2044, %v2236
    %2238 = vdwg.mxu0
    %2239 = vmatprep.subr.bf16.mxu0 %v1263
    %2240 = vmatpush1.bf16.msra.mxu0 %v1262
    %2241 = vmatprep.subr.bf16.mxu0 %v1268
    %2242 = vmatpush1.bf16.msra.mxu0 %v1267
    %2243 = vmatprep.subr.bf16.mxu0 %v1273
    %2244 = vmatpush1.bf16.msra.mxu0 %v1272
    %2245 = vmatprep.subr.bf16.mxu0 %v1278
    %2246 = vmatpush1.bf16.msra.mxu0 %v1277
    %2247 = vmatprep.subr.bf16.mxu0 %v1283
    %2248 = vmatpush1.bf16.msra.mxu0 %v1282
    %2249 = vmatprep.subr.bf16.mxu0 %v1288
    %2250 = vmatpush1.bf16.msra.mxu0 %v1287
    %2251 = vmatprep.subr.bf16.mxu0 %v1293
    %2252 = vmatpush1.bf16.msra.mxu0 %v1292
    %2253 = vmatprep.subr.bf16.mxu0 %v1298
    %2254 = vmatpush1.bf16.msra.mxu0 %v1297
    %2255 = vmatprep.subr.bf16.mxu0 %v1303
    %2256 = vmatpush1.bf16.msra.mxu0 %v1302
    %2257 = vmatprep.subr.bf16.mxu0 %v1308
    %2258 = vmatpush1.bf16.msra.mxu0 %v1307
    %2259 = vmatprep.subr.bf16.mxu0 %v1313
    %2260 = vmatpush1.bf16.msra.mxu0 %v1312
    %2261 = vmatprep.subr.bf16.mxu0 %v1318
    %2262 = vmatpush1.bf16.msra.mxu0 %v1317
    %2263 = vmatprep.subr.bf16.mxu0 %v1323
    %2264 = vmatpush1.bf16.msra.mxu0 %v1322
    %2265 = vmatprep.subr.bf16.mxu0 %v1328
    %2266 = vmatpush1.bf16.msra.mxu0 %v1327
    %2267 = vmatprep.subr.bf16.mxu0 %v1333
    %2268 = vmatpush1.bf16.msra.mxu0 %v1332
    %2269 = vmatprep.subr.bf16.mxu0 %v1338
    %2270 = vmatpush1.bf16.msra.mxu0 %v1337
    %2271 = vmatprep.mubr.bf16.mxu0 %v274
    %2272 = vmatmul.mubr.bf16.gmra.mrb[0].mxu0 %v273
    %v2273 = vpop.f32.mrb[0].mxu0
    %v2274 = vadd.f32 %v606, %v2273
    %v2275 = vpop.f32.mrb[0].mxu0
    %v2276 = vadd.f32 %v610, %v2275
    %v2277 = vpop.f32.mrb[0].mxu0
    %v2278 = vadd.f32 %v606, %v2277
    %v2279 = vpop.f32.mrb[0].mxu0
    %v2280 = vadd.f32 %v610, %v2279
    %2281 = vmatprep.mubr.bf16.mxu0 %v279
    %2282 = vmatmul.mubr.bf16.gmra.mrb[0].mxu0 %v278
    %v2283 = vpop.f32.mrb[0].mxu0
    %v2284 = vadd.f32 %v606, %v2283
    %v2285 = vpop.f32.mrb[0].mxu0
    %v2286 = vadd.f32 %v610, %v2285
    %v2287 = vpop.f32.mrb[0].mxu0
    %v2288 = vadd.f32 %v606, %v2287
    %v2289 = vpop.f32.mrb[0].mxu0
    %v2290 = vadd.f32 %v610, %v2289
    %2291 = vmatprep.mubr.bf16.mxu0 %v284
    %2292 = vmatmul.mubr.bf16.gmra.mrb[0].mxu0 %v283
    %v2293 = vpop.f32.mrb[0].mxu0
    %v2294 = vadd.f32 %v606, %v2293
    %v2295 = vpop.f32.mrb[0].mxu0
    %v2296 = vadd.f32 %v610, %v2295
    %v2297 = vpop.f32.mrb[0].mxu0
    %v2298 = vadd.f32 %v606, %v2297
    %v2299 = vpop.f32.mrb[0].mxu0
    %v2300 = vadd.f32 %v610, %v2299
    %2301 = vmatprep.mubr.bf16.mxu0 %v289
    %2302 = vmatmul.mubr.bf16.gmra.mrb[0].mxu0 %v288
    %v2303 = vpop.f32.mrb[0].mxu0
    %v2304 = vadd.f32 %v606, %v2303
    %v2305 = vpop.f32.mrb[0].mxu0
    %v2306 = vadd.f32 %v610, %v2305
    %v2307 = vpop.f32.mrb[0].mxu0
    %v2308 = vadd.f32 %v606, %v2307
    %v2309 = vpop.f32.mrb[0].mxu0
    %v2310 = vadd.f32 %v610, %v2309
    %2311 = vmatprep.mubr.bf16.mxu0 %v294
    %2312 = vmatmul.mubr.bf16.gmra.mrb[0].mxu0 %v293
    %v2313 = vpop.f32.mrb[0].mxu0
    %v2314 = vadd.f32 %v606, %v2313
    %v2315 = vpop.f32.mrb[0].mxu0
    %v2316 = vadd.f32 %v610, %v2315
    %v2317 = vpop.f32.mrb[0].mxu0
    %v2318 = vadd.f32 %v606, %v2317
    %v2319 = vpop.f32.mrb[0].mxu0
    %v2320 = vadd.f32 %v610, %v2319
    %2321 = vmatprep.mubr.bf16.mxu0 %v299
    %2322 = vmatmul.mubr.bf16.gmra.mrb[0].mxu0 %v298
    %v2323 = vpop.f32.mrb[0].mxu0
    %v2324 = vadd.f32 %v606, %v2323
    %v2325 = vpop.f32.mrb[0].mxu0
    %v2326 = vadd.f32 %v610, %v2325
    %v2327 = vpop.f32.mrb[0].mxu0
    %v2328 = vadd.f32 %v606, %v2327
    %v2329 = vpop.f32.mrb[0].mxu0
    %v2330 = vadd.f32 %v610, %v2329
    %2331 = vmatprep.mubr.bf16.mxu0 %v304
    %2332 = vmatmul.mubr.bf16.gmra.mrb[0].mxu0 %v303
    %v2333 = vpop.f32.mrb[0].mxu0
    %v2334 = vadd.f32 %v606, %v2333
    %v2335 = vpop.f32.mrb[0].mxu0
    %v2336 = vadd.f32 %v610, %v2335
    %v2337 = vpop.f32.mrb[0].mxu0
    %v2338 = vadd.f32 %v606, %v2337
    %v2339 = vpop.f32.mrb[0].mxu0
    %v2340 = vadd.f32 %v610, %v2339
    %2341 = vmatprep.mubr.bf16.mxu0 %v309
    %2342 = vmatmul.mubr.bf16.gmra.mrb[0].mxu0 %v308
    %v2343 = vpop.f32.mrb[0].mxu0
    %v2344 = vadd.f32 %v606, %v2343
    %v2345 = vpop.f32.mrb[0].mxu0
    %v2346 = vadd.f32 %v610, %v2345
    %v2347 = vpop.f32.mrb[0].mxu0
    %v2348 = vadd.f32 %v606, %v2347
    %v2349 = vpop.f32.mrb[0].mxu0
    %v2350 = vadd.f32 %v610, %v2349
    %2351 = vmatprep.mubr.bf16.mxu0 %v314
    %2352 = vmatmul.mubr.bf16.gmra.mrb[0].mxu0 %v313
    %v2353 = vpop.f32.mrb[0].mxu0
    %v2354 = vadd.f32 %v606, %v2353
    %v2355 = vpop.f32.mrb[0].mxu0
    %v2356 = vadd.f32 %v610, %v2355
    %v2357 = vpop.f32.mrb[0].mxu0
    %v2358 = vadd.f32 %v606, %v2357
    %v2359 = vpop.f32.mrb[0].mxu0
    %v2360 = vadd.f32 %v610, %v2359
    %2361 = vmatprep.mubr.bf16.mxu0 %v319
    %2362 = vmatmul.mubr.bf16.gmra.mrb[0].mxu0 %v318
    %v2363 = vpop.f32.mrb[0].mxu0
    %v2364 = vadd.f32 %v606, %v2363
    %v2365 = vpop.f32.mrb[0].mxu0
    %v2366 = vadd.f32 %v610, %v2365
    %v2367 = vpop.f32.mrb[0].mxu0
    %v2368 = vadd.f32 %v606, %v2367
    %v2369 = vpop.f32.mrb[0].mxu0
    %v2370 = vadd.f32 %v610, %v2369
    %2371 = vmatprep.mubr.bf16.mxu0 %v324
    %2372 = vmatmul.mubr.bf16.gmra.mrb[0].mxu0 %v323
    %v2373 = vpop.f32.mrb[0].mxu0
    %v2374 = vadd.f32 %v606, %v2373
    %v2375 = vpop.f32.mrb[0].mxu0
    %v2376 = vadd.f32 %v610, %v2375
    %v2377 = vpop.f32.mrb[0].mxu0
    %v2378 = vadd.f32 %v606, %v2377
    %v2379 = vpop.f32.mrb[0].mxu0
    %v2380 = vadd.f32 %v610, %v2379
    %2381 = vmatprep.mubr.bf16.mxu0 %v329
    %2382 = vmatmul.mubr.bf16.gmra.mrb[0].mxu0 %v328
    %v2383 = vpop.f32.mrb[0].mxu0
    %v2384 = vadd.f32 %v606, %v2383
    %v2385 = vpop.f32.mrb[0].mxu0
    %v2386 = vadd.f32 %v610, %v2385
    %v2387 = vpop.f32.mrb[0].mxu0
    %v2388 = vadd.f32 %v606, %v2387
    %v2389 = vpop.f32.mrb[0].mxu0
    %v2390 = vadd.f32 %v610, %v2389
    %2391 = vmatprep.mubr.bf16.mxu0 %v334
    %2392 = vmatmul.mubr.bf16.gmra.mrb[0].mxu0 %v333
    %v2393 = vpop.f32.mrb[0].mxu0
    %v2394 = vadd.f32 %v606, %v2393
    %v2395 = vpop.f32.mrb[0].mxu0
    %v2396 = vadd.f32 %v610, %v2395
    %v2397 = vpop.f32.mrb[0].mxu0
    %v2398 = vadd.f32 %v606, %v2397
    %v2399 = vpop.f32.mrb[0].mxu0
    %v2400 = vadd.f32 %v610, %v2399
    %2401 = vmatprep.mubr.bf16.mxu0 %v339
    %2402 = vmatmul.mubr.bf16.gmra.mrb[0].mxu0 %v338
    %v2403 = vpop.f32.mrb[0].mxu0
    %v2404 = vadd.f32 %v606, %v2403
    %v2405 = vpop.f32.mrb[0].mxu0
    %v2406 = vadd.f32 %v610, %v2405
    %v2407 = vpop.f32.mrb[0].mxu0
    %v2408 = vadd.f32 %v606, %v2407
    %v2409 = vpop.f32.mrb[0].mxu0
    %v2410 = vadd.f32 %v610, %v2409
    %2411 = vmatprep.mubr.bf16.mxu0 %v344
    %2412 = vmatmul.mubr.bf16.gmra.mrb[0].mxu0 %v343
    %v2413 = vpop.f32.mrb[0].mxu0
    %v2414 = vadd.f32 %v606, %v2413
    %v2415 = vpop.f32.mrb[0].mxu0
    %v2416 = vadd.f32 %v610, %v2415
    %v2417 = vpop.f32.mrb[0].mxu0
    %v2418 = vadd.f32 %v606, %v2417
    %v2419 = vpop.f32.mrb[0].mxu0
    %v2420 = vadd.f32 %v610, %v2419
    %2421 = vmatprep.mubr.bf16.mxu0 %v349
    %2422 = vmatmul.mubr.bf16.gmra.mrb[0].mxu0 %v348
    %v2423 = vpop.f32.mrb[0].mxu0
    %v2424 = vadd.f32 %v606, %v2423
    %v2425 = vpop.f32.mrb[0].mxu0
    %v2426 = vadd.f32 %v610, %v2425
    %v2427 = vpop.f32.mrb[0].mxu0
    %v2428 = vadd.f32 %v606, %v2427
    %v2429 = vpop.f32.mrb[0].mxu0
    %v2430 = vadd.f32 %v610, %v2429
    %2431 = vdwg.mxu0
    %2432 = vmatprep.subr.bf16.mxu0 %v1343
    %2433 = vmatpush1.bf16.msra.mxu0 %v1342
    %2434 = vmatprep.subr.bf16.mxu0 %v1348
    %2435 = vmatpush1.bf16.msra.mxu0 %v1347
    %2436 = vmatprep.subr.bf16.mxu0 %v1353
    %2437 = vmatpush1.bf16.msra.mxu0 %v1352
    %2438 = vmatprep.subr.bf16.mxu0 %v1358
    %2439 = vmatpush1.bf16.msra.mxu0 %v1357
    %2440 = vmatprep.subr.bf16.mxu0 %v1363
    %2441 = vmatpush1.bf16.msra.mxu0 %v1362
    %2442 = vmatprep.subr.bf16.mxu0 %v1368
    %2443 = vmatpush1.bf16.msra.mxu0 %v1367
    %2444 = vmatprep.subr.bf16.mxu0 %v1373
    %2445 = vmatpush1.bf16.msra.mxu0 %v1372
    %2446 = vmatprep.subr.bf16.mxu0 %v1378
    %2447 = vmatpush1.bf16.msra.mxu0 %v1377
    %2448 = vmatprep.subr.bf16.mxu0 %v1383
    %2449 = vmatpush1.bf16.msra.mxu0 %v1382
    %2450 = vmatprep.subr.bf16.mxu0 %v1388
    %2451 = vmatpush1.bf16.msra.mxu0 %v1387
    %2452 = vmatprep.subr.bf16.mxu0 %v1393
    %2453 = vmatpush1.bf16.msra.mxu0 %v1392
    %2454 = vmatprep.subr.bf16.mxu0 %v1398
    %2455 = vmatpush1.bf16.msra.mxu0 %v1397
    %2456 = vmatprep.subr.bf16.mxu0 %v1403
    %2457 = vmatpush1.bf16.msra.mxu0 %v1402
    %2458 = vmatprep.subr.bf16.mxu0 %v1408
    %2459 = vmatpush1.bf16.msra.mxu0 %v1407
    %2460 = vmatprep.subr.bf16.mxu0 %v1413
    %2461 = vmatpush1.bf16.msra.mxu0 %v1412
    %2462 = vmatprep.subr.bf16.mxu0 %v1418
    %2463 = vmatpush1.bf16.msra.mxu0 %v1417
    %2464 = vmatprep.mubr.bf16.mxu0 %v276
    %2465 = vmatmul.mubr.bf16.gmra.mrb[0].mxu0 %v275
    %v2466 = vpop.f32.mrb[0].mxu0
    %v2467 = vadd.f32 %v2274, %v2466
    %v2468 = vpop.f32.mrb[0].mxu0
    %v2469 = vadd.f32 %v2276, %v2468
    %v2470 = vpop.f32.mrb[0].mxu0
    %v2471 = vadd.f32 %v2278, %v2470
    %v2472 = vpop.f32.mrb[0].mxu0
    %v2473 = vadd.f32 %v2280, %v2472
    %2474 = vmatprep.mubr.bf16.mxu0 %v281
    %2475 = vmatmul.mubr.bf16.gmra.mrb[0].mxu0 %v280
    %v2476 = vpop.f32.mrb[0].mxu0
    %v2477 = vadd.f32 %v2284, %v2476
    %v2478 = vpop.f32.mrb[0].mxu0
    %v2479 = vadd.f32 %v2286, %v2478
    %v2480 = vpop.f32.mrb[0].mxu0
    %v2481 = vadd.f32 %v2288, %v2480
    %v2482 = vpop.f32.mrb[0].mxu0
    %v2483 = vadd.f32 %v2290, %v2482
    %2484 = vmatprep.mubr.bf16.mxu0 %v286
    %2485 = vmatmul.mubr.bf16.gmra.mrb[0].mxu0 %v285
    %v2486 = vpop.f32.mrb[0].mxu0
    %v2487 = vadd.f32 %v2294, %v2486
    %v2488 = vpop.f32.mrb[0].mxu0
    %v2489 = vadd.f32 %v2296, %v2488
    %v2490 = vpop.f32.mrb[0].mxu0
    %v2491 = vadd.f32 %v2298, %v2490
    %v2492 = vpop.f32.mrb[0].mxu0
    %v2493 = vadd.f32 %v2300, %v2492
    %2494 = vmatprep.mubr.bf16.mxu0 %v291
    %2495 = vmatmul.mubr.bf16.gmra.mrb[0].mxu0 %v290
    %v2496 = vpop.f32.mrb[0].mxu0
    %v2497 = vadd.f32 %v2304, %v2496
    %v2498 = vpop.f32.mrb[0].mxu0
    %v2499 = vadd.f32 %v2306, %v2498
    %v2500 = vpop.f32.mrb[0].mxu0
    %v2501 = vadd.f32 %v2308, %v2500
    %v2502 = vpop.f32.mrb[0].mxu0
    %v2503 = vadd.f32 %v2310, %v2502
    %2504 = vmatprep.mubr.bf16.mxu0 %v296
    %2505 = vmatmul.mubr.bf16.gmra.mrb[0].mxu0 %v295
    %v2506 = vpop.f32.mrb[0].mxu0
    %v2507 = vadd.f32 %v2314, %v2506
    %v2508 = vpop.f32.mrb[0].mxu0
    %v2509 = vadd.f32 %v2316, %v2508
    %v2510 = vpop.f32.mrb[0].mxu0
    %v2511 = vadd.f32 %v2318, %v2510
    %v2512 = vpop.f32.mrb[0].mxu0
    %v2513 = vadd.f32 %v2320, %v2512
    %2514 = vmatprep.mubr.bf16.mxu0 %v301
    %2515 = vmatmul.mubr.bf16.gmra.mrb[0].mxu0 %v300
    %v2516 = vpop.f32.mrb[0].mxu0
    %v2517 = vadd.f32 %v2324, %v2516
    %v2518 = vpop.f32.mrb[0].mxu0
    %v2519 = vadd.f32 %v2326, %v2518
    %v2520 = vpop.f32.mrb[0].mxu0
    %v2521 = vadd.f32 %v2328, %v2520
    %v2522 = vpop.f32.mrb[0].mxu0
    %v2523 = vadd.f32 %v2330, %v2522
    %2524 = vmatprep.mubr.bf16.mxu0 %v306
    %2525 = vmatmul.mubr.bf16.gmra.mrb[0].mxu0 %v305
    %v2526 = vpop.f32.mrb[0].mxu0
    %v2527 = vadd.f32 %v2334, %v2526
    %v2528 = vpop.f32.mrb[0].mxu0
    %v2529 = vadd.f32 %v2336, %v2528
    %v2530 = vpop.f32.mrb[0].mxu0
    %v2531 = vadd.f32 %v2338, %v2530
    %v2532 = vpop.f32.mrb[0].mxu0
    %v2533 = vadd.f32 %v2340, %v2532
    %2534 = vmatprep.mubr.bf16.mxu0 %v311
    %2535 = vmatmul.mubr.bf16.gmra.mrb[0].mxu0 %v310
    %v2536 = vpop.f32.mrb[0].mxu0
    %v2537 = vadd.f32 %v2344, %v2536
    %v2538 = vpop.f32.mrb[0].mxu0
    %v2539 = vadd.f32 %v2346, %v2538
    %v2540 = vpop.f32.mrb[0].mxu0
    %v2541 = vadd.f32 %v2348, %v2540
    %v2542 = vpop.f32.mrb[0].mxu0
    %v2543 = vadd.f32 %v2350, %v2542
    %2544 = vmatprep.mubr.bf16.mxu0 %v316
    %2545 = vmatmul.mubr.bf16.gmra.mrb[0].mxu0 %v315
    %v2546 = vpop.f32.mrb[0].mxu0
    %v2547 = vadd.f32 %v2354, %v2546
    %v2548 = vpop.f32.mrb[0].mxu0
    %v2549 = vadd.f32 %v2356, %v2548
    %v2550 = vpop.f32.mrb[0].mxu0
    %v2551 = vadd.f32 %v2358, %v2550
    %v2552 = vpop.f32.mrb[0].mxu0
    %v2553 = vadd.f32 %v2360, %v2552
    %2554 = vmatprep.mubr.bf16.mxu0 %v321
    %2555 = vmatmul.mubr.bf16.gmra.mrb[0].mxu0 %v320
    %v2556 = vpop.f32.mrb[0].mxu0
    %v2557 = vadd.f32 %v2364, %v2556
    %v2558 = vpop.f32.mrb[0].mxu0
    %v2559 = vadd.f32 %v2366, %v2558
    %v2560 = vpop.f32.mrb[0].mxu0
    %v2561 = vadd.f32 %v2368, %v2560
    %v2562 = vpop.f32.mrb[0].mxu0
    %v2563 = vadd.f32 %v2370, %v2562
    %2564 = vmatprep.mubr.bf16.mxu0 %v326
    %2565 = vmatmul.mubr.bf16.gmra.mrb[0].mxu0 %v325
    %v2566 = vpop.f32.mrb[0].mxu0
    %v2567 = vadd.f32 %v2374, %v2566
    %v2568 = vpop.f32.mrb[0].mxu0
    %v2569 = vadd.f32 %v2376, %v2568
    %v2570 = vpop.f32.mrb[0].mxu0
    %v2571 = vadd.f32 %v2378, %v2570
    %v2572 = vpop.f32.mrb[0].mxu0
    %v2573 = vadd.f32 %v2380, %v2572
    %2574 = vmatprep.mubr.bf16.mxu0 %v331
    %2575 = vmatmul.mubr.bf16.gmra.mrb[0].mxu0 %v330
    %v2576 = vpop.f32.mrb[0].mxu0
    %v2577 = vadd.f32 %v2384, %v2576
    %v2578 = vpop.f32.mrb[0].mxu0
    %v2579 = vadd.f32 %v2386, %v2578
    %v2580 = vpop.f32.mrb[0].mxu0
    %v2581 = vadd.f32 %v2388, %v2580
    %v2582 = vpop.f32.mrb[0].mxu0
    %v2583 = vadd.f32 %v2390, %v2582
    %2584 = vmatprep.mubr.bf16.mxu0 %v336
    %2585 = vmatmul.mubr.bf16.gmra.mrb[0].mxu0 %v335
    %v2586 = vpop.f32.mrb[0].mxu0
    %v2587 = vadd.f32 %v2394, %v2586
    %v2588 = vpop.f32.mrb[0].mxu0
    %v2589 = vadd.f32 %v2396, %v2588
    %v2590 = vpop.f32.mrb[0].mxu0
    %v2591 = vadd.f32 %v2398, %v2590
    %v2592 = vpop.f32.mrb[0].mxu0
    %v2593 = vadd.f32 %v2400, %v2592
    %2594 = vmatprep.mubr.bf16.mxu0 %v341
    %2595 = vmatmul.mubr.bf16.gmra.mrb[0].mxu0 %v340
    %v2596 = vpop.f32.mrb[0].mxu0
    %v2597 = vadd.f32 %v2404, %v2596
    %v2598 = vpop.f32.mrb[0].mxu0
    %v2599 = vadd.f32 %v2406, %v2598
    %v2600 = vpop.f32.mrb[0].mxu0
    %v2601 = vadd.f32 %v2408, %v2600
    %v2602 = vpop.f32.mrb[0].mxu0
    %v2603 = vadd.f32 %v2410, %v2602
    %2604 = vmatprep.mubr.bf16.mxu0 %v346
    %2605 = vmatmul.mubr.bf16.gmra.mrb[0].mxu0 %v345
    %v2606 = vpop.f32.mrb[0].mxu0
    %v2607 = vadd.f32 %v2414, %v2606
    %v2608 = vpop.f32.mrb[0].mxu0
    %v2609 = vadd.f32 %v2416, %v2608
    %v2610 = vpop.f32.mrb[0].mxu0
    %v2611 = vadd.f32 %v2418, %v2610
    %v2612 = vpop.f32.mrb[0].mxu0
    %v2613 = vadd.f32 %v2420, %v2612
    %2614 = vmatprep.mubr.bf16.mxu0 %v351
    %2615 = vmatmul.mubr.bf16.gmra.mrb[0].mxu0 %v350
    %v2616 = vpop.f32.mrb[0].mxu0
    %v2617 = vadd.f32 %v2424, %v2616
    %v2618 = vpop.f32.mrb[0].mxu0
    %v2619 = vadd.f32 %v2426, %v2618
    %v2620 = vpop.f32.mrb[0].mxu0
    %v2621 = vadd.f32 %v2428, %v2620
    %v2622 = vpop.f32.mrb[0].mxu0
    %v2623 = vadd.f32 %v2430, %v2622
    %2624 = vdwg.mxu0
    %2625 = vmatprep.subr.bf16.mxu0 %v1423
    %2626 = vmatpush1.bf16.msra.mxu0 %v1422
    %2627 = vmatprep.subr.bf16.mxu0 %v1428
    %2628 = vmatpush1.bf16.msra.mxu0 %v1427
    %2629 = vmatprep.subr.bf16.mxu0 %v1433
    %2630 = vmatpush1.bf16.msra.mxu0 %v1432
    %2631 = vmatprep.subr.bf16.mxu0 %v1438
    %2632 = vmatpush1.bf16.msra.mxu0 %v1437
    %2633 = vmatprep.subr.bf16.mxu0 %v1443
    %2634 = vmatpush1.bf16.msra.mxu0 %v1442
    %2635 = vmatprep.subr.bf16.mxu0 %v1448
    %2636 = vmatpush1.bf16.msra.mxu0 %v1447
    %2637 = vmatprep.subr.bf16.mxu0 %v1453
    %2638 = vmatpush1.bf16.msra.mxu0 %v1452
    %2639 = vmatprep.subr.bf16.mxu0 %v1458
    %2640 = vmatpush1.bf16.msra.mxu0 %v1457
    %2641 = vmatprep.subr.bf16.mxu0 0
    %2642 = vmatpush1.bf16.msra.mxu0 0
    %2643 = vmatprep.subr.bf16.mxu0 0
    %2644 = vmatpush1.bf16.msra.mxu0 0
    %2645 = vmatprep.subr.bf16.mxu0 0
    %2646 = vmatpush1.bf16.msra.mxu0 0
    %2647 = vmatprep.subr.bf16.mxu0 0
    %2648 = vmatpush1.bf16.msra.mxu0 0
    %2649 = vmatprep.subr.bf16.mxu0 0
    %2650 = vmatpush1.bf16.msra.mxu0 0
    %2651 = vmatprep.subr.bf16.mxu0 0
    %2652 = vmatpush1.bf16.msra.mxu0 0
    %2653 = vmatprep.subr.bf16.mxu0 0
    %2654 = vmatpush1.bf16.msra.mxu0 0
    %2655 = vmatprep.subr.bf16.mxu0 0
    %2656 = vmatpush1.bf16.msra.mxu0 0
    %2657 = vmatprep.mubr.bf16.mxu0 0
    %2658 = vmatmul.mubr.bf16.gmra.mrb[0].mxu0 %v277
    %v2659 = vpop.f32.mrb[0].mxu0
    %v2660 = vadd.f32 %v2467, %v2659
    %v2661 = vpop.f32.mrb[0].mxu0
    %v2662 = vadd.f32 %v2469, %v2661
    %v2663 = vpop.f32.mrb[0].mxu0
    %v2664 = vadd.f32 %v2471, %v2663
    %v2665 = vpop.f32.mrb[0].mxu0
    %v2666 = vadd.f32 %v2473, %v2665
    %2667 = vmatprep.mubr.bf16.mxu0 0
    %2668 = vmatmul.mubr.bf16.gmra.mrb[0].mxu0 %v282
    %v2669 = vpop.f32.mrb[0].mxu0
    %v2670 = vadd.f32 %v2477, %v2669
    %v2671 = vpop.f32.mrb[0].mxu0
    %v2672 = vadd.f32 %v2479, %v2671
    %v2673 = vpop.f32.mrb[0].mxu0
    %v2674 = vadd.f32 %v2481, %v2673
    %v2675 = vpop.f32.mrb[0].mxu0
    %v2676 = vadd.f32 %v2483, %v2675
    %2677 = vmatprep.mubr.bf16.mxu0 0
    %2678 = vmatmul.mubr.bf16.gmra.mrb[0].mxu0 %v287
    %v2679 = vpop.f32.mrb[0].mxu0
    %v2680 = vadd.f32 %v2487, %v2679
    %v2681 = vpop.f32.mrb[0].mxu0
    %v2682 = vadd.f32 %v2489, %v2681
    %v2683 = vpop.f32.mrb[0].mxu0
    %v2684 = vadd.f32 %v2491, %v2683
    %v2685 = vpop.f32.mrb[0].mxu0
    %v2686 = vadd.f32 %v2493, %v2685
    %2687 = vmatprep.mubr.bf16.mxu0 0
    %2688 = vmatmul.mubr.bf16.gmra.mrb[0].mxu0 %v292
    %v2689 = vpop.f32.mrb[0].mxu0
    %v2690 = vadd.f32 %v2497, %v2689
    %v2691 = vpop.f32.mrb[0].mxu0
    %v2692 = vadd.f32 %v2499, %v2691
    %v2693 = vpop.f32.mrb[0].mxu0
    %v2694 = vadd.f32 %v2501, %v2693
    %v2695 = vpop.f32.mrb[0].mxu0
    %v2696 = vadd.f32 %v2503, %v2695
    %2697 = vmatprep.mubr.bf16.mxu0 0
    %2698 = vmatmul.mubr.bf16.gmra.mrb[0].mxu0 %v297
    %v2699 = vpop.f32.mrb[0].mxu0
    %v2700 = vadd.f32 %v2507, %v2699
    %v2701 = vpop.f32.mrb[0].mxu0
    %v2702 = vadd.f32 %v2509, %v2701
    %v2703 = vpop.f32.mrb[0].mxu0
    %v2704 = vadd.f32 %v2511, %v2703
    %v2705 = vpop.f32.mrb[0].mxu0
    %v2706 = vadd.f32 %v2513, %v2705
    %2707 = vmatprep.mubr.bf16.mxu0 0
    %2708 = vmatmul.mubr.bf16.gmra.mrb[0].mxu0 %v302
    %v2709 = vpop.f32.mrb[0].mxu0
    %v2710 = vadd.f32 %v2517, %v2709
    %v2711 = vpop.f32.mrb[0].mxu0
    %v2712 = vadd.f32 %v2519, %v2711
    %v2713 = vpop.f32.mrb[0].mxu0
    %v2714 = vadd.f32 %v2521, %v2713
    %v2715 = vpop.f32.mrb[0].mxu0
    %v2716 = vadd.f32 %v2523, %v2715
    %2717 = vmatprep.mubr.bf16.mxu0 0
    %2718 = vmatmul.mubr.bf16.gmra.mrb[0].mxu0 %v307
    %v2719 = vpop.f32.mrb[0].mxu0
    %v2720 = vadd.f32 %v2527, %v2719
    %v2721 = vpop.f32.mrb[0].mxu0
    %v2722 = vadd.f32 %v2529, %v2721
    %v2723 = vpop.f32.mrb[0].mxu0
    %v2724 = vadd.f32 %v2531, %v2723
    %v2725 = vpop.f32.mrb[0].mxu0
    %v2726 = vadd.f32 %v2533, %v2725
    %2727 = vmatprep.mubr.bf16.mxu0 0
    %2728 = vmatmul.mubr.bf16.gmra.mrb[0].mxu0 %v312
    %v2729 = vpop.f32.mrb[0].mxu0
    %v2730 = vadd.f32 %v2537, %v2729
    %v2731 = vpop.f32.mrb[0].mxu0
    %v2732 = vadd.f32 %v2539, %v2731
    %v2733 = vpop.f32.mrb[0].mxu0
    %v2734 = vadd.f32 %v2541, %v2733
    %v2735 = vpop.f32.mrb[0].mxu0
    %v2736 = vadd.f32 %v2543, %v2735
    %2737 = vmatprep.mubr.bf16.mxu0 0
    %2738 = vmatmul.mubr.bf16.gmra.mrb[0].mxu0 %v317
    %v2739 = vpop.f32.mrb[0].mxu0
    %v2740 = vadd.f32 %v2547, %v2739
    %v2741 = vpop.f32.mrb[0].mxu0
    %v2742 = vadd.f32 %v2549, %v2741
    %v2743 = vpop.f32.mrb[0].mxu0
    %v2744 = vadd.f32 %v2551, %v2743
    %v2745 = vpop.f32.mrb[0].mxu0
    %v2746 = vadd.f32 %v2553, %v2745
    %2747 = vmatprep.mubr.bf16.mxu0 0
    %2748 = vmatmul.mubr.bf16.gmra.mrb[0].mxu0 %v322
    %v2749 = vpop.f32.mrb[0].mxu0
    %v2750 = vadd.f32 %v2557, %v2749
    %v2751 = vpop.f32.mrb[0].mxu0
    %v2752 = vadd.f32 %v2559, %v2751
    %v2753 = vpop.f32.mrb[0].mxu0
    %v2754 = vadd.f32 %v2561, %v2753
    %v2755 = vpop.f32.mrb[0].mxu0
    %v2756 = vadd.f32 %v2563, %v2755
    %2757 = vmatprep.mubr.bf16.mxu0 0
    %2758 = vmatmul.mubr.bf16.gmra.mrb[0].mxu0 %v327
    %v2759 = vpop.f32.mrb[0].mxu0
    %v2760 = vadd.f32 %v2567, %v2759
    %v2761 = vpop.f32.mrb[0].mxu0
    %v2762 = vadd.f32 %v2569, %v2761
    %v2763 = vpop.f32.mrb[0].mxu0
    %v2764 = vadd.f32 %v2571, %v2763
    %v2765 = vpop.f32.mrb[0].mxu0
    %v2766 = vadd.f32 %v2573, %v2765
    %2767 = vmatprep.mubr.bf16.mxu0 0
    %2768 = vmatmul.mubr.bf16.gmra.mrb[0].mxu0 %v332
    %v2769 = vpop.f32.mrb[0].mxu0
    %v2770 = vadd.f32 %v2577, %v2769
    %v2771 = vpop.f32.mrb[0].mxu0
    %v2772 = vadd.f32 %v2579, %v2771
    %v2773 = vpop.f32.mrb[0].mxu0
    %v2774 = vadd.f32 %v2581, %v2773
    %v2775 = vpop.f32.mrb[0].mxu0
    %v2776 = vadd.f32 %v2583, %v2775
    %2777 = vmatprep.mubr.bf16.mxu0 0
    %2778 = vmatmul.mubr.bf16.gmra.mrb[0].mxu0 %v337
    %v2779 = vpop.f32.mrb[0].mxu0
    %v2780 = vadd.f32 %v2587, %v2779
    %v2781 = vpop.f32.mrb[0].mxu0
    %v2782 = vadd.f32 %v2589, %v2781
    %v2783 = vpop.f32.mrb[0].mxu0
    %v2784 = vadd.f32 %v2591, %v2783
    %v2785 = vpop.f32.mrb[0].mxu0
    %v2786 = vadd.f32 %v2593, %v2785
    %2787 = vmatprep.mubr.bf16.mxu0 0
    %2788 = vmatmul.mubr.bf16.gmra.mrb[0].mxu0 %v342
    %v2789 = vpop.f32.mrb[0].mxu0
    %v2790 = vadd.f32 %v2597, %v2789
    %v2791 = vpop.f32.mrb[0].mxu0
    %v2792 = vadd.f32 %v2599, %v2791
    %v2793 = vpop.f32.mrb[0].mxu0
    %v2794 = vadd.f32 %v2601, %v2793
    %v2795 = vpop.f32.mrb[0].mxu0
    %v2796 = vadd.f32 %v2603, %v2795
    %2797 = vmatprep.mubr.bf16.mxu0 0
    %2798 = vmatmul.mubr.bf16.gmra.mrb[0].mxu0 %v347
    %v2799 = vpop.f32.mrb[0].mxu0
    %v2800 = vadd.f32 %v2607, %v2799
    %v2801 = vpop.f32.mrb[0].mxu0
    %v2802 = vadd.f32 %v2609, %v2801
    %v2803 = vpop.f32.mrb[0].mxu0
    %v2804 = vadd.f32 %v2611, %v2803
    %v2805 = vpop.f32.mrb[0].mxu0
    %v2806 = vadd.f32 %v2613, %v2805
    %2807 = vmatprep.mubr.bf16.mxu0 0
    %2808 = vmatmul.mubr.bf16.gmra.mrb[0].mxu0 %v352
    %v2809 = vpop.f32.mrb[0].mxu0
    %v2810 = vadd.f32 %v2617, %v2809
    %v2811 = vpop.f32.mrb[0].mxu0
    %v2812 = vadd.f32 %v2619, %v2811
    %v2813 = vpop.f32.mrb[0].mxu0
    %v2814 = vadd.f32 %v2621, %v2813
    %v2815 = vpop.f32.mrb[0].mxu0
    %v2816 = vadd.f32 %v2623, %v2815
    %2817 = vdwg.mxu0
    %2818 = vmatprep.subr.bf16.mxu0 0
    %2819 = vmatpush1.bf16.msra.mxu0 %v1264
    %2820 = vmatprep.subr.bf16.mxu0 0
    %2821 = vmatpush1.bf16.msra.mxu0 %v1269
    %2822 = vmatprep.subr.bf16.mxu0 0
    %2823 = vmatpush1.bf16.msra.mxu0 %v1274
    %2824 = vmatprep.subr.bf16.mxu0 0
    %2825 = vmatpush1.bf16.msra.mxu0 %v1279
    %2826 = vmatprep.subr.bf16.mxu0 0
    %2827 = vmatpush1.bf16.msra.mxu0 %v1284
    %2828 = vmatprep.subr.bf16.mxu0 0
    %2829 = vmatpush1.bf16.msra.mxu0 %v1289
    %2830 = vmatprep.subr.bf16.mxu0 0
    %2831 = vmatpush1.bf16.msra.mxu0 %v1294
    %2832 = vmatprep.subr.bf16.mxu0 0
    %2833 = vmatpush1.bf16.msra.mxu0 %v1299
    %2834 = vmatprep.subr.bf16.mxu0 0
    %2835 = vmatpush1.bf16.msra.mxu0 %v1304
    %2836 = vmatprep.subr.bf16.mxu0 0
    %2837 = vmatpush1.bf16.msra.mxu0 %v1309
    %2838 = vmatprep.subr.bf16.mxu0 0
    %2839 = vmatpush1.bf16.msra.mxu0 %v1314
    %2840 = vmatprep.subr.bf16.mxu0 0
    %2841 = vmatpush1.bf16.msra.mxu0 %v1319
    %2842 = vmatprep.subr.bf16.mxu0 0
    %2843 = vmatpush1.bf16.msra.mxu0 %v1324
    %2844 = vmatprep.subr.bf16.mxu0 0
    %2845 = vmatpush1.bf16.msra.mxu0 %v1329
    %2846 = vmatprep.subr.bf16.mxu0 0
    %2847 = vmatpush1.bf16.msra.mxu0 %v1334
    %2848 = vmatprep.subr.bf16.mxu0 0
    %2849 = vmatpush1.bf16.msra.mxu0 %v1339
    %2850 = vmatprep.mubr.bf16.mxu0 %v274
    %2851 = vmatmul.mubr.bf16.gmra.mrb[0].mxu0 %v273
    %v2852 = vpop.f32.mrb[0].mxu0
    %v2853 = vadd.f32 %v614, %v2852
    %v2854 = vpop.f32.mrb[0].mxu0
    %v2855 = vpop.f32.mrb[0].mxu0
    %v2856 = vadd.f32 %v614, %v2855
    %v2857 = vpop.f32.mrb[0].mxu0
    %2858 = vmatprep.mubr.bf16.mxu0 %v279
    %2859 = vmatmul.mubr.bf16.gmra.mrb[0].mxu0 %v278
    %v2860 = vpop.f32.mrb[0].mxu0
    %v2861 = vadd.f32 %v614, %v2860
    %v2862 = vpop.f32.mrb[0].mxu0
    %v2863 = vpop.f32.mrb[0].mxu0
    %v2864 = vadd.f32 %v614, %v2863
    %v2865 = vpop.f32.mrb[0].mxu0
    %2866 = vmatprep.mubr.bf16.mxu0 %v284
    %2867 = vmatmul.mubr.bf16.gmra.mrb[0].mxu0 %v283
    %v2868 = vpop.f32.mrb[0].mxu0
    %v2869 = vadd.f32 %v614, %v2868
    %v2870 = vpop.f32.mrb[0].mxu0
    %v2871 = vpop.f32.mrb[0].mxu0
    %v2872 = vadd.f32 %v614, %v2871
    %v2873 = vpop.f32.mrb[0].mxu0
    %2874 = vmatprep.mubr.bf16.mxu0 %v289
    %2875 = vmatmul.mubr.bf16.gmra.mrb[0].mxu0 %v288
    %v2876 = vpop.f32.mrb[0].mxu0
    %v2877 = vadd.f32 %v614, %v2876
    %v2878 = vpop.f32.mrb[0].mxu0
    %v2879 = vpop.f32.mrb[0].mxu0
    %v2880 = vadd.f32 %v614, %v2879
    %v2881 = vpop.f32.mrb[0].mxu0
    %2882 = vmatprep.mubr.bf16.mxu0 %v294
    %2883 = vmatmul.mubr.bf16.gmra.mrb[0].mxu0 %v293
    %v2884 = vpop.f32.mrb[0].mxu0
    %v2885 = vadd.f32 %v614, %v2884
    %v2886 = vpop.f32.mrb[0].mxu0
    %v2887 = vpop.f32.mrb[0].mxu0
    %v2888 = vadd.f32 %v614, %v2887
    %v2889 = vpop.f32.mrb[0].mxu0
    %2890 = vmatprep.mubr.bf16.mxu0 %v299
    %2891 = vmatmul.mubr.bf16.gmra.mrb[0].mxu0 %v298
    %v2892 = vpop.f32.mrb[0].mxu0
    %v2893 = vadd.f32 %v614, %v2892
    %v2894 = vpop.f32.mrb[0].mxu0
    %v2895 = vpop.f32.mrb[0].mxu0
    %v2896 = vadd.f32 %v614, %v2895
    %v2897 = vpop.f32.mrb[0].mxu0
    %2898 = vmatprep.mubr.bf16.mxu0 %v304
    %2899 = vmatmul.mubr.bf16.gmra.mrb[0].mxu0 %v303
    %v2900 = vpop.f32.mrb[0].mxu0
    %v2901 = vadd.f32 %v614, %v2900
    %v2902 = vpop.f32.mrb[0].mxu0
    %v2903 = vpop.f32.mrb[0].mxu0
    %v2904 = vadd.f32 %v614, %v2903
    %v2905 = vpop.f32.mrb[0].mxu0
    %2906 = vmatprep.mubr.bf16.mxu0 %v309
    %2907 = vmatmul.mubr.bf16.gmra.mrb[0].mxu0 %v308
    %v2908 = vpop.f32.mrb[0].mxu0
    %v2909 = vadd.f32 %v614, %v2908
    %v2910 = vpop.f32.mrb[0].mxu0
    %v2911 = vpop.f32.mrb[0].mxu0
    %v2912 = vadd.f32 %v614, %v2911
    %v2913 = vpop.f32.mrb[0].mxu0
    %2914 = vmatprep.mubr.bf16.mxu0 %v314
    %2915 = vmatmul.mubr.bf16.gmra.mrb[0].mxu0 %v313
    %v2916 = vpop.f32.mrb[0].mxu0
    %v2917 = vadd.f32 %v614, %v2916
    %v2918 = vpop.f32.mrb[0].mxu0
    %v2919 = vpop.f32.mrb[0].mxu0
    %v2920 = vadd.f32 %v614, %v2919
    %v2921 = vpop.f32.mrb[0].mxu0
    %2922 = vmatprep.mubr.bf16.mxu0 %v319
    %2923 = vmatmul.mubr.bf16.gmra.mrb[0].mxu0 %v318
    %v2924 = vpop.f32.mrb[0].mxu0
    %v2925 = vadd.f32 %v614, %v2924
    %v2926 = vpop.f32.mrb[0].mxu0
    %v2927 = vpop.f32.mrb[0].mxu0
    %v2928 = vadd.f32 %v614, %v2927
    %v2929 = vpop.f32.mrb[0].mxu0
    %2930 = vmatprep.mubr.bf16.mxu0 %v324
    %2931 = vmatmul.mubr.bf16.gmra.mrb[0].mxu0 %v323
    %v2932 = vpop.f32.mrb[0].mxu0
    %v2933 = vadd.f32 %v614, %v2932
    %v2934 = vpop.f32.mrb[0].mxu0
    %v2935 = vpop.f32.mrb[0].mxu0
    %v2936 = vadd.f32 %v614, %v2935
    %v2937 = vpop.f32.mrb[0].mxu0
    %2938 = vmatprep.mubr.bf16.mxu0 %v329
    %2939 = vmatmul.mubr.bf16.gmra.mrb[0].mxu0 %v328
    %v2940 = vpop.f32.mrb[0].mxu0
    %v2941 = vadd.f32 %v614, %v2940
    %v2942 = vpop.f32.mrb[0].mxu0
    %v2943 = vpop.f32.mrb[0].mxu0
    %v2944 = vadd.f32 %v614, %v2943
    %v2945 = vpop.f32.mrb[0].mxu0
    %2946 = vmatprep.mubr.bf16.mxu0 %v334
    %2947 = vmatmul.mubr.bf16.gmra.mrb[0].mxu0 %v333
    %v2948 = vpop.f32.mrb[0].mxu0
    %v2949 = vadd.f32 %v614, %v2948
    %v2950 = vpop.f32.mrb[0].mxu0
    %v2951 = vpop.f32.mrb[0].mxu0
    %v2952 = vadd.f32 %v614, %v2951
    %v2953 = vpop.f32.mrb[0].mxu0
    %2954 = vmatprep.mubr.bf16.mxu0 %v339
    %2955 = vmatmul.mubr.bf16.gmra.mrb[0].mxu0 %v338
    %v2956 = vpop.f32.mrb[0].mxu0
    %v2957 = vadd.f32 %v614, %v2956
    %v2958 = vpop.f32.mrb[0].mxu0
    %v2959 = vpop.f32.mrb[0].mxu0
    %v2960 = vadd.f32 %v614, %v2959
    %v2961 = vpop.f32.mrb[0].mxu0
    %2962 = vmatprep.mubr.bf16.mxu0 %v344
    %2963 = vmatmul.mubr.bf16.gmra.mrb[0].mxu0 %v343
    %v2964 = vpop.f32.mrb[0].mxu0
    %v2965 = vadd.f32 %v614, %v2964
    %v2966 = vpop.f32.mrb[0].mxu0
    %v2967 = vpop.f32.mrb[0].mxu0
    %v2968 = vadd.f32 %v614, %v2967
    %v2969 = vpop.f32.mrb[0].mxu0
    %2970 = vmatprep.mubr.bf16.mxu0 %v349
    %2971 = vmatmul.mubr.bf16.gmra.mrb[0].mxu0 %v348
    %v2972 = vpop.f32.mrb[0].mxu0
    %v2973 = vadd.f32 %v614, %v2972
    %v2974 = vpop.f32.mrb[0].mxu0
    %v2975 = vpop.f32.mrb[0].mxu0
    %v2976 = vadd.f32 %v614, %v2975
    %v2977 = vpop.f32.mrb[0].mxu0
    %2978 = vdwg.mxu0
    %2979 = vmatprep.subr.bf16.mxu0 0
    %2980 = vmatpush1.bf16.msra.mxu0 %v1344
    %2981 = vmatprep.subr.bf16.mxu0 0
    %2982 = vmatpush1.bf16.msra.mxu0 %v1349
    %2983 = vmatprep.subr.bf16.mxu0 0
    %2984 = vmatpush1.bf16.msra.mxu0 %v1354
    %2985 = vmatprep.subr.bf16.mxu0 0
    %2986 = vmatpush1.bf16.msra.mxu0 %v1359
    %2987 = vmatprep.subr.bf16.mxu0 0
    %2988 = vmatpush1.bf16.msra.mxu0 %v1364
    %2989 = vmatprep.subr.bf16.mxu0 0
    %2990 = vmatpush1.bf16.msra.mxu0 %v1369
    %2991 = vmatprep.subr.bf16.mxu0 0
    %2992 = vmatpush1.bf16.msra.mxu0 %v1374
    %2993 = vmatprep.subr.bf16.mxu0 0
    %2994 = vmatpush1.bf16.msra.mxu0 %v1379
    %2995 = vmatprep.subr.bf16.mxu0 0
    %2996 = vmatpush1.bf16.msra.mxu0 %v1384
    %2997 = vmatprep.subr.bf16.mxu0 0
    %2998 = vmatpush1.bf16.msra.mxu0 %v1389
    %2999 = vmatprep.subr.bf16.mxu0 0
    %3000 = vmatpush1.bf16.msra.mxu0 %v1394
    %3001 = vmatprep.subr.bf16.mxu0 0
    %3002 = vmatpush1.bf16.msra.mxu0 %v1399
    %3003 = vmatprep.subr.bf16.mxu0 0
    %3004 = vmatpush1.bf16.msra.mxu0 %v1404
    %3005 = vmatprep.subr.bf16.mxu0 0
    %3006 = vmatpush1.bf16.msra.mxu0 %v1409
    %3007 = vmatprep.subr.bf16.mxu0 0
    %3008 = vmatpush1.bf16.msra.mxu0 %v1414
    %3009 = vmatprep.subr.bf16.mxu0 0
    %3010 = vmatpush1.bf16.msra.mxu0 %v1419
    %3011 = vmatprep.mubr.bf16.mxu0 %v276
    %3012 = vmatmul.mubr.bf16.gmra.mrb[0].mxu0 %v275
    %v3013 = vpop.f32.mrb[0].mxu0
    %v3014 = vadd.f32 %v2853, %v3013
    %v3015 = vpop.f32.mrb[0].mxu0
    %v3016 = vpop.f32.mrb[0].mxu0
    %v3017 = vadd.f32 %v2856, %v3016
    %v3018 = vpop.f32.mrb[0].mxu0
    %3019 = vmatprep.mubr.bf16.mxu0 %v281
    %3020 = vmatmul.mubr.bf16.gmra.mrb[0].mxu0 %v280
    %v3021 = vpop.f32.mrb[0].mxu0
    %v3022 = vadd.f32 %v2861, %v3021
    %v3023 = vpop.f32.mrb[0].mxu0
    %v3024 = vpop.f32.mrb[0].mxu0
    %v3025 = vadd.f32 %v2864, %v3024
    %v3026 = vpop.f32.mrb[0].mxu0
    %3027 = vmatprep.mubr.bf16.mxu0 %v286
    %3028 = vmatmul.mubr.bf16.gmra.mrb[0].mxu0 %v285
    %v3029 = vpop.f32.mrb[0].mxu0
    %v3030 = vadd.f32 %v2869, %v3029
    %v3031 = vpop.f32.mrb[0].mxu0
    %v3032 = vpop.f32.mrb[0].mxu0
    %v3033 = vadd.f32 %v2872, %v3032
    %v3034 = vpop.f32.mrb[0].mxu0
    %3035 = vmatprep.mubr.bf16.mxu0 %v291
    %3036 = vmatmul.mubr.bf16.gmra.mrb[0].mxu0 %v290
    %v3037 = vpop.f32.mrb[0].mxu0
    %v3038 = vadd.f32 %v2877, %v3037
    %v3039 = vpop.f32.mrb[0].mxu0
    %v3040 = vpop.f32.mrb[0].mxu0
    %v3041 = vadd.f32 %v2880, %v3040
    %v3042 = vpop.f32.mrb[0].mxu0
    %3043 = vmatprep.mubr.bf16.mxu0 %v296
    %3044 = vmatmul.mubr.bf16.gmra.mrb[0].mxu0 %v295
    %v3045 = vpop.f32.mrb[0].mxu0
    %v3046 = vadd.f32 %v2885, %v3045
    %v3047 = vpop.f32.mrb[0].mxu0
    %v3048 = vpop.f32.mrb[0].mxu0
    %v3049 = vadd.f32 %v2888, %v3048
    %v3050 = vpop.f32.mrb[0].mxu0
    %3051 = vmatprep.mubr.bf16.mxu0 %v301
    %3052 = vmatmul.mubr.bf16.gmra.mrb[0].mxu0 %v300
    %v3053 = vpop.f32.mrb[0].mxu0
    %v3054 = vadd.f32 %v2893, %v3053
    %v3055 = vpop.f32.mrb[0].mxu0
    %v3056 = vpop.f32.mrb[0].mxu0
    %v3057 = vadd.f32 %v2896, %v3056
    %v3058 = vpop.f32.mrb[0].mxu0
    %3059 = vmatprep.mubr.bf16.mxu0 %v306
    %3060 = vmatmul.mubr.bf16.gmra.mrb[0].mxu0 %v305
    %v3061 = vpop.f32.mrb[0].mxu0
    %v3062 = vadd.f32 %v2901, %v3061
    %v3063 = vpop.f32.mrb[0].mxu0
    %v3064 = vpop.f32.mrb[0].mxu0
    %v3065 = vadd.f32 %v2904, %v3064
    %v3066 = vpop.f32.mrb[0].mxu0
    %3067 = vmatprep.mubr.bf16.mxu0 %v311
    %3068 = vmatmul.mubr.bf16.gmra.mrb[0].mxu0 %v310
    %v3069 = vpop.f32.mrb[0].mxu0
    %v3070 = vadd.f32 %v2909, %v3069
    %v3071 = vpop.f32.mrb[0].mxu0
    %v3072 = vpop.f32.mrb[0].mxu0
    %v3073 = vadd.f32 %v2912, %v3072
    %v3074 = vpop.f32.mrb[0].mxu0
    %3075 = vmatprep.mubr.bf16.mxu0 %v316
    %3076 = vmatmul.mubr.bf16.gmra.mrb[0].mxu0 %v315
    %v3077 = vpop.f32.mrb[0].mxu0
    %v3078 = vadd.f32 %v2917, %v3077
    %v3079 = vpop.f32.mrb[0].mxu0
    %v3080 = vpop.f32.mrb[0].mxu0
    %v3081 = vadd.f32 %v2920, %v3080
    %v3082 = vpop.f32.mrb[0].mxu0
    %3083 = vmatprep.mubr.bf16.mxu0 %v321
    %3084 = vmatmul.mubr.bf16.gmra.mrb[0].mxu0 %v320
    %v3085 = vpop.f32.mrb[0].mxu0
    %v3086 = vadd.f32 %v2925, %v3085
    %v3087 = vpop.f32.mrb[0].mxu0
    %v3088 = vpop.f32.mrb[0].mxu0
    %v3089 = vadd.f32 %v2928, %v3088
    %v3090 = vpop.f32.mrb[0].mxu0
    %3091 = vmatprep.mubr.bf16.mxu0 %v326
    %3092 = vmatmul.mubr.bf16.gmra.mrb[0].mxu0 %v325
    %v3093 = vpop.f32.mrb[0].mxu0
    %v3094 = vadd.f32 %v2933, %v3093
    %v3095 = vpop.f32.mrb[0].mxu0
    %v3096 = vpop.f32.mrb[0].mxu0
    %v3097 = vadd.f32 %v2936, %v3096
    %v3098 = vpop.f32.mrb[0].mxu0
    %3099 = vmatprep.mubr.bf16.mxu0 %v331
    %3100 = vmatmul.mubr.bf16.gmra.mrb[0].mxu0 %v330
    %v3101 = vpop.f32.mrb[0].mxu0
    %v3102 = vadd.f32 %v2941, %v3101
    %v3103 = vpop.f32.mrb[0].mxu0
    %v3104 = vpop.f32.mrb[0].mxu0
    %v3105 = vadd.f32 %v2944, %v3104
    %v3106 = vpop.f32.mrb[0].mxu0
    %3107 = vmatprep.mubr.bf16.mxu0 %v336
    %3108 = vmatmul.mubr.bf16.gmra.mrb[0].mxu0 %v335
    %v3109 = vpop.f32.mrb[0].mxu0
    %v3110 = vadd.f32 %v2949, %v3109
    %v3111 = vpop.f32.mrb[0].mxu0
    %v3112 = vpop.f32.mrb[0].mxu0
    %v3113 = vadd.f32 %v2952, %v3112
    %v3114 = vpop.f32.mrb[0].mxu0
    %3115 = vmatprep.mubr.bf16.mxu0 %v341
    %3116 = vmatmul.mubr.bf16.gmra.mrb[0].mxu0 %v340
    %v3117 = vpop.f32.mrb[0].mxu0
    %v3118 = vadd.f32 %v2957, %v3117
    %v3119 = vpop.f32.mrb[0].mxu0
    %v3120 = vpop.f32.mrb[0].mxu0
    %v3121 = vadd.f32 %v2960, %v3120
    %v3122 = vpop.f32.mrb[0].mxu0
    %3123 = vmatprep.mubr.bf16.mxu0 %v346
    %3124 = vmatmul.mubr.bf16.gmra.mrb[0].mxu0 %v345
    %v3125 = vpop.f32.mrb[0].mxu0
    %v3126 = vadd.f32 %v2965, %v3125
    %v3127 = vpop.f32.mrb[0].mxu0
    %v3128 = vpop.f32.mrb[0].mxu0
    %v3129 = vadd.f32 %v2968, %v3128
    %v3130 = vpop.f32.mrb[0].mxu0
    %3131 = vmatprep.mubr.bf16.mxu0 %v351
    %3132 = vmatmul.mubr.bf16.gmra.mrb[0].mxu0 %v350
    %v3133 = vpop.f32.mrb[0].mxu0
    %v3134 = vadd.f32 %v2973, %v3133
    %v3135 = vpop.f32.mrb[0].mxu0
    %v3136 = vpop.f32.mrb[0].mxu0
    %v3137 = vadd.f32 %v2976, %v3136
    %v3138 = vpop.f32.mrb[0].mxu0
    %3139 = vdwg.mxu0
    %3140 = vmatprep.subr.bf16.mxu0 0
    %3141 = vmatpush1.bf16.msra.mxu0 %v1424
    %3142 = vmatprep.subr.bf16.mxu0 0
    %3143 = vmatpush1.bf16.msra.mxu0 %v1429
    %3144 = vmatprep.subr.bf16.mxu0 0
    %3145 = vmatpush1.bf16.msra.mxu0 %v1434
    %3146 = vmatprep.subr.bf16.mxu0 0
    %3147 = vmatpush1.bf16.msra.mxu0 %v1439
    %3148 = vmatprep.subr.bf16.mxu0 0
    %3149 = vmatpush1.bf16.msra.mxu0 %v1444
    %3150 = vmatprep.subr.bf16.mxu0 0
    %3151 = vmatpush1.bf16.msra.mxu0 %v1449
    %3152 = vmatprep.subr.bf16.mxu0 0
    %3153 = vmatpush1.bf16.msra.mxu0 %v1454
    %3154 = vmatprep.subr.bf16.mxu0 0
    %3155 = vmatpush1.bf16.msra.mxu0 %v1459
    %3156 = vmatprep.subr.bf16.mxu0 0
    %3157 = vmatpush1.bf16.msra.mxu0 0
    %3158 = vmatprep.subr.bf16.mxu0 0
    %3159 = vmatpush1.bf16.msra.mxu0 0
    %3160 = vmatprep.subr.bf16.mxu0 0
    %3161 = vmatpush1.bf16.msra.mxu0 0
    %3162 = vmatprep.subr.bf16.mxu0 0
    %3163 = vmatpush1.bf16.msra.mxu0 0
    %3164 = vmatprep.subr.bf16.mxu0 0
    %3165 = vmatpush1.bf16.msra.mxu0 0
    %3166 = vmatprep.subr.bf16.mxu0 0
    %3167 = vmatpush1.bf16.msra.mxu0 0
    %3168 = vmatprep.subr.bf16.mxu0 0
    %3169 = vmatpush1.bf16.msra.mxu0 0
    %3170 = vmatprep.subr.bf16.mxu0 0
    %3171 = vmatpush1.bf16.msra.mxu0 0
    %3172 = vmatprep.mubr.bf16.mxu0 0
    %3173 = vmatmul.mubr.bf16.gmra.mrb[0].mxu0 %v277
    %v3174 = vpop.f32.mrb[0].mxu0
    %v3175 = vadd.f32 %v3014, %v3174
    %v3176 = vpop.f32.mrb[0].mxu0
    %v3177 = vpop.f32.mrb[0].mxu0
    %v3178 = vadd.f32 %v3017, %v3177
    %v3179 = vpop.f32.mrb[0].mxu0
    %3180 = vmatprep.mubr.bf16.mxu0 0
    %3181 = vmatmul.mubr.bf16.gmra.mrb[0].mxu0 %v282
    %v3182 = vpop.f32.mrb[0].mxu0
    %v3183 = vadd.f32 %v3022, %v3182
    %v3184 = vpop.f32.mrb[0].mxu0
    %v3185 = vpop.f32.mrb[0].mxu0
    %v3186 = vadd.f32 %v3025, %v3185
    %v3187 = vpop.f32.mrb[0].mxu0
    %3188 = vmatprep.mubr.bf16.mxu0 0
    %3189 = vmatmul.mubr.bf16.gmra.mrb[0].mxu0 %v287
    %v3190 = vpop.f32.mrb[0].mxu0
    %v3191 = vadd.f32 %v3030, %v3190
    %v3192 = vpop.f32.mrb[0].mxu0
    %v3193 = vpop.f32.mrb[0].mxu0
    %v3194 = vadd.f32 %v3033, %v3193
    %v3195 = vpop.f32.mrb[0].mxu0
    %3196 = vmatprep.mubr.bf16.mxu0 0
    %3197 = vmatmul.mubr.bf16.gmra.mrb[0].mxu0 %v292
    %v3198 = vpop.f32.mrb[0].mxu0
    %v3199 = vadd.f32 %v3038, %v3198
    %v3200 = vpop.f32.mrb[0].mxu0
    %v3201 = vpop.f32.mrb[0].mxu0
    %v3202 = vadd.f32 %v3041, %v3201
    %v3203 = vpop.f32.mrb[0].mxu0
    %3204 = vmatprep.mubr.bf16.mxu0 0
    %3205 = vmatmul.mubr.bf16.gmra.mrb[0].mxu0 %v297
    %v3206 = vpop.f32.mrb[0].mxu0
    %v3207 = vadd.f32 %v3046, %v3206
    %v3208 = vpop.f32.mrb[0].mxu0
    %v3209 = vpop.f32.mrb[0].mxu0
    %v3210 = vadd.f32 %v3049, %v3209
    %v3211 = vpop.f32.mrb[0].mxu0
    %3212 = vmatprep.mubr.bf16.mxu0 0
    %3213 = vmatmul.mubr.bf16.gmra.mrb[0].mxu0 %v302
    %v3214 = vpop.f32.mrb[0].mxu0
    %v3215 = vadd.f32 %v3054, %v3214
    %v3216 = vpop.f32.mrb[0].mxu0
    %v3217 = vpop.f32.mrb[0].mxu0
    %v3218 = vadd.f32 %v3057, %v3217
    %v3219 = vpop.f32.mrb[0].mxu0
    %3220 = vmatprep.mubr.bf16.mxu0 0
    %3221 = vmatmul.mubr.bf16.gmra.mrb[0].mxu0 %v307
    %v3222 = vpop.f32.mrb[0].mxu0
    %v3223 = vadd.f32 %v3062, %v3222
    %v3224 = vpop.f32.mrb[0].mxu0
    %v3225 = vpop.f32.mrb[0].mxu0
    %v3226 = vadd.f32 %v3065, %v3225
    %v3227 = vpop.f32.mrb[0].mxu0
    %3228 = vmatprep.mubr.bf16.mxu0 0
    %3229 = vmatmul.mubr.bf16.gmra.mrb[0].mxu0 %v312
    %v3230 = vpop.f32.mrb[0].mxu0
    %v3231 = vadd.f32 %v3070, %v3230
    %v3232 = vpop.f32.mrb[0].mxu0
    %v3233 = vpop.f32.mrb[0].mxu0
    %v3234 = vadd.f32 %v3073, %v3233
    %v3235 = vpop.f32.mrb[0].mxu0
    %3236 = vmatprep.mubr.bf16.mxu0 0
    %3237 = vmatmul.mubr.bf16.gmra.mrb[0].mxu0 %v317
    %v3238 = vpop.f32.mrb[0].mxu0
    %v3239 = vadd.f32 %v3078, %v3238
    %v3240 = vpop.f32.mrb[0].mxu0
    %v3241 = vpop.f32.mrb[0].mxu0
    %v3242 = vadd.f32 %v3081, %v3241
    %v3243 = vpop.f32.mrb[0].mxu0
    %3244 = vmatprep.mubr.bf16.mxu0 0
    %3245 = vmatmul.mubr.bf16.gmra.mrb[0].mxu0 %v322
    %v3246 = vpop.f32.mrb[0].mxu0
    %v3247 = vadd.f32 %v3086, %v3246
    %v3248 = vpop.f32.mrb[0].mxu0
    %v3249 = vpop.f32.mrb[0].mxu0
    %v3250 = vadd.f32 %v3089, %v3249
    %v3251 = vpop.f32.mrb[0].mxu0
    %3252 = vmatprep.mubr.bf16.mxu0 0
    %3253 = vmatmul.mubr.bf16.gmra.mrb[0].mxu0 %v327
    %v3254 = vpop.f32.mrb[0].mxu0
    %v3255 = vadd.f32 %v3094, %v3254
    %v3256 = vpop.f32.mrb[0].mxu0
    %v3257 = vpop.f32.mrb[0].mxu0
    %v3258 = vadd.f32 %v3097, %v3257
    %v3259 = vpop.f32.mrb[0].mxu0
    %3260 = vmatprep.mubr.bf16.mxu0 0
    %3261 = vmatmul.mubr.bf16.gmra.mrb[0].mxu0 %v332
    %v3262 = vpop.f32.mrb[0].mxu0
    %v3263 = vadd.f32 %v3102, %v3262
    %v3264 = vpop.f32.mrb[0].mxu0
    %v3265 = vpop.f32.mrb[0].mxu0
    %v3266 = vadd.f32 %v3105, %v3265
    %v3267 = vpop.f32.mrb[0].mxu0
    %3268 = vmatprep.mubr.bf16.mxu0 0
    %3269 = vmatmul.mubr.bf16.gmra.mrb[0].mxu0 %v337
    %v3270 = vpop.f32.mrb[0].mxu0
    %v3271 = vadd.f32 %v3110, %v3270
    %v3272 = vpop.f32.mrb[0].mxu0
    %v3273 = vpop.f32.mrb[0].mxu0
    %v3274 = vadd.f32 %v3113, %v3273
    %v3275 = vpop.f32.mrb[0].mxu0
    %3276 = vmatprep.mubr.bf16.mxu0 0
    %3277 = vmatmul.mubr.bf16.gmra.mrb[0].mxu0 %v342
    %v3278 = vpop.f32.mrb[0].mxu0
    %v3279 = vadd.f32 %v3118, %v3278
    %v3280 = vpop.f32.mrb[0].mxu0
    %v3281 = vpop.f32.mrb[0].mxu0
    %v3282 = vadd.f32 %v3121, %v3281
    %v3283 = vpop.f32.mrb[0].mxu0
    %3284 = vmatprep.mubr.bf16.mxu0 0
    %3285 = vmatmul.mubr.bf16.gmra.mrb[0].mxu0 %v347
    %v3286 = vpop.f32.mrb[0].mxu0
    %v3287 = vadd.f32 %v3126, %v3286
    %v3288 = vpop.f32.mrb[0].mxu0
    %v3289 = vpop.f32.mrb[0].mxu0
    %v3290 = vadd.f32 %v3129, %v3289
    %v3291 = vpop.f32.mrb[0].mxu0
    %3292 = vmatprep.mubr.bf16.mxu0 0
    %3293 = vmatmul.mubr.bf16.gmra.mrb[0].mxu0 %v352
    %v3294 = vpop.f32.mrb[0].mxu0
    %v3295 = vadd.f32 %v3134, %v3294
    %v3296 = vpop.f32.mrb[0].mxu0
    %v3297 = vpop.f32.mrb[0].mxu0
    %v3298 = vadd.f32 %v3137, %v3297
    %v3299 = vpop.f32.mrb[0].mxu0
    %3300 = vdwg.mxu0
    %vm3301 = vcmp.ge.f32.partialorder %v2081, 0.0
    %vm3302 = vcmp.ge.f32.partialorder %v2083, 0.0
    %vm3303 = vcmp.ge.f32.partialorder %v2660, 0.0
    %vm3304 = vcmp.ge.f32.partialorder %v2662, 0.0
    %vm3305 = vcmp.ge.f32.partialorder %v3175, 0.0
    %vm3306 = vcmp.ge.f32.partialorder %v2085, 0.0
    %vm3307 = vcmp.ge.f32.partialorder %v2087, 0.0
    %vm3308 = vcmp.ge.f32.partialorder %v2664, 0.0
    %vm3309 = vcmp.ge.f32.partialorder %v2666, 0.0
    %vm3310 = vcmp.ge.f32.partialorder %v3178, 0.0
    %vm3311 = vcmp.ge.f32.partialorder %v2091, 0.0
    %vm3312 = vcmp.ge.f32.partialorder %v2093, 0.0
    %vm3313 = vcmp.ge.f32.partialorder %v2670, 0.0
    %vm3314 = vcmp.ge.f32.partialorder %v2672, 0.0
    %vm3315 = vcmp.ge.f32.partialorder %v3183, 0.0
    %vm3316 = vcmp.ge.f32.partialorder %v2095, 0.0
    %vm3317 = vcmp.ge.f32.partialorder %v2097, 0.0
    %vm3318 = vcmp.ge.f32.partialorder %v2674, 0.0
    %vm3319 = vcmp.ge.f32.partialorder %v2676, 0.0
    %vm3320 = vcmp.ge.f32.partialorder %v3186, 0.0
    %vm3321 = vcmp.ge.f32.partialorder %v2101, 0.0
    %vm3322 = vcmp.ge.f32.partialorder %v2103, 0.0
    %vm3323 = vcmp.ge.f32.partialorder %v2680, 0.0
    %vm3324 = vcmp.ge.f32.partialorder %v2682, 0.0
    %vm3325 = vcmp.ge.f32.partialorder %v3191, 0.0
    %vm3326 = vcmp.ge.f32.partialorder %v2105, 0.0
    %vm3327 = vcmp.ge.f32.partialorder %v2107, 0.0
    %vm3328 = vcmp.ge.f32.partialorder %v2684, 0.0
    %vm3329 = vcmp.ge.f32.partialorder %v2686, 0.0
    %vm3330 = vcmp.ge.f32.partialorder %v3194, 0.0
    %vm3331 = vcmp.ge.f32.partialorder %v2111, 0.0
    %vm3332 = vcmp.ge.f32.partialorder %v2113, 0.0
    %vm3333 = vcmp.ge.f32.partialorder %v2690, 0.0
    %vm3334 = vcmp.ge.f32.partialorder %v2692, 0.0
    %vm3335 = vcmp.ge.f32.partialorder %v3199, 0.0
    %vm3336 = vcmp.ge.f32.partialorder %v2115, 0.0
    %vm3337 = vcmp.ge.f32.partialorder %v2117, 0.0
    %vm3338 = vcmp.ge.f32.partialorder %v2694, 0.0
    %vm3339 = vcmp.ge.f32.partialorder %v2696, 0.0
    %vm3340 = vcmp.ge.f32.partialorder %v3202, 0.0
    %vm3341 = vcmp.ge.f32.partialorder %v2121, 0.0
    %vm3342 = vcmp.ge.f32.partialorder %v2123, 0.0
    %vm3343 = vcmp.ge.f32.partialorder %v2700, 0.0
    %vm3344 = vcmp.ge.f32.partialorder %v2702, 0.0
    %vm3345 = vcmp.ge.f32.partialorder %v3207, 0.0
    %vm3346 = vcmp.ge.f32.partialorder %v2125, 0.0
    %vm3347 = vcmp.ge.f32.partialorder %v2127, 0.0
    %vm3348 = vcmp.ge.f32.partialorder %v2704, 0.0
    %vm3349 = vcmp.ge.f32.partialorder %v2706, 0.0
    %vm3350 = vcmp.ge.f32.partialorder %v3210, 0.0
    %vm3351 = vcmp.ge.f32.partialorder %v2131, 0.0
    %vm3352 = vcmp.ge.f32.partialorder %v2133, 0.0
    %vm3353 = vcmp.ge.f32.partialorder %v2710, 0.0
    %vm3354 = vcmp.ge.f32.partialorder %v2712, 0.0
    %vm3355 = vcmp.ge.f32.partialorder %v3215, 0.0
    %vm3356 = vcmp.ge.f32.partialorder %v2135, 0.0
    %vm3357 = vcmp.ge.f32.partialorder %v2137, 0.0
    %vm3358 = vcmp.ge.f32.partialorder %v2714, 0.0
    %vm3359 = vcmp.ge.f32.partialorder %v2716, 0.0
    %vm3360 = vcmp.ge.f32.partialorder %v3218, 0.0
    %vm3361 = vcmp.ge.f32.partialorder %v2141, 0.0
    %vm3362 = vcmp.ge.f32.partialorder %v2143, 0.0
    %vm3363 = vcmp.ge.f32.partialorder %v2720, 0.0
    %vm3364 = vcmp.ge.f32.partialorder %v2722, 0.0
    %vm3365 = vcmp.ge.f32.partialorder %v3223, 0.0
    %vm3366 = vcmp.ge.f32.partialorder %v2145, 0.0
    %vm3367 = vcmp.ge.f32.partialorder %v2147, 0.0
    %vm3368 = vcmp.ge.f32.partialorder %v2724, 0.0
    %vm3369 = vcmp.ge.f32.partialorder %v2726, 0.0
    %vm3370 = vcmp.ge.f32.partialorder %v3226, 0.0
    %vm3371 = vcmp.ge.f32.partialorder %v2151, 0.0
    %vm3372 = vcmp.ge.f32.partialorder %v2153, 0.0
    %vm3373 = vcmp.ge.f32.partialorder %v2730, 0.0
    %vm3374 = vcmp.ge.f32.partialorder %v2732, 0.0
    %vm3375 = vcmp.ge.f32.partialorder %v3231, 0.0
    %vm3376 = vcmp.ge.f32.partialorder %v2155, 0.0
    %vm3377 = vcmp.ge.f32.partialorder %v2157, 0.0
    %vm3378 = vcmp.ge.f32.partialorder %v2734, 0.0
    %vm3379 = vcmp.ge.f32.partialorder %v2736, 0.0
    %vm3380 = vcmp.ge.f32.partialorder %v3234, 0.0
    %vm3381 = vcmp.ge.f32.partialorder %v2161, 0.0
    %vm3382 = vcmp.ge.f32.partialorder %v2163, 0.0
    %vm3383 = vcmp.ge.f32.partialorder %v2740, 0.0
    %vm3384 = vcmp.ge.f32.partialorder %v2742, 0.0
    %vm3385 = vcmp.ge.f32.partialorder %v3239, 0.0
    %vm3386 = vcmp.ge.f32.partialorder %v2165, 0.0
    %vm3387 = vcmp.ge.f32.partialorder %v2167, 0.0
    %vm3388 = vcmp.ge.f32.partialorder %v2744, 0.0
    %vm3389 = vcmp.ge.f32.partialorder %v2746, 0.0
    %vm3390 = vcmp.ge.f32.partialorder %v3242, 0.0
    %vm3391 = vcmp.ge.f32.partialorder %v2171, 0.0
    %vm3392 = vcmp.ge.f32.partialorder %v2173, 0.0
    %vm3393 = vcmp.ge.f32.partialorder %v2750, 0.0
    %vm3394 = vcmp.ge.f32.partialorder %v2752, 0.0
    %vm3395 = vcmp.ge.f32.partialorder %v3247, 0.0
    %vm3396 = vcmp.ge.f32.partialorder %v2175, 0.0
    %vm3397 = vcmp.ge.f32.partialorder %v2177, 0.0
    %vm3398 = vcmp.ge.f32.partialorder %v2754, 0.0
    %vm3399 = vcmp.ge.f32.partialorder %v2756, 0.0
    %vm3400 = vcmp.ge.f32.partialorder %v3250, 0.0
    %vm3401 = vcmp.ge.f32.partialorder %v2181, 0.0
    %vm3402 = vcmp.ge.f32.partialorder %v2183, 0.0
    %vm3403 = vcmp.ge.f32.partialorder %v2760, 0.0
    %vm3404 = vcmp.ge.f32.partialorder %v2762, 0.0
    %vm3405 = vcmp.ge.f32.partialorder %v3255, 0.0
    %vm3406 = vcmp.ge.f32.partialorder %v2185, 0.0
    %vm3407 = vcmp.ge.f32.partialorder %v2187, 0.0
    %vm3408 = vcmp.ge.f32.partialorder %v2764, 0.0
    %vm3409 = vcmp.ge.f32.partialorder %v2766, 0.0
    %vm3410 = vcmp.ge.f32.partialorder %v3258, 0.0
    %vm3411 = vcmp.ge.f32.partialorder %v2191, 0.0
    %vm3412 = vcmp.ge.f32.partialorder %v2193, 0.0
    %vm3413 = vcmp.ge.f32.partialorder %v2770, 0.0
    %vm3414 = vcmp.ge.f32.partialorder %v2772, 0.0
    %vm3415 = vcmp.ge.f32.partialorder %v3263, 0.0
    %vm3416 = vcmp.ge.f32.partialorder %v2195, 0.0
    %vm3417 = vcmp.ge.f32.partialorder %v2197, 0.0
    %vm3418 = vcmp.ge.f32.partialorder %v2774, 0.0
    %vm3419 = vcmp.ge.f32.partialorder %v2776, 0.0
    %vm3420 = vcmp.ge.f32.partialorder %v3266, 0.0
    %vm3421 = vcmp.ge.f32.partialorder %v2201, 0.0
    %vm3422 = vcmp.ge.f32.partialorder %v2203, 0.0
    %vm3423 = vcmp.ge.f32.partialorder %v2780, 0.0
    %vm3424 = vcmp.ge.f32.partialorder %v2782, 0.0
    %vm3425 = vcmp.ge.f32.partialorder %v3271, 0.0
    %vm3426 = vcmp.ge.f32.partialorder %v2205, 0.0
    %vm3427 = vcmp.ge.f32.partialorder %v2207, 0.0
    %vm3428 = vcmp.ge.f32.partialorder %v2784, 0.0
    %vm3429 = vcmp.ge.f32.partialorder %v2786, 0.0
    %vm3430 = vcmp.ge.f32.partialorder %v3274, 0.0
    %vm3431 = vcmp.ge.f32.partialorder %v2211, 0.0
    %vm3432 = vcmp.ge.f32.partialorder %v2213, 0.0
    %vm3433 = vcmp.ge.f32.partialorder %v2790, 0.0
    %vm3434 = vcmp.ge.f32.partialorder %v2792, 0.0
    %vm3435 = vcmp.ge.f32.partialorder %v3279, 0.0
    %vm3436 = vcmp.ge.f32.partialorder %v2215, 0.0
    %vm3437 = vcmp.ge.f32.partialorder %v2217, 0.0
    %vm3438 = vcmp.ge.f32.partialorder %v2794, 0.0
    %vm3439 = vcmp.ge.f32.partialorder %v2796, 0.0
    %vm3440 = vcmp.ge.f32.partialorder %v3282, 0.0
    %vm3441 = vcmp.ge.f32.partialorder %v2221, 0.0
    %vm3442 = vcmp.ge.f32.partialorder %v2223, 0.0
    %vm3443 = vcmp.ge.f32.partialorder %v2800, 0.0
    %vm3444 = vcmp.ge.f32.partialorder %v2802, 0.0
    %vm3445 = vcmp.ge.f32.partialorder %v3287, 0.0
    %vm3446 = vcmp.ge.f32.partialorder %v2225, 0.0
    %vm3447 = vcmp.ge.f32.partialorder %v2227, 0.0
    %vm3448 = vcmp.ge.f32.partialorder %v2804, 0.0
    %vm3449 = vcmp.ge.f32.partialorder %v2806, 0.0
    %vm3450 = vcmp.ge.f32.partialorder %v3290, 0.0
    %vm3451 = vcmp.ge.f32.partialorder %v2231, 0.0
    %vm3452 = vcmp.ge.f32.partialorder %v2233, 0.0
    %vm3453 = vcmp.ge.f32.partialorder %v2810, 0.0
    %vm3454 = vcmp.ge.f32.partialorder %v2812, 0.0
    %vm3455 = vcmp.ge.f32.partialorder %v3295, 0.0
    %vm3456 = vcmp.ge.f32.partialorder %v2235, 0.0
    %vm3457 = vcmp.ge.f32.partialorder %v2237, 0.0
    %vm3458 = vcmp.ge.f32.partialorder %v2814, 0.0
    %vm3459 = vcmp.ge.f32.partialorder %v2816, 0.0
    %vm3460 = vcmp.ge.f32.partialorder %v3298, 0.0
    %v3461 = vstv %s112
    %v3462 = vmul.f32 %v3461, %v2081
    %v3463 = vmul.f32 %v3461, %v2083
    %v3464 = vmul.f32 %v3461, %v2660
    %v3465 = vmul.f32 %v3461, %v2662
    %v3466 = vmul.f32 %v3461, %v3175
    %v3467 = vmul.f32 %v3461, %v2085
    %v3468 = vmul.f32 %v3461, %v2087
    %v3469 = vmul.f32 %v3461, %v2664
    %v3470 = vmul.f32 %v3461, %v2666
    %v3471 = vmul.f32 %v3461, %v3178
    %v3472 = vmul.f32 %v3461, %v2091
    %v3473 = vmul.f32 %v3461, %v2093
    %v3474 = vmul.f32 %v3461, %v2670
    %v3475 = vmul.f32 %v3461, %v2672
    %v3476 = vmul.f32 %v3461, %v3183
    %v3477 = vmul.f32 %v3461, %v2095
    %v3478 = vmul.f32 %v3461, %v2097
    %v3479 = vmul.f32 %v3461, %v2674
    %v3480 = vmul.f32 %v3461, %v2676
    %v3481 = vmul.f32 %v3461, %v3186
    %v3482 = vmul.f32 %v3461, %v2101
    %v3483 = vmul.f32 %v3461, %v2103
    %v3484 = vmul.f32 %v3461, %v2680
    %v3485 = vmul.f32 %v3461, %v2682
    %v3486 = vmul.f32 %v3461, %v3191
    %v3487 = vmul.f32 %v3461, %v2105
    %v3488 = vmul.f32 %v3461, %v2107
    %v3489 = vmul.f32 %v3461, %v2684
    %v3490 = vmul.f32 %v3461, %v2686
    %v3491 = vmul.f32 %v3461, %v3194
    %v3492 = vmul.f32 %v3461, %v2111
    %v3493 = vmul.f32 %v3461, %v2113
    %v3494 = vmul.f32 %v3461, %v2690
    %v3495 = vmul.f32 %v3461, %v2692
    %v3496 = vmul.f32 %v3461, %v3199
    %v3497 = vmul.f32 %v3461, %v2115
    %v3498 = vmul.f32 %v3461, %v2117
    %v3499 = vmul.f32 %v3461, %v2694
    %v3500 = vmul.f32 %v3461, %v2696
    %v3501 = vmul.f32 %v3461, %v3202
    %v3502 = vmul.f32 %v3461, %v2121
    %v3503 = vmul.f32 %v3461, %v2123
    %v3504 = vmul.f32 %v3461, %v2700
    %v3505 = vmul.f32 %v3461, %v2702
    %v3506 = vmul.f32 %v3461, %v3207
    %v3507 = vmul.f32 %v3461, %v2125
    %v3508 = vmul.f32 %v3461, %v2127
    %v3509 = vmul.f32 %v3461, %v2704
    %v3510 = vmul.f32 %v3461, %v2706
    %v3511 = vmul.f32 %v3461, %v3210
    %v3512 = vmul.f32 %v3461, %v2131
    %v3513 = vmul.f32 %v3461, %v2133
    %v3514 = vmul.f32 %v3461, %v2710
    %v3515 = vmul.f32 %v3461, %v2712
    %v3516 = vmul.f32 %v3461, %v3215
    %v3517 = vmul.f32 %v3461, %v2135
    %v3518 = vmul.f32 %v3461, %v2137
    %v3519 = vmul.f32 %v3461, %v2714
    %v3520 = vmul.f32 %v3461, %v2716
    %v3521 = vmul.f32 %v3461, %v3218
    %v3522 = vmul.f32 %v3461, %v2141
    %v3523 = vmul.f32 %v3461, %v2143
    %v3524 = vmul.f32 %v3461, %v2720
    %v3525 = vmul.f32 %v3461, %v2722
    %v3526 = vmul.f32 %v3461, %v3223
    %v3527 = vmul.f32 %v3461, %v2145
    %v3528 = vmul.f32 %v3461, %v2147
    %v3529 = vmul.f32 %v3461, %v2724
    %v3530 = vmul.f32 %v3461, %v2726
    %v3531 = vmul.f32 %v3461, %v3226
    %v3532 = vmul.f32 %v3461, %v2151
    %v3533 = vmul.f32 %v3461, %v2153
    %v3534 = vmul.f32 %v3461, %v2730
    %v3535 = vmul.f32 %v3461, %v2732
    %v3536 = vmul.f32 %v3461, %v3231
    %v3537 = vmul.f32 %v3461, %v2155
    %v3538 = vmul.f32 %v3461, %v2157
    %v3539 = vmul.f32 %v3461, %v2734
    %v3540 = vmul.f32 %v3461, %v2736
    %v3541 = vmul.f32 %v3461, %v3234
    %v3542 = vmul.f32 %v3461, %v2161
    %v3543 = vmul.f32 %v3461, %v2163
    %v3544 = vmul.f32 %v3461, %v2740
    %v3545 = vmul.f32 %v3461, %v2742
    %v3546 = vmul.f32 %v3461, %v3239
    %v3547 = vmul.f32 %v3461, %v2165
    %v3548 = vmul.f32 %v3461, %v2167
    %v3549 = vmul.f32 %v3461, %v2744
    %v3550 = vmul.f32 %v3461, %v2746
    %v3551 = vmul.f32 %v3461, %v3242
    %v3552 = vmul.f32 %v3461, %v2171
    %v3553 = vmul.f32 %v3461, %v2173
    %v3554 = vmul.f32 %v3461, %v2750
    %v3555 = vmul.f32 %v3461, %v2752
    %v3556 = vmul.f32 %v3461, %v3247
    %v3557 = vmul.f32 %v3461, %v2175
    %v3558 = vmul.f32 %v3461, %v2177
    %v3559 = vmul.f32 %v3461, %v2754
    %v3560 = vmul.f32 %v3461, %v2756
    %v3561 = vmul.f32 %v3461, %v3250
    %v3562 = vmul.f32 %v3461, %v2181
    %v3563 = vmul.f32 %v3461, %v2183
    %v3564 = vmul.f32 %v3461, %v2760
    %v3565 = vmul.f32 %v3461, %v2762
    %v3566 = vmul.f32 %v3461, %v3255
    %v3567 = vmul.f32 %v3461, %v2185
    %v3568 = vmul.f32 %v3461, %v2187
    %v3569 = vmul.f32 %v3461, %v2764
    %v3570 = vmul.f32 %v3461, %v2766
    %v3571 = vmul.f32 %v3461, %v3258
    %v3572 = vmul.f32 %v3461, %v2191
    %v3573 = vmul.f32 %v3461, %v2193
    %v3574 = vmul.f32 %v3461, %v2770
    %v3575 = vmul.f32 %v3461, %v2772
    %v3576 = vmul.f32 %v3461, %v3263
    %v3577 = vmul.f32 %v3461, %v2195
    %v3578 = vmul.f32 %v3461, %v2197
    %v3579 = vmul.f32 %v3461, %v2774
    %v3580 = vmul.f32 %v3461, %v2776
    %v3581 = vmul.f32 %v3461, %v3266
    %v3582 = vmul.f32 %v3461, %v2201
    %v3583 = vmul.f32 %v3461, %v2203
    %v3584 = vmul.f32 %v3461, %v2780
    %v3585 = vmul.f32 %v3461, %v2782
    %v3586 = vmul.f32 %v3461, %v3271
    %v3587 = vmul.f32 %v3461, %v2205
    %v3588 = vmul.f32 %v3461, %v2207
    %v3589 = vmul.f32 %v3461, %v2784
    %v3590 = vmul.f32 %v3461, %v2786
    %v3591 = vmul.f32 %v3461, %v3274
    %v3592 = vmul.f32 %v3461, %v2211
    %v3593 = vmul.f32 %v3461, %v2213
    %v3594 = vmul.f32 %v3461, %v2790
    %v3595 = vmul.f32 %v3461, %v2792
    %v3596 = vmul.f32 %v3461, %v3279
    %v3597 = vmul.f32 %v3461, %v2215
    %v3598 = vmul.f32 %v3461, %v2217
    %v3599 = vmul.f32 %v3461, %v2794
    %v3600 = vmul.f32 %v3461, %v2796
    %v3601 = vmul.f32 %v3461, %v3282
    %v3602 = vmul.f32 %v3461, %v2221
    %v3603 = vmul.f32 %v3461, %v2223
    %v3604 = vmul.f32 %v3461, %v2800
    %v3605 = vmul.f32 %v3461, %v2802
    %v3606 = vmul.f32 %v3461, %v3287
    %v3607 = vmul.f32 %v3461, %v2225
    %v3608 = vmul.f32 %v3461, %v2227
    %v3609 = vmul.f32 %v3461, %v2804
    %v3610 = vmul.f32 %v3461, %v2806
    %v3611 = vmul.f32 %v3461, %v3290
    %v3612 = vmul.f32 %v3461, %v2231
    %v3613 = vmul.f32 %v3461, %v2233
    %v3614 = vmul.f32 %v3461, %v2810
    %v3615 = vmul.f32 %v3461, %v2812
    %v3616 = vmul.f32 %v3461, %v3295
    %v3617 = vmul.f32 %v3461, %v2235
    %v3618 = vmul.f32 %v3461, %v2237
    %v3619 = vmul.f32 %v3461, %v2814
    %v3620 = vmul.f32 %v3461, %v2816
    %v3621 = vmul.f32 %v3461, %v3298
    %v3622 = vsel %vm3301, %v2081, %v3462
    %v3623 = vsel %vm3302, %v2083, %v3463
    %v3624 = vsel %vm3303, %v2660, %v3464
    %v3625 = vsel %vm3304, %v2662, %v3465
    %v3626 = vsel %vm3305, %v3175, %v3466
    %v3627 = vsel %vm3306, %v2085, %v3467
    %v3628 = vsel %vm3307, %v2087, %v3468
    %v3629 = vsel %vm3308, %v2664, %v3469
    %v3630 = vsel %vm3309, %v2666, %v3470
    %v3631 = vsel %vm3310, %v3178, %v3471
    %v3632 = vsel %vm3311, %v2091, %v3472
    %v3633 = vsel %vm3312, %v2093, %v3473
    %v3634 = vsel %vm3313, %v2670, %v3474
    %v3635 = vsel %vm3314, %v2672, %v3475
    %v3636 = vsel %vm3315, %v3183, %v3476
    %v3637 = vsel %vm3316, %v2095, %v3477
    %v3638 = vsel %vm3317, %v2097, %v3478
    %v3639 = vsel %vm3318, %v2674, %v3479
    %v3640 = vsel %vm3319, %v2676, %v3480
    %v3641 = vsel %vm3320, %v3186, %v3481
    %v3642 = vsel %vm3321, %v2101, %v3482
    %v3643 = vsel %vm3322, %v2103, %v3483
    %v3644 = vsel %vm3323, %v2680, %v3484
    %v3645 = vsel %vm3324, %v2682, %v3485
    %v3646 = vsel %vm3325, %v3191, %v3486
    %v3647 = vsel %vm3326, %v2105, %v3487
    %v3648 = vsel %vm3327, %v2107, %v3488
    %v3649 = vsel %vm3328, %v2684, %v3489
    %v3650 = vsel %vm3329, %v2686, %v3490
    %v3651 = vsel %vm3330, %v3194, %v3491
    %v3652 = vsel %vm3331, %v2111, %v3492
    %v3653 = vsel %vm3332, %v2113, %v3493
    %v3654 = vsel %vm3333, %v2690, %v3494
    %v3655 = vsel %vm3334, %v2692, %v3495
    %v3656 = vsel %vm3335, %v3199, %v3496
    %v3657 = vsel %vm3336, %v2115, %v3497
    %v3658 = vsel %vm3337, %v2117, %v3498
    %v3659 = vsel %vm3338, %v2694, %v3499
    %v3660 = vsel %vm3339, %v2696, %v3500
    %v3661 = vsel %vm3340, %v3202, %v3501
    %v3662 = vsel %vm3341, %v2121, %v3502
    %v3663 = vsel %vm3342, %v2123, %v3503
    %v3664 = vsel %vm3343, %v2700, %v3504
    %v3665 = vsel %vm3344, %v2702, %v3505
    %v3666 = vsel %vm3345, %v3207, %v3506
    %v3667 = vsel %vm3346, %v2125, %v3507
    %v3668 = vsel %vm3347, %v2127, %v3508
    %v3669 = vsel %vm3348, %v2704, %v3509
    %v3670 = vsel %vm3349, %v2706, %v3510
    %v3671 = vsel %vm3350, %v3210, %v3511
    %v3672 = vsel %vm3351, %v2131, %v3512
    %v3673 = vsel %vm3352, %v2133, %v3513
    %v3674 = vsel %vm3353, %v2710, %v3514
    %v3675 = vsel %vm3354, %v2712, %v3515
    %v3676 = vsel %vm3355, %v3215, %v3516
    %v3677 = vsel %vm3356, %v2135, %v3517
    %v3678 = vsel %vm3357, %v2137, %v3518
    %v3679 = vsel %vm3358, %v2714, %v3519
    %v3680 = vsel %vm3359, %v2716, %v3520
    %v3681 = vsel %vm3360, %v3218, %v3521
    %v3682 = vsel %vm3361, %v2141, %v3522
    %v3683 = vsel %vm3362, %v2143, %v3523
    %v3684 = vsel %vm3363, %v2720, %v3524
    %v3685 = vsel %vm3364, %v2722, %v3525
    %v3686 = vsel %vm3365, %v3223, %v3526
    %v3687 = vsel %vm3366, %v2145, %v3527
    %v3688 = vsel %vm3367, %v2147, %v3528
    %v3689 = vsel %vm3368, %v2724, %v3529
    %v3690 = vsel %vm3369, %v2726, %v3530
    %v3691 = vsel %vm3370, %v3226, %v3531
    %v3692 = vsel %vm3371, %v2151, %v3532
    %v3693 = vsel %vm3372, %v2153, %v3533
    %v3694 = vsel %vm3373, %v2730, %v3534
    %v3695 = vsel %vm3374, %v2732, %v3535
    %v3696 = vsel %vm3375, %v3231, %v3536
    %v3697 = vsel %vm3376, %v2155, %v3537
    %v3698 = vsel %vm3377, %v2157, %v3538
    %v3699 = vsel %vm3378, %v2734, %v3539
    %v3700 = vsel %vm3379, %v2736, %v3540
    %v3701 = vsel %vm3380, %v3234, %v3541
    %v3702 = vsel %vm3381, %v2161, %v3542
    %v3703 = vsel %vm3382, %v2163, %v3543
    %v3704 = vsel %vm3383, %v2740, %v3544
    %v3705 = vsel %vm3384, %v2742, %v3545
    %v3706 = vsel %vm3385, %v3239, %v3546
    %v3707 = vsel %vm3386, %v2165, %v3547
    %v3708 = vsel %vm3387, %v2167, %v3548
    %v3709 = vsel %vm3388, %v2744, %v3549
    %v3710 = vsel %vm3389, %v2746, %v3550
    %v3711 = vsel %vm3390, %v3242, %v3551
    %v3712 = vsel %vm3391, %v2171, %v3552
    %v3713 = vsel %vm3392, %v2173, %v3553
    %v3714 = vsel %vm3393, %v2750, %v3554
    %v3715 = vsel %vm3394, %v2752, %v3555
    %v3716 = vsel %vm3395, %v3247, %v3556
    %v3717 = vsel %vm3396, %v2175, %v3557
    %v3718 = vsel %vm3397, %v2177, %v3558
    %v3719 = vsel %vm3398, %v2754, %v3559
    %v3720 = vsel %vm3399, %v2756, %v3560
    %v3721 = vsel %vm3400, %v3250, %v3561
    %v3722 = vsel %vm3401, %v2181, %v3562
    %v3723 = vsel %vm3402, %v2183, %v3563
    %v3724 = vsel %vm3403, %v2760, %v3564
    %v3725 = vsel %vm3404, %v2762, %v3565
    %v3726 = vsel %vm3405, %v3255, %v3566
    %v3727 = vsel %vm3406, %v2185, %v3567
    %v3728 = vsel %vm3407, %v2187, %v3568
    %v3729 = vsel %vm3408, %v2764, %v3569
    %v3730 = vsel %vm3409, %v2766, %v3570
    %v3731 = vsel %vm3410, %v3258, %v3571
    %v3732 = vsel %vm3411, %v2191, %v3572
    %v3733 = vsel %vm3412, %v2193, %v3573
    %v3734 = vsel %vm3413, %v2770, %v3574
    %v3735 = vsel %vm3414, %v2772, %v3575
    %v3736 = vsel %vm3415, %v3263, %v3576
    %v3737 = vsel %vm3416, %v2195, %v3577
    %v3738 = vsel %vm3417, %v2197, %v3578
    %v3739 = vsel %vm3418, %v2774, %v3579
    %v3740 = vsel %vm3419, %v2776, %v3580
    %v3741 = vsel %vm3420, %v3266, %v3581
    %v3742 = vsel %vm3421, %v2201, %v3582
    %v3743 = vsel %vm3422, %v2203, %v3583
    %v3744 = vsel %vm3423, %v2780, %v3584
    %v3745 = vsel %vm3424, %v2782, %v3585
    %v3746 = vsel %vm3425, %v3271, %v3586
    %v3747 = vsel %vm3426, %v2205, %v3587
    %v3748 = vsel %vm3427, %v2207, %v3588
    %v3749 = vsel %vm3428, %v2784, %v3589
    %v3750 = vsel %vm3429, %v2786, %v3590
    %v3751 = vsel %vm3430, %v3274, %v3591
    %v3752 = vsel %vm3431, %v2211, %v3592
    %v3753 = vsel %vm3432, %v2213, %v3593
    %v3754 = vsel %vm3433, %v2790, %v3594
    %v3755 = vsel %vm3434, %v2792, %v3595
    %v3756 = vsel %vm3435, %v3279, %v3596
    %v3757 = vsel %vm3436, %v2215, %v3597
    %v3758 = vsel %vm3437, %v2217, %v3598
    %v3759 = vsel %vm3438, %v2794, %v3599
    %v3760 = vsel %vm3439, %v2796, %v3600
    %v3761 = vsel %vm3440, %v3282, %v3601
    %v3762 = vsel %vm3441, %v2221, %v3602
    %v3763 = vsel %vm3442, %v2223, %v3603
    %v3764 = vsel %vm3443, %v2800, %v3604
    %v3765 = vsel %vm3444, %v2802, %v3605
    %v3766 = vsel %vm3445, %v3287, %v3606
    %v3767 = vsel %vm3446, %v2225, %v3607
    %v3768 = vsel %vm3447, %v2227, %v3608
    %v3769 = vsel %vm3448, %v2804, %v3609
    %v3770 = vsel %vm3449, %v2806, %v3610
    %v3771 = vsel %vm3450, %v3290, %v3611
    %v3772 = vsel %vm3451, %v2231, %v3612
    %v3773 = vsel %vm3452, %v2233, %v3613
    %v3774 = vsel %vm3453, %v2810, %v3614
    %v3775 = vsel %vm3454, %v2812, %v3615
    %v3776 = vsel %vm3455, %v3295, %v3616
    %v3777 = vsel %vm3456, %v2235, %v3617
    %v3778 = vsel %vm3457, %v2237, %v3618
    %v3779 = vsel %vm3458, %v2814, %v3619
    %v3780 = vsel %vm3459, %v2816, %v3620
    %v3781 = vsel %vm3460, %v3298, %v3621
    %v3782 = vpack.c.bf16 %v3627, %v3622
    %v3783 = vpack.c.bf16 %v3628, %v3623
    %v3784 = vpack.c.bf16 %v3629, %v3624
    %v3785 = vpack.c.bf16 %v3630, %v3625
    %v3786 = vpack.c.bf16 %v3631, %v3626
    %v3787 = vpack.c.bf16 %v3637, %v3632
    %v3788 = vpack.c.bf16 %v3638, %v3633
    %v3789 = vpack.c.bf16 %v3639, %v3634
    %v3790 = vpack.c.bf16 %v3640, %v3635
    %v3791 = vpack.c.bf16 %v3641, %v3636
    %v3792 = vpack.c.bf16 %v3647, %v3642
    %v3793 = vpack.c.bf16 %v3648, %v3643
    %v3794 = vpack.c.bf16 %v3649, %v3644
    %v3795 = vpack.c.bf16 %v3650, %v3645
    %v3796 = vpack.c.bf16 %v3651, %v3646
    %v3797 = vpack.c.bf16 %v3657, %v3652
    %v3798 = vpack.c.bf16 %v3658, %v3653
    %v3799 = vpack.c.bf16 %v3659, %v3654
    %v3800 = vpack.c.bf16 %v3660, %v3655
    %v3801 = vpack.c.bf16 %v3661, %v3656
    %v3802 = vpack.c.bf16 %v3667, %v3662
    %v3803 = vpack.c.bf16 %v3668, %v3663
    %v3804 = vpack.c.bf16 %v3669, %v3664
    %v3805 = vpack.c.bf16 %v3670, %v3665
    %v3806 = vpack.c.bf16 %v3671, %v3666
    %v3807 = vpack.c.bf16 %v3677, %v3672
    %v3808 = vpack.c.bf16 %v3678, %v3673
    %v3809 = vpack.c.bf16 %v3679, %v3674
    %v3810 = vpack.c.bf16 %v3680, %v3675
    %v3811 = vpack.c.bf16 %v3681, %v3676
    %v3812 = vpack.c.bf16 %v3687, %v3682
    %v3813 = vpack.c.bf16 %v3688, %v3683
    %v3814 = vpack.c.bf16 %v3689, %v3684
    %v3815 = vpack.c.bf16 %v3690, %v3685
    %v3816 = vpack.c.bf16 %v3691, %v3686
    %v3817 = vpack.c.bf16 %v3697, %v3692
    %v3818 = vpack.c.bf16 %v3698, %v3693
    %v3819 = vpack.c.bf16 %v3699, %v3694
    %v3820 = vpack.c.bf16 %v3700, %v3695
    %v3821 = vpack.c.bf16 %v3701, %v3696
    %v3822 = vpack.c.bf16 %v3707, %v3702
    %v3823 = vpack.c.bf16 %v3708, %v3703
    %v3824 = vpack.c.bf16 %v3709, %v3704
    %v3825 = vpack.c.bf16 %v3710, %v3705
    %v3826 = vpack.c.bf16 %v3711, %v3706
    %v3827 = vpack.c.bf16 %v3717, %v3712
    %v3828 = vpack.c.bf16 %v3718, %v3713
    %v3829 = vpack.c.bf16 %v3719, %v3714
    %v3830 = vpack.c.bf16 %v3720, %v3715
    %v3831 = vpack.c.bf16 %v3721, %v3716
    %v3832 = vpack.c.bf16 %v3727, %v3722
    %v3833 = vpack.c.bf16 %v3728, %v3723
    %v3834 = vpack.c.bf16 %v3729, %v3724
    %v3835 = vpack.c.bf16 %v3730, %v3725
    %v3836 = vpack.c.bf16 %v3731, %v3726
    %v3837 = vpack.c.bf16 %v3737, %v3732
    %v3838 = vpack.c.bf16 %v3738, %v3733
    %v3839 = vpack.c.bf16 %v3739, %v3734
    %v3840 = vpack.c.bf16 %v3740, %v3735
    %v3841 = vpack.c.bf16 %v3741, %v3736
    %v3842 = vpack.c.bf16 %v3747, %v3742
    %v3843 = vpack.c.bf16 %v3748, %v3743
    %v3844 = vpack.c.bf16 %v3749, %v3744
    %v3845 = vpack.c.bf16 %v3750, %v3745
    %v3846 = vpack.c.bf16 %v3751, %v3746
    %v3847 = vpack.c.bf16 %v3757, %v3752
    %v3848 = vpack.c.bf16 %v3758, %v3753
    %v3849 = vpack.c.bf16 %v3759, %v3754
    %v3850 = vpack.c.bf16 %v3760, %v3755
    %v3851 = vpack.c.bf16 %v3761, %v3756
    %v3852 = vpack.c.bf16 %v3767, %v3762
    %v3853 = vpack.c.bf16 %v3768, %v3763
    %v3854 = vpack.c.bf16 %v3769, %v3764
    %v3855 = vpack.c.bf16 %v3770, %v3765
    %v3856 = vpack.c.bf16 %v3771, %v3766
    %v3857 = vpack.c.bf16 %v3777, %v3772
    %v3858 = vpack.c.bf16 %v3778, %v3773
    %v3859 = vpack.c.bf16 %v3779, %v3774
    %v3860 = vpack.c.bf16 %v3780, %v3775
    %v3861 = vpack.c.bf16 %v3781, %v3776
    %v3862 = vld [vmem:[#allocation9] sm:$0xff]
    %v3863 = vld [vmem:[#allocation9 + $0x8] sm:$0xff]
    %v3864 = vld [vmem:[#allocation9 + $0x10] sm:$0xff]
    %v3865 = vld [vmem:[#allocation9 + $0x18] sm:$0xff]
    %v3866 = vld [vmem:[#allocation9 + $0x20] sm:$0xff]
    %v3867 = vld [vmem:[#allocation9 + $0x28] sm:$0xff]
    %v3868 = vld [vmem:[#allocation9 + $0x30] sm:$0xff]
    %v3869 = vld [vmem:[#allocation9 + $0x38] sm:$0xff]
    %v3870 = vld [vmem:[#allocation9 + $0x40] sm:$0xff]
    %v3871 = vld [vmem:[#allocation9 + $0x48] sm:$0xff]
    %v3872 = vld [vmem:[#allocation9 + $0x50] sm:$0xff]
    %v3873 = vld [vmem:[#allocation9 + $0x58] sm:$0xff]
    %v3874 = vld [vmem:[#allocation9 + $0x60] sm:$0xff]
    %v3875 = vld [vmem:[#allocation9 + $0x68] sm:$0xff]
    %v3876 = vld [vmem:[#allocation9 + $0x70] sm:$0xff]
    %v3877 = vld [vmem:[#allocation9 + $0x78] sm:$0xff]
    %v3878 = vld [vmem:[#allocation9 + $0x80] sm:$0xff]
    %v3879 = vld [vmem:[#allocation9 + $0x88] sm:$0xff]
    %v3880 = vld [vmem:[#allocation9 + $0x90] sm:$0xff]
    %v3881 = vld [vmem:[#allocation9 + $0x98] sm:$0xff]
    %v3882 = vld [vmem:[#allocation9 + $0xa0] sm:$0xff]
    %v3883 = vld [vmem:[#allocation9 + $0xa8] sm:$0xff]
    %v3884 = vld [vmem:[#allocation9 + $0xb0] sm:$0xff]
    %v3885 = vld [vmem:[#allocation9 + $0xb8] sm:$0xff]
    %v3886 = vld [vmem:[#allocation9 + $0xc0] sm:$0xff]
    %v3887 = vld [vmem:[#allocation9 + $0xc8] sm:$0xff]
    %v3888 = vld [vmem:[#allocation9 + $0xd0] sm:$0xff]
    %v3889 = vld [vmem:[#allocation9 + $0xd8] sm:$0xff]
    %v3890 = vld [vmem:[#allocation9 + $0xe0] sm:$0xff]
    %v3891 = vld [vmem:[#allocation9 + $0xe8] sm:$0xff]
    %v3892 = vld [vmem:[#allocation9 + $0xf0] sm:$0xff]
    %v3893 = vld [vmem:[#allocation9 + $0xf8] sm:$0xff]
    %v3894 = vld [vmem:[#allocation9 + $0x100] sm:$0xff]
    %v3895 = vld [vmem:[#allocation9 + $0x108] sm:$0xff]
    %v3896 = vld [vmem:[#allocation9 + $0x110] sm:$0xff]
    %v3897 = vld [vmem:[#allocation9 + $0x118] sm:$0xff]
    %v3898 = vld [vmem:[#allocation9 + $0x120] sm:$0xff]
    %v3899 = vld [vmem:[#allocation9 + $0x128] sm:$0xff]
    %v3900 = vld [vmem:[#allocation9 + $0x130] sm:$0xff]
    %v3901 = vld [vmem:[#allocation9 + $0x138] sm:$0xff]
    %v3902 = vld [vmem:[#allocation9 + $0x140] sm:$0xff]
    %v3903 = vld [vmem:[#allocation9 + $0x148] sm:$0xff]
    %v3904 = vld [vmem:[#allocation9 + $0x150] sm:$0xff]
    %v3905 = vld [vmem:[#allocation9 + $0x158] sm:$0xff]
    %v3906 = vld [vmem:[#allocation9 + $0x160] sm:$0xff]
    %v3907 = vld [vmem:[#allocation9 + $0x168] sm:$0xff]
    %v3908 = vld [vmem:[#allocation9 + $0x170] sm:$0xff]
    %v3909 = vld [vmem:[#allocation9 + $0x178] sm:$0xff]
    %v3910 = vld [vmem:[#allocation9 + $0x180] sm:$0xff]
    %v3911 = vld [vmem:[#allocation9 + $0x188] sm:$0xff]
    %v3912 = vld [vmem:[#allocation9 + $0x190] sm:$0xff]
    %v3913 = vld [vmem:[#allocation9 + $0x198] sm:$0xff]
    %v3914 = vld [vmem:[#allocation9 + $0x1a0] sm:$0xff]
    %v3915 = vld [vmem:[#allocation9 + $0x1a8] sm:$0xff]
    %v3916 = vld [vmem:[#allocation9 + $0x1b0] sm:$0xff]
    %v3917 = vld [vmem:[#allocation9 + $0x1b8] sm:$0xff]
    %v3918 = vld [vmem:[#allocation9 + $0x1c0] sm:$0xff]
    %v3919 = vld [vmem:[#allocation9 + $0x1c8] sm:$0xff]
    %v3920 = vld [vmem:[#allocation9 + $0x1d0] sm:$0xff]
    %v3921 = vld [vmem:[#allocation9 + $0x1d8] sm:$0xff]
    %v3922 = vld [vmem:[#allocation9 + $0x1e0] sm:$0xff]
    %v3923 = vld [vmem:[#allocation9 + $0x1e8] sm:$0xff]
    %v3924 = vld [vmem:[#allocation9 + $0x1f0] sm:$0xff]
    %v3925 = vld [vmem:[#allocation9 + $0x1f8] sm:$0xff]
    %v3926 = vld [vmem:[#allocation9 + $0x200] sm:$0xff]
    %v3927 = vld [vmem:[#allocation9 + $0x208] sm:$0xff]
    %v3928 = vld [vmem:[#allocation9 + $0x210] sm:$0xff]
    %v3929 = vld [vmem:[#allocation9 + $0x218] sm:$0xff]
    %v3930 = vld [vmem:[#allocation9 + $0x220] sm:$0xff]
    %v3931 = vld [vmem:[#allocation9 + $0x228] sm:$0xff]
    %v3932 = vld [vmem:[#allocation9 + $0x230] sm:$0xff]
    %v3933 = vld [vmem:[#allocation9 + $0x238] sm:$0xff]
    %v3934 = vld [vmem:[#allocation9 + $0x240] sm:$0xff]
    %v3935 = vld [vmem:[#allocation9 + $0x248] sm:$0xff]
    %v3936 = vld [vmem:[#allocation9 + $0x250] sm:$0xff]
    %v3937 = vld [vmem:[#allocation9 + $0x258] sm:$0xff]
    %v3938 = vld [vmem:[#allocation9 + $0x260] sm:$0xff]
    %v3939 = vld [vmem:[#allocation9 + $0x268] sm:$0xff]
    %v3940 = vld [vmem:[#allocation9 + $0x270] sm:$0xff]
    %v3941 = vld [vmem:[#allocation9 + $0x278] sm:$0xff]
    %v3942 = vld [vmem:[%s7 + $0x5] sm:$0x3]
    %v3944 = vlaneseq
    %v3945 = vshrl.u32 %v3944, 7
    %v3946 = vsub.s32 0, %v3945
    %v3947 = vrot.slane %v3942, %v3946
    %v3948 = vlaneseq
    %v3949 = vshrl.u32 %v3948, 7
    %v3950 = vsub.s32 1, %v3949
    %v3951 = vrot.slane %v3942, %v3950
    %v4034 = vunpack.c.l.b16 %v3862
    %v4035 = vunpack.c.h.b16 %v3862
    %v4036 = vunpack.c.l.b16 %v3863
    %v4037 = vunpack.c.h.b16 %v3863
    %v4038 = vunpack.c.l.b16 %v3864
    %v4039 = vunpack.c.h.b16 %v3864
    %v4040 = vunpack.c.l.b16 %v3865
    %v4041 = vunpack.c.h.b16 %v3865
    %v4042 = vunpack.c.l.b16 %v3866
    %v4043 = vunpack.c.h.b16 %v3866
    %v4044 = vunpack.c.l.b16 %v3867
    %v4045 = vunpack.c.h.b16 %v3867
    %v4046 = vunpack.c.l.b16 %v3868
    %v4047 = vunpack.c.h.b16 %v3868
    %v4048 = vunpack.c.l.b16 %v3869
    %v4049 = vunpack.c.h.b16 %v3869
    %v4050 = vunpack.c.l.b16 %v3870
    %v4051 = vunpack.c.h.b16 %v3870
    %v4052 = vunpack.c.l.b16 %v3871
    %v4053 = vunpack.c.h.b16 %v3871
    %v4054 = vunpack.c.l.b16 %v3872
    %v4055 = vunpack.c.h.b16 %v3872
    %v4056 = vunpack.c.l.b16 %v3873
    %v4057 = vunpack.c.h.b16 %v3873
    %v4058 = vunpack.c.l.b16 %v3874
    %v4059 = vunpack.c.h.b16 %v3874
    %v4060 = vunpack.c.l.b16 %v3875
    %v4061 = vunpack.c.h.b16 %v3875
    %v4062 = vunpack.c.l.b16 %v3876
    %v4063 = vunpack.c.h.b16 %v3876
    %v4064 = vunpack.c.l.b16 %v3877
    %v4065 = vunpack.c.h.b16 %v3877
    %v4066 = vunpack.c.l.b16 %v3878
    %v4067 = vunpack.c.h.b16 %v3878
    %v4068 = vunpack.c.l.b16 %v3879
    %v4069 = vunpack.c.h.b16 %v3879
    %v4070 = vunpack.c.l.b16 %v3880
    %v4071 = vunpack.c.h.b16 %v3880
    %v4072 = vunpack.c.l.b16 %v3881
    %v4073 = vunpack.c.h.b16 %v3881
    %v4074 = vunpack.c.l.b16 %v3882
    %v4075 = vunpack.c.h.b16 %v3882
    %v4076 = vunpack.c.l.b16 %v3883
    %v4077 = vunpack.c.h.b16 %v3883
    %v4078 = vunpack.c.l.b16 %v3884
    %v4079 = vunpack.c.h.b16 %v3884
    %v4080 = vunpack.c.l.b16 %v3885
    %v4081 = vunpack.c.h.b16 %v3885
    %v4082 = vunpack.c.l.b16 %v3886
    %v4083 = vunpack.c.h.b16 %v3886
    %v4084 = vunpack.c.l.b16 %v3887
    %v4085 = vunpack.c.h.b16 %v3887
    %v4086 = vunpack.c.l.b16 %v3888
    %v4087 = vunpack.c.h.b16 %v3888
    %v4088 = vunpack.c.l.b16 %v3889
    %v4089 = vunpack.c.h.b16 %v3889
    %v4090 = vunpack.c.l.b16 %v3890
    %v4091 = vunpack.c.h.b16 %v3890
    %v4092 = vunpack.c.l.b16 %v3891
    %v4093 = vunpack.c.h.b16 %v3891
    %v4094 = vunpack.c.l.b16 %v3892
    %v4095 = vunpack.c.h.b16 %v3892
    %v4096 = vunpack.c.l.b16 %v3893
    %v4097 = vunpack.c.h.b16 %v3893
    %v4098 = vunpack.c.l.b16 %v3894
    %v4099 = vunpack.c.h.b16 %v3894
    %v4100 = vunpack.c.l.b16 %v3895
    %v4101 = vunpack.c.h.b16 %v3895
    %v4102 = vunpack.c.l.b16 %v3896
    %v4103 = vunpack.c.h.b16 %v3896
    %v4104 = vunpack.c.l.b16 %v3897
    %v4105 = vunpack.c.h.b16 %v3897
    %v4106 = vunpack.c.l.b16 %v3898
    %v4107 = vunpack.c.h.b16 %v3898
    %v4108 = vunpack.c.l.b16 %v3899
    %v4109 = vunpack.c.h.b16 %v3899
    %v4110 = vunpack.c.l.b16 %v3900
    %v4111 = vunpack.c.h.b16 %v3900
    %v4112 = vunpack.c.l.b16 %v3901
    %v4113 = vunpack.c.h.b16 %v3901
    %v4114 = vunpack.c.l.b16 %v3902
    %v4115 = vunpack.c.h.b16 %v3902
    %v4116 = vunpack.c.l.b16 %v3903
    %v4117 = vunpack.c.h.b16 %v3903
    %v4118 = vunpack.c.l.b16 %v3904
    %v4119 = vunpack.c.h.b16 %v3904
    %v4120 = vunpack.c.l.b16 %v3905
    %v4121 = vunpack.c.h.b16 %v3905
    %v4122 = vunpack.c.l.b16 %v3906
    %v4123 = vunpack.c.h.b16 %v3906
    %v4124 = vunpack.c.l.b16 %v3907
    %v4125 = vunpack.c.h.b16 %v3907
    %v4126 = vunpack.c.l.b16 %v3908
    %v4127 = vunpack.c.h.b16 %v3908
    %v4128 = vunpack.c.l.b16 %v3909
    %v4129 = vunpack.c.h.b16 %v3909
    %v4130 = vunpack.c.l.b16 %v3910
    %v4131 = vunpack.c.h.b16 %v3910
    %v4132 = vunpack.c.l.b16 %v3911
    %v4133 = vunpack.c.h.b16 %v3911
    %v4134 = vunpack.c.l.b16 %v3912
    %v4135 = vunpack.c.h.b16 %v3912
    %v4136 = vunpack.c.l.b16 %v3913
    %v4137 = vunpack.c.h.b16 %v3913
    %v4138 = vunpack.c.l.b16 %v3914
    %v4139 = vunpack.c.h.b16 %v3914
    %v4140 = vunpack.c.l.b16 %v3915
    %v4141 = vunpack.c.h.b16 %v3915
    %v4142 = vunpack.c.l.b16 %v3916
    %v4143 = vunpack.c.h.b16 %v3916
    %v4144 = vunpack.c.l.b16 %v3917
    %v4145 = vunpack.c.h.b16 %v3917
    %v4146 = vunpack.c.l.b16 %v3918
    %v4147 = vunpack.c.h.b16 %v3918
    %v4148 = vunpack.c.l.b16 %v3919
    %v4149 = vunpack.c.h.b16 %v3919
    %v4150 = vunpack.c.l.b16 %v3920
    %v4151 = vunpack.c.h.b16 %v3920
    %v4152 = vunpack.c.l.b16 %v3921
    %v4153 = vunpack.c.h.b16 %v3921
    %v4154 = vunpack.c.l.b16 %v3922
    %v4155 = vunpack.c.h.b16 %v3922
    %v4156 = vunpack.c.l.b16 %v3923
    %v4157 = vunpack.c.h.b16 %v3923
    %v4158 = vunpack.c.l.b16 %v3924
    %v4159 = vunpack.c.h.b16 %v3924
    %v4160 = vunpack.c.l.b16 %v3925
    %v4161 = vunpack.c.h.b16 %v3925
    %v4162 = vunpack.c.l.b16 %v3926
    %v4163 = vunpack.c.h.b16 %v3926
    %v4164 = vunpack.c.l.b16 %v3927
    %v4165 = vunpack.c.h.b16 %v3927
    %v4166 = vunpack.c.l.b16 %v3928
    %v4167 = vunpack.c.h.b16 %v3928
    %v4168 = vunpack.c.l.b16 %v3929
    %v4169 = vunpack.c.h.b16 %v3929
    %v4170 = vunpack.c.l.b16 %v3930
    %v4171 = vunpack.c.h.b16 %v3930
    %v4172 = vunpack.c.l.b16 %v3931
    %v4173 = vunpack.c.h.b16 %v3931
    %v4174 = vunpack.c.l.b16 %v3932
    %v4175 = vunpack.c.h.b16 %v3932
    %v4176 = vunpack.c.l.b16 %v3933
    %v4177 = vunpack.c.h.b16 %v3933
    %v4178 = vunpack.c.l.b16 %v3934
    %v4179 = vunpack.c.h.b16 %v3934
    %v4180 = vunpack.c.l.b16 %v3935
    %v4181 = vunpack.c.h.b16 %v3935
    %v4182 = vunpack.c.l.b16 %v3936
    %v4183 = vunpack.c.h.b16 %v3936
    %v4184 = vunpack.c.l.b16 %v3937
    %v4185 = vunpack.c.h.b16 %v3937
    %v4186 = vunpack.c.l.b16 %v3938
    %v4187 = vunpack.c.h.b16 %v3938
    %v4188 = vunpack.c.l.b16 %v3939
    %v4189 = vunpack.c.h.b16 %v3939
    %v4190 = vunpack.c.l.b16 %v3940
    %v4191 = vunpack.c.h.b16 %v3940
    %v4192 = vunpack.c.l.b16 %v3941
    %v4193 = vunpack.c.h.b16 %v3941
    %v4194 = vpack.c.b16 %v4036, %v4034
    %v4195 = vpack.c.b16 %v4037, %v4035
    %v4196 = vpack.c.b16 %v4040, %v4038
    %v4197 = vpack.c.b16 %v4041, %v4039
    %v4198 = vpack.c.b16 %v4044, %v4042
    %v4199 = vpack.c.b16 %v4045, %v4043
    %v4200 = vpack.c.b16 %v4048, %v4046
    %v4201 = vpack.c.b16 %v4049, %v4047
    %v4202 = vpack.c.b16 %v4052, %v4050
    %v4203 = vpack.c.b16 %v4053, %v4051
    %v4204 = vpack.c.b16 %v4056, %v4054
    %v4205 = vpack.c.b16 %v4057, %v4055
    %v4206 = vpack.c.b16 %v4060, %v4058
    %v4207 = vpack.c.b16 %v4061, %v4059
    %v4208 = vpack.c.b16 %v4064, %v4062
    %v4209 = vpack.c.b16 %v4065, %v4063
    %v4210 = vpack.c.b16 %v4068, %v4066
    %v4211 = vpack.c.b16 %v4069, %v4067
    %v4212 = vpack.c.b16 %v4072, %v4070
    %v4213 = vpack.c.b16 %v4073, %v4071
    %v4214 = vpack.c.b16 %v4076, %v4074
    %v4215 = vpack.c.b16 %v4077, %v4075
    %v4216 = vpack.c.b16 %v4080, %v4078
    %v4217 = vpack.c.b16 %v4081, %v4079
    %v4218 = vpack.c.b16 %v4084, %v4082
    %v4219 = vpack.c.b16 %v4085, %v4083
    %v4220 = vpack.c.b16 %v4088, %v4086
    %v4221 = vpack.c.b16 %v4089, %v4087
    %v4222 = vpack.c.b16 %v4092, %v4090
    %v4223 = vpack.c.b16 %v4093, %v4091
    %v4224 = vpack.c.b16 %v4096, %v4094
    %v4225 = vpack.c.b16 %v4097, %v4095
    %v4226 = vpack.c.b16 %v4100, %v4098
    %v4227 = vpack.c.b16 %v4101, %v4099
    %v4228 = vpack.c.b16 %v4104, %v4102
    %v4229 = vpack.c.b16 %v4105, %v4103
    %v4230 = vpack.c.b16 %v4108, %v4106
    %v4231 = vpack.c.b16 %v4109, %v4107
    %v4232 = vpack.c.b16 %v4112, %v4110
    %v4233 = vpack.c.b16 %v4113, %v4111
    %v4234 = vpack.c.b16 %v4116, %v4114
    %v4235 = vpack.c.b16 %v4117, %v4115
    %v4236 = vpack.c.b16 %v4120, %v4118
    %v4237 = vpack.c.b16 %v4121, %v4119
    %v4238 = vpack.c.b16 %v4124, %v4122
    %v4239 = vpack.c.b16 %v4125, %v4123
    %v4240 = vpack.c.b16 %v4128, %v4126
    %v4241 = vpack.c.b16 %v4129, %v4127
    %v4242 = vpack.c.b16 %v4132, %v4130
    %v4243 = vpack.c.b16 %v4133, %v4131
    %v4244 = vpack.c.b16 %v4136, %v4134
    %v4245 = vpack.c.b16 %v4137, %v4135
    %v4246 = vpack.c.b16 %v4140, %v4138
    %v4247 = vpack.c.b16 %v4141, %v4139
    %v4248 = vpack.c.b16 %v4144, %v4142
    %v4249 = vpack.c.b16 %v4145, %v4143
    %v4250 = vpack.c.b16 %v4148, %v4146
    %v4251 = vpack.c.b16 %v4149, %v4147
    %v4252 = vpack.c.b16 %v4152, %v4150
    %v4253 = vpack.c.b16 %v4153, %v4151
    %v4254 = vpack.c.b16 %v4156, %v4154
    %v4255 = vpack.c.b16 %v4157, %v4155
    %v4256 = vpack.c.b16 %v4160, %v4158
    %v4257 = vpack.c.b16 %v4161, %v4159
    %v4258 = vpack.c.b16 %v4164, %v4162
    %v4259 = vpack.c.b16 %v4165, %v4163
    %v4260 = vpack.c.b16 %v4168, %v4166
    %v4261 = vpack.c.b16 %v4169, %v4167
    %v4262 = vpack.c.b16 %v4172, %v4170
    %v4263 = vpack.c.b16 %v4173, %v4171
    %v4264 = vpack.c.b16 %v4176, %v4174
    %v4265 = vpack.c.b16 %v4177, %v4175
    %v4266 = vpack.c.b16 %v4180, %v4178
    %v4267 = vpack.c.b16 %v4181, %v4179
    %v4268 = vpack.c.b16 %v4184, %v4182
    %v4269 = vpack.c.b16 %v4185, %v4183
    %v4270 = vpack.c.b16 %v4188, %v4186
    %v4271 = vpack.c.b16 %v4189, %v4187
    %v4272 = vpack.c.b16 %v4192, %v4190
    %v4273 = vpack.c.b16 %v4193, %v4191
    %4354 = vmatprep.subr.bf16.mxu0 %v4195
    %4355 = vmatpush1.bf16.msra.mxu0 %v4194
    %4356 = vmatprep.subr.bf16.mxu0 %v4197
    %4357 = vmatpush1.bf16.msra.mxu0 %v4196
    %4358 = vmatprep.subr.bf16.mxu0 %v4199
    %4359 = vmatpush1.bf16.msra.mxu0 %v4198
    %4360 = vmatprep.subr.bf16.mxu0 %v4201
    %4361 = vmatpush1.bf16.msra.mxu0 %v4200
    %4362 = vmatprep.subr.bf16.mxu0 %v4203
    %4363 = vmatpush1.bf16.msra.mxu0 %v4202
    %4364 = vmatprep.subr.bf16.mxu0 %v4205
    %4365 = vmatpush1.bf16.msra.mxu0 %v4204
    %4366 = vmatprep.subr.bf16.mxu0 %v4207
    %4367 = vmatpush1.bf16.msra.mxu0 %v4206
    %4368 = vmatprep.subr.bf16.mxu0 %v4209
    %4369 = vmatpush1.bf16.msra.mxu0 %v4208
    %4370 = vmatprep.subr.bf16.mxu0 %v4211
    %4371 = vmatpush1.bf16.msra.mxu0 %v4210
    %4372 = vmatprep.subr.bf16.mxu0 %v4213
    %4373 = vmatpush1.bf16.msra.mxu0 %v4212
    %4374 = vmatprep.subr.bf16.mxu0 %v4215
    %4375 = vmatpush1.bf16.msra.mxu0 %v4214
    %4376 = vmatprep.subr.bf16.mxu0 %v4217
    %4377 = vmatpush1.bf16.msra.mxu0 %v4216
    %4378 = vmatprep.subr.bf16.mxu0 %v4219
    %4379 = vmatpush1.bf16.msra.mxu0 %v4218
    %4380 = vmatprep.subr.bf16.mxu0 %v4221
    %4381 = vmatpush1.bf16.msra.mxu0 %v4220
    %4382 = vmatprep.subr.bf16.mxu0 %v4223
    %4383 = vmatpush1.bf16.msra.mxu0 %v4222
    %4384 = vmatprep.subr.bf16.mxu0 %v4225
    %4385 = vmatpush1.bf16.msra.mxu0 %v4224
    %4386 = vmatprep.mubr.bf16.mxu0 %v3783
    %4387 = vmatmul.mubr.bf16.gmra.mrb[0].mxu0 %v3782
    %v4388 = vpop.f32.mrb[0].mxu0
    %v4389 = vadd.f32 %v3947, %v4388
    %v4390 = vpop.f32.mrb[0].mxu0
    %v4391 = vadd.f32 %v3951, %v4390
    %v4392 = vpop.f32.mrb[0].mxu0
    %v4393 = vadd.f32 %v3947, %v4392
    %v4394 = vpop.f32.mrb[0].mxu0
    %v4395 = vadd.f32 %v3951, %v4394
    %4396 = vmatprep.mubr.bf16.mxu0 %v3788
    %4397 = vmatmul.mubr.bf16.gmra.mrb[0].mxu0 %v3787
    %v4398 = vpop.f32.mrb[0].mxu0
    %v4399 = vadd.f32 %v3947, %v4398
    %v4400 = vpop.f32.mrb[0].mxu0
    %v4401 = vadd.f32 %v3951, %v4400
    %v4402 = vpop.f32.mrb[0].mxu0
    %v4403 = vadd.f32 %v3947, %v4402
    %v4404 = vpop.f32.mrb[0].mxu0
    %v4405 = vadd.f32 %v3951, %v4404
    %4406 = vmatprep.mubr.bf16.mxu0 %v3793
    %4407 = vmatmul.mubr.bf16.gmra.mrb[0].mxu0 %v3792
    %v4408 = vpop.f32.mrb[0].mxu0
    %v4409 = vadd.f32 %v3947, %v4408
    %v4410 = vpop.f32.mrb[0].mxu0
    %v4411 = vadd.f32 %v3951, %v4410
    %v4412 = vpop.f32.mrb[0].mxu0
    %v4413 = vadd.f32 %v3947, %v4412
    %v4414 = vpop.f32.mrb[0].mxu0
    %v4415 = vadd.f32 %v3951, %v4414
    %4416 = vmatprep.mubr.bf16.mxu0 %v3798
    %4417 = vmatmul.mubr.bf16.gmra.mrb[0].mxu0 %v3797
    %v4418 = vpop.f32.mrb[0].mxu0
    %v4419 = vadd.f32 %v3947, %v4418
    %v4420 = vpop.f32.mrb[0].mxu0
    %v4421 = vadd.f32 %v3951, %v4420
    %v4422 = vpop.f32.mrb[0].mxu0
    %v4423 = vadd.f32 %v3947, %v4422
    %v4424 = vpop.f32.mrb[0].mxu0
    %v4425 = vadd.f32 %v3951, %v4424
    %4426 = vmatprep.mubr.bf16.mxu0 %v3803
    %4427 = vmatmul.mubr.bf16.gmra.mrb[0].mxu0 %v3802
    %v4428 = vpop.f32.mrb[0].mxu0
    %v4429 = vadd.f32 %v3947, %v4428
    %v4430 = vpop.f32.mrb[0].mxu0
    %v4431 = vadd.f32 %v3951, %v4430
    %v4432 = vpop.f32.mrb[0].mxu0
    %v4433 = vadd.f32 %v3947, %v4432
    %v4434 = vpop.f32.mrb[0].mxu0
    %v4435 = vadd.f32 %v3951, %v4434
    %4436 = vmatprep.mubr.bf16.mxu0 %v3808
    %4437 = vmatmul.mubr.bf16.gmra.mrb[0].mxu0 %v3807
    %v4438 = vpop.f32.mrb[0].mxu0
    %v4439 = vadd.f32 %v3947, %v4438
    %v4440 = vpop.f32.mrb[0].mxu0
    %v4441 = vadd.f32 %v3951, %v4440
    %v4442 = vpop.f32.mrb[0].mxu0
    %v4443 = vadd.f32 %v3947, %v4442
    %v4444 = vpop.f32.mrb[0].mxu0
    %v4445 = vadd.f32 %v3951, %v4444
    %4446 = vmatprep.mubr.bf16.mxu0 %v3813
    %4447 = vmatmul.mubr.bf16.gmra.mrb[0].mxu0 %v3812
    %v4448 = vpop.f32.mrb[0].mxu0
    %v4449 = vadd.f32 %v3947, %v4448
    %v4450 = vpop.f32.mrb[0].mxu0
    %v4451 = vadd.f32 %v3951, %v4450
    %v4452 = vpop.f32.mrb[0].mxu0
    %v4453 = vadd.f32 %v3947, %v4452
    %v4454 = vpop.f32.mrb[0].mxu0
    %v4455 = vadd.f32 %v3951, %v4454
    %4456 = vmatprep.mubr.bf16.mxu0 %v3818
    %4457 = vmatmul.mubr.bf16.gmra.mrb[0].mxu0 %v3817
    %v4458 = vpop.f32.mrb[0].mxu0
    %v4459 = vadd.f32 %v3947, %v4458
    %v4460 = vpop.f32.mrb[0].mxu0
    %v4461 = vadd.f32 %v3951, %v4460
    %v4462 = vpop.f32.mrb[0].mxu0
    %v4463 = vadd.f32 %v3947, %v4462
    %v4464 = vpop.f32.mrb[0].mxu0
    %v4465 = vadd.f32 %v3951, %v4464
    %4466 = vmatprep.mubr.bf16.mxu0 %v3823
    %4467 = vmatmul.mubr.bf16.gmra.mrb[0].mxu0 %v3822
    %v4468 = vpop.f32.mrb[0].mxu0
    %v4469 = vadd.f32 %v3947, %v4468
    %v4470 = vpop.f32.mrb[0].mxu0
    %v4471 = vadd.f32 %v3951, %v4470
    %v4472 = vpop.f32.mrb[0].mxu0
    %v4473 = vadd.f32 %v3947, %v4472
    %v4474 = vpop.f32.mrb[0].mxu0
    %v4475 = vadd.f32 %v3951, %v4474
    %4476 = vmatprep.mubr.bf16.mxu0 %v3828
    %4477 = vmatmul.mubr.bf16.gmra.mrb[0].mxu0 %v3827
    %v4478 = vpop.f32.mrb[0].mxu0
    %v4479 = vadd.f32 %v3947, %v4478
    %v4480 = vpop.f32.mrb[0].mxu0
    %v4481 = vadd.f32 %v3951, %v4480
    %v4482 = vpop.f32.mrb[0].mxu0
    %v4483 = vadd.f32 %v3947, %v4482
    %v4484 = vpop.f32.mrb[0].mxu0
    %v4485 = vadd.f32 %v3951, %v4484
    %4486 = vmatprep.mubr.bf16.mxu0 %v3833
    %4487 = vmatmul.mubr.bf16.gmra.mrb[0].mxu0 %v3832
    %v4488 = vpop.f32.mrb[0].mxu0
    %v4489 = vadd.f32 %v3947, %v4488
    %v4490 = vpop.f32.mrb[0].mxu0
    %v4491 = vadd.f32 %v3951, %v4490
    %v4492 = vpop.f32.mrb[0].mxu0
    %v4493 = vadd.f32 %v3947, %v4492
    %v4494 = vpop.f32.mrb[0].mxu0
    %v4495 = vadd.f32 %v3951, %v4494
    %4496 = vmatprep.mubr.bf16.mxu0 %v3838
    %4497 = vmatmul.mubr.bf16.gmra.mrb[0].mxu0 %v3837
    %v4498 = vpop.f32.mrb[0].mxu0
    %v4499 = vadd.f32 %v3947, %v4498
    %v4500 = vpop.f32.mrb[0].mxu0
    %v4501 = vadd.f32 %v3951, %v4500
    %v4502 = vpop.f32.mrb[0].mxu0
    %v4503 = vadd.f32 %v3947, %v4502
    %v4504 = vpop.f32.mrb[0].mxu0
    %v4505 = vadd.f32 %v3951, %v4504
    %4506 = vmatprep.mubr.bf16.mxu0 %v3843
    %4507 = vmatmul.mubr.bf16.gmra.mrb[0].mxu0 %v3842
    %v4508 = vpop.f32.mrb[0].mxu0
    %v4509 = vadd.f32 %v3947, %v4508
    %v4510 = vpop.f32.mrb[0].mxu0
    %v4511 = vadd.f32 %v3951, %v4510
    %v4512 = vpop.f32.mrb[0].mxu0
    %v4513 = vadd.f32 %v3947, %v4512
    %v4514 = vpop.f32.mrb[0].mxu0
    %v4515 = vadd.f32 %v3951, %v4514
    %4516 = vmatprep.mubr.bf16.mxu0 %v3848
    %4517 = vmatmul.mubr.bf16.gmra.mrb[0].mxu0 %v3847
    %v4518 = vpop.f32.mrb[0].mxu0
    %v4519 = vadd.f32 %v3947, %v4518
    %v4520 = vpop.f32.mrb[0].mxu0
    %v4521 = vadd.f32 %v3951, %v4520
    %v4522 = vpop.f32.mrb[0].mxu0
    %v4523 = vadd.f32 %v3947, %v4522
    %v4524 = vpop.f32.mrb[0].mxu0
    %v4525 = vadd.f32 %v3951, %v4524
    %4526 = vmatprep.mubr.bf16.mxu0 %v3853
    %4527 = vmatmul.mubr.bf16.gmra.mrb[0].mxu0 %v3852
    %v4528 = vpop.f32.mrb[0].mxu0
    %v4529 = vadd.f32 %v3947, %v4528
    %v4530 = vpop.f32.mrb[0].mxu0
    %v4531 = vadd.f32 %v3951, %v4530
    %v4532 = vpop.f32.mrb[0].mxu0
    %v4533 = vadd.f32 %v3947, %v4532
    %v4534 = vpop.f32.mrb[0].mxu0
    %v4535 = vadd.f32 %v3951, %v4534
    %4536 = vmatprep.mubr.bf16.mxu0 %v3858
    %4537 = vmatmul.mubr.bf16.gmra.mrb[0].mxu0 %v3857
    %v4538 = vpop.f32.mrb[0].mxu0
    %v4539 = vadd.f32 %v3947, %v4538
    %v4540 = vpop.f32.mrb[0].mxu0
    %v4541 = vadd.f32 %v3951, %v4540
    %v4542 = vpop.f32.mrb[0].mxu0
    %v4543 = vadd.f32 %v3947, %v4542
    %v4544 = vpop.f32.mrb[0].mxu0
    %v4545 = vadd.f32 %v3951, %v4544
    %4546 = vdwg.mxu0
    %4547 = vmatprep.subr.bf16.mxu0 %v4227
    %4548 = vmatpush1.bf16.msra.mxu0 %v4226
    %4549 = vmatprep.subr.bf16.mxu0 %v4229
    %4550 = vmatpush1.bf16.msra.mxu0 %v4228
    %4551 = vmatprep.subr.bf16.mxu0 %v4231
    %4552 = vmatpush1.bf16.msra.mxu0 %v4230
    %4553 = vmatprep.subr.bf16.mxu0 %v4233
    %4554 = vmatpush1.bf16.msra.mxu0 %v4232
    %4555 = vmatprep.subr.bf16.mxu0 %v4235
    %4556 = vmatpush1.bf16.msra.mxu0 %v4234
    %4557 = vmatprep.subr.bf16.mxu0 %v4237
    %4558 = vmatpush1.bf16.msra.mxu0 %v4236
    %4559 = vmatprep.subr.bf16.mxu0 %v4239
    %4560 = vmatpush1.bf16.msra.mxu0 %v4238
    %4561 = vmatprep.subr.bf16.mxu0 %v4241
    %4562 = vmatpush1.bf16.msra.mxu0 %v4240
    %4563 = vmatprep.subr.bf16.mxu0 %v4243
    %4564 = vmatpush1.bf16.msra.mxu0 %v4242
    %4565 = vmatprep.subr.bf16.mxu0 %v4245
    %4566 = vmatpush1.bf16.msra.mxu0 %v4244
    %4567 = vmatprep.subr.bf16.mxu0 %v4247
    %4568 = vmatpush1.bf16.msra.mxu0 %v4246
    %4569 = vmatprep.subr.bf16.mxu0 %v4249
    %4570 = vmatpush1.bf16.msra.mxu0 %v4248
    %4571 = vmatprep.subr.bf16.mxu0 %v4251
    %4572 = vmatpush1.bf16.msra.mxu0 %v4250
    %4573 = vmatprep.subr.bf16.mxu0 %v4253
    %4574 = vmatpush1.bf16.msra.mxu0 %v4252
    %4575 = vmatprep.subr.bf16.mxu0 %v4255
    %4576 = vmatpush1.bf16.msra.mxu0 %v4254
    %4577 = vmatprep.subr.bf16.mxu0 %v4257
    %4578 = vmatpush1.bf16.msra.mxu0 %v4256
    %4579 = vmatprep.mubr.bf16.mxu0 %v3785
    %4580 = vmatmul.mubr.bf16.gmra.mrb[0].mxu0 %v3784
    %v4581 = vpop.f32.mrb[0].mxu0
    %v4582 = vadd.f32 %v4389, %v4581
    %v4583 = vpop.f32.mrb[0].mxu0
    %v4584 = vadd.f32 %v4391, %v4583
    %v4585 = vpop.f32.mrb[0].mxu0
    %v4586 = vadd.f32 %v4393, %v4585
    %v4587 = vpop.f32.mrb[0].mxu0
    %v4588 = vadd.f32 %v4395, %v4587
    %4589 = vmatprep.mubr.bf16.mxu0 %v3790
    %4590 = vmatmul.mubr.bf16.gmra.mrb[0].mxu0 %v3789
    %v4591 = vpop.f32.mrb[0].mxu0
    %v4592 = vadd.f32 %v4399, %v4591
    %v4593 = vpop.f32.mrb[0].mxu0
    %v4594 = vadd.f32 %v4401, %v4593
    %v4595 = vpop.f32.mrb[0].mxu0
    %v4596 = vadd.f32 %v4403, %v4595
    %v4597 = vpop.f32.mrb[0].mxu0
    %v4598 = vadd.f32 %v4405, %v4597
    %4599 = vmatprep.mubr.bf16.mxu0 %v3795
    %4600 = vmatmul.mubr.bf16.gmra.mrb[0].mxu0 %v3794
    %v4601 = vpop.f32.mrb[0].mxu0
    %v4602 = vadd.f32 %v4409, %v4601
    %v4603 = vpop.f32.mrb[0].mxu0
    %v4604 = vadd.f32 %v4411, %v4603
    %v4605 = vpop.f32.mrb[0].mxu0
    %v4606 = vadd.f32 %v4413, %v4605
    %v4607 = vpop.f32.mrb[0].mxu0
    %v4608 = vadd.f32 %v4415, %v4607
    %4609 = vmatprep.mubr.bf16.mxu0 %v3800
    %4610 = vmatmul.mubr.bf16.gmra.mrb[0].mxu0 %v3799
    %v4611 = vpop.f32.mrb[0].mxu0
    %v4612 = vadd.f32 %v4419, %v4611
    %v4613 = vpop.f32.mrb[0].mxu0
    %v4614 = vadd.f32 %v4421, %v4613
    %v4615 = vpop.f32.mrb[0].mxu0
    %v4616 = vadd.f32 %v4423, %v4615
    %v4617 = vpop.f32.mrb[0].mxu0
    %v4618 = vadd.f32 %v4425, %v4617
    %4619 = vmatprep.mubr.bf16.mxu0 %v3805
    %4620 = vmatmul.mubr.bf16.gmra.mrb[0].mxu0 %v3804
    %v4621 = vpop.f32.mrb[0].mxu0
    %v4622 = vadd.f32 %v4429, %v4621
    %v4623 = vpop.f32.mrb[0].mxu0
    %v4624 = vadd.f32 %v4431, %v4623
    %v4625 = vpop.f32.mrb[0].mxu0
    %v4626 = vadd.f32 %v4433, %v4625
    %v4627 = vpop.f32.mrb[0].mxu0
    %v4628 = vadd.f32 %v4435, %v4627
    %4629 = vmatprep.mubr.bf16.mxu0 %v3810
    %4630 = vmatmul.mubr.bf16.gmra.mrb[0].mxu0 %v3809
    %v4631 = vpop.f32.mrb[0].mxu0
    %v4632 = vadd.f32 %v4439, %v4631
    %v4633 = vpop.f32.mrb[0].mxu0
    %v4634 = vadd.f32 %v4441, %v4633
    %v4635 = vpop.f32.mrb[0].mxu0
    %v4636 = vadd.f32 %v4443, %v4635
    %v4637 = vpop.f32.mrb[0].mxu0
    %v4638 = vadd.f32 %v4445, %v4637
    %4639 = vmatprep.mubr.bf16.mxu0 %v3815
    %4640 = vmatmul.mubr.bf16.gmra.mrb[0].mxu0 %v3814
    %v4641 = vpop.f32.mrb[0].mxu0
    %v4642 = vadd.f32 %v4449, %v4641
    %v4643 = vpop.f32.mrb[0].mxu0
    %v4644 = vadd.f32 %v4451, %v4643
    %v4645 = vpop.f32.mrb[0].mxu0
    %v4646 = vadd.f32 %v4453, %v4645
    %v4647 = vpop.f32.mrb[0].mxu0
    %v4648 = vadd.f32 %v4455, %v4647
    %4649 = vmatprep.mubr.bf16.mxu0 %v3820
    %4650 = vmatmul.mubr.bf16.gmra.mrb[0].mxu0 %v3819
    %v4651 = vpop.f32.mrb[0].mxu0
    %v4652 = vadd.f32 %v4459, %v4651
    %v4653 = vpop.f32.mrb[0].mxu0
    %v4654 = vadd.f32 %v4461, %v4653
    %v4655 = vpop.f32.mrb[0].mxu0
    %v4656 = vadd.f32 %v4463, %v4655
    %v4657 = vpop.f32.mrb[0].mxu0
    %v4658 = vadd.f32 %v4465, %v4657
    %4659 = vmatprep.mubr.bf16.mxu0 %v3825
    %4660 = vmatmul.mubr.bf16.gmra.mrb[0].mxu0 %v3824
    %v4661 = vpop.f32.mrb[0].mxu0
    %v4662 = vadd.f32 %v4469, %v4661
    %v4663 = vpop.f32.mrb[0].mxu0
    %v4664 = vadd.f32 %v4471, %v4663
    %v4665 = vpop.f32.mrb[0].mxu0
    %v4666 = vadd.f32 %v4473, %v4665
    %v4667 = vpop.f32.mrb[0].mxu0
    %v4668 = vadd.f32 %v4475, %v4667
    %4669 = vmatprep.mubr.bf16.mxu0 %v3830
    %4670 = vmatmul.mubr.bf16.gmra.mrb[0].mxu0 %v3829
    %v4671 = vpop.f32.mrb[0].mxu0
    %v4672 = vadd.f32 %v4479, %v4671
    %v4673 = vpop.f32.mrb[0].mxu0
    %v4674 = vadd.f32 %v4481, %v4673
    %v4675 = vpop.f32.mrb[0].mxu0
    %v4676 = vadd.f32 %v4483, %v4675
    %v4677 = vpop.f32.mrb[0].mxu0
    %v4678 = vadd.f32 %v4485, %v4677
    %4679 = vmatprep.mubr.bf16.mxu0 %v3835
    %4680 = vmatmul.mubr.bf16.gmra.mrb[0].mxu0 %v3834
    %v4681 = vpop.f32.mrb[0].mxu0
    %v4682 = vadd.f32 %v4489, %v4681
    %v4683 = vpop.f32.mrb[0].mxu0
    %v4684 = vadd.f32 %v4491, %v4683
    %v4685 = vpop.f32.mrb[0].mxu0
    %v4686 = vadd.f32 %v4493, %v4685
    %v4687 = vpop.f32.mrb[0].mxu0
    %v4688 = vadd.f32 %v4495, %v4687
    %4689 = vmatprep.mubr.bf16.mxu0 %v3840
    %4690 = vmatmul.mubr.bf16.gmra.mrb[0].mxu0 %v3839
    %v4691 = vpop.f32.mrb[0].mxu0
    %v4692 = vadd.f32 %v4499, %v4691
    %v4693 = vpop.f32.mrb[0].mxu0
    %v4694 = vadd.f32 %v4501, %v4693
    %v4695 = vpop.f32.mrb[0].mxu0
    %v4696 = vadd.f32 %v4503, %v4695
    %v4697 = vpop.f32.mrb[0].mxu0
    %v4698 = vadd.f32 %v4505, %v4697
    %4699 = vmatprep.mubr.bf16.mxu0 %v3845
    %4700 = vmatmul.mubr.bf16.gmra.mrb[0].mxu0 %v3844
    %v4701 = vpop.f32.mrb[0].mxu0
    %v4702 = vadd.f32 %v4509, %v4701
    %v4703 = vpop.f32.mrb[0].mxu0
    %v4704 = vadd.f32 %v4511, %v4703
    %v4705 = vpop.f32.mrb[0].mxu0
    %v4706 = vadd.f32 %v4513, %v4705
    %v4707 = vpop.f32.mrb[0].mxu0
    %v4708 = vadd.f32 %v4515, %v4707
    %4709 = vmatprep.mubr.bf16.mxu0 %v3850
    %4710 = vmatmul.mubr.bf16.gmra.mrb[0].mxu0 %v3849
    %v4711 = vpop.f32.mrb[0].mxu0
    %v4712 = vadd.f32 %v4519, %v4711
    %v4713 = vpop.f32.mrb[0].mxu0
    %v4714 = vadd.f32 %v4521, %v4713
    %v4715 = vpop.f32.mrb[0].mxu0
    %v4716 = vadd.f32 %v4523, %v4715
    %v4717 = vpop.f32.mrb[0].mxu0
    %v4718 = vadd.f32 %v4525, %v4717
    %4719 = vmatprep.mubr.bf16.mxu0 %v3855
    %4720 = vmatmul.mubr.bf16.gmra.mrb[0].mxu0 %v3854
    %v4721 = vpop.f32.mrb[0].mxu0
    %v4722 = vadd.f32 %v4529, %v4721
    %v4723 = vpop.f32.mrb[0].mxu0
    %v4724 = vadd.f32 %v4531, %v4723
    %v4725 = vpop.f32.mrb[0].mxu0
    %v4726 = vadd.f32 %v4533, %v4725
    %v4727 = vpop.f32.mrb[0].mxu0
    %v4728 = vadd.f32 %v4535, %v4727
    %4729 = vmatprep.mubr.bf16.mxu0 %v3860
    %4730 = vmatmul.mubr.bf16.gmra.mrb[0].mxu0 %v3859
    %v4731 = vpop.f32.mrb[0].mxu0
    %v4732 = vadd.f32 %v4539, %v4731
    %v4733 = vpop.f32.mrb[0].mxu0
    %v4734 = vadd.f32 %v4541, %v4733
    %v4735 = vpop.f32.mrb[0].mxu0
    %v4736 = vadd.f32 %v4543, %v4735
    %v4737 = vpop.f32.mrb[0].mxu0
    %v4738 = vadd.f32 %v4545, %v4737
    %4739 = vdwg.mxu0
    %4740 = vmatprep.subr.bf16.mxu0 %v4259
    %4741 = vmatpush1.bf16.msra.mxu0 %v4258
    %4742 = vmatprep.subr.bf16.mxu0 %v4261
    %4743 = vmatpush1.bf16.msra.mxu0 %v4260
    %4744 = vmatprep.subr.bf16.mxu0 %v4263
    %4745 = vmatpush1.bf16.msra.mxu0 %v4262
    %4746 = vmatprep.subr.bf16.mxu0 %v4265
    %4747 = vmatpush1.bf16.msra.mxu0 %v4264
    %4748 = vmatprep.subr.bf16.mxu0 %v4267
    %4749 = vmatpush1.bf16.msra.mxu0 %v4266
    %4750 = vmatprep.subr.bf16.mxu0 %v4269
    %4751 = vmatpush1.bf16.msra.mxu0 %v4268
    %4752 = vmatprep.subr.bf16.mxu0 %v4271
    %4753 = vmatpush1.bf16.msra.mxu0 %v4270
    %4754 = vmatprep.subr.bf16.mxu0 %v4273
    %4755 = vmatpush1.bf16.msra.mxu0 %v4272
    %4756 = vmatprep.subr.bf16.mxu0 0
    %4757 = vmatpush1.bf16.msra.mxu0 0
    %4758 = vmatprep.subr.bf16.mxu0 0
    %4759 = vmatpush1.bf16.msra.mxu0 0
    %4760 = vmatprep.subr.bf16.mxu0 0
    %4761 = vmatpush1.bf16.msra.mxu0 0
    %4762 = vmatprep.subr.bf16.mxu0 0
    %4763 = vmatpush1.bf16.msra.mxu0 0
    %4764 = vmatprep.subr.bf16.mxu0 0
    %4765 = vmatpush1.bf16.msra.mxu0 0
    %4766 = vmatprep.subr.bf16.mxu0 0
    %4767 = vmatpush1.bf16.msra.mxu0 0
    %4768 = vmatprep.subr.bf16.mxu0 0
    %4769 = vmatpush1.bf16.msra.mxu0 0
    %4770 = vmatprep.subr.bf16.mxu0 0
    %4771 = vmatpush1.bf16.msra.mxu0 0
    %4772 = vmatprep.mubr.bf16.mxu0 0
    %4773 = vmatmul.mubr.bf16.gmra.mrb[0].mxu0 %v3786
    %v4774 = vpop.f32.mrb[0].mxu0
    %v4775 = vadd.f32 %v4582, %v4774
    %v4776 = vpop.f32.mrb[0].mxu0
    %v4777 = vadd.f32 %v4584, %v4776
    %v4778 = vpop.f32.mrb[0].mxu0
    %v4779 = vadd.f32 %v4586, %v4778
    %v4780 = vpop.f32.mrb[0].mxu0
    %v4781 = vadd.f32 %v4588, %v4780
    %4782 = vmatprep.mubr.bf16.mxu0 0
    %4783 = vmatmul.mubr.bf16.gmra.mrb[0].mxu0 %v3791
    %v4784 = vpop.f32.mrb[0].mxu0
    %v4785 = vadd.f32 %v4592, %v4784
    %v4786 = vpop.f32.mrb[0].mxu0
    %v4787 = vadd.f32 %v4594, %v4786
    %v4788 = vpop.f32.mrb[0].mxu0
    %v4789 = vadd.f32 %v4596, %v4788
    %v4790 = vpop.f32.mrb[0].mxu0
    %v4791 = vadd.f32 %v4598, %v4790
    %4792 = vmatprep.mubr.bf16.mxu0 0
    %4793 = vmatmul.mubr.bf16.gmra.mrb[0].mxu0 %v3796
    %v4794 = vpop.f32.mrb[0].mxu0
    %v4795 = vadd.f32 %v4602, %v4794
    %v4796 = vpop.f32.mrb[0].mxu0
    %v4797 = vadd.f32 %v4604, %v4796
    %v4798 = vpop.f32.mrb[0].mxu0
    %v4799 = vadd.f32 %v4606, %v4798
    %v4800 = vpop.f32.mrb[0].mxu0
    %v4801 = vadd.f32 %v4608, %v4800
    %4802 = vmatprep.mubr.bf16.mxu0 0
    %4803 = vmatmul.mubr.bf16.gmra.mrb[0].mxu0 %v3801
    %v4804 = vpop.f32.mrb[0].mxu0
    %v4805 = vadd.f32 %v4612, %v4804
    %v4806 = vpop.f32.mrb[0].mxu0
    %v4807 = vadd.f32 %v4614, %v4806
    %v4808 = vpop.f32.mrb[0].mxu0
    %v4809 = vadd.f32 %v4616, %v4808
    %v4810 = vpop.f32.mrb[0].mxu0
    %v4811 = vadd.f32 %v4618, %v4810
    %4812 = vmatprep.mubr.bf16.mxu0 0
    %4813 = vmatmul.mubr.bf16.gmra.mrb[0].mxu0 %v3806
    %v4814 = vpop.f32.mrb[0].mxu0
    %v4815 = vadd.f32 %v4622, %v4814
    %v4816 = vpop.f32.mrb[0].mxu0
    %v4817 = vadd.f32 %v4624, %v4816
    %v4818 = vpop.f32.mrb[0].mxu0
    %v4819 = vadd.f32 %v4626, %v4818
    %v4820 = vpop.f32.mrb[0].mxu0
    %v4821 = vadd.f32 %v4628, %v4820
    %4822 = vmatprep.mubr.bf16.mxu0 0
    %4823 = vmatmul.mubr.bf16.gmra.mrb[0].mxu0 %v3811
    %v4824 = vpop.f32.mrb[0].mxu0
    %v4825 = vadd.f32 %v4632, %v4824
    %v4826 = vpop.f32.mrb[0].mxu0
    %v4827 = vadd.f32 %v4634, %v4826
    %v4828 = vpop.f32.mrb[0].mxu0
    %v4829 = vadd.f32 %v4636, %v4828
    %v4830 = vpop.f32.mrb[0].mxu0
    %v4831 = vadd.f32 %v4638, %v4830
    %4832 = vmatprep.mubr.bf16.mxu0 0
    %4833 = vmatmul.mubr.bf16.gmra.mrb[0].mxu0 %v3816
    %v4834 = vpop.f32.mrb[0].mxu0
    %v4835 = vadd.f32 %v4642, %v4834
    %v4836 = vpop.f32.mrb[0].mxu0
    %v4837 = vadd.f32 %v4644, %v4836
    %v4838 = vpop.f32.mrb[0].mxu0
    %v4839 = vadd.f32 %v4646, %v4838
    %v4840 = vpop.f32.mrb[0].mxu0
    %v4841 = vadd.f32 %v4648, %v4840
    %4842 = vmatprep.mubr.bf16.mxu0 0
    %4843 = vmatmul.mubr.bf16.gmra.mrb[0].mxu0 %v3821
    %v4844 = vpop.f32.mrb[0].mxu0
    %v4845 = vadd.f32 %v4652, %v4844
    %v4846 = vpop.f32.mrb[0].mxu0
    %v4847 = vadd.f32 %v4654, %v4846
    %v4848 = vpop.f32.mrb[0].mxu0
    %v4849 = vadd.f32 %v4656, %v4848
    %v4850 = vpop.f32.mrb[0].mxu0
    %v4851 = vadd.f32 %v4658, %v4850
    %4852 = vmatprep.mubr.bf16.mxu0 0
    %4853 = vmatmul.mubr.bf16.gmra.mrb[0].mxu0 %v3826
    %v4854 = vpop.f32.mrb[0].mxu0
    %v4855 = vadd.f32 %v4662, %v4854
    %v4856 = vpop.f32.mrb[0].mxu0
    %v4857 = vadd.f32 %v4664, %v4856
    %v4858 = vpop.f32.mrb[0].mxu0
    %v4859 = vadd.f32 %v4666, %v4858
    %v4860 = vpop.f32.mrb[0].mxu0
    %v4861 = vadd.f32 %v4668, %v4860
    %4862 = vmatprep.mubr.bf16.mxu0 0
    %4863 = vmatmul.mubr.bf16.gmra.mrb[0].mxu0 %v3831
    %v4864 = vpop.f32.mrb[0].mxu0
    %v4865 = vadd.f32 %v4672, %v4864
    %v4866 = vpop.f32.mrb[0].mxu0
    %v4867 = vadd.f32 %v4674, %v4866
    %v4868 = vpop.f32.mrb[0].mxu0
    %v4869 = vadd.f32 %v4676, %v4868
    %v4870 = vpop.f32.mrb[0].mxu0
    %v4871 = vadd.f32 %v4678, %v4870
    %4872 = vmatprep.mubr.bf16.mxu0 0
    %4873 = vmatmul.mubr.bf16.gmra.mrb[0].mxu0 %v3836
    %v4874 = vpop.f32.mrb[0].mxu0
    %v4875 = vadd.f32 %v4682, %v4874
    %v4876 = vpop.f32.mrb[0].mxu0
    %v4877 = vadd.f32 %v4684, %v4876
    %v4878 = vpop.f32.mrb[0].mxu0
    %v4879 = vadd.f32 %v4686, %v4878
    %v4880 = vpop.f32.mrb[0].mxu0
    %v4881 = vadd.f32 %v4688, %v4880
    %4882 = vmatprep.mubr.bf16.mxu0 0
    %4883 = vmatmul.mubr.bf16.gmra.mrb[0].mxu0 %v3841
    %v4884 = vpop.f32.mrb[0].mxu0
    %v4885 = vadd.f32 %v4692, %v4884
    %v4886 = vpop.f32.mrb[0].mxu0
    %v4887 = vadd.f32 %v4694, %v4886
    %v4888 = vpop.f32.mrb[0].mxu0
    %v4889 = vadd.f32 %v4696, %v4888
    %v4890 = vpop.f32.mrb[0].mxu0
    %v4891 = vadd.f32 %v4698, %v4890
    %4892 = vmatprep.mubr.bf16.mxu0 0
    %4893 = vmatmul.mubr.bf16.gmra.mrb[0].mxu0 %v3846
    %v4894 = vpop.f32.mrb[0].mxu0
    %v4895 = vadd.f32 %v4702, %v4894
    %v4896 = vpop.f32.mrb[0].mxu0
    %v4897 = vadd.f32 %v4704, %v4896
    %v4898 = vpop.f32.mrb[0].mxu0
    %v4899 = vadd.f32 %v4706, %v4898
    %v4900 = vpop.f32.mrb[0].mxu0
    %v4901 = vadd.f32 %v4708, %v4900
    %4902 = vmatprep.mubr.bf16.mxu0 0
    %4903 = vmatmul.mubr.bf16.gmra.mrb[0].mxu0 %v3851
    %v4904 = vpop.f32.mrb[0].mxu0
    %v4905 = vadd.f32 %v4712, %v4904
    %v4906 = vpop.f32.mrb[0].mxu0
    %v4907 = vadd.f32 %v4714, %v4906
    %v4908 = vpop.f32.mrb[0].mxu0
    %v4909 = vadd.f32 %v4716, %v4908
    %v4910 = vpop.f32.mrb[0].mxu0
    %v4911 = vadd.f32 %v4718, %v4910
    %4912 = vmatprep.mubr.bf16.mxu0 0
    %4913 = vmatmul.mubr.bf16.gmra.mrb[0].mxu0 %v3856
    %v4914 = vpop.f32.mrb[0].mxu0
    %v4915 = vadd.f32 %v4722, %v4914
    %v4916 = vpop.f32.mrb[0].mxu0
    %v4917 = vadd.f32 %v4724, %v4916
    %v4918 = vpop.f32.mrb[0].mxu0
    %v4919 = vadd.f32 %v4726, %v4918
    %v4920 = vpop.f32.mrb[0].mxu0
    %v4921 = vadd.f32 %v4728, %v4920
    %4922 = vmatprep.mubr.bf16.mxu0 0
    %4923 = vmatmul.mubr.bf16.gmra.mrb[0].mxu0 %v3861
    %v4924 = vpop.f32.mrb[0].mxu0
    %v4925 = vadd.f32 %v4732, %v4924
    %v4926 = vpop.f32.mrb[0].mxu0
    %v4927 = vadd.f32 %v4734, %v4926
    %v4928 = vpop.f32.mrb[0].mxu0
    %v4929 = vadd.f32 %v4736, %v4928
    %v4930 = vpop.f32.mrb[0].mxu0
    %v4931 = vadd.f32 %v4738, %v4930
    %4932 = vdwg.mxu0
    %vm4933 = vcmp.ge.f32.partialorder %v4775, 0.0
    %vm4934 = vcmp.ge.f32.partialorder %v4777, 0.0
    %vm4935 = vcmp.ge.f32.partialorder %v4779, 0.0
    %vm4936 = vcmp.ge.f32.partialorder %v4781, 0.0
    %vm4937 = vcmp.ge.f32.partialorder %v4785, 0.0
    %vm4938 = vcmp.ge.f32.partialorder %v4787, 0.0
    %vm4939 = vcmp.ge.f32.partialorder %v4789, 0.0
    %vm4940 = vcmp.ge.f32.partialorder %v4791, 0.0
    %vm4941 = vcmp.ge.f32.partialorder %v4795, 0.0
    %vm4942 = vcmp.ge.f32.partialorder %v4797, 0.0
    %vm4943 = vcmp.ge.f32.partialorder %v4799, 0.0
    %vm4944 = vcmp.ge.f32.partialorder %v4801, 0.0
    %vm4945 = vcmp.ge.f32.partialorder %v4805, 0.0
    %vm4946 = vcmp.ge.f32.partialorder %v4807, 0.0
    %vm4947 = vcmp.ge.f32.partialorder %v4809, 0.0
    %vm4948 = vcmp.ge.f32.partialorder %v4811, 0.0
    %vm4949 = vcmp.ge.f32.partialorder %v4815, 0.0
    %vm4950 = vcmp.ge.f32.partialorder %v4817, 0.0
    %vm4951 = vcmp.ge.f32.partialorder %v4819, 0.0
    %vm4952 = vcmp.ge.f32.partialorder %v4821, 0.0
    %vm4953 = vcmp.ge.f32.partialorder %v4825, 0.0
    %vm4954 = vcmp.ge.f32.partialorder %v4827, 0.0
    %vm4955 = vcmp.ge.f32.partialorder %v4829, 0.0
    %vm4956 = vcmp.ge.f32.partialorder %v4831, 0.0
    %vm4957 = vcmp.ge.f32.partialorder %v4835, 0.0
    %vm4958 = vcmp.ge.f32.partialorder %v4837, 0.0
    %vm4959 = vcmp.ge.f32.partialorder %v4839, 0.0
    %vm4960 = vcmp.ge.f32.partialorder %v4841, 0.0
    %vm4961 = vcmp.ge.f32.partialorder %v4845, 0.0
    %vm4962 = vcmp.ge.f32.partialorder %v4847, 0.0
    %vm4963 = vcmp.ge.f32.partialorder %v4849, 0.0
    %vm4964 = vcmp.ge.f32.partialorder %v4851, 0.0
    %vm4965 = vcmp.ge.f32.partialorder %v4855, 0.0
    %vm4966 = vcmp.ge.f32.partialorder %v4857, 0.0
    %vm4967 = vcmp.ge.f32.partialorder %v4859, 0.0
    %vm4968 = vcmp.ge.f32.partialorder %v4861, 0.0
    %vm4969 = vcmp.ge.f32.partialorder %v4865, 0.0
    %vm4970 = vcmp.ge.f32.partialorder %v4867, 0.0
    %vm4971 = vcmp.ge.f32.partialorder %v4869, 0.0
    %vm4972 = vcmp.ge.f32.partialorder %v4871, 0.0
    %vm4973 = vcmp.ge.f32.partialorder %v4875, 0.0
    %vm4974 = vcmp.ge.f32.partialorder %v4877, 0.0
    %vm4975 = vcmp.ge.f32.partialorder %v4879, 0.0
    %vm4976 = vcmp.ge.f32.partialorder %v4881, 0.0
    %vm4977 = vcmp.ge.f32.partialorder %v4885, 0.0
    %vm4978 = vcmp.ge.f32.partialorder %v4887, 0.0
    %vm4979 = vcmp.ge.f32.partialorder %v4889, 0.0
    %vm4980 = vcmp.ge.f32.partialorder %v4891, 0.0
    %vm4981 = vcmp.ge.f32.partialorder %v4895, 0.0
    %vm4982 = vcmp.ge.f32.partialorder %v4897, 0.0
    %vm4983 = vcmp.ge.f32.partialorder %v4899, 0.0
    %vm4984 = vcmp.ge.f32.partialorder %v4901, 0.0
    %vm4985 = vcmp.ge.f32.partialorder %v4905, 0.0
    %vm4986 = vcmp.ge.f32.partialorder %v4907, 0.0
    %vm4987 = vcmp.ge.f32.partialorder %v4909, 0.0
    %vm4988 = vcmp.ge.f32.partialorder %v4911, 0.0
    %vm4989 = vcmp.ge.f32.partialorder %v4915, 0.0
    %vm4990 = vcmp.ge.f32.partialorder %v4917, 0.0
    %vm4991 = vcmp.ge.f32.partialorder %v4919, 0.0
    %vm4992 = vcmp.ge.f32.partialorder %v4921, 0.0
    %vm4993 = vcmp.ge.f32.partialorder %v4925, 0.0
    %vm4994 = vcmp.ge.f32.partialorder %v4927, 0.0
    %vm4995 = vcmp.ge.f32.partialorder %v4929, 0.0
    %vm4996 = vcmp.ge.f32.partialorder %v4931, 0.0
    %v4997 = vmul.f32 %v3461, %v4775
    %v4998 = vmul.f32 %v3461, %v4777
    %v4999 = vmul.f32 %v3461, %v4779
    %v5000 = vmul.f32 %v3461, %v4781
    %v5001 = vmul.f32 %v3461, %v4785
    %v5002 = vmul.f32 %v3461, %v4787
    %v5003 = vmul.f32 %v3461, %v4789
    %v5004 = vmul.f32 %v3461, %v4791
    %v5005 = vmul.f32 %v3461, %v4795
    %v5006 = vmul.f32 %v3461, %v4797
    %v5007 = vmul.f32 %v3461, %v4799
    %v5008 = vmul.f32 %v3461, %v4801
    %v5009 = vmul.f32 %v3461, %v4805
    %v5010 = vmul.f32 %v3461, %v4807
    %v5011 = vmul.f32 %v3461, %v4809
    %v5012 = vmul.f32 %v3461, %v4811
    %v5013 = vmul.f32 %v3461, %v4815
    %v5014 = vmul.f32 %v3461, %v4817
    %v5015 = vmul.f32 %v3461, %v4819
    %v5016 = vmul.f32 %v3461, %v4821
    %v5017 = vmul.f32 %v3461, %v4825
    %v5018 = vmul.f32 %v3461, %v4827
    %v5019 = vmul.f32 %v3461, %v4829
    %v5020 = vmul.f32 %v3461, %v4831
    %v5021 = vmul.f32 %v3461, %v4835
    %v5022 = vmul.f32 %v3461, %v4837
    %v5023 = vmul.f32 %v3461, %v4839
    %v5024 = vmul.f32 %v3461, %v4841
    %v5025 = vmul.f32 %v3461, %v4845
    %v5026 = vmul.f32 %v3461, %v4847
    %v5027 = vmul.f32 %v3461, %v4849
    %v5028 = vmul.f32 %v3461, %v4851
    %v5029 = vmul.f32 %v3461, %v4855
    %v5030 = vmul.f32 %v3461, %v4857
    %v5031 = vmul.f32 %v3461, %v4859
    %v5032 = vmul.f32 %v3461, %v4861
    %v5033 = vmul.f32 %v3461, %v4865
    %v5034 = vmul.f32 %v3461, %v4867
    %v5035 = vmul.f32 %v3461, %v4869
    %v5036 = vmul.f32 %v3461, %v4871
    %v5037 = vmul.f32 %v3461, %v4875
    %v5038 = vmul.f32 %v3461, %v4877
    %v5039 = vmul.f32 %v3461, %v4879
    %v5040 = vmul.f32 %v3461, %v4881
    %v5041 = vmul.f32 %v3461, %v4885
    %v5042 = vmul.f32 %v3461, %v4887
    %v5043 = vmul.f32 %v3461, %v4889
    %v5044 = vmul.f32 %v3461, %v4891
    %v5045 = vmul.f32 %v3461, %v4895
    %v5046 = vmul.f32 %v3461, %v4897
    %v5047 = vmul.f32 %v3461, %v4899
    %v5048 = vmul.f32 %v3461, %v4901
    %v5049 = vmul.f32 %v3461, %v4905
    %v5050 = vmul.f32 %v3461, %v4907
    %v5051 = vmul.f32 %v3461, %v4909
    %v5052 = vmul.f32 %v3461, %v4911
    %v5053 = vmul.f32 %v3461, %v4915
    %v5054 = vmul.f32 %v3461, %v4917
    %v5055 = vmul.f32 %v3461, %v4919
    %v5056 = vmul.f32 %v3461, %v4921
    %v5057 = vmul.f32 %v3461, %v4925
    %v5058 = vmul.f32 %v3461, %v4927
    %v5059 = vmul.f32 %v3461, %v4929
    %v5060 = vmul.f32 %v3461, %v4931
    %v5061 = vsel %vm4933, %v4775, %v4997
    %v5062 = vsel %vm4934, %v4777, %v4998
    %v5063 = vsel %vm4935, %v4779, %v4999
    %v5064 = vsel %vm4936, %v4781, %v5000
    %v5065 = vsel %vm4937, %v4785, %v5001
    %v5066 = vsel %vm4938, %v4787, %v5002
    %v5067 = vsel %vm4939, %v4789, %v5003
    %v5068 = vsel %vm4940, %v4791, %v5004
    %v5069 = vsel %vm4941, %v4795, %v5005
    %v5070 = vsel %vm4942, %v4797, %v5006
    %v5071 = vsel %vm4943, %v4799, %v5007
    %v5072 = vsel %vm4944, %v4801, %v5008
    %v5073 = vsel %vm4945, %v4805, %v5009
    %v5074 = vsel %vm4946, %v4807, %v5010
    %v5075 = vsel %vm4947, %v4809, %v5011
    %v5076 = vsel %vm4948, %v4811, %v5012
    %v5077 = vsel %vm4949, %v4815, %v5013
    %v5078 = vsel %vm4950, %v4817, %v5014
    %v5079 = vsel %vm4951, %v4819, %v5015
    %v5080 = vsel %vm4952, %v4821, %v5016
    %v5081 = vsel %vm4953, %v4825, %v5017
    %v5082 = vsel %vm4954, %v4827, %v5018
    %v5083 = vsel %vm4955, %v4829, %v5019
    %v5084 = vsel %vm4956, %v4831, %v5020
    %v5085 = vsel %vm4957, %v4835, %v5021
    %v5086 = vsel %vm4958, %v4837, %v5022
    %v5087 = vsel %vm4959, %v4839, %v5023
    %v5088 = vsel %vm4960, %v4841, %v5024
    %v5089 = vsel %vm4961, %v4845, %v5025
    %v5090 = vsel %vm4962, %v4847, %v5026
    %v5091 = vsel %vm4963, %v4849, %v5027
    %v5092 = vsel %vm4964, %v4851, %v5028
    %v5093 = vsel %vm4965, %v4855, %v5029
    %v5094 = vsel %vm4966, %v4857, %v5030
    %v5095 = vsel %vm4967, %v4859, %v5031
    %v5096 = vsel %vm4968, %v4861, %v5032
    %v5097 = vsel %vm4969, %v4865, %v5033
    %v5098 = vsel %vm4970, %v4867, %v5034
    %v5099 = vsel %vm4971, %v4869, %v5035
    %v5100 = vsel %vm4972, %v4871, %v5036
    %v5101 = vsel %vm4973, %v4875, %v5037
    %v5102 = vsel %vm4974, %v4877, %v5038
    %v5103 = vsel %vm4975, %v4879, %v5039
    %v5104 = vsel %vm4976, %v4881, %v5040
    %v5105 = vsel %vm4977, %v4885, %v5041
    %v5106 = vsel %vm4978, %v4887, %v5042
    %v5107 = vsel %vm4979, %v4889, %v5043
    %v5108 = vsel %vm4980, %v4891, %v5044
    %v5109 = vsel %vm4981, %v4895, %v5045
    %v5110 = vsel %vm4982, %v4897, %v5046
    %v5111 = vsel %vm4983, %v4899, %v5047
    %v5112 = vsel %vm4984, %v4901, %v5048
    %v5113 = vsel %vm4985, %v4905, %v5049
    %v5114 = vsel %vm4986, %v4907, %v5050
    %v5115 = vsel %vm4987, %v4909, %v5051
    %v5116 = vsel %vm4988, %v4911, %v5052
    %v5117 = vsel %vm4989, %v4915, %v5053
    %v5118 = vsel %vm4990, %v4917, %v5054
    %v5119 = vsel %vm4991, %v4919, %v5055
    %v5120 = vsel %vm4992, %v4921, %v5056
    %v5121 = vsel %vm4993, %v4925, %v5057
    %v5122 = vsel %vm4994, %v4927, %v5058
    %v5123 = vsel %vm4995, %v4929, %v5059
    %v5124 = vsel %vm4996, %v4931, %v5060
    %v5125 = vpack.c.bf16 %v5063, %v5061
    %v5126 = vpack.c.bf16 %v5064, %v5062
    %v5127 = vpack.c.bf16 %v5067, %v5065
    %v5128 = vpack.c.bf16 %v5068, %v5066
    %v5129 = vpack.c.bf16 %v5071, %v5069
    %v5130 = vpack.c.bf16 %v5072, %v5070
    %v5131 = vpack.c.bf16 %v5075, %v5073
    %v5132 = vpack.c.bf16 %v5076, %v5074
    %v5133 = vpack.c.bf16 %v5079, %v5077
    %v5134 = vpack.c.bf16 %v5080, %v5078
    %v5135 = vpack.c.bf16 %v5083, %v5081
    %v5136 = vpack.c.bf16 %v5084, %v5082
    %v5137 = vpack.c.bf16 %v5087, %v5085
    %v5138 = vpack.c.bf16 %v5088, %v5086
    %v5139 = vpack.c.bf16 %v5091, %v5089
    %v5140 = vpack.c.bf16 %v5092, %v5090
    %v5141 = vpack.c.bf16 %v5095, %v5093
    %v5142 = vpack.c.bf16 %v5096, %v5094
    %v5143 = vpack.c.bf16 %v5099, %v5097
    %v5144 = vpack.c.bf16 %v5100, %v5098
    %v5145 = vpack.c.bf16 %v5103, %v5101
    %v5146 = vpack.c.bf16 %v5104, %v5102
    %v5147 = vpack.c.bf16 %v5107, %v5105
    %v5148 = vpack.c.bf16 %v5108, %v5106
    %v5149 = vpack.c.bf16 %v5111, %v5109
    %v5150 = vpack.c.bf16 %v5112, %v5110
    %v5151 = vpack.c.bf16 %v5115, %v5113
    %v5152 = vpack.c.bf16 %v5116, %v5114
    %v5153 = vpack.c.bf16 %v5119, %v5117
    %v5154 = vpack.c.bf16 %v5120, %v5118
    %v5155 = vpack.c.bf16 %v5123, %v5121
    %v5156 = vpack.c.bf16 %v5124, %v5122
    %v5157 = vld [vmem:[#allocation10] sm:$0xf]
    %v5158 = vld [vmem:[#allocation10 + $0x4] sm:$0xf]
    %v5159 = vld [vmem:[#allocation10 + $0x8] sm:$0xf]
    %v5160 = vld [vmem:[#allocation10 + $0xc] sm:$0xf]
    %v5161 = vld [vmem:[#allocation10 + $0x10] sm:$0xf]
    %v5162 = vld [vmem:[#allocation10 + $0x14] sm:$0xf]
    %v5163 = vld [vmem:[#allocation10 + $0x18] sm:$0xf]
    %v5164 = vld [vmem:[#allocation10 + $0x1c] sm:$0xf]
    %v5165 = vld [vmem:[#allocation10 + $0x20] sm:$0xf]
    %v5166 = vld [vmem:[#allocation10 + $0x24] sm:$0xf]
    %v5167 = vld [vmem:[#allocation10 + $0x28] sm:$0xf]
    %v5168 = vld [vmem:[#allocation10 + $0x2c] sm:$0xf]
    %v5169 = vld [vmem:[#allocation10 + $0x30] sm:$0xf]
    %v5170 = vld [vmem:[#allocation10 + $0x34] sm:$0xf]
    %v5171 = vld [vmem:[#allocation10 + $0x38] sm:$0xf]
    %v5172 = vld [vmem:[#allocation10 + $0x3c] sm:$0xf]
    %v5173 = vld [vmem:[#allocation10 + $0x40] sm:$0xf]
    %v5174 = vld [vmem:[#allocation10 + $0x44] sm:$0xf]
    %v5175 = vld [vmem:[#allocation10 + $0x48] sm:$0xf]
    %v5176 = vld [vmem:[#allocation10 + $0x4c] sm:$0xf]
    %v5177 = vld [vmem:[#allocation10 + $0x50] sm:$0xf]
    %v5178 = vld [vmem:[#allocation10 + $0x54] sm:$0xf]
    %v5179 = vld [vmem:[#allocation10 + $0x58] sm:$0xf]
    %v5180 = vld [vmem:[#allocation10 + $0x5c] sm:$0xf]
    %v5181 = vld [vmem:[#allocation10 + $0x60] sm:$0xf]
    %v5182 = vld [vmem:[#allocation10 + $0x64] sm:$0xf]
    %v5183 = vld [vmem:[#allocation10 + $0x68] sm:$0xf]
    %v5184 = vld [vmem:[#allocation10 + $0x6c] sm:$0xf]
    %v5185 = vld [vmem:[#allocation10 + $0x70] sm:$0xf]
    %v5186 = vld [vmem:[#allocation10 + $0x74] sm:$0xf]
    %v5187 = vld [vmem:[#allocation10 + $0x78] sm:$0xf]
    %v5188 = vld [vmem:[#allocation10 + $0x7c] sm:$0xf]
    %v5189 = vld [vmem:[%s7 + $0x7] sm:$0x1]
    %v5191 = vlaneseq
    %v5192 = vshrl.u32 %v5191, 7
    %v5193 = vsub.s32 0, %v5192
    %v5194 = vrot.slane %v5189, %v5193
    %v5228 = vunpack.c.l.b16 %v5157
    %v5229 = vunpack.c.l.b16 %v5158
    %v5230 = vunpack.c.l.b16 %v5159
    %v5231 = vunpack.c.l.b16 %v5160
    %v5232 = vunpack.c.l.b16 %v5161
    %v5233 = vunpack.c.l.b16 %v5162
    %v5234 = vunpack.c.l.b16 %v5163
    %v5235 = vunpack.c.l.b16 %v5164
    %v5236 = vunpack.c.l.b16 %v5165
    %v5237 = vunpack.c.l.b16 %v5166
    %v5238 = vunpack.c.l.b16 %v5167
    %v5239 = vunpack.c.l.b16 %v5168
    %v5240 = vunpack.c.l.b16 %v5169
    %v5241 = vunpack.c.l.b16 %v5170
    %v5242 = vunpack.c.l.b16 %v5171
    %v5243 = vunpack.c.l.b16 %v5172
    %v5244 = vunpack.c.l.b16 %v5173
    %v5245 = vunpack.c.l.b16 %v5174
    %v5246 = vunpack.c.l.b16 %v5175
    %v5247 = vunpack.c.l.b16 %v5176
    %v5248 = vunpack.c.l.b16 %v5177
    %v5249 = vunpack.c.l.b16 %v5178
    %v5250 = vunpack.c.l.b16 %v5179
    %v5251 = vunpack.c.l.b16 %v5180
    %v5252 = vunpack.c.l.b16 %v5181
    %v5253 = vunpack.c.l.b16 %v5182
    %v5254 = vunpack.c.l.b16 %v5183
    %v5255 = vunpack.c.l.b16 %v5184
    %v5256 = vunpack.c.l.b16 %v5185
    %v5257 = vunpack.c.l.b16 %v5186
    %v5258 = vunpack.c.l.b16 %v5187
    %v5259 = vunpack.c.l.b16 %v5188
    %v5260 = vpack.c.b16 %v5229, %v5228
    %v5261 = vpack.c.b16 %v5231, %v5230
    %v5262 = vpack.c.b16 %v5233, %v5232
    %v5263 = vpack.c.b16 %v5235, %v5234
    %v5264 = vpack.c.b16 %v5237, %v5236
    %v5265 = vpack.c.b16 %v5239, %v5238
    %v5266 = vpack.c.b16 %v5241, %v5240
    %v5267 = vpack.c.b16 %v5243, %v5242
    %v5268 = vpack.c.b16 %v5245, %v5244
    %v5269 = vpack.c.b16 %v5247, %v5246
    %v5270 = vpack.c.b16 %v5249, %v5248
    %v5271 = vpack.c.b16 %v5251, %v5250
    %v5272 = vpack.c.b16 %v5253, %v5252
    %v5273 = vpack.c.b16 %v5255, %v5254
    %v5274 = vpack.c.b16 %v5257, %v5256
    %v5275 = vpack.c.b16 %v5259, %v5258
    %5292 = vmatprep.subr.bf16.mxu0 0
    %5293 = vmatpush1.bf16.msra.mxu0 %v5260
    %5294 = vmatprep.subr.bf16.mxu0 0
    %5295 = vmatpush1.bf16.msra.mxu0 %v5261
    %5296 = vmatprep.subr.bf16.mxu0 0
    %5297 = vmatpush1.bf16.msra.mxu0 %v5262
    %5298 = vmatprep.subr.bf16.mxu0 0
    %5299 = vmatpush1.bf16.msra.mxu0 %v5263
    %5300 = vmatprep.subr.bf16.mxu0 0
    %5301 = vmatpush1.bf16.msra.mxu0 %v5264
    %5302 = vmatprep.subr.bf16.mxu0 0
    %5303 = vmatpush1.bf16.msra.mxu0 %v5265
    %5304 = vmatprep.subr.bf16.mxu0 0
    %5305 = vmatpush1.bf16.msra.mxu0 %v5266
    %5306 = vmatprep.subr.bf16.mxu0 0
    %5307 = vmatpush1.bf16.msra.mxu0 %v5267
    %5308 = vmatprep.subr.bf16.mxu0 0
    %5309 = vmatpush1.bf16.msra.mxu0 %v5268
    %5310 = vmatprep.subr.bf16.mxu0 0
    %5311 = vmatpush1.bf16.msra.mxu0 %v5269
    %5312 = vmatprep.subr.bf16.mxu0 0
    %5313 = vmatpush1.bf16.msra.mxu0 %v5270
    %5314 = vmatprep.subr.bf16.mxu0 0
    %5315 = vmatpush1.bf16.msra.mxu0 %v5271
    %5316 = vmatprep.subr.bf16.mxu0 0
    %5317 = vmatpush1.bf16.msra.mxu0 %v5272
    %5318 = vmatprep.subr.bf16.mxu0 0
    %5319 = vmatpush1.bf16.msra.mxu0 %v5273
    %5320 = vmatprep.subr.bf16.mxu0 0
    %5321 = vmatpush1.bf16.msra.mxu0 %v5274
    %5322 = vmatprep.subr.bf16.mxu0 0
    %5323 = vmatpush1.bf16.msra.mxu0 %v5275
    %5324 = vmatprep.mubr.bf16.mxu0 %v5126
    %5325 = vmatmul.mubr.bf16.gmra.mrb[0].mxu0 %v5125
    %v5326 = vpop.f32.mrb[0].mxu0
    %v5327 = vadd.f32 %v5194, %v5326
    %v5328 = vpop.f32.mrb[0].mxu0
    %v5329 = vpop.f32.mrb[0].mxu0
    %v5330 = vadd.f32 %v5194, %v5329
    %v5331 = vpop.f32.mrb[0].mxu0
    %5332 = vmatprep.mubr.bf16.mxu0 %v5128
    %5333 = vmatmul.mubr.bf16.gmra.mrb[0].mxu0 %v5127
    %v5334 = vpop.f32.mrb[0].mxu0
    %v5335 = vadd.f32 %v5194, %v5334
    %v5336 = vpop.f32.mrb[0].mxu0
    %v5337 = vpop.f32.mrb[0].mxu0
    %v5338 = vadd.f32 %v5194, %v5337
    %v5339 = vpop.f32.mrb[0].mxu0
    %5340 = vmatprep.mubr.bf16.mxu0 %v5130
    %5341 = vmatmul.mubr.bf16.gmra.mrb[0].mxu0 %v5129
    %v5342 = vpop.f32.mrb[0].mxu0
    %v5343 = vadd.f32 %v5194, %v5342
    %v5344 = vpop.f32.mrb[0].mxu0
    %v5345 = vpop.f32.mrb[0].mxu0
    %v5346 = vadd.f32 %v5194, %v5345
    %v5347 = vpop.f32.mrb[0].mxu0
    %5348 = vmatprep.mubr.bf16.mxu0 %v5132
    %5349 = vmatmul.mubr.bf16.gmra.mrb[0].mxu0 %v5131
    %v5350 = vpop.f32.mrb[0].mxu0
    %v5351 = vadd.f32 %v5194, %v5350
    %v5352 = vpop.f32.mrb[0].mxu0
    %v5353 = vpop.f32.mrb[0].mxu0
    %v5354 = vadd.f32 %v5194, %v5353
    %v5355 = vpop.f32.mrb[0].mxu0
    %5356 = vmatprep.mubr.bf16.mxu0 %v5134
    %5357 = vmatmul.mubr.bf16.gmra.mrb[0].mxu0 %v5133
    %v5358 = vpop.f32.mrb[0].mxu0
    %v5359 = vadd.f32 %v5194, %v5358
    %v5360 = vpop.f32.mrb[0].mxu0
    %v5361 = vpop.f32.mrb[0].mxu0
    %v5362 = vadd.f32 %v5194, %v5361
    %v5363 = vpop.f32.mrb[0].mxu0
    %5364 = vmatprep.mubr.bf16.mxu0 %v5136
    %5365 = vmatmul.mubr.bf16.gmra.mrb[0].mxu0 %v5135
    %v5366 = vpop.f32.mrb[0].mxu0
    %v5367 = vadd.f32 %v5194, %v5366
    %v5368 = vpop.f32.mrb[0].mxu0
    %v5369 = vpop.f32.mrb[0].mxu0
    %v5370 = vadd.f32 %v5194, %v5369
    %v5371 = vpop.f32.mrb[0].mxu0
    %5372 = vmatprep.mubr.bf16.mxu0 %v5138
    %5373 = vmatmul.mubr.bf16.gmra.mrb[0].mxu0 %v5137
    %v5374 = vpop.f32.mrb[0].mxu0
    %v5375 = vadd.f32 %v5194, %v5374
    %v5376 = vpop.f32.mrb[0].mxu0
    %v5377 = vpop.f32.mrb[0].mxu0
    %v5378 = vadd.f32 %v5194, %v5377
    %v5379 = vpop.f32.mrb[0].mxu0
    %5380 = vmatprep.mubr.bf16.mxu0 %v5140
    %5381 = vmatmul.mubr.bf16.gmra.mrb[0].mxu0 %v5139
    %v5382 = vpop.f32.mrb[0].mxu0
    %v5383 = vadd.f32 %v5194, %v5382
    %v5384 = vpop.f32.mrb[0].mxu0
    %v5385 = vpop.f32.mrb[0].mxu0
    %v5386 = vadd.f32 %v5194, %v5385
    %v5387 = vpop.f32.mrb[0].mxu0
    %5388 = vmatprep.mubr.bf16.mxu0 %v5142
    %5389 = vmatmul.mubr.bf16.gmra.mrb[0].mxu0 %v5141
    %v5390 = vpop.f32.mrb[0].mxu0
    %v5391 = vadd.f32 %v5194, %v5390
    %v5392 = vpop.f32.mrb[0].mxu0
    %v5393 = vpop.f32.mrb[0].mxu0
    %v5394 = vadd.f32 %v5194, %v5393
    %v5395 = vpop.f32.mrb[0].mxu0
    %5396 = vmatprep.mubr.bf16.mxu0 %v5144
    %5397 = vmatmul.mubr.bf16.gmra.mrb[0].mxu0 %v5143
    %v5398 = vpop.f32.mrb[0].mxu0
    %v5399 = vadd.f32 %v5194, %v5398
    %v5400 = vpop.f32.mrb[0].mxu0
    %v5401 = vpop.f32.mrb[0].mxu0
    %v5402 = vadd.f32 %v5194, %v5401
    %v5403 = vpop.f32.mrb[0].mxu0
    %5404 = vmatprep.mubr.bf16.mxu0 %v5146
    %5405 = vmatmul.mubr.bf16.gmra.mrb[0].mxu0 %v5145
    %v5406 = vpop.f32.mrb[0].mxu0
    %v5407 = vadd.f32 %v5194, %v5406
    %v5408 = vpop.f32.mrb[0].mxu0
    %v5409 = vpop.f32.mrb[0].mxu0
    %v5410 = vadd.f32 %v5194, %v5409
    %v5411 = vpop.f32.mrb[0].mxu0
    %5412 = vmatprep.mubr.bf16.mxu0 %v5148
    %5413 = vmatmul.mubr.bf16.gmra.mrb[0].mxu0 %v5147
    %v5414 = vpop.f32.mrb[0].mxu0
    %v5415 = vadd.f32 %v5194, %v5414
    %v5416 = vpop.f32.mrb[0].mxu0
    %v5417 = vpop.f32.mrb[0].mxu0
    %v5418 = vadd.f32 %v5194, %v5417
    %v5419 = vpop.f32.mrb[0].mxu0
    %5420 = vmatprep.mubr.bf16.mxu0 %v5150
    %5421 = vmatmul.mubr.bf16.gmra.mrb[0].mxu0 %v5149
    %v5422 = vpop.f32.mrb[0].mxu0
    %v5423 = vadd.f32 %v5194, %v5422
    %v5424 = vpop.f32.mrb[0].mxu0
    %v5425 = vpop.f32.mrb[0].mxu0
    %v5426 = vadd.f32 %v5194, %v5425
    %v5427 = vpop.f32.mrb[0].mxu0
    %5428 = vmatprep.mubr.bf16.mxu0 %v5152
    %5429 = vmatmul.mubr.bf16.gmra.mrb[0].mxu0 %v5151
    %v5430 = vpop.f32.mrb[0].mxu0
    %v5431 = vadd.f32 %v5194, %v5430
    %v5432 = vpop.f32.mrb[0].mxu0
    %v5433 = vpop.f32.mrb[0].mxu0
    %v5434 = vadd.f32 %v5194, %v5433
    %v5435 = vpop.f32.mrb[0].mxu0
    %5436 = vmatprep.mubr.bf16.mxu0 %v5154
    %5437 = vmatmul.mubr.bf16.gmra.mrb[0].mxu0 %v5153
    %v5438 = vpop.f32.mrb[0].mxu0
    %v5439 = vadd.f32 %v5194, %v5438
    %v5440 = vpop.f32.mrb[0].mxu0
    %v5441 = vpop.f32.mrb[0].mxu0
    %v5442 = vadd.f32 %v5194, %v5441
    %v5443 = vpop.f32.mrb[0].mxu0
    %5444 = vmatprep.mubr.bf16.mxu0 %v5156
    %5445 = vmatmul.mubr.bf16.gmra.mrb[0].mxu0 %v5155
    %v5446 = vpop.f32.mrb[0].mxu0
    %v5447 = vadd.f32 %v5194, %v5446
    %v5448 = vpop.f32.mrb[0].mxu0
    %v5449 = vpop.f32.mrb[0].mxu0
    %v5450 = vadd.f32 %v5194, %v5449
    %v5451 = vpop.f32.mrb[0].mxu0
    %5452 = vdwg.mxu0
    %vm5453 = vcmp.ge.f32.partialorder %v5327, 0.0
    %vm5454 = vcmp.ge.f32.partialorder %v5330, 0.0
    %vm5455 = vcmp.ge.f32.partialorder %v5335, 0.0
    %vm5456 = vcmp.ge.f32.partialorder %v5338, 0.0
    %vm5457 = vcmp.ge.f32.partialorder %v5343, 0.0
    %vm5458 = vcmp.ge.f32.partialorder %v5346, 0.0
    %vm5459 = vcmp.ge.f32.partialorder %v5351, 0.0
    %vm5460 = vcmp.ge.f32.partialorder %v5354, 0.0
    %vm5461 = vcmp.ge.f32.partialorder %v5359, 0.0
    %vm5462 = vcmp.ge.f32.partialorder %v5362, 0.0
    %vm5463 = vcmp.ge.f32.partialorder %v5367, 0.0
    %vm5464 = vcmp.ge.f32.partialorder %v5370, 0.0
    %vm5465 = vcmp.ge.f32.partialorder %v5375, 0.0
    %vm5466 = vcmp.ge.f32.partialorder %v5378, 0.0
    %vm5467 = vcmp.ge.f32.partialorder %v5383, 0.0
    %vm5468 = vcmp.ge.f32.partialorder %v5386, 0.0
    %vm5469 = vcmp.ge.f32.partialorder %v5391, 0.0
    %vm5470 = vcmp.ge.f32.partialorder %v5394, 0.0
    %vm5471 = vcmp.ge.f32.partialorder %v5399, 0.0
    %vm5472 = vcmp.ge.f32.partialorder %v5402, 0.0
    %vm5473 = vcmp.ge.f32.partialorder %v5407, 0.0
    %vm5474 = vcmp.ge.f32.partialorder %v5410, 0.0
    %vm5475 = vcmp.ge.f32.partialorder %v5415, 0.0
    %vm5476 = vcmp.ge.f32.partialorder %v5418, 0.0
    %vm5477 = vcmp.ge.f32.partialorder %v5423, 0.0
    %vm5478 = vcmp.ge.f32.partialorder %v5426, 0.0
    %vm5479 = vcmp.ge.f32.partialorder %v5431, 0.0
    %vm5480 = vcmp.ge.f32.partialorder %v5434, 0.0
    %vm5481 = vcmp.ge.f32.partialorder %v5439, 0.0
    %vm5482 = vcmp.ge.f32.partialorder %v5442, 0.0
    %vm5483 = vcmp.ge.f32.partialorder %v5447, 0.0
    %vm5484 = vcmp.ge.f32.partialorder %v5450, 0.0
    %v5485 = vmul.f32 %v3461, %v5327
    %v5486 = vmul.f32 %v3461, %v5330
    %v5487 = vmul.f32 %v3461, %v5335
    %v5488 = vmul.f32 %v3461, %v5338
    %v5489 = vmul.f32 %v3461, %v5343
    %v5490 = vmul.f32 %v3461, %v5346
    %v5491 = vmul.f32 %v3461, %v5351
    %v5492 = vmul.f32 %v3461, %v5354
    %v5493 = vmul.f32 %v3461, %v5359
    %v5494 = vmul.f32 %v3461, %v5362
    %v5495 = vmul.f32 %v3461, %v5367
    %v5496 = vmul.f32 %v3461, %v5370
    %v5497 = vmul.f32 %v3461, %v5375
    %v5498 = vmul.f32 %v3461, %v5378
    %v5499 = vmul.f32 %v3461, %v5383
    %v5500 = vmul.f32 %v3461, %v5386
    %v5501 = vmul.f32 %v3461, %v5391
    %v5502 = vmul.f32 %v3461, %v5394
    %v5503 = vmul.f32 %v3461, %v5399
    %v5504 = vmul.f32 %v3461, %v5402
    %v5505 = vmul.f32 %v3461, %v5407
    %v5506 = vmul.f32 %v3461, %v5410
    %v5507 = vmul.f32 %v3461, %v5415
    %v5508 = vmul.f32 %v3461, %v5418
    %v5509 = vmul.f32 %v3461, %v5423
    %v5510 = vmul.f32 %v3461, %v5426
    %v5511 = vmul.f32 %v3461, %v5431
    %v5512 = vmul.f32 %v3461, %v5434
    %v5513 = vmul.f32 %v3461, %v5439
    %v5514 = vmul.f32 %v3461, %v5442
    %v5515 = vmul.f32 %v3461, %v5447
    %v5516 = vmul.f32 %v3461, %v5450
    %v5517 = vsel %vm5453, %v5327, %v5485
    %v5518 = vsel %vm5454, %v5330, %v5486
    %v5519 = vsel %vm5455, %v5335, %v5487
    %v5520 = vsel %vm5456, %v5338, %v5488
    %v5521 = vsel %vm5457, %v5343, %v5489
    %v5522 = vsel %vm5458, %v5346, %v5490
    %v5523 = vsel %vm5459, %v5351, %v5491
    %v5524 = vsel %vm5460, %v5354, %v5492
    %v5525 = vsel %vm5461, %v5359, %v5493
    %v5526 = vsel %vm5462, %v5362, %v5494
    %v5527 = vsel %vm5463, %v5367, %v5495
    %v5528 = vsel %vm5464, %v5370, %v5496
    %v5529 = vsel %vm5465, %v5375, %v5497
    %v5530 = vsel %vm5466, %v5378, %v5498
    %v5531 = vsel %vm5467, %v5383, %v5499
    %v5532 = vsel %vm5468, %v5386, %v5500
    %v5533 = vsel %vm5469, %v5391, %v5501
    %v5534 = vsel %vm5470, %v5394, %v5502
    %v5535 = vsel %vm5471, %v5399, %v5503
    %v5536 = vsel %vm5472, %v5402, %v5504
    %v5537 = vsel %vm5473, %v5407, %v5505
    %v5538 = vsel %vm5474, %v5410, %v5506
    %v5539 = vsel %vm5475, %v5415, %v5507
    %v5540 = vsel %vm5476, %v5418, %v5508
    %v5541 = vsel %vm5477, %v5423, %v5509
    %v5542 = vsel %vm5478, %v5426, %v5510
    %v5543 = vsel %vm5479, %v5431, %v5511
    %v5544 = vsel %vm5480, %v5434, %v5512
    %v5545 = vsel %vm5481, %v5439, %v5513
    %v5546 = vsel %vm5482, %v5442, %v5514
    %v5547 = vsel %vm5483, %v5447, %v5515
    %v5548 = vsel %vm5484, %v5450, %v5516
    %v5549 = vpack.c.bf16 %v5518, %v5517
    %v5550 = vpack.c.bf16 %v5520, %v5519
    %v5551 = vpack.c.bf16 %v5522, %v5521
    %v5552 = vpack.c.bf16 %v5524, %v5523
    %v5553 = vpack.c.bf16 %v5526, %v5525
    %v5554 = vpack.c.bf16 %v5528, %v5527
    %v5555 = vpack.c.bf16 %v5530, %v5529
    %v5556 = vpack.c.bf16 %v5532, %v5531
    %v5557 = vpack.c.bf16 %v5534, %v5533
    %v5558 = vpack.c.bf16 %v5536, %v5535
    %v5559 = vpack.c.bf16 %v5538, %v5537
    %v5560 = vpack.c.bf16 %v5540, %v5539
    %v5561 = vpack.c.bf16 %v5542, %v5541
    %v5562 = vpack.c.bf16 %v5544, %v5543
    %v5563 = vpack.c.bf16 %v5546, %v5545
    %v5564 = vpack.c.bf16 %v5548, %v5547
    %v5565 = vld [vmem:[#allocation12] sm:$0xf]
    %v5566 = vld [vmem:[#allocation12 + $0x4] sm:$0xf]
    %v5567 = vld [vmem:[#allocation12 + $0x8] sm:$0xf]
    %v5568 = vld [vmem:[#allocation12 + $0xc] sm:$0xf]
    %v5569 = vld [vmem:[#allocation12 + $0x10] sm:$0xf]
    %v5570 = vld [vmem:[#allocation12 + $0x14] sm:$0xf]
    %v5571 = vld [vmem:[#allocation12 + $0x18] sm:$0xf]
    %v5572 = vld [vmem:[#allocation12 + $0x1c] sm:$0xf]
    %v5573 = vld [vmem:[#allocation12 + $0x20] sm:$0xf]
    %v5574 = vld [vmem:[#allocation12 + $0x24] sm:$0xf]
    %v5575 = vld [vmem:[#allocation12 + $0x28] sm:$0xf]
    %v5576 = vld [vmem:[#allocation12 + $0x2c] sm:$0xf]
    %v5577 = vld [vmem:[#allocation12 + $0x30] sm:$0xf]
    %v5578 = vld [vmem:[#allocation12 + $0x34] sm:$0xf]
    %v5579 = vld [vmem:[#allocation12 + $0x38] sm:$0xf]
    %v5580 = vld [vmem:[#allocation12 + $0x3c] sm:$0xf]
    %v5581 = vld [vmem:[%s7 + $0x8] sm:$0x1]
    %v5583 = vlaneseq
    %v5584 = vshrl.u32 %v5583, 7
    %v5585 = vsub.s32 0, %v5584
    %v5586 = vrot.slane %v5581, %v5585
    %v5604 = vunpack.c.l.b16 %v5565
    %v5605 = vunpack.c.l.b16 %v5566
    %v5606 = vunpack.c.l.b16 %v5567
    %v5607 = vunpack.c.l.b16 %v5568
    %v5608 = vunpack.c.l.b16 %v5569
    %v5609 = vunpack.c.l.b16 %v5570
    %v5610 = vunpack.c.l.b16 %v5571
    %v5611 = vunpack.c.l.b16 %v5572
    %v5612 = vunpack.c.l.b16 %v5573
    %v5613 = vunpack.c.l.b16 %v5574
    %v5614 = vunpack.c.l.b16 %v5575
    %v5615 = vunpack.c.l.b16 %v5576
    %v5616 = vunpack.c.l.b16 %v5577
    %v5617 = vunpack.c.l.b16 %v5578
    %v5618 = vunpack.c.l.b16 %v5579
    %v5619 = vunpack.c.l.b16 %v5580
    %v5620 = vpack.c.b16 %v5605, %v5604
    %v5621 = vpack.c.b16 %v5607, %v5606
    %v5622 = vpack.c.b16 %v5609, %v5608
    %v5623 = vpack.c.b16 %v5611, %v5610
    %v5624 = vpack.c.b16 %v5613, %v5612
    %v5625 = vpack.c.b16 %v5615, %v5614
    %v5626 = vpack.c.b16 %v5617, %v5616
    %v5627 = vpack.c.b16 %v5619, %v5618
    %5636 = vmatprep.subr.bf16.mxu0 0
    %5637 = vmatpush1.bf16.msra.mxu0 %v5620
    %5638 = vmatprep.subr.bf16.mxu0 0
    %5639 = vmatpush1.bf16.msra.mxu0 %v5621
    %5640 = vmatprep.subr.bf16.mxu0 0
    %5641 = vmatpush1.bf16.msra.mxu0 %v5622
    %5642 = vmatprep.subr.bf16.mxu0 0
    %5643 = vmatpush1.bf16.msra.mxu0 %v5623
    %5644 = vmatprep.subr.bf16.mxu0 0
    %5645 = vmatpush1.bf16.msra.mxu0 %v5624
    %5646 = vmatprep.subr.bf16.mxu0 0
    %5647 = vmatpush1.bf16.msra.mxu0 %v5625
    %5648 = vmatprep.subr.bf16.mxu0 0
    %5649 = vmatpush1.bf16.msra.mxu0 %v5626
    %5650 = vmatprep.subr.bf16.mxu0 0
    %5651 = vmatpush1.bf16.msra.mxu0 %v5627
    %5652 = vmatprep.subr.bf16.mxu0 0
    %5653 = vmatpush1.bf16.msra.mxu0 0
    %5654 = vmatprep.subr.bf16.mxu0 0
    %5655 = vmatpush1.bf16.msra.mxu0 0
    %5656 = vmatprep.subr.bf16.mxu0 0
    %5657 = vmatpush1.bf16.msra.mxu0 0
    %5658 = vmatprep.subr.bf16.mxu0 0
    %5659 = vmatpush1.bf16.msra.mxu0 0
    %5660 = vmatprep.subr.bf16.mxu0 0
    %5661 = vmatpush1.bf16.msra.mxu0 0
    %5662 = vmatprep.subr.bf16.mxu0 0
    %5663 = vmatpush1.bf16.msra.mxu0 0
    %5664 = vmatprep.subr.bf16.mxu0 0
    %5665 = vmatpush1.bf16.msra.mxu0 0
    %5666 = vmatprep.subr.bf16.mxu0 0
    %5667 = vmatpush1.bf16.msra.mxu0 0
    %5668 = vmatprep.mubr.bf16.mxu0 0
    %5669 = vmatmul.mubr.bf16.gmra.mrb[0].mxu0 %v5549
    %v5670 = vpop.f32.mrb[0].mxu0
    %v5671 = vadd.f32 %v5586, %v5670
    %v5672 = vpop.f32.mrb[0].mxu0
    %v5673 = vpop.f32.mrb[0].mxu0
    %v5674 = vadd.f32 %v5586, %v5673
    %v5675 = vpop.f32.mrb[0].mxu0
    %5676 = vmatprep.mubr.bf16.mxu0 0
    %5677 = vmatmul.mubr.bf16.gmra.mrb[0].mxu0 %v5550
    %v5678 = vpop.f32.mrb[0].mxu0
    %v5679 = vadd.f32 %v5586, %v5678
    %v5680 = vpop.f32.mrb[0].mxu0
    %v5681 = vpop.f32.mrb[0].mxu0
    %v5682 = vadd.f32 %v5586, %v5681
    %v5683 = vpop.f32.mrb[0].mxu0
    %5684 = vmatprep.mubr.bf16.mxu0 0
    %5685 = vmatmul.mubr.bf16.gmra.mrb[0].mxu0 %v5551
    %v5686 = vpop.f32.mrb[0].mxu0
    %v5687 = vadd.f32 %v5586, %v5686
    %v5688 = vpop.f32.mrb[0].mxu0
    %v5689 = vpop.f32.mrb[0].mxu0
    %v5690 = vadd.f32 %v5586, %v5689
    %v5691 = vpop.f32.mrb[0].mxu0
    %5692 = vmatprep.mubr.bf16.mxu0 0
    %5693 = vmatmul.mubr.bf16.gmra.mrb[0].mxu0 %v5552
    %v5694 = vpop.f32.mrb[0].mxu0
    %v5695 = vadd.f32 %v5586, %v5694
    %v5696 = vpop.f32.mrb[0].mxu0
    %v5697 = vpop.f32.mrb[0].mxu0
    %v5698 = vadd.f32 %v5586, %v5697
    %v5699 = vpop.f32.mrb[0].mxu0
    %5700 = vmatprep.mubr.bf16.mxu0 0
    %5701 = vmatmul.mubr.bf16.gmra.mrb[0].mxu0 %v5553
    %v5702 = vpop.f32.mrb[0].mxu0
    %v5703 = vadd.f32 %v5586, %v5702
    %v5704 = vpop.f32.mrb[0].mxu0
    %v5705 = vpop.f32.mrb[0].mxu0
    %v5706 = vadd.f32 %v5586, %v5705
    %v5707 = vpop.f32.mrb[0].mxu0
    %5708 = vmatprep.mubr.bf16.mxu0 0
    %5709 = vmatmul.mubr.bf16.gmra.mrb[0].mxu0 %v5554
    %v5710 = vpop.f32.mrb[0].mxu0
    %v5711 = vadd.f32 %v5586, %v5710
    %v5712 = vpop.f32.mrb[0].mxu0
    %v5713 = vpop.f32.mrb[0].mxu0
    %v5714 = vadd.f32 %v5586, %v5713
    %v5715 = vpop.f32.mrb[0].mxu0
    %5716 = vmatprep.mubr.bf16.mxu0 0
    %5717 = vmatmul.mubr.bf16.gmra.mrb[0].mxu0 %v5555
    %v5718 = vpop.f32.mrb[0].mxu0
    %v5719 = vadd.f32 %v5586, %v5718
    %v5720 = vpop.f32.mrb[0].mxu0
    %v5721 = vpop.f32.mrb[0].mxu0
    %v5722 = vadd.f32 %v5586, %v5721
    %v5723 = vpop.f32.mrb[0].mxu0
    %5724 = vmatprep.mubr.bf16.mxu0 0
    %5725 = vmatmul.mubr.bf16.gmra.mrb[0].mxu0 %v5556
    %v5726 = vpop.f32.mrb[0].mxu0
    %v5727 = vadd.f32 %v5586, %v5726
    %v5728 = vpop.f32.mrb[0].mxu0
    %v5729 = vpop.f32.mrb[0].mxu0
    %v5730 = vadd.f32 %v5586, %v5729
    %v5731 = vpop.f32.mrb[0].mxu0
    %5732 = vmatprep.mubr.bf16.mxu0 0
    %5733 = vmatmul.mubr.bf16.gmra.mrb[0].mxu0 %v5557
    %v5734 = vpop.f32.mrb[0].mxu0
    %v5735 = vadd.f32 %v5586, %v5734
    %v5736 = vpop.f32.mrb[0].mxu0
    %v5737 = vpop.f32.mrb[0].mxu0
    %v5738 = vadd.f32 %v5586, %v5737
    %v5739 = vpop.f32.mrb[0].mxu0
    %5740 = vmatprep.mubr.bf16.mxu0 0
    %5741 = vmatmul.mubr.bf16.gmra.mrb[0].mxu0 %v5558
    %v5742 = vpop.f32.mrb[0].mxu0
    %v5743 = vadd.f32 %v5586, %v5742
    %v5744 = vpop.f32.mrb[0].mxu0
    %v5745 = vpop.f32.mrb[0].mxu0
    %v5746 = vadd.f32 %v5586, %v5745
    %v5747 = vpop.f32.mrb[0].mxu0
    %5748 = vmatprep.mubr.bf16.mxu0 0
    %5749 = vmatmul.mubr.bf16.gmra.mrb[0].mxu0 %v5559
    %v5750 = vpop.f32.mrb[0].mxu0
    %v5751 = vadd.f32 %v5586, %v5750
    %v5752 = vpop.f32.mrb[0].mxu0
    %v5753 = vpop.f32.mrb[0].mxu0
    %v5754 = vadd.f32 %v5586, %v5753
    %v5755 = vpop.f32.mrb[0].mxu0
    %5756 = vmatprep.mubr.bf16.mxu0 0
    %5757 = vmatmul.mubr.bf16.gmra.mrb[0].mxu0 %v5560
    %v5758 = vpop.f32.mrb[0].mxu0
    %v5759 = vadd.f32 %v5586, %v5758
    %v5760 = vpop.f32.mrb[0].mxu0
    %v5761 = vpop.f32.mrb[0].mxu0
    %v5762 = vadd.f32 %v5586, %v5761
    %v5763 = vpop.f32.mrb[0].mxu0
    %5764 = vmatprep.mubr.bf16.mxu0 0
    %5765 = vmatmul.mubr.bf16.gmra.mrb[0].mxu0 %v5561
    %v5766 = vpop.f32.mrb[0].mxu0
    %v5767 = vadd.f32 %v5586, %v5766
    %v5768 = vpop.f32.mrb[0].mxu0
    %v5769 = vpop.f32.mrb[0].mxu0
    %v5770 = vadd.f32 %v5586, %v5769
    %v5771 = vpop.f32.mrb[0].mxu0
    %5772 = vmatprep.mubr.bf16.mxu0 0
    %5773 = vmatmul.mubr.bf16.gmra.mrb[0].mxu0 %v5562
    %v5774 = vpop.f32.mrb[0].mxu0
    %v5775 = vadd.f32 %v5586, %v5774
    %v5776 = vpop.f32.mrb[0].mxu0
    %v5777 = vpop.f32.mrb[0].mxu0
    %v5778 = vadd.f32 %v5586, %v5777
    %v5779 = vpop.f32.mrb[0].mxu0
    %5780 = vmatprep.mubr.bf16.mxu0 0
    %5781 = vmatmul.mubr.bf16.gmra.mrb[0].mxu0 %v5563
    %v5782 = vpop.f32.mrb[0].mxu0
    %v5783 = vadd.f32 %v5586, %v5782
    %v5784 = vpop.f32.mrb[0].mxu0
    %v5785 = vpop.f32.mrb[0].mxu0
    %v5786 = vadd.f32 %v5586, %v5785
    %v5787 = vpop.f32.mrb[0].mxu0
    %5788 = vmatprep.mubr.bf16.mxu0 0
    %5789 = vmatmul.mubr.bf16.gmra.mrb[0].mxu0 %v5564
    %v5790 = vpop.f32.mrb[0].mxu0
    %v5791 = vadd.f32 %v5586, %v5790
    %v5792 = vpop.f32.mrb[0].mxu0
    %v5793 = vpop.f32.mrb[0].mxu0
    %v5794 = vadd.f32 %v5586, %v5793
    %v5795 = vpop.f32.mrb[0].mxu0
    %5796 = vdwg.mxu0
    %vm5797 = vcmp.ge.f32.partialorder %v5671, 0.0
    %vm5798 = vcmp.ge.f32.partialorder %v5674, 0.0
    %vm5799 = vcmp.ge.f32.partialorder %v5679, 0.0
    %vm5800 = vcmp.ge.f32.partialorder %v5682, 0.0
    %vm5801 = vcmp.ge.f32.partialorder %v5687, 0.0
    %vm5802 = vcmp.ge.f32.partialorder %v5690, 0.0
    %vm5803 = vcmp.ge.f32.partialorder %v5695, 0.0
    %vm5804 = vcmp.ge.f32.partialorder %v5698, 0.0
    %vm5805 = vcmp.ge.f32.partialorder %v5703, 0.0
    %vm5806 = vcmp.ge.f32.partialorder %v5706, 0.0
    %vm5807 = vcmp.ge.f32.partialorder %v5711, 0.0
    %vm5808 = vcmp.ge.f32.partialorder %v5714, 0.0
    %vm5809 = vcmp.ge.f32.partialorder %v5719, 0.0
    %vm5810 = vcmp.ge.f32.partialorder %v5722, 0.0
    %vm5811 = vcmp.ge.f32.partialorder %v5727, 0.0
    %vm5812 = vcmp.ge.f32.partialorder %v5730, 0.0
    %vm5813 = vcmp.ge.f32.partialorder %v5735, 0.0
    %vm5814 = vcmp.ge.f32.partialorder %v5738, 0.0
    %vm5815 = vcmp.ge.f32.partialorder %v5743, 0.0
    %vm5816 = vcmp.ge.f32.partialorder %v5746, 0.0
    %vm5817 = vcmp.ge.f32.partialorder %v5751, 0.0
    %vm5818 = vcmp.ge.f32.partialorder %v5754, 0.0
    %vm5819 = vcmp.ge.f32.partialorder %v5759, 0.0
    %vm5820 = vcmp.ge.f32.partialorder %v5762, 0.0
    %vm5821 = vcmp.ge.f32.partialorder %v5767, 0.0
    %vm5822 = vcmp.ge.f32.partialorder %v5770, 0.0
    %vm5823 = vcmp.ge.f32.partialorder %v5775, 0.0
    %vm5824 = vcmp.ge.f32.partialorder %v5778, 0.0
    %vm5825 = vcmp.ge.f32.partialorder %v5783, 0.0
    %vm5826 = vcmp.ge.f32.partialorder %v5786, 0.0
    %vm5827 = vcmp.ge.f32.partialorder %v5791, 0.0
    %vm5828 = vcmp.ge.f32.partialorder %v5794, 0.0
    %v5829 = vmul.f32 %v3461, %v5671
    %v5830 = vmul.f32 %v3461, %v5674
    %v5831 = vmul.f32 %v3461, %v5679
    %v5832 = vmul.f32 %v3461, %v5682
    %v5833 = vmul.f32 %v3461, %v5687
    %v5834 = vmul.f32 %v3461, %v5690
    %v5835 = vmul.f32 %v3461, %v5695
    %v5836 = vmul.f32 %v3461, %v5698
    %v5837 = vmul.f32 %v3461, %v5703
    %v5838 = vmul.f32 %v3461, %v5706
    %v5839 = vmul.f32 %v3461, %v5711
    %v5840 = vmul.f32 %v3461, %v5714
    %v5841 = vmul.f32 %v3461, %v5719
    %v5842 = vmul.f32 %v3461, %v5722
    %v5843 = vmul.f32 %v3461, %v5727
    %v5844 = vmul.f32 %v3461, %v5730
    %v5845 = vmul.f32 %v3461, %v5735
    %v5846 = vmul.f32 %v3461, %v5738
    %v5847 = vmul.f32 %v3461, %v5743
    %v5848 = vmul.f32 %v3461, %v5746
    %v5849 = vmul.f32 %v3461, %v5751
    %v5850 = vmul.f32 %v3461, %v5754
    %v5851 = vmul.f32 %v3461, %v5759
    %v5852 = vmul.f32 %v3461, %v5762
    %v5853 = vmul.f32 %v3461, %v5767
    %v5854 = vmul.f32 %v3461, %v5770
    %v5855 = vmul.f32 %v3461, %v5775
    %v5856 = vmul.f32 %v3461, %v5778
    %v5857 = vmul.f32 %v3461, %v5783
    %v5858 = vmul.f32 %v3461, %v5786
    %v5859 = vmul.f32 %v3461, %v5791
    %v5860 = vmul.f32 %v3461, %v5794
    %v5861 = vsel %vm5797, %v5671, %v5829
    %v5862 = vsel %vm5798, %v5674, %v5830
    %v5863 = vsel %vm5799, %v5679, %v5831
    %v5864 = vsel %vm5800, %v5682, %v5832
    %v5865 = vsel %vm5801, %v5687, %v5833
    %v5866 = vsel %vm5802, %v5690, %v5834
    %v5867 = vsel %vm5803, %v5695, %v5835
    %v5868 = vsel %vm5804, %v5698, %v5836
    %v5869 = vsel %vm5805, %v5703, %v5837
    %v5870 = vsel %vm5806, %v5706, %v5838
    %v5871 = vsel %vm5807, %v5711, %v5839
    %v5872 = vsel %vm5808, %v5714, %v5840
    %v5873 = vsel %vm5809, %v5719, %v5841
    %v5874 = vsel %vm5810, %v5722, %v5842
    %v5875 = vsel %vm5811, %v5727, %v5843
    %v5876 = vsel %vm5812, %v5730, %v5844
    %v5877 = vsel %vm5813, %v5735, %v5845
    %v5878 = vsel %vm5814, %v5738, %v5846
    %v5879 = vsel %vm5815, %v5743, %v5847
    %v5880 = vsel %vm5816, %v5746, %v5848
    %v5881 = vsel %vm5817, %v5751, %v5849
    %v5882 = vsel %vm5818, %v5754, %v5850
    %v5883 = vsel %vm5819, %v5759, %v5851
    %v5884 = vsel %vm5820, %v5762, %v5852
    %v5885 = vsel %vm5821, %v5767, %v5853
    %v5886 = vsel %vm5822, %v5770, %v5854
    %v5887 = vsel %vm5823, %v5775, %v5855
    %v5888 = vsel %vm5824, %v5778, %v5856
    %v5889 = vsel %vm5825, %v5783, %v5857
    %v5890 = vsel %vm5826, %v5786, %v5858
    %v5891 = vsel %vm5827, %v5791, %v5859
    %v5892 = vsel %vm5828, %v5794, %v5860
    %v5893 = vpack.c.bf16 %v5862, %v5861
    %v5894 = vpack.c.bf16 %v5864, %v5863
    %v5895 = vpack.c.bf16 %v5866, %v5865
    %v5896 = vpack.c.bf16 %v5868, %v5867
    %v5897 = vpack.c.bf16 %v5870, %v5869
    %v5898 = vpack.c.bf16 %v5872, %v5871
    %v5899 = vpack.c.bf16 %v5874, %v5873
    %v5900 = vpack.c.bf16 %v5876, %v5875
    %v5901 = vpack.c.bf16 %v5878, %v5877
    %v5902 = vpack.c.bf16 %v5880, %v5879
    %v5903 = vpack.c.bf16 %v5882, %v5881
    %v5904 = vpack.c.bf16 %v5884, %v5883
    %v5905 = vpack.c.bf16 %v5886, %v5885
    %v5906 = vpack.c.bf16 %v5888, %v5887
    %v5907 = vpack.c.bf16 %v5890, %v5889
    %v5908 = vpack.c.bf16 %v5892, %v5891
    %v5909 = vld [vmem:[#allocation13] sm:$0xf]
    %v5910 = vld [vmem:[#allocation13 + $0x4] sm:$0xf]
    %v5911 = vld [vmem:[#allocation13 + $0x8] sm:$0xf]
    %v5912 = vld [vmem:[#allocation13 + $0xc] sm:$0xf]
    %v5913 = vld [vmem:[#allocation13 + $0x10] sm:$0xf]
    %v5914 = vld [vmem:[#allocation13 + $0x14] sm:$0xf]
    %v5915 = vld [vmem:[#allocation13 + $0x18] sm:$0xf]
    %v5916 = vld [vmem:[#allocation13 + $0x1c] sm:$0xf]
    %v5917 = vld [vmem:[#allocation13 + $0x20] sm:$0xf]
    %v5918 = vld [vmem:[#allocation13 + $0x24] sm:$0xf]
    %v5919 = vld [vmem:[#allocation13 + $0x28] sm:$0xf]
    %v5920 = vld [vmem:[#allocation13 + $0x2c] sm:$0xf]
    %v5921 = vld [vmem:[#allocation13 + $0x30] sm:$0xf]
    %v5922 = vld [vmem:[#allocation13 + $0x34] sm:$0xf]
    %v5923 = vld [vmem:[#allocation13 + $0x38] sm:$0xf]
    %v5924 = vld [vmem:[#allocation13 + $0x3c] sm:$0xf]
    %v5925 = vld [vmem:[%s7 + $0x9] sm:$0x1]
    %v5927 = vlaneseq
    %v5928 = vshrl.u32 %v5927, 7
    %v5929 = vsub.s32 0, %v5928
    %v5930 = vrot.slane %v5925, %v5929
    %v5948 = vunpack.c.l.b16 %v5909
    %v5949 = vunpack.c.l.b16 %v5910
    %v5950 = vunpack.c.l.b16 %v5911
    %v5951 = vunpack.c.l.b16 %v5912
    %v5952 = vunpack.c.l.b16 %v5913
    %v5953 = vunpack.c.l.b16 %v5914
    %v5954 = vunpack.c.l.b16 %v5915
    %v5955 = vunpack.c.l.b16 %v5916
    %v5956 = vunpack.c.l.b16 %v5917
    %v5957 = vunpack.c.l.b16 %v5918
    %v5958 = vunpack.c.l.b16 %v5919
    %v5959 = vunpack.c.l.b16 %v5920
    %v5960 = vunpack.c.l.b16 %v5921
    %v5961 = vunpack.c.l.b16 %v5922
    %v5962 = vunpack.c.l.b16 %v5923
    %v5963 = vunpack.c.l.b16 %v5924
    %v5964 = vpack.c.b16 %v5949, %v5948
    %v5965 = vpack.c.b16 %v5951, %v5950
    %v5966 = vpack.c.b16 %v5953, %v5952
    %v5967 = vpack.c.b16 %v5955, %v5954
    %v5968 = vpack.c.b16 %v5957, %v5956
    %v5969 = vpack.c.b16 %v5959, %v5958
    %v5970 = vpack.c.b16 %v5961, %v5960
    %v5971 = vpack.c.b16 %v5963, %v5962
    %5980 = vmatprep.subr.bf16.mxu0 0
    %5981 = vmatpush1.bf16.msra.mxu0 %v5964
    %5982 = vmatprep.subr.bf16.mxu0 0
    %5983 = vmatpush1.bf16.msra.mxu0 %v5965
    %5984 = vmatprep.subr.bf16.mxu0 0
    %5985 = vmatpush1.bf16.msra.mxu0 %v5966
    %5986 = vmatprep.subr.bf16.mxu0 0
    %5987 = vmatpush1.bf16.msra.mxu0 %v5967
    %5988 = vmatprep.subr.bf16.mxu0 0
    %5989 = vmatpush1.bf16.msra.mxu0 %v5968
    %5990 = vmatprep.subr.bf16.mxu0 0
    %5991 = vmatpush1.bf16.msra.mxu0 %v5969
    %5992 = vmatprep.subr.bf16.mxu0 0
    %5993 = vmatpush1.bf16.msra.mxu0 %v5970
    %5994 = vmatprep.subr.bf16.mxu0 0
    %5995 = vmatpush1.bf16.msra.mxu0 %v5971
    %5996 = vmatprep.subr.bf16.mxu0 0
    %5997 = vmatpush1.bf16.msra.mxu0 0
    %5998 = vmatprep.subr.bf16.mxu0 0
    %5999 = vmatpush1.bf16.msra.mxu0 0
    %6000 = vmatprep.subr.bf16.mxu0 0
    %6001 = vmatpush1.bf16.msra.mxu0 0
    %6002 = vmatprep.subr.bf16.mxu0 0
    %6003 = vmatpush1.bf16.msra.mxu0 0
    %6004 = vmatprep.subr.bf16.mxu0 0
    %6005 = vmatpush1.bf16.msra.mxu0 0
    %6006 = vmatprep.subr.bf16.mxu0 0
    %6007 = vmatpush1.bf16.msra.mxu0 0
    %6008 = vmatprep.subr.bf16.mxu0 0
    %6009 = vmatpush1.bf16.msra.mxu0 0
    %6010 = vmatprep.subr.bf16.mxu0 0
    %6011 = vmatpush1.bf16.msra.mxu0 0
    %6012 = vmatprep.mubr.bf16.mxu0 0
    %6013 = vmatmul.mubr.bf16.gmra.mrb[0].mxu0 %v5893
    %v6014 = vpop.f32.mrb[0].mxu0
    %v6015 = vadd.f32 %v5930, %v6014
    %v6016 = vpop.f32.mrb[0].mxu0
    %v6017 = vpop.f32.mrb[0].mxu0
    %v6018 = vadd.f32 %v5930, %v6017
    %v6019 = vpop.f32.mrb[0].mxu0
    %6020 = vmatprep.mubr.bf16.mxu0 0
    %6021 = vmatmul.mubr.bf16.gmra.mrb[0].mxu0 %v5894
    %v6022 = vpop.f32.mrb[0].mxu0
    %v6023 = vadd.f32 %v5930, %v6022
    %v6024 = vpop.f32.mrb[0].mxu0
    %v6025 = vpop.f32.mrb[0].mxu0
    %v6026 = vadd.f32 %v5930, %v6025
    %v6027 = vpop.f32.mrb[0].mxu0
    %6028 = vmatprep.mubr.bf16.mxu0 0
    %6029 = vmatmul.mubr.bf16.gmra.mrb[0].mxu0 %v5895
    %v6030 = vpop.f32.mrb[0].mxu0
    %v6031 = vadd.f32 %v5930, %v6030
    %v6032 = vpop.f32.mrb[0].mxu0
    %v6033 = vpop.f32.mrb[0].mxu0
    %v6034 = vadd.f32 %v5930, %v6033
    %v6035 = vpop.f32.mrb[0].mxu0
    %6036 = vmatprep.mubr.bf16.mxu0 0
    %6037 = vmatmul.mubr.bf16.gmra.mrb[0].mxu0 %v5896
    %v6038 = vpop.f32.mrb[0].mxu0
    %v6039 = vadd.f32 %v5930, %v6038
    %v6040 = vpop.f32.mrb[0].mxu0
    %v6041 = vpop.f32.mrb[0].mxu0
    %v6042 = vadd.f32 %v5930, %v6041
    %v6043 = vpop.f32.mrb[0].mxu0
    %6044 = vmatprep.mubr.bf16.mxu0 0
    %6045 = vmatmul.mubr.bf16.gmra.mrb[0].mxu0 %v5897
    %v6046 = vpop.f32.mrb[0].mxu0
    %v6047 = vadd.f32 %v5930, %v6046
    %v6048 = vpop.f32.mrb[0].mxu0
    %v6049 = vpop.f32.mrb[0].mxu0
    %v6050 = vadd.f32 %v5930, %v6049
    %v6051 = vpop.f32.mrb[0].mxu0
    %6052 = vmatprep.mubr.bf16.mxu0 0
    %6053 = vmatmul.mubr.bf16.gmra.mrb[0].mxu0 %v5898
    %v6054 = vpop.f32.mrb[0].mxu0
    %v6055 = vadd.f32 %v5930, %v6054
    %v6056 = vpop.f32.mrb[0].mxu0
    %v6057 = vpop.f32.mrb[0].mxu0
    %v6058 = vadd.f32 %v5930, %v6057
    %v6059 = vpop.f32.mrb[0].mxu0
    %6060 = vmatprep.mubr.bf16.mxu0 0
    %6061 = vmatmul.mubr.bf16.gmra.mrb[0].mxu0 %v5899
    %v6062 = vpop.f32.mrb[0].mxu0
    %v6063 = vadd.f32 %v5930, %v6062
    %v6064 = vpop.f32.mrb[0].mxu0
    %v6065 = vpop.f32.mrb[0].mxu0
    %v6066 = vadd.f32 %v5930, %v6065
    %v6067 = vpop.f32.mrb[0].mxu0
    %6068 = vmatprep.mubr.bf16.mxu0 0
    %6069 = vmatmul.mubr.bf16.gmra.mrb[0].mxu0 %v5900
    %v6070 = vpop.f32.mrb[0].mxu0
    %v6071 = vadd.f32 %v5930, %v6070
    %v6072 = vpop.f32.mrb[0].mxu0
    %v6073 = vpop.f32.mrb[0].mxu0
    %v6074 = vadd.f32 %v5930, %v6073
    %v6075 = vpop.f32.mrb[0].mxu0
    %6076 = vmatprep.mubr.bf16.mxu0 0
    %6077 = vmatmul.mubr.bf16.gmra.mrb[0].mxu0 %v5901
    %v6078 = vpop.f32.mrb[0].mxu0
    %v6079 = vadd.f32 %v5930, %v6078
    %v6080 = vpop.f32.mrb[0].mxu0
    %v6081 = vpop.f32.mrb[0].mxu0
    %v6082 = vadd.f32 %v5930, %v6081
    %v6083 = vpop.f32.mrb[0].mxu0
    %6084 = vmatprep.mubr.bf16.mxu0 0
    %6085 = vmatmul.mubr.bf16.gmra.mrb[0].mxu0 %v5902
    %v6086 = vpop.f32.mrb[0].mxu0
    %v6087 = vadd.f32 %v5930, %v6086
    %v6088 = vpop.f32.mrb[0].mxu0
    %v6089 = vpop.f32.mrb[0].mxu0
    %v6090 = vadd.f32 %v5930, %v6089
    %v6091 = vpop.f32.mrb[0].mxu0
    %6092 = vmatprep.mubr.bf16.mxu0 0
    %6093 = vmatmul.mubr.bf16.gmra.mrb[0].mxu0 %v5903
    %v6094 = vpop.f32.mrb[0].mxu0
    %v6095 = vadd.f32 %v5930, %v6094
    %v6096 = vpop.f32.mrb[0].mxu0
    %v6097 = vpop.f32.mrb[0].mxu0
    %v6098 = vadd.f32 %v5930, %v6097
    %v6099 = vpop.f32.mrb[0].mxu0
    %6100 = vmatprep.mubr.bf16.mxu0 0
    %6101 = vmatmul.mubr.bf16.gmra.mrb[0].mxu0 %v5904
    %v6102 = vpop.f32.mrb[0].mxu0
    %v6103 = vadd.f32 %v5930, %v6102
    %v6104 = vpop.f32.mrb[0].mxu0
    %v6105 = vpop.f32.mrb[0].mxu0
    %v6106 = vadd.f32 %v5930, %v6105
    %v6107 = vpop.f32.mrb[0].mxu0
    %6108 = vmatprep.mubr.bf16.mxu0 0
    %6109 = vmatmul.mubr.bf16.gmra.mrb[0].mxu0 %v5905
    %v6110 = vpop.f32.mrb[0].mxu0
    %v6111 = vadd.f32 %v5930, %v6110
    %v6112 = vpop.f32.mrb[0].mxu0
    %v6113 = vpop.f32.mrb[0].mxu0
    %v6114 = vadd.f32 %v5930, %v6113
    %v6115 = vpop.f32.mrb[0].mxu0
    %6116 = vmatprep.mubr.bf16.mxu0 0
    %6117 = vmatmul.mubr.bf16.gmra.mrb[0].mxu0 %v5906
    %v6118 = vpop.f32.mrb[0].mxu0
    %v6119 = vadd.f32 %v5930, %v6118
    %v6120 = vpop.f32.mrb[0].mxu0
    %v6121 = vpop.f32.mrb[0].mxu0
    %v6122 = vadd.f32 %v5930, %v6121
    %v6123 = vpop.f32.mrb[0].mxu0
    %6124 = vmatprep.mubr.bf16.mxu0 0
    %6125 = vmatmul.mubr.bf16.gmra.mrb[0].mxu0 %v5907
    %v6126 = vpop.f32.mrb[0].mxu0
    %v6127 = vadd.f32 %v5930, %v6126
    %v6128 = vpop.f32.mrb[0].mxu0
    %v6129 = vpop.f32.mrb[0].mxu0
    %v6130 = vadd.f32 %v5930, %v6129
    %v6131 = vpop.f32.mrb[0].mxu0
    %6132 = vmatprep.mubr.bf16.mxu0 0
    %6133 = vmatmul.mubr.bf16.gmra.mrb[0].mxu0 %v5908
    %v6134 = vpop.f32.mrb[0].mxu0
    %v6135 = vadd.f32 %v5930, %v6134
    %v6136 = vpop.f32.mrb[0].mxu0
    %v6137 = vpop.f32.mrb[0].mxu0
    %v6138 = vadd.f32 %v5930, %v6137
    %v6139 = vpop.f32.mrb[0].mxu0
    %6140 = vdwg.mxu0
    %vm6141 = vcmp.ge.f32.partialorder %v6015, 0.0
    %vm6142 = vcmp.ge.f32.partialorder %v6018, 0.0
    %vm6143 = vcmp.ge.f32.partialorder %v6023, 0.0
    %vm6144 = vcmp.ge.f32.partialorder %v6026, 0.0
    %vm6145 = vcmp.ge.f32.partialorder %v6031, 0.0
    %vm6146 = vcmp.ge.f32.partialorder %v6034, 0.0
    %vm6147 = vcmp.ge.f32.partialorder %v6039, 0.0
    %vm6148 = vcmp.ge.f32.partialorder %v6042, 0.0
    %vm6149 = vcmp.ge.f32.partialorder %v6047, 0.0
    %vm6150 = vcmp.ge.f32.partialorder %v6050, 0.0
    %vm6151 = vcmp.ge.f32.partialorder %v6055, 0.0
    %vm6152 = vcmp.ge.f32.partialorder %v6058, 0.0
    %vm6153 = vcmp.ge.f32.partialorder %v6063, 0.0
    %vm6154 = vcmp.ge.f32.partialorder %v6066, 0.0
    %vm6155 = vcmp.ge.f32.partialorder %v6071, 0.0
    %vm6156 = vcmp.ge.f32.partialorder %v6074, 0.0
    %vm6157 = vcmp.ge.f32.partialorder %v6079, 0.0
    %vm6158 = vcmp.ge.f32.partialorder %v6082, 0.0
    %vm6159 = vcmp.ge.f32.partialorder %v6087, 0.0
    %vm6160 = vcmp.ge.f32.partialorder %v6090, 0.0
    %vm6161 = vcmp.ge.f32.partialorder %v6095, 0.0
    %vm6162 = vcmp.ge.f32.partialorder %v6098, 0.0
    %vm6163 = vcmp.ge.f32.partialorder %v6103, 0.0
    %vm6164 = vcmp.ge.f32.partialorder %v6106, 0.0
    %vm6165 = vcmp.ge.f32.partialorder %v6111, 0.0
    %vm6166 = vcmp.ge.f32.partialorder %v6114, 0.0
    %vm6167 = vcmp.ge.f32.partialorder %v6119, 0.0
    %vm6168 = vcmp.ge.f32.partialorder %v6122, 0.0
    %vm6169 = vcmp.ge.f32.partialorder %v6127, 0.0
    %vm6170 = vcmp.ge.f32.partialorder %v6130, 0.0
    %vm6171 = vcmp.ge.f32.partialorder %v6135, 0.0
    %vm6172 = vcmp.ge.f32.partialorder %v6138, 0.0
    %v6173 = vmul.f32 %v3461, %v6015
    %v6174 = vmul.f32 %v3461, %v6018
    %v6175 = vmul.f32 %v3461, %v6023
    %v6176 = vmul.f32 %v3461, %v6026
    %v6177 = vmul.f32 %v3461, %v6031
    %v6178 = vmul.f32 %v3461, %v6034
    %v6179 = vmul.f32 %v3461, %v6039
    %v6180 = vmul.f32 %v3461, %v6042
    %v6181 = vmul.f32 %v3461, %v6047
    %v6182 = vmul.f32 %v3461, %v6050
    %v6183 = vmul.f32 %v3461, %v6055
    %v6184 = vmul.f32 %v3461, %v6058
    %v6185 = vmul.f32 %v3461, %v6063
    %v6186 = vmul.f32 %v3461, %v6066
    %v6187 = vmul.f32 %v3461, %v6071
    %v6188 = vmul.f32 %v3461, %v6074
    %v6189 = vmul.f32 %v3461, %v6079
    %v6190 = vmul.f32 %v3461, %v6082
    %v6191 = vmul.f32 %v3461, %v6087
    %v6192 = vmul.f32 %v3461, %v6090
    %v6193 = vmul.f32 %v3461, %v6095
    %v6194 = vmul.f32 %v3461, %v6098
    %v6195 = vmul.f32 %v3461, %v6103
    %v6196 = vmul.f32 %v3461, %v6106
    %v6197 = vmul.f32 %v3461, %v6111
    %v6198 = vmul.f32 %v3461, %v6114
    %v6199 = vmul.f32 %v3461, %v6119
    %v6200 = vmul.f32 %v3461, %v6122
    %v6201 = vmul.f32 %v3461, %v6127
    %v6202 = vmul.f32 %v3461, %v6130
    %v6203 = vmul.f32 %v3461, %v6135
    %v6204 = vmul.f32 %v3461, %v6138
    %v6205 = vsel %vm6141, %v6015, %v6173
    %v6206 = vsel %vm6142, %v6018, %v6174
    %v6207 = vsel %vm6143, %v6023, %v6175
    %v6208 = vsel %vm6144, %v6026, %v6176
    %v6209 = vsel %vm6145, %v6031, %v6177
    %v6210 = vsel %vm6146, %v6034, %v6178
    %v6211 = vsel %vm6147, %v6039, %v6179
    %v6212 = vsel %vm6148, %v6042, %v6180
    %v6213 = vsel %vm6149, %v6047, %v6181
    %v6214 = vsel %vm6150, %v6050, %v6182
    %v6215 = vsel %vm6151, %v6055, %v6183
    %v6216 = vsel %vm6152, %v6058, %v6184
    %v6217 = vsel %vm6153, %v6063, %v6185
    %v6218 = vsel %vm6154, %v6066, %v6186
    %v6219 = vsel %vm6155, %v6071, %v6187
    %v6220 = vsel %vm6156, %v6074, %v6188
    %v6221 = vsel %vm6157, %v6079, %v6189
    %v6222 = vsel %vm6158, %v6082, %v6190
    %v6223 = vsel %vm6159, %v6087, %v6191
    %v6224 = vsel %vm6160, %v6090, %v6192
    %v6225 = vsel %vm6161, %v6095, %v6193
    %v6226 = vsel %vm6162, %v6098, %v6194
    %v6227 = vsel %vm6163, %v6103, %v6195
    %v6228 = vsel %vm6164, %v6106, %v6196
    %v6229 = vsel %vm6165, %v6111, %v6197
    %v6230 = vsel %vm6166, %v6114, %v6198
    %v6231 = vsel %vm6167, %v6119, %v6199
    %v6232 = vsel %vm6168, %v6122, %v6200
    %v6233 = vsel %vm6169, %v6127, %v6201
    %v6234 = vsel %vm6170, %v6130, %v6202
    %v6235 = vsel %vm6171, %v6135, %v6203
    %v6236 = vsel %vm6172, %v6138, %v6204
    %v6237 = vlaneseq
    %v6238 = vand.u32 %v6237, 127
    %vm6239 = vcmp.lt.s32.totalorder %v6238, 2
    %v6240 = vsel %vm6239, %v6205, -1e+30
    %v6241 = vsel %vm6239, %v6206, -1e+30
    %v6242 = vsel %vm6239, %v6207, -1e+30
    %v6243 = vsel %vm6239, %v6208, -1e+30
    %v6244 = vsel %vm6239, %v6209, -1e+30
    %v6245 = vsel %vm6239, %v6210, -1e+30
    %v6246 = vsel %vm6239, %v6211, -1e+30
    %v6247 = vsel %vm6239, %v6212, -1e+30
    %v6248 = vsel %vm6239, %v6213, -1e+30
    %v6249 = vsel %vm6239, %v6214, -1e+30
    %v6250 = vsel %vm6239, %v6215, -1e+30
    %v6251 = vsel %vm6239, %v6216, -1e+30
    %v6252 = vsel %vm6239, %v6217, -1e+30
    %v6253 = vsel %vm6239, %v6218, -1e+30
    %v6254 = vsel %vm6239, %v6219, -1e+30
    %v6255 = vsel %vm6239, %v6220, -1e+30
    %v6256 = vsel %vm6239, %v6221, -1e+30
    %v6257 = vsel %vm6239, %v6222, -1e+30
    %v6258 = vsel %vm6239, %v6223, -1e+30
    %v6259 = vsel %vm6239, %v6224, -1e+30
    %v6260 = vsel %vm6239, %v6225, -1e+30
    %v6261 = vsel %vm6239, %v6226, -1e+30
    %v6262 = vsel %vm6239, %v6227, -1e+30
    %v6263 = vsel %vm6239, %v6228, -1e+30
    %v6264 = vsel %vm6239, %v6229, -1e+30
    %v6265 = vsel %vm6239, %v6230, -1e+30
    %v6266 = vsel %vm6239, %v6231, -1e+30
    %v6267 = vsel %vm6239, %v6232, -1e+30
    %v6268 = vsel %vm6239, %v6233, -1e+30
    %v6269 = vsel %vm6239, %v6234, -1e+30
    %v6270 = vsel %vm6239, %v6235, -1e+30
    %v6271 = vsel %vm6239, %v6236, -1e+30
    %6272 = vmax.xlane.f32.xlu0 %v6240
    %v6273 = vpop.xlane.xlu0 %6272
    %6274 = vmax.xlane.f32.xlu0 %v6241
    %v6275 = vpop.xlane.xlu0 %6274
    %6276 = vmax.xlane.f32.xlu0 %v6242
    %v6277 = vpop.xlane.xlu0 %6276
    %6278 = vmax.xlane.f32.xlu0 %v6243
    %v6279 = vpop.xlane.xlu0 %6278
    %6280 = vmax.xlane.f32.xlu0 %v6244
    %v6281 = vpop.xlane.xlu0 %6280
    %6282 = vmax.xlane.f32.xlu0 %v6245
    %v6283 = vpop.xlane.xlu0 %6282
    %6284 = vmax.xlane.f32.xlu0 %v6246
    %v6285 = vpop.xlane.xlu0 %6284
    %6286 = vmax.xlane.f32.xlu0 %v6247
    %v6287 = vpop.xlane.xlu0 %6286
    %6288 = vmax.xlane.f32.xlu0 %v6248
    %v6289 = vpop.xlane.xlu0 %6288
    %6290 = vmax.xlane.f32.xlu0 %v6249
    %v6291 = vpop.xlane.xlu0 %6290
    %6292 = vmax.xlane.f32.xlu0 %v6250
    %v6293 = vpop.xlane.xlu0 %6292
    %6294 = vmax.xlane.f32.xlu0 %v6251
    %v6295 = vpop.xlane.xlu0 %6294
    %6296 = vmax.xlane.f32.xlu0 %v6252
    %v6297 = vpop.xlane.xlu0 %6296
    %6298 = vmax.xlane.f32.xlu0 %v6253
    %v6299 = vpop.xlane.xlu0 %6298
    %6300 = vmax.xlane.f32.xlu0 %v6254
    %v6301 = vpop.xlane.xlu0 %6300
    %6302 = vmax.xlane.f32.xlu0 %v6255
    %v6303 = vpop.xlane.xlu0 %6302
    %6304 = vmax.xlane.f32.xlu0 %v6256
    %v6305 = vpop.xlane.xlu0 %6304
    %6306 = vmax.xlane.f32.xlu0 %v6257
    %v6307 = vpop.xlane.xlu0 %6306
    %6308 = vmax.xlane.f32.xlu0 %v6258
    %v6309 = vpop.xlane.xlu0 %6308
    %6310 = vmax.xlane.f32.xlu0 %v6259
    %v6311 = vpop.xlane.xlu0 %6310
    %6312 = vmax.xlane.f32.xlu0 %v6260
    %v6313 = vpop.xlane.xlu0 %6312
    %6314 = vmax.xlane.f32.xlu0 %v6261
    %v6315 = vpop.xlane.xlu0 %6314
    %6316 = vmax.xlane.f32.xlu0 %v6262
    %v6317 = vpop.xlane.xlu0 %6316
    %6318 = vmax.xlane.f32.xlu0 %v6263
    %v6319 = vpop.xlane.xlu0 %6318
    %6320 = vmax.xlane.f32.xlu0 %v6264
    %v6321 = vpop.xlane.xlu0 %6320
    %6322 = vmax.xlane.f32.xlu0 %v6265
    %v6323 = vpop.xlane.xlu0 %6322
    %6324 = vmax.xlane.f32.xlu0 %v6266
    %v6325 = vpop.xlane.xlu0 %6324
    %6326 = vmax.xlane.f32.xlu0 %v6267
    %v6327 = vpop.xlane.xlu0 %6326
    %6328 = vmax.xlane.f32.xlu0 %v6268
    %v6329 = vpop.xlane.xlu0 %6328
    %6330 = vmax.xlane.f32.xlu0 %v6269
    %v6331 = vpop.xlane.xlu0 %6330
    %6332 = vmax.xlane.f32.xlu0 %v6270
    %v6333 = vpop.xlane.xlu0 %6332
    %6334 = vmax.xlane.f32.xlu0 %v6271
    %v6335 = vpop.xlane.xlu0 %6334
    %v6336 = vsub.f32 %v6240, %v6273
    %v6337 = vsub.f32 %v6241, %v6275
    %v6338 = vsub.f32 %v6242, %v6277
    %v6339 = vsub.f32 %v6243, %v6279
    %v6340 = vsub.f32 %v6244, %v6281
    %v6341 = vsub.f32 %v6245, %v6283
    %v6342 = vsub.f32 %v6246, %v6285
    %v6343 = vsub.f32 %v6247, %v6287
    %v6344 = vsub.f32 %v6248, %v6289
    %v6345 = vsub.f32 %v6249, %v6291
    %v6346 = vsub.f32 %v6250, %v6293
    %v6347 = vsub.f32 %v6251, %v6295
    %v6348 = vsub.f32 %v6252, %v6297
    %v6349 = vsub.f32 %v6253, %v6299
    %v6350 = vsub.f32 %v6254, %v6301
    %v6351 = vsub.f32 %v6255, %v6303
    %v6352 = vsub.f32 %v6256, %v6305
    %v6353 = vsub.f32 %v6257, %v6307
    %v6354 = vsub.f32 %v6258, %v6309
    %v6355 = vsub.f32 %v6259, %v6311
    %v6356 = vsub.f32 %v6260, %v6313
    %v6357 = vsub.f32 %v6261, %v6315
    %v6358 = vsub.f32 %v6262, %v6317
    %v6359 = vsub.f32 %v6263, %v6319
    %v6360 = vsub.f32 %v6264, %v6321
    %v6361 = vsub.f32 %v6265, %v6323
    %v6362 = vsub.f32 %v6266, %v6325
    %v6363 = vsub.f32 %v6267, %v6327
    %v6364 = vsub.f32 %v6268, %v6329
    %v6365 = vsub.f32 %v6269, %v6331
    %v6366 = vsub.f32 %v6270, %v6333
    %v6367 = vsub.f32 %v6271, %v6335
    %v6368 = vmul.f32 %v6336, 1.442695
    %v6369 = vpow.pop %v6368
    %v6370 = vmul.f32 %v6337, 1.442695
    %v6371 = vpow.pop %v6370
    %v6372 = vmul.f32 %v6338, 1.442695
    %v6373 = vpow.pop %v6372
    %v6374 = vmul.f32 %v6339, 1.442695
    %v6375 = vpow.pop %v6374
    %v6376 = vmul.f32 %v6340, 1.442695
    %v6377 = vpow.pop %v6376
    %v6378 = vmul.f32 %v6341, 1.442695
    %v6379 = vpow.pop %v6378
    %v6380 = vmul.f32 %v6342, 1.442695
    %v6381 = vpow.pop %v6380
    %v6382 = vmul.f32 %v6343, 1.442695
    %v6383 = vpow.pop %v6382
    %v6384 = vmul.f32 %v6344, 1.442695
    %v6385 = vpow.pop %v6384
    %v6386 = vmul.f32 %v6345, 1.442695
    %v6387 = vpow.pop %v6386
    %v6388 = vmul.f32 %v6346, 1.442695
    %v6389 = vpow.pop %v6388
    %v6390 = vmul.f32 %v6347, 1.442695
    %v6391 = vpow.pop %v6390
    %v6392 = vmul.f32 %v6348, 1.442695
    %v6393 = vpow.pop %v6392
    %v6394 = vmul.f32 %v6349, 1.442695
    %v6395 = vpow.pop %v6394
    %v6396 = vmul.f32 %v6350, 1.442695
    %v6397 = vpow.pop %v6396
    %v6398 = vmul.f32 %v6351, 1.442695
    %v6399 = vpow.pop %v6398
    %v6400 = vmul.f32 %v6352, 1.442695
    %v6401 = vpow.pop %v6400
    %v6402 = vmul.f32 %v6353, 1.442695
    %v6403 = vpow.pop %v6402
    %v6404 = vmul.f32 %v6354, 1.442695
    %v6405 = vpow.pop %v6404
    %v6406 = vmul.f32 %v6355, 1.442695
    %v6407 = vpow.pop %v6406
    %v6408 = vmul.f32 %v6356, 1.442695
    %v6409 = vpow.pop %v6408
    %v6410 = vmul.f32 %v6357, 1.442695
    %v6411 = vpow.pop %v6410
    %v6412 = vmul.f32 %v6358, 1.442695
    %v6413 = vpow.pop %v6412
    %v6414 = vmul.f32 %v6359, 1.442695
    %v6415 = vpow.pop %v6414
    %v6416 = vmul.f32 %v6360, 1.442695
    %v6417 = vpow.pop %v6416
    %v6418 = vmul.f32 %v6361, 1.442695
    %v6419 = vpow.pop %v6418
    %v6420 = vmul.f32 %v6362, 1.442695
    %v6421 = vpow.pop %v6420
    %v6422 = vmul.f32 %v6363, 1.442695
    %v6423 = vpow.pop %v6422
    %v6424 = vmul.f32 %v6364, 1.442695
    %v6425 = vpow.pop %v6424
    %v6426 = vmul.f32 %v6365, 1.442695
    %v6427 = vpow.pop %v6426
    %v6428 = vmul.f32 %v6366, 1.442695
    %v6429 = vpow.pop %v6428
    %v6430 = vmul.f32 %v6367, 1.442695
    %v6431 = vpow.pop %v6430
    %6432 = vadd.xlane.f32.xlu0 %v6369
    %v6433 = vpop.xlane.xlu0 %6432
    %6434 = vadd.xlane.f32.xlu0 %v6371
    %v6435 = vpop.xlane.xlu0 %6434
    %6436 = vadd.xlane.f32.xlu0 %v6373
    %v6437 = vpop.xlane.xlu0 %6436
    %6438 = vadd.xlane.f32.xlu0 %v6375
    %v6439 = vpop.xlane.xlu0 %6438
    %6440 = vadd.xlane.f32.xlu0 %v6377
    %v6441 = vpop.xlane.xlu0 %6440
    %6442 = vadd.xlane.f32.xlu0 %v6379
    %v6443 = vpop.xlane.xlu0 %6442
    %6444 = vadd.xlane.f32.xlu0 %v6381
    %v6445 = vpop.xlane.xlu0 %6444
    %6446 = vadd.xlane.f32.xlu0 %v6383
    %v6447 = vpop.xlane.xlu0 %6446
    %6448 = vadd.xlane.f32.xlu0 %v6385
    %v6449 = vpop.xlane.xlu0 %6448
    %6450 = vadd.xlane.f32.xlu0 %v6387
    %v6451 = vpop.xlane.xlu0 %6450
    %6452 = vadd.xlane.f32.xlu0 %v6389
    %v6453 = vpop.xlane.xlu0 %6452
    %6454 = vadd.xlane.f32.xlu0 %v6391
    %v6455 = vpop.xlane.xlu0 %6454
    %6456 = vadd.xlane.f32.xlu0 %v6393
    %v6457 = vpop.xlane.xlu0 %6456
    %6458 = vadd.xlane.f32.xlu0 %v6395
    %v6459 = vpop.xlane.xlu0 %6458
    %6460 = vadd.xlane.f32.xlu0 %v6397
    %v6461 = vpop.xlane.xlu0 %6460
    %6462 = vadd.xlane.f32.xlu0 %v6399
    %v6463 = vpop.xlane.xlu0 %6462
    %6464 = vadd.xlane.f32.xlu0 %v6401
    %v6465 = vpop.xlane.xlu0 %6464
    %6466 = vadd.xlane.f32.xlu0 %v6403
    %v6467 = vpop.xlane.xlu0 %6466
    %6468 = vadd.xlane.f32.xlu0 %v6405
    %v6469 = vpop.xlane.xlu0 %6468
    %6470 = vadd.xlane.f32.xlu0 %v6407
    %v6471 = vpop.xlane.xlu0 %6470
    %6472 = vadd.xlane.f32.xlu0 %v6409
    %v6473 = vpop.xlane.xlu0 %6472
    %6474 = vadd.xlane.f32.xlu0 %v6411
    %v6475 = vpop.xlane.xlu0 %6474
    %6476 = vadd.xlane.f32.xlu0 %v6413
    %v6477 = vpop.xlane.xlu0 %6476
    %6478 = vadd.xlane.f32.xlu0 %v6415
    %v6479 = vpop.xlane.xlu0 %6478
    %6480 = vadd.xlane.f32.xlu0 %v6417
    %v6481 = vpop.xlane.xlu0 %6480
    %6482 = vadd.xlane.f32.xlu0 %v6419
    %v6483 = vpop.xlane.xlu0 %6482
    %6484 = vadd.xlane.f32.xlu0 %v6421
    %v6485 = vpop.xlane.xlu0 %6484
    %6486 = vadd.xlane.f32.xlu0 %v6423
    %v6487 = vpop.xlane.xlu0 %6486
    %6488 = vadd.xlane.f32.xlu0 %v6425
    %v6489 = vpop.xlane.xlu0 %6488
    %6490 = vadd.xlane.f32.xlu0 %v6427
    %v6491 = vpop.xlane.xlu0 %6490
    %6492 = vadd.xlane.f32.xlu0 %v6429
    %v6493 = vpop.xlane.xlu0 %6492
    %6494 = vadd.xlane.f32.xlu0 %v6431
    %v6495 = vpop.xlane.xlu0 %6494
    %v6496 = vrcp.pop %v6433
    %v6497 = vmul.f32 %v6369, %v6496
    %v6498 = vrcp.pop %v6435
    %v6499 = vmul.f32 %v6371, %v6498
    %v6500 = vrcp.pop %v6437
    %v6501 = vmul.f32 %v6373, %v6500
    %v6502 = vrcp.pop %v6439
    %v6503 = vmul.f32 %v6375, %v6502
    %v6504 = vrcp.pop %v6441
    %v6505 = vmul.f32 %v6377, %v6504
    %v6506 = vrcp.pop %v6443
    %v6507 = vmul.f32 %v6379, %v6506
    %v6508 = vrcp.pop %v6445
    %v6509 = vmul.f32 %v6381, %v6508
    %v6510 = vrcp.pop %v6447
    %v6511 = vmul.f32 %v6383, %v6510
    %v6512 = vrcp.pop %v6449
    %v6513 = vmul.f32 %v6385, %v6512
    %v6514 = vrcp.pop %v6451
    %v6515 = vmul.f32 %v6387, %v6514
    %v6516 = vrcp.pop %v6453
    %v6517 = vmul.f32 %v6389, %v6516
    %v6518 = vrcp.pop %v6455
    %v6519 = vmul.f32 %v6391, %v6518
    %v6520 = vrcp.pop %v6457
    %v6521 = vmul.f32 %v6393, %v6520
    %v6522 = vrcp.pop %v6459
    %v6523 = vmul.f32 %v6395, %v6522
    %v6524 = vrcp.pop %v6461
    %v6525 = vmul.f32 %v6397, %v6524
    %v6526 = vrcp.pop %v6463
    %v6527 = vmul.f32 %v6399, %v6526
    %v6528 = vrcp.pop %v6465
    %v6529 = vmul.f32 %v6401, %v6528
    %v6530 = vrcp.pop %v6467
    %v6531 = vmul.f32 %v6403, %v6530
    %v6532 = vrcp.pop %v6469
    %v6533 = vmul.f32 %v6405, %v6532
    %v6534 = vrcp.pop %v6471
    %v6535 = vmul.f32 %v6407, %v6534
    %v6536 = vrcp.pop %v6473
    %v6537 = vmul.f32 %v6409, %v6536
    %v6538 = vrcp.pop %v6475
    %v6539 = vmul.f32 %v6411, %v6538
    %v6540 = vrcp.pop %v6477
    %v6541 = vmul.f32 %v6413, %v6540
    %v6542 = vrcp.pop %v6479
    %v6543 = vmul.f32 %v6415, %v6542
    %v6544 = vrcp.pop %v6481
    %v6545 = vmul.f32 %v6417, %v6544
    %v6546 = vrcp.pop %v6483
    %v6547 = vmul.f32 %v6419, %v6546
    %v6548 = vrcp.pop %v6485
    %v6549 = vmul.f32 %v6421, %v6548
    %v6550 = vrcp.pop %v6487
    %v6551 = vmul.f32 %v6423, %v6550
    %v6552 = vrcp.pop %v6489
    %v6553 = vmul.f32 %v6425, %v6552
    %v6554 = vrcp.pop %v6491
    %v6555 = vmul.f32 %v6427, %v6554
    %v6556 = vrcp.pop %v6493
    %v6557 = vmul.f32 %v6429, %v6556
    %v6558 = vrcp.pop %v6495
    %v6559 = vmul.f32 %v6431, %v6558
    %6560 = vst [vmem:[#allocation15] sm:$0xff] %v6497
    %6561 = vst [vmem:[#allocation15 + $0x8] sm:$0xff] %v6499
    %6562 = vst [vmem:[#allocation15 + $0x10] sm:$0xff] %v6501
    %6563 = vst [vmem:[#allocation15 + $0x18] sm:$0xff] %v6503
    %6564 = vst [vmem:[#allocation15 + $0x20] sm:$0xff] %v6505
    %6565 = vst [vmem:[#allocation15 + $0x28] sm:$0xff] %v6507
    %6566 = vst [vmem:[#allocation15 + $0x30] sm:$0xff] %v6509
    %6567 = vst [vmem:[#allocation15 + $0x38] sm:$0xff] %v6511
    %6568 = vst [vmem:[#allocation15 + $0x40] sm:$0xff] %v6513
    %6569 = vst [vmem:[#allocation15 + $0x48] sm:$0xff] %v6515
    %6570 = vst [vmem:[#allocation15 + $0x50] sm:$0xff] %v6517
    %6571 = vst [vmem:[#allocation15 + $0x58] sm:$0xff] %v6519
    %6572 = vst [vmem:[#allocation15 + $0x60] sm:$0xff] %v6521
    %6573 = vst [vmem:[#allocation15 + $0x68] sm:$0xff] %v6523
    %6574 = vst [vmem:[#allocation15 + $0x70] sm:$0xff] %v6525
    %6575 = vst [vmem:[#allocation15 + $0x78] sm:$0xff] %v6527
    %6576 = vst [vmem:[#allocation15 + $0x80] sm:$0xff] %v6529
    %6577 = vst [vmem:[#allocation15 + $0x88] sm:$0xff] %v6531
    %6578 = vst [vmem:[#allocation15 + $0x90] sm:$0xff] %v6533
    %6579 = vst [vmem:[#allocation15 + $0x98] sm:$0xff] %v6535
    %6580 = vst [vmem:[#allocation15 + $0xa0] sm:$0xff] %v6537
    %6581 = vst [vmem:[#allocation15 + $0xa8] sm:$0xff] %v6539
    %6582 = vst [vmem:[#allocation15 + $0xb0] sm:$0xff] %v6541
    %6583 = vst [vmem:[#allocation15 + $0xb8] sm:$0xff] %v6543
    %6584 = vst [vmem:[#allocation15 + $0xc0] sm:$0xff] %v6545
    %6585 = vst [vmem:[#allocation15 + $0xc8] sm:$0xff] %v6547
    %6586 = vst [vmem:[#allocation15 + $0xd0] sm:$0xff] %v6549
    %6587 = vst [vmem:[#allocation15 + $0xd8] sm:$0xff] %v6551
    %6588 = vst [vmem:[#allocation15 + $0xe0] sm:$0xff] %v6553
    %6589 = vst [vmem:[#allocation15 + $0xe8] sm:$0xff] %v6555
    %6590 = vst [vmem:[#allocation15 + $0xf0] sm:$0xff] %v6557
    %6591 = vst [vmem:[#allocation15 + $0xf8] sm:$0xff] %v6559
    // Predicated region
    $region54: #{tpu_custom_call.1} parent=1 // pred_check
      _
    $region55: #{tpu_custom_call.1} parent=1 // pred_check_branch
      %6593 = sbr.rel (0) target = $region57
    $region56: #{tpu_custom_call.1} parent=1 // pred_region
      %s6595 = ssub.s32 4096, 4096
      %6596 = vsyncadd [#allocation6], %s6595
      %s6597 = sshll.u32 [#allocation15], 4
      %s6598 = int_to_ptr.vmem [resolvable:$true] %s6597
      %6603 = dma.vmem_to_hbm [thread:$0]  %s6598, 4096, %s8, [#allocation6], 128, 128, 8
    $region57: #{tpu_custom_call.1} parent=1 // pred_fallthru
      _
    // Predicated region
    $region58: #{tpu_custom_call.1} parent=1 // pred_check
      _
    $region59: #{tpu_custom_call.1} parent=1 // pred_check_branch
      %6605 = sbr.rel (0) target = $region61
    $region60: #{tpu_custom_call.1} parent=1 // pred_region
      %6606 = dma.done [#allocation6], 4096
    $region61: #{tpu_custom_call.1} parent=1 // pred_fallthru
      _
    %6607 = vsyncpa [#allocation5], 1
    %6608 = vsyncpa [#allocation8], 1
    %6609 = vsyncpa [#allocation11], 1
    %6610 = vsyncpa [#allocation14], 1
    %6611 = vsyncpa [#allocation6], 1

</llo_original>
